<compile_context>
chip_gen: v7x
topology: tpu7x:2x2x1
jax: 0.10.0
libtpu: 0.0.40
codegen_flags: <defaults>
</compile_context>

<pallas_src>
from functools import partial

import numpy as np
import jax
import jax.numpy as jnp
from jax.experimental import pallas as pl
from jax.experimental.pallas import tpu as pltpu

NODE_DIM = 8
EDGE_DIM = 4
HIDDEN = 32
NUM_LAYERS = 6
NUM_STUDENTS = 8
NUM_COLLEGES = 8
NUM_NODES = NUM_STUDENTS + NUM_COLLEGES
NUM_EDGES = NUM_STUDENTS * NUM_COLLEGES
SINKHORN_ITERS = 10
LN_EPS = 1e-5
BATCH = 4

# ------------------------- packed parameter layout ---------------------------
# One [320, 64] f32 array (rows x lanes) holding every weight and vector.
_R_WP = 0                                        # rows 0..7,    lanes 0:32  proj W
_R_WSC = _R_WP + NODE_DIM                        # rows 8..39,   lanes 0:64  [ws|wc]
_R_WG = _R_WSC + HIDDEN                          # rows 40..231, lanes 0:32  6 GCN W
_R_EBLK = _R_WG + NUM_LAYERS * HIDDEN            # rows 232..263, lanes 0:8  edge blkdiag
_R_WC1C = _R_EBLK + NUM_COLLEGES * EDGE_DIM      # rows 264..295, lane 0     wc1 column
_RV_BP = _R_WC1C + HIDDEN                        # 296
_RV_BG = _RV_BP + 1                              # 297..302 (per GCN layer)
_RV_GAMMA = _RV_BG + NUM_LAYERS                  # 303..308
_RV_BETA = _RV_GAMMA + NUM_LAYERS                # 309..314
_RV_BSC = _RV_BETA + NUM_LAYERS                  # 315, lanes 0:64  [bs|bc]
_RV_WA = _RV_BSC + 1                             # 316, lanes 0:32
_RV_WC2 = _RV_WA + 1                             # 317, lanes 0:32
_RV_BA = _RV_WC2 + 1                             # 318, lane 0
_RV_BCOMB = _RV_BA + 1                           # 319, lane 0 (bcomb + be.wc3)
_PACK_ROWS = _RV_BCOMB + 1                       # 320 (multiple of 8)


# ------------------------------ Pallas kernel --------------------------------
def fair_matching_kernel(x_ref, a_ref, e2_ref, w_ref, out_ref):
    f32 = jnp.float32
    H = HIDDEN
    NS, NC, NN = NUM_STUDENTS, NUM_COLLEGES, NUM_NODES
    P = out_ref.shape[0]               # graphs packed into this grid step

    x_in = x_ref[...]                  # [P*NN, node_dim]
    a_blk = a_ref[...]                 # [P*NN, P*NN] block-diagonal GCN adjacency

    # x = relu(proj(x)) for all packed graphs at once
    wp = w_ref[_R_WP:_R_WP + NODE_DIM, 0:H]
    bp = w_ref[_RV_BP:_RV_BP + 1, 0:H]
    x = jnp.maximum(jnp.dot(x_in, wp, preferred_element_type=f32) + bp, 0.0)

    # GCN stack (sublane-packed batch): x = LayerNorm(relu(GCNConv(x) + x))
    for l in range(NUM_LAYERS):
        wg_l = w_ref[_R_WG + l * H:_R_WG + (l + 1) * H, 0:H]
        xw = jnp.dot(x, wg_l, preferred_element_type=f32)
        gx = (jnp.dot(a_blk, xw, preferred_element_type=f32)
              + w_ref[_RV_BG + l:_RV_BG + l + 1, 0:H])
        x = jnp.maximum(gx + x, 0.0)
        mu = jnp.mean(x, axis=-1, keepdims=True)
        var = jnp.mean((x - mu) ** 2, axis=-1, keepdims=True)
        x = ((x - mu) * jax.lax.rsqrt(var + LN_EPS)
             * w_ref[_RV_GAMMA + l:_RV_GAMMA + l + 1, 0:H]
             + w_ref[_RV_BETA + l:_RV_BETA + l + 1, 0:H])

    # Fused student/college attention projections for all nodes / graphs.
    w_sc = w_ref[_R_WSC:_R_WSC + H, 0:2 * H]
    b_sc = w_ref[_RV_BSC:_RV_BSC + 1, 0:2 * H]
    y = jnp.dot(x, w_sc, preferred_element_type=f32) + b_sc      # [P*NN, 2H]

    # Small weights hoisted out of the per-graph loop (JAX does not CSE
    # broadcast_in_dim, so hoist the reshape too).
    wa3 = w_ref[_RV_WA:_RV_WA + 1, 0:H].reshape(1, 1, H)
    ba = w_ref[_RV_BA:_RV_BA + 1, 0:1]
    wc1_col = w_ref[_R_WC1C:_R_WC1C + H, 0:1]
    wc2_row = w_ref[_RV_WC2:_RV_WC2 + 1, 0:H]
    bcomb = w_ref[_RV_BCOMB:_RV_BCOMB + 1, 0:1]

    # Per-graph bipartite attention (pairwise tanh) — unrolled so the P
    # independent chains can interleave in one VLIW schedule.
    sm_parts = []
    for g in range(P):
        s0 = g * NN
        S_g = y[s0:s0 + NS, 0:H]                  # student_proj  [NS, H]
        C_g = y[s0 + NS:s0 + NN, H:2 * H]         # college_proj  [NC, H]
        college_g = x[s0 + NS:s0 + NN, :]         # GCN college feats [NC, H]
        T = jnp.tanh(S_g[:, None, :] + C_g[None, :, :])          # [NS, NC, H]
        att = jnp.sum(T * wa3, axis=-1) + ba                     # [NS, NC]
        m = jnp.max(att, axis=-1, keepdims=True)
        e = jnp.exp(att - m)
        inv = pl.reciprocal(jnp.sum(e, axis=-1, keepdims=True), approx=True)
        attended_g = jnp.dot(e * inv, college_g,
                             preferred_element_type=f32)         # [NS, H]
        # combined_proj decomposed: attended.wc1 column + wc2.college row
        a_col = jnp.dot(attended_g, wc1_col,
                        preferred_element_type=f32)              # [NS, 1]
        c_row = jax.lax.dot_general(wc2_row, college_g,
                                    (((1,), (1,)), ((), ())),
                                    preferred_element_type=f32)  # [1, NC]
        sm_parts.append(a_col + c_row)                           # [NS, NC]

    # Weight-folded edge term for ALL graphs in one MXU op:
    #   edge_attr . (we @ wc3^T) laid out block-diagonally per college.
    e_blk = w_ref[_R_EBLK:_R_EBLK + NC * EDGE_DIM, 0:NC]         # [NC*ED, NC]
    e_mat = jnp.dot(e2_ref[...], e_blk, preferred_element_type=f32)  # [P*NS, NC]

    sm = (jnp.stack(sm_parts, axis=0)
          + e_mat.reshape(P, NS, NC) + bcomb)                    # [P, NS, NC]

    # Batched log-domain Sinkhorn over the P independent graphs.
    for _ in range(SINKHORN_ITERS):
        m1 = jnp.max(sm, axis=2, keepdims=True)
        sm = sm - (m1 + jnp.log(jnp.sum(jnp.exp(sm - m1), axis=2, keepdims=True)))
        m0 = jnp.max(sm, axis=1, keepdims=True)
        sm = sm - (m0 + jnp.log(jnp.sum(jnp.exp(sm - m0), axis=1, keepdims=True)))

    out_ref[...] = jnp.exp(sm)


# ------------------------- wrapper / weight folding ---------------------------
def _pack_params(params):
    """Fold and pack every weight into one [320, 64] f32 array."""
    f32 = jnp.float32
    H = HIDDEN
    W = 2 * H

    def padw(m):
        m = jnp.asarray(m, f32)
        return jnp.pad(m, ((0, 0), (0, W - m.shape[-1])))

    # fused attention projection [ws | wc], [bs | bc]
    w_sc = jnp.concatenate([params['ws'], params['wc']], axis=1).astype(f32)
    b_sc = jnp.concatenate([params['bs'], params['bc']], axis=1).astype(f32)

    # edge-path weight fold: score contribution of edge (s,c) is
    #   edge_attr[s*Nc+c] . (we @ wc3^T)  +  be . wc3
    w_fold = (params['we'] @ params['wc3'].T).reshape(-1)          # [edge_dim]
    sel = np.zeros((NUM_COLLEGES * EDGE_DIM, NUM_COLLEGES), np.float32)
    for c in range(NUM_COLLEGES):
        sel[c * EDGE_DIM:(c + 1) * EDGE_DIM, c] = 1.0
    e_blk = jnp.asarray(sel) * jnp.tile(w_fold, NUM_COLLEGES)[:, None]
    bcomb_total = params['bcomb'][0, 0] + jnp.sum(params['be'] * params['wc3'])

    wc1_colblk = jnp.zeros((H, W), f32).at[:, 0].set(
        params['wc1'].reshape(-1).astype(f32))
    wg_flat = params['wg'].astype(f32).reshape(NUM_LAYERS * H, H)

    ba_row = jnp.zeros((1, W), f32).at[0, 0].set(params['ba'][0, 0])
    bcomb_row = jnp.zeros((1, W), f32).at[0, 0].set(bcomb_total)

    rows = [padw(params['wp']),       # _R_WP
            padw(w_sc),               # _R_WSC
            padw(wg_flat),            # _R_WG
            padw(e_blk),              # _R_EBLK
            wc1_colblk,               # _R_WC1C
            padw(params['bp'])]       # _RV_BP
    rows += [padw(params['bg'][l]) for l in range(NUM_LAYERS)]
    rows += [padw(params['gamma'][l]) for l in range(NUM_LAYERS)]
    rows += [padw(params['beta'][l]) for l in range(NUM_LAYERS)]
    rows += [padw(b_sc), padw(params['wa']), padw(params['wc2']),
             ba_row, bcomb_row]
    wpack = jnp.concatenate(rows, axis=0)
    assert wpack.shape == (_PACK_ROWS, W)
    return wpack


def _tc_shards():
    """2-wide parallel grid on v7x (2 TensorCores/chip); 1 step otherwise."""
    try:
        kind = jax.devices()[0].device_kind.lower()
    except Exception:
        return 1
    return 2 if ("v7" in kind or "7x" in kind) else 1


@partial(jax.jit, static_argnames=("num_shards",))
def _fair_matching_impl(x_b, a_hat, edge_attr_b, params, num_shards):
    B = x_b.shape[0]
    G = num_shards
    P = B // G

    wpack = _pack_params(params)
    x_flat = x_b.astype(jnp.float32).reshape(B * NUM_NODES, NODE_DIM)
    e2 = edge_attr_b.astype(jnp.float32).reshape(B * NUM_STUDENTS,
                                                 NUM_COLLEGES * EDGE_DIM)
    # Shared graph structure -> block-diagonal adjacency for the P graphs
    # packed into one grid step (same for every shard).
    a_blk = jnp.kron(jnp.eye(P, dtype=jnp.float32), a_hat.astype(jnp.float32))

    grid_spec = pltpu.PrefetchScalarGridSpec(
        num_scalar_prefetch=0,
        grid=(G,),
        in_specs=[
            pl.BlockSpec((P * NUM_NODES, NODE_DIM), lambda g: (g, 0)),
            pl.BlockSpec((P * NUM_NODES, P * NUM_NODES), lambda g: (0, 0)),
            pl.BlockSpec((P * NUM_STUDENTS, NUM_COLLEGES * EDGE_DIM),
                         lambda g: (g, 0)),
            pl.BlockSpec((_PACK_ROWS, 2 * HIDDEN), lambda g: (0, 0)),
        ],
        out_specs=pl.BlockSpec((P, NUM_STUDENTS, NUM_COLLEGES),
                               lambda g: (g, 0, 0)),
    )
    score_mat = pl.pallas_call(
        fair_matching_kernel,
        out_shape=jax.ShapeDtypeStruct((B, NUM_STUDENTS, NUM_COLLEGES),
                                       jnp.float32),
        grid_spec=grid_spec,
        compiler_params=pltpu.CompilerParams(
            dimension_semantics=("parallel",)),
    )(x_flat, a_blk, e2, wpack)
    # free contiguous view == score_matrix.view(-1) per graph
    return score_mat.reshape(B, NUM_EDGES)


def fair_matching_pallas(x_b, a_hat, edge_attr_b, params):
    """Batched forward: x_b [B,N_nodes,node_dim], edge_attr_b [B,E,edge_dim].
    Returns [B, E] flattened Sinkhorn-normalized score matrices."""
    B = x_b.shape[0]
    shards = _tc_shards()
    if B % shards != 0:
        shards = 1
    return _fair_matching_impl(x_b, a_hat, edge_attr_b, params, shards)


# ------------------------------ glue / reference ----------------------------
def build_gcn_adjacency(edge_index, num_nodes):
    """Dense A_hat so that GCNConv(x) == A_hat @ (x @ W) + b (PyG semantics)."""
    src = np.concatenate([edge_index[0], np.arange(num_nodes)])
    dst = np.concatenate([edge_index[1], np.arange(num_nodes)])
    deg = np.zeros(num_nodes, dtype=np.float64)
    np.add.at(deg, dst, 1.0)
    dinv = np.where(deg > 0, 1.0 / np.sqrt(deg), 0.0)
    a = np.zeros((num_nodes, num_nodes), dtype=np.float64)
    np.add.at(a, (dst, src), dinv[src] * dinv[dst])
    return jnp.asarray(a, dtype=jnp.float32)


def forward_ref(x, a_hat, params, edge_attr, sid, cid):
    """Pure-JAX replica of the PyTorch forward (per-edge loop vectorized)."""
    h = jax.nn.relu(x @ params['wp'] + params['bp'])
    for l in range(NUM_LAYERS):
        res = h
        h = a_hat @ (h @ params['wg'][l]) + params['bg'][l]
        h = jax.nn.relu(h + res)
        mu = h.mean(-1, keepdims=True)
        var = ((h - mu) ** 2).mean(-1, keepdims=True)
        h = (h - mu) * jax.lax.rsqrt(var + LN_EPS) * params['gamma'][l] + params['beta'][l]
    student = h[:NUM_STUDENTS]
    college = h[NUM_STUDENTS:]
    S = student @ params['ws'] + params['bs']
    C = college @ params['wc'] + params['bc']
    att = jnp.tanh(S[:, None, :] + C[None, :, :])
    scores = jnp.einsum('sch,h->sc', att, params['wa'][0]) + params['ba'][0, 0]
    w = jax.nn.softmax(scores, axis=-1)
    attended = w @ college
    edge_emb = edge_attr @ params['we'] + params['be']
    comb = jnp.concatenate([attended[sid], college[cid], edge_emb], axis=1)
    wcomb = jnp.concatenate([params['wc1'], params['wc2'], params['wc3']], axis=1)
    e_scores = (comb @ wcomb.T + params['bcomb']).reshape(-1)
    sm = e_scores.reshape(NUM_STUDENTS, NUM_COLLEGES)
    for _ in range(SINKHORN_ITERS):
        sm = sm - jax.scipy.special.logsumexp(sm, axis=1, keepdims=True)
        sm = sm - jax.scipy.special.logsumexp(sm, axis=0, keepdims=True)
    return jnp.exp(sm).reshape(-1)


# ---------------------------------- main -------------------------------------
if __name__ == "__main__":
    keys = jax.random.split(jax.random.PRNGKey(0), 20)

    def rnd(k, shape, scale):
        return (scale * jax.random.normal(k, shape)).astype(jnp.float32)

    params = dict(
        wp=rnd(keys[0], (NODE_DIM, HIDDEN), 0.3),
        bp=rnd(keys[1], (1, HIDDEN), 0.1),
        wg=rnd(keys[2], (NUM_LAYERS, HIDDEN, HIDDEN), 0.15),
        bg=rnd(keys[3], (NUM_LAYERS, 1, HIDDEN), 0.05),
        gamma=(1.0 + rnd(keys[4], (NUM_LAYERS, 1, HIDDEN), 0.05)).astype(jnp.float32),
        beta=rnd(keys[5], (NUM_LAYERS, 1, HIDDEN), 0.05),
        ws=rnd(keys[6], (HIDDEN, HIDDEN), 0.15),
        bs=rnd(keys[7], (1, HIDDEN), 0.05),
        wc=rnd(keys[8], (HIDDEN, HIDDEN), 0.15),
        bc=rnd(keys[9], (1, HIDDEN), 0.05),
        wa=rnd(keys[10], (1, HIDDEN), 0.3),
        ba=rnd(keys[11], (1, 1), 0.05),
        we=rnd(keys[12], (EDGE_DIM, HIDDEN), 0.3),
        be=rnd(keys[13], (1, HIDDEN), 0.05),
        wc1=rnd(keys[14], (1, HIDDEN), 0.3),   # combined_proj weight, attended slice
        wc2=rnd(keys[15], (1, HIDDEN), 0.3),   # combined_proj weight, college slice
        wc3=rnd(keys[16], (1, HIDDEN), 0.3),   # combined_proj weight, edge_emb slice
        bcomb=rnd(keys[17], (1, 1), 0.05),
    )

    # B independent graphs (same full-bipartite structure, required by Sinkhorn).
    x_b = rnd(keys[18], (BATCH, NUM_NODES, NODE_DIM), 1.0)
    edge_attr_b = rnd(keys[19], (BATCH, NUM_EDGES, EDGE_DIM), 1.0)

    sid = np.arange(NUM_EDGES) // NUM_COLLEGES
    cid = np.arange(NUM_EDGES) % NUM_COLLEGES
    edge_index = np.stack([sid, NUM_STUDENTS + cid]).astype(np.int32)  # [2, E]
    a_hat = build_gcn_adjacency(edge_index, NUM_NODES)

    out = fair_matching_pallas(x_b, a_hat, edge_attr_b, params)
    out = jax.block_until_ready(out)

    for b in range(BATCH):
        ref = forward_ref(x_b[b], a_hat, params, edge_attr_b[b],
                          jnp.asarray(sid), jnp.asarray(cid))
        np.testing.assert_allclose(np.asarray(out[b]), np.asarray(ref),
                                   rtol=1e-2, atol=1e-2)

    # TODO(synk): compute_loss (host-side python dict / rank-matrix lookups per
    # edge) is not a kernel-translatable forward op and is not implemented.
    print("KERNEL_OK")
</pallas_src>

<mosaic_0001>
module attributes {stable_mosaic.version = 11 : i64} {
  func.func @fair_matching_kernel(%arg0: i32, %arg1: memref<64x8xf32, #tpu.memory_space<vmem>>, %arg2: memref<64x64xf32, #tpu.memory_space<vmem>>, %arg3: memref<32x32xf32, #tpu.memory_space<vmem>>, %arg4: memref<320x64xf32, #tpu.memory_space<vmem>>, %arg5: memref<4x8x8xf32, #tpu.memory_space<vmem>>) attributes {dimension_semantics = [#tpu.dimension_semantics<parallel>], iteration_bounds = array<i64: 1>, scalar_prefetch = 0 : i64, scratch_operands = 0 : i64, tpu.core_type = #tpu.core_type<tc>, window_params = [{transform_indices = @transform_0, window_bounds = array<i64: 64, 8>}, {pipeline_mode = #tpu.pipeline_mode<synchronous>, transform_indices = @transform_1, window_bounds = array<i64: 64, 64>}, {transform_indices = @transform_2, window_bounds = array<i64: 32, 32>}, {pipeline_mode = #tpu.pipeline_mode<synchronous>, transform_indices = @transform_3, window_bounds = array<i64: 320, 64>}, {transform_indices = @transform_4, window_bounds = array<i64: 4, 8, 8>}]} {
    %c0 = arith.constant 0 : index
    %c0_0 = arith.constant 0 : index
    %0 = vector.load %arg1[%c0, %c0_0] : memref<64x8xf32, #tpu.memory_space<vmem>>, vector<64x8xf32>
    %c0_1 = arith.constant 0 : index
    %c0_2 = arith.constant 0 : index
    %1 = vector.load %arg2[%c0_1, %c0_2] : memref<64x64xf32, #tpu.memory_space<vmem>>, vector<64x64xf32>
    %c0_3 = arith.constant 0 : index
    %c0_4 = arith.constant 0 : index
    %2 = vector.load %arg4[%c0_3, %c0_4] : memref<320x64xf32, #tpu.memory_space<vmem>>, vector<8x32xf32>
    %c296 = arith.constant 296 : index
    %c0_5 = arith.constant 0 : index
    %3 = vector.load %arg4[%c296, %c0_5] : memref<320x64xf32, #tpu.memory_space<vmem>>, vector<1x32xf32>
    %cst = arith.constant dense<0.000000e+00> : vector<64x32xf32>
    %4 = tpu.matmul %0, %2, %cst {dimension_numbers = #tpu.dot_dimension_numbers<[1], [0], [0], [1], [0, 0, 1, 1], [], []>} : vector<64x8xf32>, vector<8x32xf32>, vector<64x32xf32> -> vector<64x32xf32>
    %5 = vector.broadcast %3 : vector<1x32xf32> to vector<64x32xf32>
    %6 = arith.addf %4, %5 : vector<64x32xf32>
    %cst_6 = arith.constant 0.000000e+00 : f32
    %7 = vector.broadcast %cst_6 : f32 to vector<64x32xf32>
    %8 = arith.maximumf %6, %7 : vector<64x32xf32>
    %c40 = arith.constant 40 : index
    %c0_7 = arith.constant 0 : index
    %9 = vector.load %arg4[%c40, %c0_7] : memref<320x64xf32, #tpu.memory_space<vmem>>, vector<32x32xf32>
    %cst_8 = arith.constant dense<0.000000e+00> : vector<64x32xf32>
    %10 = tpu.matmul %8, %9, %cst_8 {dimension_numbers = #tpu.dot_dimension_numbers<[1], [0], [0], [1], [0, 0, 1, 1], [], []>} : vector<64x32xf32>, vector<32x32xf32>, vector<64x32xf32> -> vector<64x32xf32>
    %cst_9 = arith.constant dense<0.000000e+00> : vector<64x32xf32>
    %11 = tpu.matmul %1, %10, %cst_9 {dimension_numbers = #tpu.dot_dimension_numbers<[1], [0], [0], [1], [0, 0, 1, 1], [], []>} : vector<64x64xf32>, vector<64x32xf32>, vector<64x32xf32> -> vector<64x32xf32>
    %c297 = arith.constant 297 : index
    %c0_10 = arith.constant 0 : index
    %12 = vector.load %arg4[%c297, %c0_10] : memref<320x64xf32, #tpu.memory_space<vmem>>, vector<1x32xf32>
    %13 = vector.broadcast %12 : vector<1x32xf32> to vector<64x32xf32>
    %14 = arith.addf %11, %13 : vector<64x32xf32>
    %15 = arith.addf %14, %8 : vector<64x32xf32>
    %cst_11 = arith.constant 0.000000e+00 : f32
    %16 = vector.broadcast %cst_11 : f32 to vector<64x32xf32>
    %17 = arith.maximumf %15, %16 : vector<64x32xf32>
    %cst_12 = arith.constant dense<0.000000e+00> : vector<64xf32>
    %18 = vector.multi_reduction <add>, %17, %cst_12 [1] : vector<64x32xf32> to vector<64xf32>
    %19 = vector.shape_cast %18 : vector<64xf32> to vector<64x1xf32>
    %cst_13 = arith.constant 3.200000e+01 : f32
    %20 = vector.broadcast %cst_13 : f32 to vector<64x1xf32>
    %21 = arith.divf %19, %20 : vector<64x1xf32>
    %22 = vector.broadcast %21 : vector<64x1xf32> to vector<64x32xf32>
    %23 = arith.subf %17, %22 : vector<64x32xf32>
    %24 = arith.mulf %23, %23 : vector<64x32xf32>
    %cst_14 = arith.constant dense<0.000000e+00> : vector<64xf32>
    %25 = vector.multi_reduction <add>, %24, %cst_14 [1] : vector<64x32xf32> to vector<64xf32>
    %26 = vector.shape_cast %25 : vector<64xf32> to vector<64x1xf32>
    %cst_15 = arith.constant 3.200000e+01 : f32
    %27 = vector.broadcast %cst_15 : f32 to vector<64x1xf32>
    %28 = arith.divf %26, %27 : vector<64x1xf32>
    %29 = vector.broadcast %21 : vector<64x1xf32> to vector<64x32xf32>
    %30 = arith.subf %17, %29 : vector<64x32xf32>
    %cst_16 = arith.constant 9.99999974E-6 : f32
    %31 = vector.broadcast %cst_16 : f32 to vector<64x1xf32>
    %32 = arith.addf %28, %31 : vector<64x1xf32>
    %33 = math.rsqrt %32 : vector<64x1xf32>
    %34 = vector.broadcast %33 : vector<64x1xf32> to vector<64x32xf32>
    %35 = arith.mulf %30, %34 : vector<64x32xf32>
    %c303 = arith.constant 303 : index
    %c0_17 = arith.constant 0 : index
    %36 = vector.load %arg4[%c303, %c0_17] : memref<320x64xf32, #tpu.memory_space<vmem>>, vector<1x32xf32>
    %37 = vector.broadcast %36 : vector<1x32xf32> to vector<64x32xf32>
    %38 = arith.mulf %35, %37 : vector<64x32xf32>
    %c309 = arith.constant 309 : index
    %c0_18 = arith.constant 0 : index
    %39 = vector.load %arg4[%c309, %c0_18] : memref<320x64xf32, #tpu.memory_space<vmem>>, vector<1x32xf32>
    %40 = vector.broadcast %39 : vector<1x32xf32> to vector<64x32xf32>
    %41 = arith.addf %38, %40 : vector<64x32xf32>
    %c72 = arith.constant 72 : index
    %c0_19 = arith.constant 0 : index
    %42 = vector.load %arg4[%c72, %c0_19] : memref<320x64xf32, #tpu.memory_space<vmem>>, vector<32x32xf32>
    %cst_20 = arith.constant dense<0.000000e+00> : vector<64x32xf32>
    %43 = tpu.matmul %41, %42, %cst_20 {dimension_numbers = #tpu.dot_dimension_numbers<[1], [0], [0], [1], [0, 0, 1, 1], [], []>} : vector<64x32xf32>, vector<32x32xf32>, vector<64x32xf32> -> vector<64x32xf32>
    %cst_21 = arith.constant dense<0.000000e+00> : vector<64x32xf32>
    %44 = tpu.matmul %1, %43, %cst_21 {dimension_numbers = #tpu.dot_dimension_numbers<[1], [0], [0], [1], [0, 0, 1, 1], [], []>} : vector<64x64xf32>, vector<64x32xf32>, vector<64x32xf32> -> vector<64x32xf32>
    %c298 = arith.constant 298 : index
    %c0_22 = arith.constant 0 : index
    %45 = vector.load %arg4[%c298, %c0_22] : memref<320x64xf32, #tpu.memory_space<vmem>>, vector<1x32xf32>
    %46 = vector.broadcast %45 : vector<1x32xf32> to vector<64x32xf32>
    %47 = arith.addf %44, %46 : vector<64x32xf32>
    %48 = arith.addf %47, %41 : vector<64x32xf32>
    %cst_23 = arith.constant 0.000000e+00 : f32
    %49 = vector.broadcast %cst_23 : f32 to vector<64x32xf32>
    %50 = arith.maximumf %48, %49 : vector<64x32xf32>
    %cst_24 = arith.constant dense<0.000000e+00> : vector<64xf32>
    %51 = vector.multi_reduction <add>, %50, %cst_24 [1] : vector<64x32xf32> to vector<64xf32>
    %52 = vector.shape_cast %51 : vector<64xf32> to vector<64x1xf32>
    %cst_25 = arith.constant 3.200000e+01 : f32
    %53 = vector.broadcast %cst_25 : f32 to vector<64x1xf32>
    %54 = arith.divf %52, %53 : vector<64x1xf32>
    %55 = vector.broadcast %54 : vector<64x1xf32> to vector<64x32xf32>
    %56 = arith.subf %50, %55 : vector<64x32xf32>
    %57 = arith.mulf %56, %56 : vector<64x32xf32>
    %cst_26 = arith.constant dense<0.000000e+00> : vector<64xf32>
    %58 = vector.multi_reduction <add>, %57, %cst_26 [1] : vector<64x32xf32> to vector<64xf32>
    %59 = vector.shape_cast %58 : vector<64xf32> to vector<64x1xf32>
    %cst_27 = arith.constant 3.200000e+01 : f32
    %60 = vector.broadcast %cst_27 : f32 to vector<64x1xf32>
    %61 = arith.divf %59, %60 : vector<64x1xf32>
    %62 = vector.broadcast %54 : vector<64x1xf32> to vector<64x32xf32>
    %63 = arith.subf %50, %62 : vector<64x32xf32>
    %cst_28 = arith.constant 9.99999974E-6 : f32
    %64 = vector.broadcast %cst_28 : f32 to vector<64x1xf32>
    %65 = arith.addf %61, %64 : vector<64x1xf32>
    %66 = math.rsqrt %65 : vector<64x1xf32>
    %67 = vector.broadcast %66 : vector<64x1xf32> to vector<64x32xf32>
    %68 = arith.mulf %63, %67 : vector<64x32xf32>
    %c304 = arith.constant 304 : index
    %c0_29 = arith.constant 0 : index
    %69 = vector.load %arg4[%c304, %c0_29] : memref<320x64xf32, #tpu.memory_space<vmem>>, vector<1x32xf32>
    %70 = vector.broadcast %69 : vector<1x32xf32> to vector<64x32xf32>
    %71 = arith.mulf %68, %70 : vector<64x32xf32>
    %c310 = arith.constant 310 : index
    %c0_30 = arith.constant 0 : index
    %72 = vector.load %arg4[%c310, %c0_30] : memref<320x64xf32, #tpu.memory_space<vmem>>, vector<1x32xf32>
    %73 = vector.broadcast %72 : vector<1x32xf32> to vector<64x32xf32>
    %74 = arith.addf %71, %73 : vector<64x32xf32>
    %c104 = arith.constant 104 : index
    %c0_31 = arith.constant 0 : index
    %75 = vector.load %arg4[%c104, %c0_31] : memref<320x64xf32, #tpu.memory_space<vmem>>, vector<32x32xf32>
    %cst_32 = arith.constant dense<0.000000e+00> : vector<64x32xf32>
    %76 = tpu.matmul %74, %75, %cst_32 {dimension_numbers = #tpu.dot_dimension_numbers<[1], [0], [0], [1], [0, 0, 1, 1], [], []>} : vector<64x32xf32>, vector<32x32xf32>, vector<64x32xf32> -> vector<64x32xf32>
    %cst_33 = arith.constant dense<0.000000e+00> : vector<64x32xf32>
    %77 = tpu.matmul %1, %76, %cst_33 {dimension_numbers = #tpu.dot_dimension_numbers<[1], [0], [0], [1], [0, 0, 1, 1], [], []>} : vector<64x64xf32>, vector<64x32xf32>, vector<64x32xf32> -> vector<64x32xf32>
    %c299 = arith.constant 299 : index
    %c0_34 = arith.constant 0 : index
    %78 = vector.load %arg4[%c299, %c0_34] : memref<320x64xf32, #tpu.memory_space<vmem>>, vector<1x32xf32>
    %79 = vector.broadcast %78 : vector<1x32xf32> to vector<64x32xf32>
    %80 = arith.addf %77, %79 : vector<64x32xf32>
    %81 = arith.addf %80, %74 : vector<64x32xf32>
    %cst_35 = arith.constant 0.000000e+00 : f32
    %82 = vector.broadcast %cst_35 : f32 to vector<64x32xf32>
    %83 = arith.maximumf %81, %82 : vector<64x32xf32>
    %cst_36 = arith.constant dense<0.000000e+00> : vector<64xf32>
    %84 = vector.multi_reduction <add>, %83, %cst_36 [1] : vector<64x32xf32> to vector<64xf32>
    %85 = vector.shape_cast %84 : vector<64xf32> to vector<64x1xf32>
    %cst_37 = arith.constant 3.200000e+01 : f32
    %86 = vector.broadcast %cst_37 : f32 to vector<64x1xf32>
    %87 = arith.divf %85, %86 : vector<64x1xf32>
    %88 = vector.broadcast %87 : vector<64x1xf32> to vector<64x32xf32>
    %89 = arith.subf %83, %88 : vector<64x32xf32>
    %90 = arith.mulf %89, %89 : vector<64x32xf32>
    %cst_38 = arith.constant dense<0.000000e+00> : vector<64xf32>
    %91 = vector.multi_reduction <add>, %90, %cst_38 [1] : vector<64x32xf32> to vector<64xf32>
    %92 = vector.shape_cast %91 : vector<64xf32> to vector<64x1xf32>
    %cst_39 = arith.constant 3.200000e+01 : f32
    %93 = vector.broadcast %cst_39 : f32 to vector<64x1xf32>
    %94 = arith.divf %92, %93 : vector<64x1xf32>
    %95 = vector.broadcast %87 : vector<64x1xf32> to vector<64x32xf32>
    %96 = arith.subf %83, %95 : vector<64x32xf32>
    %cst_40 = arith.constant 9.99999974E-6 : f32
    %97 = vector.broadcast %cst_40 : f32 to vector<64x1xf32>
    %98 = arith.addf %94, %97 : vector<64x1xf32>
    %99 = math.rsqrt %98 : vector<64x1xf32>
    %100 = vector.broadcast %99 : vector<64x1xf32> to vector<64x32xf32>
    %101 = arith.mulf %96, %100 : vector<64x32xf32>
    %c305 = arith.constant 305 : index
    %c0_41 = arith.constant 0 : index
    %102 = vector.load %arg4[%c305, %c0_41] : memref<320x64xf32, #tpu.memory_space<vmem>>, vector<1x32xf32>
    %103 = vector.broadcast %102 : vector<1x32xf32> to vector<64x32xf32>
    %104 = arith.mulf %101, %103 : vector<64x32xf32>
    %c311 = arith.constant 311 : index
    %c0_42 = arith.constant 0 : index
    %105 = vector.load %arg4[%c311, %c0_42] : memref<320x64xf32, #tpu.memory_space<vmem>>, vector<1x32xf32>
    %106 = vector.broadcast %105 : vector<1x32xf32> to vector<64x32xf32>
    %107 = arith.addf %104, %106 : vector<64x32xf32>
    %c136 = arith.constant 136 : index
    %c0_43 = arith.constant 0 : index
    %108 = vector.load %arg4[%c136, %c0_43] : memref<320x64xf32, #tpu.memory_space<vmem>>, vector<32x32xf32>
    %cst_44 = arith.constant dense<0.000000e+00> : vector<64x32xf32>
    %109 = tpu.matmul %107, %108, %cst_44 {dimension_numbers = #tpu.dot_dimension_numbers<[1], [0], [0], [1], [0, 0, 1, 1], [], []>} : vector<64x32xf32>, vector<32x32xf32>, vector<64x32xf32> -> vector<64x32xf32>
    %cst_45 = arith.constant dense<0.000000e+00> : vector<64x32xf32>
    %110 = tpu.matmul %1, %109, %cst_45 {dimension_numbers = #tpu.dot_dimension_numbers<[1], [0], [0], [1], [0, 0, 1, 1], [], []>} : vector<64x64xf32>, vector<64x32xf32>, vector<64x32xf32> -> vector<64x32xf32>
    %c300 = arith.constant 300 : index
    %c0_46 = arith.constant 0 : index
    %111 = vector.load %arg4[%c300, %c0_46] : memref<320x64xf32, #tpu.memory_space<vmem>>, vector<1x32xf32>
    %112 = vector.broadcast %111 : vector<1x32xf32> to vector<64x32xf32>
    %113 = arith.addf %110, %112 : vector<64x32xf32>
    %114 = arith.addf %113, %107 : vector<64x32xf32>
    %cst_47 = arith.constant 0.000000e+00 : f32
    %115 = vector.broadcast %cst_47 : f32 to vector<64x32xf32>
    %116 = arith.maximumf %114, %115 : vector<64x32xf32>
    %cst_48 = arith.constant dense<0.000000e+00> : vector<64xf32>
    %117 = vector.multi_reduction <add>, %116, %cst_48 [1] : vector<64x32xf32> to vector<64xf32>
    %118 = vector.shape_cast %117 : vector<64xf32> to vector<64x1xf32>
    %cst_49 = arith.constant 3.200000e+01 : f32
    %119 = vector.broadcast %cst_49 : f32 to vector<64x1xf32>
    %120 = arith.divf %118, %119 : vector<64x1xf32>
    %121 = vector.broadcast %120 : vector<64x1xf32> to vector<64x32xf32>
    %122 = arith.subf %116, %121 : vector<64x32xf32>
    %123 = arith.mulf %122, %122 : vector<64x32xf32>
    %cst_50 = arith.constant dense<0.000000e+00> : vector<64xf32>
    %124 = vector.multi_reduction <add>, %123, %cst_50 [1] : vector<64x32xf32> to vector<64xf32>
    %125 = vector.shape_cast %124 : vector<64xf32> to vector<64x1xf32>
    %cst_51 = arith.constant 3.200000e+01 : f32
    %126 = vector.broadcast %cst_51 : f32 to vector<64x1xf32>
    %127 = arith.divf %125, %126 : vector<64x1xf32>
    %128 = vector.broadcast %120 : vector<64x1xf32> to vector<64x32xf32>
    %129 = arith.subf %116, %128 : vector<64x32xf32>
    %cst_52 = arith.constant 9.99999974E-6 : f32
    %130 = vector.broadcast %cst_52 : f32 to vector<64x1xf32>
    %131 = arith.addf %127, %130 : vector<64x1xf32>
    %132 = math.rsqrt %131 : vector<64x1xf32>
    %133 = vector.broadcast %132 : vector<64x1xf32> to vector<64x32xf32>
    %134 = arith.mulf %129, %133 : vector<64x32xf32>
    %c306 = arith.constant 306 : index
    %c0_53 = arith.constant 0 : index
    %135 = vector.load %arg4[%c306, %c0_53] : memref<320x64xf32, #tpu.memory_space<vmem>>, vector<1x32xf32>
    %136 = vector.broadcast %135 : vector<1x32xf32> to vector<64x32xf32>
    %137 = arith.mulf %134, %136 : vector<64x32xf32>
    %c312 = arith.constant 312 : index
    %c0_54 = arith.constant 0 : index
    %138 = vector.load %arg4[%c312, %c0_54] : memref<320x64xf32, #tpu.memory_space<vmem>>, vector<1x32xf32>
    %139 = vector.broadcast %138 : vector<1x32xf32> to vector<64x32xf32>
    %140 = arith.addf %137, %139 : vector<64x32xf32>
    %c168 = arith.constant 168 : index
    %c0_55 = arith.constant 0 : index
    %141 = vector.load %arg4[%c168, %c0_55] : memref<320x64xf32, #tpu.memory_space<vmem>>, vector<32x32xf32>
    %cst_56 = arith.constant dense<0.000000e+00> : vector<64x32xf32>
    %142 = tpu.matmul %140, %141, %cst_56 {dimension_numbers = #tpu.dot_dimension_numbers<[1], [0], [0], [1], [0, 0, 1, 1], [], []>} : vector<64x32xf32>, vector<32x32xf32>, vector<64x32xf32> -> vector<64x32xf32>
    %cst_57 = arith.constant dense<0.000000e+00> : vector<64x32xf32>
    %143 = tpu.matmul %1, %142, %cst_57 {dimension_numbers = #tpu.dot_dimension_numbers<[1], [0], [0], [1], [0, 0, 1, 1], [], []>} : vector<64x64xf32>, vector<64x32xf32>, vector<64x32xf32> -> vector<64x32xf32>
    %c301 = arith.constant 301 : index
    %c0_58 = arith.constant 0 : index
    %144 = vector.load %arg4[%c301, %c0_58] : memref<320x64xf32, #tpu.memory_space<vmem>>, vector<1x32xf32>
    %145 = vector.broadcast %144 : vector<1x32xf32> to vector<64x32xf32>
    %146 = arith.addf %143, %145 : vector<64x32xf32>
    %147 = arith.addf %146, %140 : vector<64x32xf32>
    %cst_59 = arith.constant 0.000000e+00 : f32
    %148 = vector.broadcast %cst_59 : f32 to vector<64x32xf32>
    %149 = arith.maximumf %147, %148 : vector<64x32xf32>
    %cst_60 = arith.constant dense<0.000000e+00> : vector<64xf32>
    %150 = vector.multi_reduction <add>, %149, %cst_60 [1] : vector<64x32xf32> to vector<64xf32>
    %151 = vector.shape_cast %150 : vector<64xf32> to vector<64x1xf32>
    %cst_61 = arith.constant 3.200000e+01 : f32
    %152 = vector.broadcast %cst_61 : f32 to vector<64x1xf32>
    %153 = arith.divf %151, %152 : vector<64x1xf32>
    %154 = vector.broadcast %153 : vector<64x1xf32> to vector<64x32xf32>
    %155 = arith.subf %149, %154 : vector<64x32xf32>
    %156 = arith.mulf %155, %155 : vector<64x32xf32>
    %cst_62 = arith.constant dense<0.000000e+00> : vector<64xf32>
    %157 = vector.multi_reduction <add>, %156, %cst_62 [1] : vector<64x32xf32> to vector<64xf32>
    %158 = vector.shape_cast %157 : vector<64xf32> to vector<64x1xf32>
    %cst_63 = arith.constant 3.200000e+01 : f32
    %159 = vector.broadcast %cst_63 : f32 to vector<64x1xf32>
    %160 = arith.divf %158, %159 : vector<64x1xf32>
    %161 = vector.broadcast %153 : vector<64x1xf32> to vector<64x32xf32>
    %162 = arith.subf %149, %161 : vector<64x32xf32>
    %cst_64 = arith.constant 9.99999974E-6 : f32
    %163 = vector.broadcast %cst_64 : f32 to vector<64x1xf32>
    %164 = arith.addf %160, %163 : vector<64x1xf32>
    %165 = math.rsqrt %164 : vector<64x1xf32>
    %166 = vector.broadcast %165 : vector<64x1xf32> to vector<64x32xf32>
    %167 = arith.mulf %162, %166 : vector<64x32xf32>
    %c307 = arith.constant 307 : index
    %c0_65 = arith.constant 0 : index
    %168 = vector.load %arg4[%c307, %c0_65] : memref<320x64xf32, #tpu.memory_space<vmem>>, vector<1x32xf32>
    %169 = vector.broadcast %168 : vector<1x32xf32> to vector<64x32xf32>
    %170 = arith.mulf %167, %169 : vector<64x32xf32>
    %c313 = arith.constant 313 : index
    %c0_66 = arith.constant 0 : index
    %171 = vector.load %arg4[%c313, %c0_66] : memref<320x64xf32, #tpu.memory_space<vmem>>, vector<1x32xf32>
    %172 = vector.broadcast %171 : vector<1x32xf32> to vector<64x32xf32>
    %173 = arith.addf %170, %172 : vector<64x32xf32>
    %c200 = arith.constant 200 : index
    %c0_67 = arith.constant 0 : index
    %174 = vector.load %arg4[%c200, %c0_67] : memref<320x64xf32, #tpu.memory_space<vmem>>, vector<32x32xf32>
    %cst_68 = arith.constant dense<0.000000e+00> : vector<64x32xf32>
    %175 = tpu.matmul %173, %174, %cst_68 {dimension_numbers = #tpu.dot_dimension_numbers<[1], [0], [0], [1], [0, 0, 1, 1], [], []>} : vector<64x32xf32>, vector<32x32xf32>, vector<64x32xf32> -> vector<64x32xf32>
    %cst_69 = arith.constant dense<0.000000e+00> : vector<64x32xf32>
    %176 = tpu.matmul %1, %175, %cst_69 {dimension_numbers = #tpu.dot_dimension_numbers<[1], [0], [0], [1], [0, 0, 1, 1], [], []>} : vector<64x64xf32>, vector<64x32xf32>, vector<64x32xf32> -> vector<64x32xf32>
    %c302 = arith.constant 302 : index
    %c0_70 = arith.constant 0 : index
    %177 = vector.load %arg4[%c302, %c0_70] : memref<320x64xf32, #tpu.memory_space<vmem>>, vector<1x32xf32>
    %178 = vector.broadcast %177 : vector<1x32xf32> to vector<64x32xf32>
    %179 = arith.addf %176, %178 : vector<64x32xf32>
    %180 = arith.addf %179, %173 : vector<64x32xf32>
    %cst_71 = arith.constant 0.000000e+00 : f32
    %181 = vector.broadcast %cst_71 : f32 to vector<64x32xf32>
    %182 = arith.maximumf %180, %181 : vector<64x32xf32>
    %cst_72 = arith.constant dense<0.000000e+00> : vector<64xf32>
    %183 = vector.multi_reduction <add>, %182, %cst_72 [1] : vector<64x32xf32> to vector<64xf32>
    %184 = vector.shape_cast %183 : vector<64xf32> to vector<64x1xf32>
    %cst_73 = arith.constant 3.200000e+01 : f32
    %185 = vector.broadcast %cst_73 : f32 to vector<64x1xf32>
    %186 = arith.divf %184, %185 : vector<64x1xf32>
    %187 = vector.broadcast %186 : vector<64x1xf32> to vector<64x32xf32>
    %188 = arith.subf %182, %187 : vector<64x32xf32>
    %189 = arith.mulf %188, %188 : vector<64x32xf32>
    %cst_74 = arith.constant dense<0.000000e+00> : vector<64xf32>
    %190 = vector.multi_reduction <add>, %189, %cst_74 [1] : vector<64x32xf32> to vector<64xf32>
    %191 = vector.shape_cast %190 : vector<64xf32> to vector<64x1xf32>
    %cst_75 = arith.constant 3.200000e+01 : f32
    %192 = vector.broadcast %cst_75 : f32 to vector<64x1xf32>
    %193 = arith.divf %191, %192 : vector<64x1xf32>
    %194 = vector.broadcast %186 : vector<64x1xf32> to vector<64x32xf32>
    %195 = arith.subf %182, %194 : vector<64x32xf32>
    %cst_76 = arith.constant 9.99999974E-6 : f32
    %196 = vector.broadcast %cst_76 : f32 to vector<64x1xf32>
    %197 = arith.addf %193, %196 : vector<64x1xf32>
    %198 = math.rsqrt %197 : vector<64x1xf32>
    %199 = vector.broadcast %198 : vector<64x1xf32> to vector<64x32xf32>
    %200 = arith.mulf %195, %199 : vector<64x32xf32>
    %c308 = arith.constant 308 : index
    %c0_77 = arith.constant 0 : index
    %201 = vector.load %arg4[%c308, %c0_77] : memref<320x64xf32, #tpu.memory_space<vmem>>, vector<1x32xf32>
    %202 = vector.broadcast %201 : vector<1x32xf32> to vector<64x32xf32>
    %203 = arith.mulf %200, %202 : vector<64x32xf32>
    %c314 = arith.constant 314 : index
    %c0_78 = arith.constant 0 : index
    %204 = vector.load %arg4[%c314, %c0_78] : memref<320x64xf32, #tpu.memory_space<vmem>>, vector<1x32xf32>
    %205 = vector.broadcast %204 : vector<1x32xf32> to vector<64x32xf32>
    %206 = arith.addf %203, %205 : vector<64x32xf32>
    %c8 = arith.constant 8 : index
    %c0_79 = arith.constant 0 : index
    %207 = vector.load %arg4[%c8, %c0_79] : memref<320x64xf32, #tpu.memory_space<vmem>>, vector<32x64xf32>
    %c315 = arith.constant 315 : index
    %c0_80 = arith.constant 0 : index
    %208 = vector.load %arg4[%c315, %c0_80] : memref<320x64xf32, #tpu.memory_space<vmem>>, vector<1x64xf32>
    %cst_81 = arith.constant dense<0.000000e+00> : vector<64x64xf32>
    %209 = tpu.matmul %206, %207, %cst_81 {dimension_numbers = #tpu.dot_dimension_numbers<[1], [0], [0], [1], [0, 0, 1, 1], [], []>} : vector<64x32xf32>, vector<32x64xf32>, vector<64x64xf32> -> vector<64x64xf32>
    %210 = vector.broadcast %208 : vector<1x64xf32> to vector<64x64xf32>
    %211 = arith.addf %209, %210 : vector<64x64xf32>
    %c316 = arith.constant 316 : index
    %c0_82 = arith.constant 0 : index
    %212 = vector.load %arg4[%c316, %c0_82] : memref<320x64xf32, #tpu.memory_space<vmem>>, vector<1x32xf32>
    %213 = vector.shape_cast %212 : vector<1x32xf32> to vector<1x1x32xf32>
    %c318 = arith.constant 318 : index
    %c0_83 = arith.constant 0 : index
    %214 = vector.load %arg4[%c318, %c0_83] : memref<320x64xf32, #tpu.memory_space<vmem>>, vector<1x1xf32>
    %c264 = arith.constant 264 : index
    %c0_84 = arith.constant 0 : index
    %215 = vector.load %arg4[%c264, %c0_84] : memref<320x64xf32, #tpu.memory_space<vmem>>, vector<32x1xf32>
    %c317 = arith.constant 317 : index
    %c0_85 = arith.constant 0 : index
    %216 = vector.load %arg4[%c317, %c0_85] : memref<320x64xf32, #tpu.memory_space<vmem>>, vector<1x32xf32>
    %c319 = arith.constant 319 : index
    %c0_86 = arith.constant 0 : index
    %217 = vector.load %arg4[%c319, %c0_86] : memref<320x64xf32, #tpu.memory_space<vmem>>, vector<1x1xf32>
    %218 = vector.extract_strided_slice %211 {offsets = [0, 0], sizes = [8, 32], strides = [1, 1]} : vector<64x64xf32> to vector<8x32xf32>
    %219 = vector.extract_strided_slice %211 {offsets = [8, 32], sizes = [8, 32], strides = [1, 1]} : vector<64x64xf32> to vector<8x32xf32>
    %220 = vector.extract_strided_slice %206 {offsets = [8, 0], sizes = [8, 32], strides = [1, 1]} : vector<64x32xf32> to vector<8x32xf32>
    %221 = vector.shape_cast %218 : vector<8x32xf32> to vector<8x1x32xf32>
    %222 = vector.shape_cast %219 : vector<8x32xf32> to vector<1x8x32xf32>
    %223 = vector.broadcast %221 : vector<8x1x32xf32> to vector<8x8x32xf32>
    %224 = vector.broadcast %222 : vector<1x8x32xf32> to vector<8x8x32xf32>
    %225 = arith.addf %223, %224 : vector<8x8x32xf32>
    %226 = math.tanh %225 : vector<8x8x32xf32>
    %227 = vector.broadcast %213 : vector<1x1x32xf32> to vector<8x8x32xf32>
    %228 = arith.mulf %226, %227 : vector<8x8x32xf32>
    %cst_87 = arith.constant dense<0.000000e+00> : vector<8x8xf32>
    %229 = vector.multi_reduction <add>, %228, %cst_87 [2] : vector<8x8x32xf32> to vector<8x8xf32>
    %230 = vector.broadcast %214 : vector<1x1xf32> to vector<8x8xf32>
    %231 = arith.addf %229, %230 : vector<8x8xf32>
    %cst_88 = arith.constant dense<0xFF800000> : vector<8xf32>
    %232 = vector.multi_reduction <maximumf>, %231, %cst_88 [1] : vector<8x8xf32> to vector<8xf32>
    %233 = vector.shape_cast %232 : vector<8xf32> to vector<8x1xf32>
    %234 = vector.broadcast %233 : vector<8x1xf32> to vector<8x8xf32>
    %235 = arith.subf %231, %234 : vector<8x8xf32>
    %236 = math.exp %235 : vector<8x8xf32>
    %cst_89 = arith.constant dense<0.000000e+00> : vector<8xf32>
    %237 = vector.multi_reduction <add>, %236, %cst_89 [1] : vector<8x8xf32> to vector<8xf32>
    %238 = vector.shape_cast %237 : vector<8xf32> to vector<8x1xf32>
    %239 = tpu.reciprocal %238 {approx = true} : vector<8x1xf32> -> vector<8x1xf32>
    %240 = vector.broadcast %239 : vector<8x1xf32> to vector<8x8xf32>
    %241 = arith.mulf %236, %240 : vector<8x8xf32>
    %cst_90 = arith.constant dense<0.000000e+00> : vector<8x32xf32>
    %242 = tpu.matmul %241, %220, %cst_90 {dimension_numbers = #tpu.dot_dimension_numbers<[1], [0], [0], [1], [0, 0, 1, 1], [], []>} : vector<8x8xf32>, vector<8x32xf32>, vector<8x32xf32> -> vector<8x32xf32>
    %cst_91 = arith.constant dense<0.000000e+00> : vector<8x1xf32>
    %243 = tpu.matmul %242, %215, %cst_91 {dimension_numbers = #tpu.dot_dimension_numbers<[1], [0], [0], [1], [0, 0, 1, 1], [], []>} : vector<8x32xf32>, vector<32x1xf32>, vector<8x1xf32> -> vector<8x1xf32>
    %cst_92 = arith.constant dense<0.000000e+00> : vector<1x8xf32>
    %244 = tpu.matmul %216, %220, %cst_92 {dimension_numbers = #tpu.dot_dimension_numbers<[1], [1], [0], [0], [0, 0, 1, 0], [], []>} : vector<1x32xf32>, vector<8x32xf32>, vector<1x8xf32> -> vector<1x8xf32>
    %245 = vector.broadcast %243 : vector<8x1xf32> to vector<8x8xf32>
    %246 = vector.broadcast %244 : vector<1x8xf32> to vector<8x8xf32>
    %247 = arith.addf %245, %246 : vector<8x8xf32>
    %248 = vector.extract_strided_slice %211 {offsets = [16, 0], sizes = [8, 32], strides = [1, 1]} : vector<64x64xf32> to vector<8x32xf32>
    %249 = vector.extract_strided_slice %211 {offsets = [24, 32], sizes = [8, 32], strides = [1, 1]} : vector<64x64xf32> to vector<8x32xf32>
    %250 = vector.extract_strided_slice %206 {offsets = [24, 0], sizes = [8, 32], strides = [1, 1]} : vector<64x32xf32> to vector<8x32xf32>
    %251 = vector.shape_cast %248 : vector<8x32xf32> to vector<8x1x32xf32>
    %252 = vector.shape_cast %249 : vector<8x32xf32> to vector<1x8x32xf32>
    %253 = vector.broadcast %251 : vector<8x1x32xf32> to vector<8x8x32xf32>
    %254 = vector.broadcast %252 : vector<1x8x32xf32> to vector<8x8x32xf32>
    %255 = arith.addf %253, %254 : vector<8x8x32xf32>
    %256 = math.tanh %255 : vector<8x8x32xf32>
    %257 = vector.broadcast %213 : vector<1x1x32xf32> to vector<8x8x32xf32>
    %258 = arith.mulf %256, %257 : vector<8x8x32xf32>
    %cst_93 = arith.constant dense<0.000000e+00> : vector<8x8xf32>
    %259 = vector.multi_reduction <add>, %258, %cst_93 [2] : vector<8x8x32xf32> to vector<8x8xf32>
    %260 = vector.broadcast %214 : vector<1x1xf32> to vector<8x8xf32>
    %261 = arith.addf %259, %260 : vector<8x8xf32>
    %cst_94 = arith.constant dense<0xFF800000> : vector<8xf32>
    %262 = vector.multi_reduction <maximumf>, %261, %cst_94 [1] : vector<8x8xf32> to vector<8xf32>
    %263 = vector.shape_cast %262 : vector<8xf32> to vector<8x1xf32>
    %264 = vector.broadcast %263 : vector<8x1xf32> to vector<8x8xf32>
    %265 = arith.subf %261, %264 : vector<8x8xf32>
    %266 = math.exp %265 : vector<8x8xf32>
    %cst_95 = arith.constant dense<0.000000e+00> : vector<8xf32>
    %267 = vector.multi_reduction <add>, %266, %cst_95 [1] : vector<8x8xf32> to vector<8xf32>
    %268 = vector.shape_cast %267 : vector<8xf32> to vector<8x1xf32>
    %269 = tpu.reciprocal %268 {approx = true} : vector<8x1xf32> -> vector<8x1xf32>
    %270 = vector.broadcast %269 : vector<8x1xf32> to vector<8x8xf32>
    %271 = arith.mulf %266, %270 : vector<8x8xf32>
    %cst_96 = arith.constant dense<0.000000e+00> : vector<8x32xf32>
    %272 = tpu.matmul %271, %250, %cst_96 {dimension_numbers = #tpu.dot_dimension_numbers<[1], [0], [0], [1], [0, 0, 1, 1], [], []>} : vector<8x8xf32>, vector<8x32xf32>, vector<8x32xf32> -> vector<8x32xf32>
    %cst_97 = arith.constant dense<0.000000e+00> : vector<8x1xf32>
    %273 = tpu.matmul %272, %215, %cst_97 {dimension_numbers = #tpu.dot_dimension_numbers<[1], [0], [0], [1], [0, 0, 1, 1], [], []>} : vector<8x32xf32>, vector<32x1xf32>, vector<8x1xf32> -> vector<8x1xf32>
    %cst_98 = arith.constant dense<0.000000e+00> : vector<1x8xf32>
    %274 = tpu.matmul %216, %250, %cst_98 {dimension_numbers = #tpu.dot_dimension_numbers<[1], [1], [0], [0], [0, 0, 1, 0], [], []>} : vector<1x32xf32>, vector<8x32xf32>, vector<1x8xf32> -> vector<1x8xf32>
    %275 = vector.broadcast %273 : vector<8x1xf32> to vector<8x8xf32>
    %276 = vector.broadcast %274 : vector<1x8xf32> to vector<8x8xf32>
    %277 = arith.addf %275, %276 : vector<8x8xf32>
    %278 = vector.extract_strided_slice %211 {offsets = [32, 0], sizes = [8, 32], strides = [1, 1]} : vector<64x64xf32> to vector<8x32xf32>
    %279 = vector.extract_strided_slice %211 {offsets = [40, 32], sizes = [8, 32], strides = [1, 1]} : vector<64x64xf32> to vector<8x32xf32>
    %280 = vector.extract_strided_slice %206 {offsets = [40, 0], sizes = [8, 32], strides = [1, 1]} : vector<64x32xf32> to vector<8x32xf32>
    %281 = vector.shape_cast %278 : vector<8x32xf32> to vector<8x1x32xf32>
    %282 = vector.shape_cast %279 : vector<8x32xf32> to vector<1x8x32xf32>
    %283 = vector.broadcast %281 : vector<8x1x32xf32> to vector<8x8x32xf32>
    %284 = vector.broadcast %282 : vector<1x8x32xf32> to vector<8x8x32xf32>
    %285 = arith.addf %283, %284 : vector<8x8x32xf32>
    %286 = math.tanh %285 : vector<8x8x32xf32>
    %287 = vector.broadcast %213 : vector<1x1x32xf32> to vector<8x8x32xf32>
    %288 = arith.mulf %286, %287 : vector<8x8x32xf32>
    %cst_99 = arith.constant dense<0.000000e+00> : vector<8x8xf32>
    %289 = vector.multi_reduction <add>, %288, %cst_99 [2] : vector<8x8x32xf32> to vector<8x8xf32>
    %290 = vector.broadcast %214 : vector<1x1xf32> to vector<8x8xf32>
    %291 = arith.addf %289, %290 : vector<8x8xf32>
    %cst_100 = arith.constant dense<0xFF800000> : vector<8xf32>
    %292 = vector.multi_reduction <maximumf>, %291, %cst_100 [1] : vector<8x8xf32> to vector<8xf32>
    %293 = vector.shape_cast %292 : vector<8xf32> to vector<8x1xf32>
    %294 = vector.broadcast %293 : vector<8x1xf32> to vector<8x8xf32>
    %295 = arith.subf %291, %294 : vector<8x8xf32>
    %296 = math.exp %295 : vector<8x8xf32>
    %cst_101 = arith.constant dense<0.000000e+00> : vector<8xf32>
    %297 = vector.multi_reduction <add>, %296, %cst_101 [1] : vector<8x8xf32> to vector<8xf32>
    %298 = vector.shape_cast %297 : vector<8xf32> to vector<8x1xf32>
    %299 = tpu.reciprocal %298 {approx = true} : vector<8x1xf32> -> vector<8x1xf32>
    %300 = vector.broadcast %299 : vector<8x1xf32> to vector<8x8xf32>
    %301 = arith.mulf %296, %300 : vector<8x8xf32>
    %cst_102 = arith.constant dense<0.000000e+00> : vector<8x32xf32>
    %302 = tpu.matmul %301, %280, %cst_102 {dimension_numbers = #tpu.dot_dimension_numbers<[1], [0], [0], [1], [0, 0, 1, 1], [], []>} : vector<8x8xf32>, vector<8x32xf32>, vector<8x32xf32> -> vector<8x32xf32>
    %cst_103 = arith.constant dense<0.000000e+00> : vector<8x1xf32>
    %303 = tpu.matmul %302, %215, %cst_103 {dimension_numbers = #tpu.dot_dimension_numbers<[1], [0], [0], [1], [0, 0, 1, 1], [], []>} : vector<8x32xf32>, vector<32x1xf32>, vector<8x1xf32> -> vector<8x1xf32>
    %cst_104 = arith.constant dense<0.000000e+00> : vector<1x8xf32>
    %304 = tpu.matmul %216, %280, %cst_104 {dimension_numbers = #tpu.dot_dimension_numbers<[1], [1], [0], [0], [0, 0, 1, 0], [], []>} : vector<1x32xf32>, vector<8x32xf32>, vector<1x8xf32> -> vector<1x8xf32>
    %305 = vector.broadcast %303 : vector<8x1xf32> to vector<8x8xf32>
    %306 = vector.broadcast %304 : vector<1x8xf32> to vector<8x8xf32>
    %307 = arith.addf %305, %306 : vector<8x8xf32>
    %308 = vector.extract_strided_slice %211 {offsets = [48, 0], sizes = [8, 32], strides = [1, 1]} : vector<64x64xf32> to vector<8x32xf32>
    %309 = vector.extract_strided_slice %211 {offsets = [56, 32], sizes = [8, 32], strides = [1, 1]} : vector<64x64xf32> to vector<8x32xf32>
    %310 = vector.extract_strided_slice %206 {offsets = [56, 0], sizes = [8, 32], strides = [1, 1]} : vector<64x32xf32> to vector<8x32xf32>
    %311 = vector.shape_cast %308 : vector<8x32xf32> to vector<8x1x32xf32>
    %312 = vector.shape_cast %309 : vector<8x32xf32> to vector<1x8x32xf32>
    %313 = vector.broadcast %311 : vector<8x1x32xf32> to vector<8x8x32xf32>
    %314 = vector.broadcast %312 : vector<1x8x32xf32> to vector<8x8x32xf32>
    %315 = arith.addf %313, %314 : vector<8x8x32xf32>
    %316 = math.tanh %315 : vector<8x8x32xf32>
    %317 = vector.broadcast %213 : vector<1x1x32xf32> to vector<8x8x32xf32>
    %318 = arith.mulf %316, %317 : vector<8x8x32xf32>
    %cst_105 = arith.constant dense<0.000000e+00> : vector<8x8xf32>
    %319 = vector.multi_reduction <add>, %318, %cst_105 [2] : vector<8x8x32xf32> to vector<8x8xf32>
    %320 = vector.broadcast %214 : vector<1x1xf32> to vector<8x8xf32>
    %321 = arith.addf %319, %320 : vector<8x8xf32>
    %cst_106 = arith.constant dense<0xFF800000> : vector<8xf32>
    %322 = vector.multi_reduction <maximumf>, %321, %cst_106 [1] : vector<8x8xf32> to vector<8xf32>
    %323 = vector.shape_cast %322 : vector<8xf32> to vector<8x1xf32>
    %324 = vector.broadcast %323 : vector<8x1xf32> to vector<8x8xf32>
    %325 = arith.subf %321, %324 : vector<8x8xf32>
    %326 = math.exp %325 : vector<8x8xf32>
    %cst_107 = arith.constant dense<0.000000e+00> : vector<8xf32>
    %327 = vector.multi_reduction <add>, %326, %cst_107 [1] : vector<8x8xf32> to vector<8xf32>
    %328 = vector.shape_cast %327 : vector<8xf32> to vector<8x1xf32>
    %329 = tpu.reciprocal %328 {approx = true} : vector<8x1xf32> -> vector<8x1xf32>
    %330 = vector.broadcast %329 : vector<8x1xf32> to vector<8x8xf32>
    %331 = arith.mulf %326, %330 : vector<8x8xf32>
    %cst_108 = arith.constant dense<0.000000e+00> : vector<8x32xf32>
    %332 = tpu.matmul %331, %310, %cst_108 {dimension_numbers = #tpu.dot_dimension_numbers<[1], [0], [0], [1], [0, 0, 1, 1], [], []>} : vector<8x8xf32>, vector<8x32xf32>, vector<8x32xf32> -> vector<8x32xf32>
    %cst_109 = arith.constant dense<0.000000e+00> : vector<8x1xf32>
    %333 = tpu.matmul %332, %215, %cst_109 {dimension_numbers = #tpu.dot_dimension_numbers<[1], [0], [0], [1], [0, 0, 1, 1], [], []>} : vector<8x32xf32>, vector<32x1xf32>, vector<8x1xf32> -> vector<8x1xf32>
    %cst_110 = arith.constant dense<0.000000e+00> : vector<1x8xf32>
    %334 = tpu.matmul %216, %310, %cst_110 {dimension_numbers = #tpu.dot_dimension_numbers<[1], [1], [0], [0], [0, 0, 1, 0], [], []>} : vector<1x32xf32>, vector<8x32xf32>, vector<1x8xf32> -> vector<1x8xf32>
    %335 = vector.broadcast %333 : vector<8x1xf32> to vector<8x8xf32>
    %336 = vector.broadcast %334 : vector<1x8xf32> to vector<8x8xf32>
    %337 = arith.addf %335, %336 : vector<8x8xf32>
    %c232 = arith.constant 232 : index
    %c0_111 = arith.constant 0 : index
    %338 = vector.load %arg4[%c232, %c0_111] : memref<320x64xf32, #tpu.memory_space<vmem>>, vector<32x8xf32>
    %c0_112 = arith.constant 0 : index
    %c0_113 = arith.constant 0 : index
    %339 = vector.load %arg3[%c0_112, %c0_113] : memref<32x32xf32, #tpu.memory_space<vmem>>, vector<32x32xf32>
    %cst_114 = arith.constant dense<0.000000e+00> : vector<32x8xf32>
    %340 = tpu.matmul %339, %338, %cst_114 {dimension_numbers = #tpu.dot_dimension_numbers<[1], [0], [0], [1], [0, 0, 1, 1], [], []>} : vector<32x32xf32>, vector<32x8xf32>, vector<32x8xf32> -> vector<32x8xf32>
    %341 = vector.shape_cast %247 : vector<8x8xf32> to vector<1x8x8xf32>
    %342 = vector.shape_cast %277 : vector<8x8xf32> to vector<1x8x8xf32>
    %343 = vector.shape_cast %307 : vector<8x8xf32> to vector<1x8x8xf32>
    %344 = vector.shape_cast %337 : vector<8x8xf32> to vector<1x8x8xf32>
    %345 = tpu.concatenate %341, %342, %343, %344 in 0 : vector<1x8x8xf32>, vector<1x8x8xf32>, vector<1x8x8xf32>, vector<1x8x8xf32> -> vector<4x8x8xf32>
    %346 = vector.shape_cast %340 : vector<32x8xf32> to vector<4x8x8xf32>
    %347 = arith.addf %345, %346 : vector<4x8x8xf32>
    %348 = vector.shape_cast %217 : vector<1x1xf32> to vector<1x1x1xf32>
    %349 = vector.broadcast %348 : vector<1x1x1xf32> to vector<4x8x8xf32>
    %350 = arith.addf %347, %349 : vector<4x8x8xf32>
    %cst_115 = arith.constant dense<0xFF800000> : vector<4x8xf32>
    %351 = vector.multi_reduction <maximumf>, %350, %cst_115 [2] : vector<4x8x8xf32> to vector<4x8xf32>
    %352 = vector.shape_cast %351 : vector<4x8xf32> to vector<4x8x1xf32>
    %353 = vector.broadcast %352 : vector<4x8x1xf32> to vector<4x8x8xf32>
    %354 = arith.subf %350, %353 : vector<4x8x8xf32>
    %355 = math.exp %354 : vector<4x8x8xf32>
    %cst_116 = arith.constant dense<0.000000e+00> : vector<4x8xf32>
    %356 = vector.multi_reduction <add>, %355, %cst_116 [2] : vector<4x8x8xf32> to vector<4x8xf32>
    %357 = vector.shape_cast %356 : vector<4x8xf32> to vector<4x8x1xf32>
    %358 = math.log %357 : vector<4x8x1xf32>
    %359 = arith.addf %352, %358 : vector<4x8x1xf32>
    %360 = vector.broadcast %359 : vector<4x8x1xf32> to vector<4x8x8xf32>
    %361 = arith.subf %350, %360 : vector<4x8x8xf32>
    %cst_117 = arith.constant dense<0xFF800000> : vector<4x8xf32>
    %362 = vector.multi_reduction <maximumf>, %361, %cst_117 [1] : vector<4x8x8xf32> to vector<4x8xf32>
    %363 = vector.shape_cast %362 : vector<4x8xf32> to vector<4x1x8xf32>
    %364 = vector.broadcast %363 : vector<4x1x8xf32> to vector<4x8x8xf32>
    %365 = arith.subf %361, %364 : vector<4x8x8xf32>
    %366 = math.exp %365 : vector<4x8x8xf32>
    %cst_118 = arith.constant dense<0.000000e+00> : vector<4x8xf32>
    %367 = vector.multi_reduction <add>, %366, %cst_118 [1] : vector<4x8x8xf32> to vector<4x8xf32>
    %368 = vector.shape_cast %367 : vector<4x8xf32> to vector<4x1x8xf32>
    %369 = math.log %368 : vector<4x1x8xf32>
    %370 = arith.addf %363, %369 : vector<4x1x8xf32>
    %371 = vector.broadcast %370 : vector<4x1x8xf32> to vector<4x8x8xf32>
    %372 = arith.subf %361, %371 : vector<4x8x8xf32>
    %cst_119 = arith.constant dense<0xFF800000> : vector<4x8xf32>
    %373 = vector.multi_reduction <maximumf>, %372, %cst_119 [2] : vector<4x8x8xf32> to vector<4x8xf32>
    %374 = vector.shape_cast %373 : vector<4x8xf32> to vector<4x8x1xf32>
    %375 = vector.broadcast %374 : vector<4x8x1xf32> to vector<4x8x8xf32>
    %376 = arith.subf %372, %375 : vector<4x8x8xf32>
    %377 = math.exp %376 : vector<4x8x8xf32>
    %cst_120 = arith.constant dense<0.000000e+00> : vector<4x8xf32>
    %378 = vector.multi_reduction <add>, %377, %cst_120 [2] : vector<4x8x8xf32> to vector<4x8xf32>
    %379 = vector.shape_cast %378 : vector<4x8xf32> to vector<4x8x1xf32>
    %380 = math.log %379 : vector<4x8x1xf32>
    %381 = arith.addf %374, %380 : vector<4x8x1xf32>
    %382 = vector.broadcast %381 : vector<4x8x1xf32> to vector<4x8x8xf32>
    %383 = arith.subf %372, %382 : vector<4x8x8xf32>
    %cst_121 = arith.constant dense<0xFF800000> : vector<4x8xf32>
    %384 = vector.multi_reduction <maximumf>, %383, %cst_121 [1] : vector<4x8x8xf32> to vector<4x8xf32>
    %385 = vector.shape_cast %384 : vector<4x8xf32> to vector<4x1x8xf32>
    %386 = vector.broadcast %385 : vector<4x1x8xf32> to vector<4x8x8xf32>
    %387 = arith.subf %383, %386 : vector<4x8x8xf32>
    %388 = math.exp %387 : vector<4x8x8xf32>
    %cst_122 = arith.constant dense<0.000000e+00> : vector<4x8xf32>
    %389 = vector.multi_reduction <add>, %388, %cst_122 [1] : vector<4x8x8xf32> to vector<4x8xf32>
    %390 = vector.shape_cast %389 : vector<4x8xf32> to vector<4x1x8xf32>
    %391 = math.log %390 : vector<4x1x8xf32>
    %392 = arith.addf %385, %391 : vector<4x1x8xf32>
    %393 = vector.broadcast %392 : vector<4x1x8xf32> to vector<4x8x8xf32>
    %394 = arith.subf %383, %393 : vector<4x8x8xf32>
    %cst_123 = arith.constant dense<0xFF800000> : vector<4x8xf32>
    %395 = vector.multi_reduction <maximumf>, %394, %cst_123 [2] : vector<4x8x8xf32> to vector<4x8xf32>
    %396 = vector.shape_cast %395 : vector<4x8xf32> to vector<4x8x1xf32>
    %397 = vector.broadcast %396 : vector<4x8x1xf32> to vector<4x8x8xf32>
    %398 = arith.subf %394, %397 : vector<4x8x8xf32>
    %399 = math.exp %398 : vector<4x8x8xf32>
    %cst_124 = arith.constant dense<0.000000e+00> : vector<4x8xf32>
    %400 = vector.multi_reduction <add>, %399, %cst_124 [2] : vector<4x8x8xf32> to vector<4x8xf32>
    %401 = vector.shape_cast %400 : vector<4x8xf32> to vector<4x8x1xf32>
    %402 = math.log %401 : vector<4x8x1xf32>
    %403 = arith.addf %396, %402 : vector<4x8x1xf32>
    %404 = vector.broadcast %403 : vector<4x8x1xf32> to vector<4x8x8xf32>
    %405 = arith.subf %394, %404 : vector<4x8x8xf32>
    %cst_125 = arith.constant dense<0xFF800000> : vector<4x8xf32>
    %406 = vector.multi_reduction <maximumf>, %405, %cst_125 [1] : vector<4x8x8xf32> to vector<4x8xf32>
    %407 = vector.shape_cast %406 : vector<4x8xf32> to vector<4x1x8xf32>
    %408 = vector.broadcast %407 : vector<4x1x8xf32> to vector<4x8x8xf32>
    %409 = arith.subf %405, %408 : vector<4x8x8xf32>
    %410 = math.exp %409 : vector<4x8x8xf32>
    %cst_126 = arith.constant dense<0.000000e+00> : vector<4x8xf32>
    %411 = vector.multi_reduction <add>, %410, %cst_126 [1] : vector<4x8x8xf32> to vector<4x8xf32>
    %412 = vector.shape_cast %411 : vector<4x8xf32> to vector<4x1x8xf32>
    %413 = math.log %412 : vector<4x1x8xf32>
    %414 = arith.addf %407, %413 : vector<4x1x8xf32>
    %415 = vector.broadcast %414 : vector<4x1x8xf32> to vector<4x8x8xf32>
    %416 = arith.subf %405, %415 : vector<4x8x8xf32>
    %cst_127 = arith.constant dense<0xFF800000> : vector<4x8xf32>
    %417 = vector.multi_reduction <maximumf>, %416, %cst_127 [2] : vector<4x8x8xf32> to vector<4x8xf32>
    %418 = vector.shape_cast %417 : vector<4x8xf32> to vector<4x8x1xf32>
    %419 = vector.broadcast %418 : vector<4x8x1xf32> to vector<4x8x8xf32>
    %420 = arith.subf %416, %419 : vector<4x8x8xf32>
    %421 = math.exp %420 : vector<4x8x8xf32>
    %cst_128 = arith.constant dense<0.000000e+00> : vector<4x8xf32>
    %422 = vector.multi_reduction <add>, %421, %cst_128 [2] : vector<4x8x8xf32> to vector<4x8xf32>
    %423 = vector.shape_cast %422 : vector<4x8xf32> to vector<4x8x1xf32>
    %424 = math.log %423 : vector<4x8x1xf32>
    %425 = arith.addf %418, %424 : vector<4x8x1xf32>
    %426 = vector.broadcast %425 : vector<4x8x1xf32> to vector<4x8x8xf32>
    %427 = arith.subf %416, %426 : vector<4x8x8xf32>
    %cst_129 = arith.constant dense<0xFF800000> : vector<4x8xf32>
    %428 = vector.multi_reduction <maximumf>, %427, %cst_129 [1] : vector<4x8x8xf32> to vector<4x8xf32>
    %429 = vector.shape_cast %428 : vector<4x8xf32> to vector<4x1x8xf32>
    %430 = vector.broadcast %429 : vector<4x1x8xf32> to vector<4x8x8xf32>
    %431 = arith.subf %427, %430 : vector<4x8x8xf32>
    %432 = math.exp %431 : vector<4x8x8xf32>
    %cst_130 = arith.constant dense<0.000000e+00> : vector<4x8xf32>
    %433 = vector.multi_reduction <add>, %432, %cst_130 [1] : vector<4x8x8xf32> to vector<4x8xf32>
    %434 = vector.shape_cast %433 : vector<4x8xf32> to vector<4x1x8xf32>
    %435 = math.log %434 : vector<4x1x8xf32>
    %436 = arith.addf %429, %435 : vector<4x1x8xf32>
    %437 = vector.broadcast %436 : vector<4x1x8xf32> to vector<4x8x8xf32>
    %438 = arith.subf %427, %437 : vector<4x8x8xf32>
    %cst_131 = arith.constant dense<0xFF800000> : vector<4x8xf32>
    %439 = vector.multi_reduction <maximumf>, %438, %cst_131 [2] : vector<4x8x8xf32> to vector<4x8xf32>
    %440 = vector.shape_cast %439 : vector<4x8xf32> to vector<4x8x1xf32>
    %441 = vector.broadcast %440 : vector<4x8x1xf32> to vector<4x8x8xf32>
    %442 = arith.subf %438, %441 : vector<4x8x8xf32>
    %443 = math.exp %442 : vector<4x8x8xf32>
    %cst_132 = arith.constant dense<0.000000e+00> : vector<4x8xf32>
    %444 = vector.multi_reduction <add>, %443, %cst_132 [2] : vector<4x8x8xf32> to vector<4x8xf32>
    %445 = vector.shape_cast %444 : vector<4x8xf32> to vector<4x8x1xf32>
    %446 = math.log %445 : vector<4x8x1xf32>
    %447 = arith.addf %440, %446 : vector<4x8x1xf32>
    %448 = vector.broadcast %447 : vector<4x8x1xf32> to vector<4x8x8xf32>
    %449 = arith.subf %438, %448 : vector<4x8x8xf32>
    %cst_133 = arith.constant dense<0xFF800000> : vector<4x8xf32>
    %450 = vector.multi_reduction <maximumf>, %449, %cst_133 [1] : vector<4x8x8xf32> to vector<4x8xf32>
    %451 = vector.shape_cast %450 : vector<4x8xf32> to vector<4x1x8xf32>
    %452 = vector.broadcast %451 : vector<4x1x8xf32> to vector<4x8x8xf32>
    %453 = arith.subf %449, %452 : vector<4x8x8xf32>
    %454 = math.exp %453 : vector<4x8x8xf32>
    %cst_134 = arith.constant dense<0.000000e+00> : vector<4x8xf32>
    %455 = vector.multi_reduction <add>, %454, %cst_134 [1] : vector<4x8x8xf32> to vector<4x8xf32>
    %456 = vector.shape_cast %455 : vector<4x8xf32> to vector<4x1x8xf32>
    %457 = math.log %456 : vector<4x1x8xf32>
    %458 = arith.addf %451, %457 : vector<4x1x8xf32>
    %459 = vector.broadcast %458 : vector<4x1x8xf32> to vector<4x8x8xf32>
    %460 = arith.subf %449, %459 : vector<4x8x8xf32>
    %cst_135 = arith.constant dense<0xFF800000> : vector<4x8xf32>
    %461 = vector.multi_reduction <maximumf>, %460, %cst_135 [2] : vector<4x8x8xf32> to vector<4x8xf32>
    %462 = vector.shape_cast %461 : vector<4x8xf32> to vector<4x8x1xf32>
    %463 = vector.broadcast %462 : vector<4x8x1xf32> to vector<4x8x8xf32>
    %464 = arith.subf %460, %463 : vector<4x8x8xf32>
    %465 = math.exp %464 : vector<4x8x8xf32>
    %cst_136 = arith.constant dense<0.000000e+00> : vector<4x8xf32>
    %466 = vector.multi_reduction <add>, %465, %cst_136 [2] : vector<4x8x8xf32> to vector<4x8xf32>
    %467 = vector.shape_cast %466 : vector<4x8xf32> to vector<4x8x1xf32>
    %468 = math.log %467 : vector<4x8x1xf32>
    %469 = arith.addf %462, %468 : vector<4x8x1xf32>
    %470 = vector.broadcast %469 : vector<4x8x1xf32> to vector<4x8x8xf32>
    %471 = arith.subf %460, %470 : vector<4x8x8xf32>
    %cst_137 = arith.constant dense<0xFF800000> : vector<4x8xf32>
    %472 = vector.multi_reduction <maximumf>, %471, %cst_137 [1] : vector<4x8x8xf32> to vector<4x8xf32>
    %473 = vector.shape_cast %472 : vector<4x8xf32> to vector<4x1x8xf32>
    %474 = vector.broadcast %473 : vector<4x1x8xf32> to vector<4x8x8xf32>
    %475 = arith.subf %471, %474 : vector<4x8x8xf32>
    %476 = math.exp %475 : vector<4x8x8xf32>
    %cst_138 = arith.constant dense<0.000000e+00> : vector<4x8xf32>
    %477 = vector.multi_reduction <add>, %476, %cst_138 [1] : vector<4x8x8xf32> to vector<4x8xf32>
    %478 = vector.shape_cast %477 : vector<4x8xf32> to vector<4x1x8xf32>
    %479 = math.log %478 : vector<4x1x8xf32>
    %480 = arith.addf %473, %479 : vector<4x1x8xf32>
    %481 = vector.broadcast %480 : vector<4x1x8xf32> to vector<4x8x8xf32>
    %482 = arith.subf %471, %481 : vector<4x8x8xf32>
    %cst_139 = arith.constant dense<0xFF800000> : vector<4x8xf32>
    %483 = vector.multi_reduction <maximumf>, %482, %cst_139 [2] : vector<4x8x8xf32> to vector<4x8xf32>
    %484 = vector.shape_cast %483 : vector<4x8xf32> to vector<4x8x1xf32>
    %485 = vector.broadcast %484 : vector<4x8x1xf32> to vector<4x8x8xf32>
    %486 = arith.subf %482, %485 : vector<4x8x8xf32>
    %487 = math.exp %486 : vector<4x8x8xf32>
    %cst_140 = arith.constant dense<0.000000e+00> : vector<4x8xf32>
    %488 = vector.multi_reduction <add>, %487, %cst_140 [2] : vector<4x8x8xf32> to vector<4x8xf32>
    %489 = vector.shape_cast %488 : vector<4x8xf32> to vector<4x8x1xf32>
    %490 = math.log %489 : vector<4x8x1xf32>
    %491 = arith.addf %484, %490 : vector<4x8x1xf32>
    %492 = vector.broadcast %491 : vector<4x8x1xf32> to vector<4x8x8xf32>
    %493 = arith.subf %482, %492 : vector<4x8x8xf32>
    %cst_141 = arith.constant dense<0xFF800000> : vector<4x8xf32>
    %494 = vector.multi_reduction <maximumf>, %493, %cst_141 [1] : vector<4x8x8xf32> to vector<4x8xf32>
    %495 = vector.shape_cast %494 : vector<4x8xf32> to vector<4x1x8xf32>
    %496 = vector.broadcast %495 : vector<4x1x8xf32> to vector<4x8x8xf32>
    %497 = arith.subf %493, %496 : vector<4x8x8xf32>
    %498 = math.exp %497 : vector<4x8x8xf32>
    %cst_142 = arith.constant dense<0.000000e+00> : vector<4x8xf32>
    %499 = vector.multi_reduction <add>, %498, %cst_142 [1] : vector<4x8x8xf32> to vector<4x8xf32>
    %500 = vector.shape_cast %499 : vector<4x8xf32> to vector<4x1x8xf32>
    %501 = math.log %500 : vector<4x1x8xf32>
    %502 = arith.addf %495, %501 : vector<4x1x8xf32>
    %503 = vector.broadcast %502 : vector<4x1x8xf32> to vector<4x8x8xf32>
    %504 = arith.subf %493, %503 : vector<4x8x8xf32>
    %cst_143 = arith.constant dense<0xFF800000> : vector<4x8xf32>
    %505 = vector.multi_reduction <maximumf>, %504, %cst_143 [2] : vector<4x8x8xf32> to vector<4x8xf32>
    %506 = vector.shape_cast %505 : vector<4x8xf32> to vector<4x8x1xf32>
    %507 = vector.broadcast %506 : vector<4x8x1xf32> to vector<4x8x8xf32>
    %508 = arith.subf %504, %507 : vector<4x8x8xf32>
    %509 = math.exp %508 : vector<4x8x8xf32>
    %cst_144 = arith.constant dense<0.000000e+00> : vector<4x8xf32>
    %510 = vector.multi_reduction <add>, %509, %cst_144 [2] : vector<4x8x8xf32> to vector<4x8xf32>
    %511 = vector.shape_cast %510 : vector<4x8xf32> to vector<4x8x1xf32>
    %512 = math.log %511 : vector<4x8x1xf32>
    %513 = arith.addf %506, %512 : vector<4x8x1xf32>
    %514 = vector.broadcast %513 : vector<4x8x1xf32> to vector<4x8x8xf32>
    %515 = arith.subf %504, %514 : vector<4x8x8xf32>
    %cst_145 = arith.constant dense<0xFF800000> : vector<4x8xf32>
    %516 = vector.multi_reduction <maximumf>, %515, %cst_145 [1] : vector<4x8x8xf32> to vector<4x8xf32>
    %517 = vector.shape_cast %516 : vector<4x8xf32> to vector<4x1x8xf32>
    %518 = vector.broadcast %517 : vector<4x1x8xf32> to vector<4x8x8xf32>
    %519 = arith.subf %515, %518 : vector<4x8x8xf32>
    %520 = math.exp %519 : vector<4x8x8xf32>
    %cst_146 = arith.constant dense<0.000000e+00> : vector<4x8xf32>
    %521 = vector.multi_reduction <add>, %520, %cst_146 [1] : vector<4x8x8xf32> to vector<4x8xf32>
    %522 = vector.shape_cast %521 : vector<4x8xf32> to vector<4x1x8xf32>
    %523 = math.log %522 : vector<4x1x8xf32>
    %524 = arith.addf %517, %523 : vector<4x1x8xf32>
    %525 = vector.broadcast %524 : vector<4x1x8xf32> to vector<4x8x8xf32>
    %526 = arith.subf %515, %525 : vector<4x8x8xf32>
    %cst_147 = arith.constant dense<0xFF800000> : vector<4x8xf32>
    %527 = vector.multi_reduction <maximumf>, %526, %cst_147 [2] : vector<4x8x8xf32> to vector<4x8xf32>
    %528 = vector.shape_cast %527 : vector<4x8xf32> to vector<4x8x1xf32>
    %529 = vector.broadcast %528 : vector<4x8x1xf32> to vector<4x8x8xf32>
    %530 = arith.subf %526, %529 : vector<4x8x8xf32>
    %531 = math.exp %530 : vector<4x8x8xf32>
    %cst_148 = arith.constant dense<0.000000e+00> : vector<4x8xf32>
    %532 = vector.multi_reduction <add>, %531, %cst_148 [2] : vector<4x8x8xf32> to vector<4x8xf32>
    %533 = vector.shape_cast %532 : vector<4x8xf32> to vector<4x8x1xf32>
    %534 = math.log %533 : vector<4x8x1xf32>
    %535 = arith.addf %528, %534 : vector<4x8x1xf32>
    %536 = vector.broadcast %535 : vector<4x8x1xf32> to vector<4x8x8xf32>
    %537 = arith.subf %526, %536 : vector<4x8x8xf32>
    %cst_149 = arith.constant dense<0xFF800000> : vector<4x8xf32>
    %538 = vector.multi_reduction <maximumf>, %537, %cst_149 [1] : vector<4x8x8xf32> to vector<4x8xf32>
    %539 = vector.shape_cast %538 : vector<4x8xf32> to vector<4x1x8xf32>
    %540 = vector.broadcast %539 : vector<4x1x8xf32> to vector<4x8x8xf32>
    %541 = arith.subf %537, %540 : vector<4x8x8xf32>
    %542 = math.exp %541 : vector<4x8x8xf32>
    %cst_150 = arith.constant dense<0.000000e+00> : vector<4x8xf32>
    %543 = vector.multi_reduction <add>, %542, %cst_150 [1] : vector<4x8x8xf32> to vector<4x8xf32>
    %544 = vector.shape_cast %543 : vector<4x8xf32> to vector<4x1x8xf32>
    %545 = math.log %544 : vector<4x1x8xf32>
    %546 = arith.addf %539, %545 : vector<4x1x8xf32>
    %547 = vector.broadcast %546 : vector<4x1x8xf32> to vector<4x8x8xf32>
    %548 = arith.subf %537, %547 : vector<4x8x8xf32>
    %cst_151 = arith.constant dense<0xFF800000> : vector<4x8xf32>
    %549 = vector.multi_reduction <maximumf>, %548, %cst_151 [2] : vector<4x8x8xf32> to vector<4x8xf32>
    %550 = vector.shape_cast %549 : vector<4x8xf32> to vector<4x8x1xf32>
    %551 = vector.broadcast %550 : vector<4x8x1xf32> to vector<4x8x8xf32>
    %552 = arith.subf %548, %551 : vector<4x8x8xf32>
    %553 = math.exp %552 : vector<4x8x8xf32>
    %cst_152 = arith.constant dense<0.000000e+00> : vector<4x8xf32>
    %554 = vector.multi_reduction <add>, %553, %cst_152 [2] : vector<4x8x8xf32> to vector<4x8xf32>
    %555 = vector.shape_cast %554 : vector<4x8xf32> to vector<4x8x1xf32>
    %556 = math.log %555 : vector<4x8x1xf32>
    %557 = arith.addf %550, %556 : vector<4x8x1xf32>
    %558 = vector.broadcast %557 : vector<4x8x1xf32> to vector<4x8x8xf32>
    %559 = arith.subf %548, %558 : vector<4x8x8xf32>
    %cst_153 = arith.constant dense<0xFF800000> : vector<4x8xf32>
    %560 = vector.multi_reduction <maximumf>, %559, %cst_153 [1] : vector<4x8x8xf32> to vector<4x8xf32>
    %561 = vector.shape_cast %560 : vector<4x8xf32> to vector<4x1x8xf32>
    %562 = vector.broadcast %561 : vector<4x1x8xf32> to vector<4x8x8xf32>
    %563 = arith.subf %559, %562 : vector<4x8x8xf32>
    %564 = math.exp %563 : vector<4x8x8xf32>
    %cst_154 = arith.constant dense<0.000000e+00> : vector<4x8xf32>
    %565 = vector.multi_reduction <add>, %564, %cst_154 [1] : vector<4x8x8xf32> to vector<4x8xf32>
    %566 = vector.shape_cast %565 : vector<4x8xf32> to vector<4x1x8xf32>
    %567 = math.log %566 : vector<4x1x8xf32>
    %568 = arith.addf %561, %567 : vector<4x1x8xf32>
    %569 = vector.broadcast %568 : vector<4x1x8xf32> to vector<4x8x8xf32>
    %570 = arith.subf %559, %569 : vector<4x8x8xf32>
    %571 = math.exp %570 : vector<4x8x8xf32>
    %c0_155 = arith.constant 0 : index
    %c0_156 = arith.constant 0 : index
    %c0_157 = arith.constant 0 : index
    %572 = vector.load %arg5[%c0_155, %c0_156, %c0_157] : memref<4x8x8xf32, #tpu.memory_space<vmem>>, vector<4x8x8xf32>
    tpu.vector_store %arg5[%c0_155, %c0_156, %c0_157], %571 {strides = array<i32>} : memref<4x8x8xf32, #tpu.memory_space<vmem>>, vector<4x8x8xf32>,
    return
  }
  func.func @transform_0(%arg0: i32) -> (i32, i32) {
    %c0_i32 = arith.constant 0 : i32
    %c0_i32_0 = arith.constant 0 : i32
    return %arg0, %c0_i32 : i32, i32
  }
  func.func @transform_1(%arg0: i32) -> (i32, i32) {
    %c0_i32 = arith.constant 0 : i32
    %c0_i32_0 = arith.constant 0 : i32
    %c0_i32_1 = arith.constant 0 : i32
    return %c0_i32, %c0_i32_0 : i32, i32
  }
  func.func @transform_2(%arg0: i32) -> (i32, i32) {
    %c0_i32 = arith.constant 0 : i32
    %c0_i32_0 = arith.constant 0 : i32
    return %arg0, %c0_i32 : i32, i32
  }
  func.func @transform_3(%arg0: i32) -> (i32, i32) {
    %c0_i32 = arith.constant 0 : i32
    %c0_i32_0 = arith.constant 0 : i32
    %c0_i32_1 = arith.constant 0 : i32
    return %c0_i32, %c0_i32_0 : i32, i32
  }
  func.func @transform_4(%arg0: i32) -> (i32, i32, i32) {
    %c0_i32 = arith.constant 0 : i32
    %c0_i32_0 = arith.constant 0 : i32
    %c0_i32_1 = arith.constant 0 : i32
    return %arg0, %c0_i32, %c0_i32_0 : i32, i32, i32
  }
}

</mosaic_0001>

<llo_original>
// kernel: tile.6
$region0: #{tile.6}
  #allocation0 [shape = 's32[1]{0}', space=sflag, size = 0x4, scoped, tag = 'scoped memory for tile.6']
  %s0 = inlined_call_operand.vmem [shape: f32[4], index: 0, kind: input, shape index: {}]
  %s1 = inlined_call_operand.vmem [shape: f32[8,4], index: 1, kind: output, shape index: {}]
  // Predicated region
  $region2: #{tile.6} parent=0 // pred_check
    _
  $region3: #{tile.6} parent=0 // pred_check_branch
    %3 = sbr.rel (0) target = $region5
  $region4: #{tile.6} parent=0 // pred_region
    _
  $region5: #{tile.6} parent=0 // pred_fallthru
    _
  %v4 = vld [vmem:[%s0] ss:$0 sm:$0xff]
  %5 = vst [vmem:[%s1] sm:$0xff] %v4

// kernel: mul.20
$region0: #{mul.20}
  %s0 = inlined_call_operand.vmem [shape: f32[8,4], index: 0, kind: input, shape index: {}]
  %s1 = inlined_call_operand.vmem [shape: f32[32], index: 1, kind: output, shape index: {}]
  $region1: #{mul.20} parent=0
    #allocation0 [shape = 'u8[4096]{0}', space=vmem, size = 0x1000, scoped, tag = 'scoped mem for output reshape']
    %v2 = vld [vmem:[%s0] sm:$0x1]
    %vm3 = vcmask 31744
    %4 = vst.msk [vmem:[#allocation0] sm:$0x1] %vm3, %v2
    %s5 = scalar_lea.vmem %s0, 7
    %v6 = vld [vmem:[%s5] sm:$0x1]
    %7 = vrot.lane.b32.xlu0 %v6, 28
    %v8 = vpop.permute.xlu0 %7
    %vm9 = vcmask 261344
    %10 = vst.msk [vmem:[#allocation0] sm:$0x1] %vm9, %v8
    %s11 = scalar_lea.vmem %s0, 6
    %v12 = vld [vmem:[%s11] sm:$0x1]
    %13 = vrot.lane.b32.xlu0 %v12, 24
    %v14 = vpop.permute.xlu0 %13
    %vm15 = vcmask 228544
    %16 = vst.msk [vmem:[#allocation0] sm:$0x1] %vm15, %v14
    %s17 = scalar_lea.vmem %s0, 5
    %v18 = vld [vmem:[%s17] sm:$0x1]
    %19 = vrot.lane.b32.xlu0 %v18, 20
    %v20 = vpop.permute.xlu0 %19
    %vm21 = vcmask 195744
    %22 = vst.msk [vmem:[#allocation0] sm:$0x1] %vm21, %v20
    %s23 = scalar_lea.vmem %s0, 4
    %v24 = vld [vmem:[%s23] sm:$0x1]
    %25 = vrot.lane.b32.xlu0 %v24, 16
    %v26 = vpop.permute.xlu0 %25
    %vm27 = vcmask 162944
    %28 = vst.msk [vmem:[#allocation0] sm:$0x1] %vm27, %v26
    %s29 = scalar_lea.vmem %s0, 3
    %v30 = vld [vmem:[%s29] sm:$0x1]
    %31 = vrot.lane.b32.xlu0 %v30, 12
    %v32 = vpop.permute.xlu0 %31
    %vm33 = vcmask 130144
    %34 = vst.msk [vmem:[#allocation0] sm:$0x1] %vm33, %v32
    %s35 = scalar_lea.vmem %s0, 2
    %v36 = vld [vmem:[%s35] sm:$0x1]
    %37 = vrot.lane.b32.xlu0 %v36, 8
    %v38 = vpop.permute.xlu0 %37
    %vm39 = vcmask 97344
    %40 = vst.msk [vmem:[#allocation0] sm:$0x1] %vm39, %v38
    %s41 = scalar_lea.vmem %s0, 1
    %v42 = vld [vmem:[%s41] sm:$0x1]
    %43 = vrot.lane.b32.xlu0 %v42, 4
    %v44 = vpop.permute.xlu0 %43
    %vm45 = vcmask 64544
    %46 = vst.msk [vmem:[#allocation0] sm:$0x1] %vm45, %v44
    %s48 = sshllo.u32 0, 1
    %v50 = vld [vmem:[#allocation0] sm:%s48]
    %s51 = sshllo.u32 0, 1
    %52 = vst [vmem:[%s1] sm:%s51] %v50

// kernel: _fair_matching_impl.1
$region0: #{_fair_matching_impl.1}
  #allocation0 [shape = 'u32[]', space=smem, size = 0x4, offset = 0x4, fixed_abs, tag = 'smem constant byte address 0x4 - core index']
  #allocation1 [shape = 'u32[144,128]{1,0:T(1,128)}', space=vmem, size = 0x12000, scoped, tag = 'internal scratch']
  %s0 = inlined_call_operand.vmem [shape: f32[64,8], index: 0, kind: input, shape index: {}]
  %s1 = inlined_call_operand.vmem [shape: f32[64,64], index: 1, kind: input, shape index: {}]
  %s2 = inlined_call_operand.vmem [shape: f32[32,32], index: 2, kind: input, shape index: {}]
  %s3 = inlined_call_operand.vmem [shape: f32[320,64], index: 3, kind: input, shape index: {}]
  %s4 = inlined_call_operand.vmem [shape: f32[4,8,8], index: 4, kind: output, shape index: {}]
  %s5 = sld [smem:[#allocation0]]
  $region26: #{_fair_matching_impl.1} parent=0
    _
  %s7 = ssub.s32 1, %s5
  %s8 = scalar_select 0, %s7, %s5
  // Predicated region
  $region2: #{_fair_matching_impl.1} parent=0 // pred_check
    _
  $region3: #{_fair_matching_impl.1} parent=0 // pred_check_branch
    %10 = sbr.rel (0) target = $region5
  $region4: #{_fair_matching_impl.1} parent=0 // pred_region
    _
  $region5: #{_fair_matching_impl.1} parent=0 // pred_fallthru
    _
  // Predicated region
  $region6: #{_fair_matching_impl.1} parent=0 // pred_check
    _
  $region7: #{_fair_matching_impl.1} parent=0 // pred_check_branch
    %12 = sbr.rel (0) target = $region9
  $region8: #{_fair_matching_impl.1} parent=0 // pred_region
    _
  $region9: #{_fair_matching_impl.1} parent=0 // pred_fallthru
    _
  // Predicated region
  $region10: #{_fair_matching_impl.1} parent=0 // pred_check
    _
  $region11: #{_fair_matching_impl.1} parent=0 // pred_check_branch
    %14 = sbr.rel (0) target = $region13
  $region12: #{_fair_matching_impl.1} parent=0 // pred_region
    _
  $region13: #{_fair_matching_impl.1} parent=0 // pred_fallthru
    _
  // Predicated region
  $region14: #{_fair_matching_impl.1} parent=0 // pred_check
    _
  $region15: #{_fair_matching_impl.1} parent=0 // pred_check_branch
    %16 = sbr.rel (0) target = $region17
  $region16: #{_fair_matching_impl.1} parent=0 // pred_region
    _
  $region17: #{_fair_matching_impl.1} parent=0 // pred_fallthru
    _
  %v17 = vld [vmem:[%s0] sm:$0xff]
  %v18 = vld [vmem:[%s0 + $0x8] sm:$0xff]
  %v19 = vld [vmem:[%s0 + $0x10] sm:$0xff]
  %v20 = vld [vmem:[%s0 + $0x18] sm:$0xff]
  %v21 = vld [vmem:[%s0 + $0x20] sm:$0xff]
  %v22 = vld [vmem:[%s0 + $0x28] sm:$0xff]
  %v23 = vld [vmem:[%s0 + $0x30] sm:$0xff]
  %v24 = vld [vmem:[%s0 + $0x38] sm:$0xff]
  %v25 = vld [vmem:[%s1] sm:$0xff]
  %v26 = vld [vmem:[%s1 + $0x8] sm:$0xff]
  %v27 = vld [vmem:[%s1 + $0x10] sm:$0xff]
  %v28 = vld [vmem:[%s1 + $0x18] sm:$0xff]
  %v29 = vld [vmem:[%s1 + $0x20] sm:$0xff]
  %v30 = vld [vmem:[%s1 + $0x28] sm:$0xff]
  %v31 = vld [vmem:[%s1 + $0x30] sm:$0xff]
  %v32 = vld [vmem:[%s1 + $0x38] sm:$0xff]
  %v33 = vld [vmem:[%s3] sm:$0xff]
  %v34 = vld [vmem:[%s3 + $0x128] sm:$0x1]
  %v35 = vlaneseq
  %v36 = vshrl.u32 %v35, 7
  %v37 = vsub.s32 0, %v36
  %v38 = vrot.slane %v34, %v37
  %vm39 = vcmask 64512
  %v41 = vsel %vm39, %v17, 0
  %v44 = vsel %vm39, %v18, 0
  %v47 = vsel %vm39, %v19, 0
  %v50 = vsel %vm39, %v20, 0
  %v53 = vsel %vm39, %v21, 0
  %v56 = vsel %vm39, %v22, 0
  %v59 = vsel %vm39, %v23, 0
  %v62 = vsel %vm39, %v24, 0
  %64 = vmatprep.subr.mxu0 0.0
  %65 = vmatpush1.msra.mxu0 %v33
  %66 = vmatprep.subr.mxu0 0.0
  %67 = vmatpush1.msra.mxu0 0.0
  %68 = vmatprep.subr.mxu0 0.0
  %69 = vmatpush1.msra.mxu0 0.0
  %70 = vmatprep.subr.mxu0 0.0
  %71 = vmatpush1.msra.mxu0 0.0
  %72 = vmatprep.subr.mxu0 0.0
  %73 = vmatpush1.msra.mxu0 0.0
  %74 = vmatprep.subr.mxu0 0.0
  %75 = vmatpush1.msra.mxu0 0.0
  %76 = vmatprep.subr.mxu0 0.0
  %77 = vmatpush1.msra.mxu0 0.0
  %78 = vmatprep.subr.mxu0 0.0
  %79 = vmatpush1.msra.mxu0 0.0
  %80 = vmatprep.subr.mxu0 0.0
  %81 = vmatpush1.msra.mxu0 0.0
  %82 = vmatprep.subr.mxu0 0.0
  %83 = vmatpush1.msra.mxu0 0.0
  %84 = vmatprep.subr.mxu0 0.0
  %85 = vmatpush1.msra.mxu0 0.0
  %86 = vmatprep.subr.mxu0 0.0
  %87 = vmatpush1.msra.mxu0 0.0
  %88 = vmatprep.subr.mxu0 0.0
  %89 = vmatpush1.msra.mxu0 0.0
  %90 = vmatprep.subr.mxu0 0.0
  %91 = vmatpush1.msra.mxu0 0.0
  %92 = vmatprep.subr.mxu0 0.0
  %93 = vmatpush1.msra.mxu0 0.0
  %94 = vmatprep.subr.mxu0 0.0
  %95 = vmatpush1.msra.mxu0 0.0
  %96 = vmatprep.subr.mxu0 0.0
  %97 = vmatpush1.msra.mxu0 0.0
  %98 = vmatprep.subr.mxu0 0.0
  %99 = vmatpush1.msra.mxu0 0.0
  %100 = vmatprep.subr.mxu0 0.0
  %101 = vmatpush1.msra.mxu0 0.0
  %102 = vmatprep.subr.mxu0 0.0
  %103 = vmatpush1.msra.mxu0 0.0
  %104 = vmatprep.subr.mxu0 0.0
  %105 = vmatpush1.msra.mxu0 0.0
  %106 = vmatprep.subr.mxu0 0.0
  %107 = vmatpush1.msra.mxu0 0.0
  %108 = vmatprep.subr.mxu0 0.0
  %109 = vmatpush1.msra.mxu0 0.0
  %110 = vmatprep.subr.mxu0 0.0
  %111 = vmatpush1.msra.mxu0 0.0
  %112 = vmatprep.subr.mxu0 0.0
  %113 = vmatpush1.msra.mxu0 0.0
  %114 = vmatprep.subr.mxu0 0.0
  %115 = vmatpush1.msra.mxu0 0.0
  %116 = vmatprep.subr.mxu0 0.0
  %117 = vmatpush1.msra.mxu0 0.0
  %118 = vmatprep.subr.mxu0 0.0
  %119 = vmatpush1.msra.mxu0 0.0
  %120 = vmatprep.subr.mxu0 0.0
  %121 = vmatpush1.msra.mxu0 0.0
  %122 = vmatprep.subr.mxu0 0.0
  %123 = vmatpush1.msra.mxu0 0.0
  %124 = vmatprep.subr.mxu0 0.0
  %125 = vmatpush1.msra.mxu0 0.0
  %126 = vmatprep.subr.mxu0 0.0
  %127 = vmatpush1.msra.mxu0 0.0
  %128 = vmatprep.mubr.f32.mxu0 0.0
  %129 = vmatmul.mubr.f32.gmra.mrb[0].mxu0 %v41
  %v130 = vpop.f32.mrb[0].mxu0
  %v131 = vadd.f32 %v38, %v130
  %v132 = vpop.f32.mrb[0].mxu0
  %133 = vmatprep.mubr.f32.mxu0 0.0
  %134 = vmatmul.mubr.f32.gmra.mrb[0].mxu0 %v44
  %v135 = vpop.f32.mrb[0].mxu0
  %v136 = vadd.f32 %v38, %v135
  %v137 = vpop.f32.mrb[0].mxu0
  %138 = vmatprep.mubr.f32.mxu0 0.0
  %139 = vmatmul.mubr.f32.gmra.mrb[0].mxu0 %v47
  %v140 = vpop.f32.mrb[0].mxu0
  %v141 = vadd.f32 %v38, %v140
  %v142 = vpop.f32.mrb[0].mxu0
  %143 = vmatprep.mubr.f32.mxu0 0.0
  %144 = vmatmul.mubr.f32.gmra.mrb[0].mxu0 %v50
  %v145 = vpop.f32.mrb[0].mxu0
  %v146 = vadd.f32 %v38, %v145
  %v147 = vpop.f32.mrb[0].mxu0
  %148 = vmatprep.mubr.f32.mxu0 0.0
  %149 = vmatmul.mubr.f32.gmra.mrb[0].mxu0 %v53
  %v150 = vpop.f32.mrb[0].mxu0
  %v151 = vadd.f32 %v38, %v150
  %v152 = vpop.f32.mrb[0].mxu0
  %153 = vmatprep.mubr.f32.mxu0 0.0
  %154 = vmatmul.mubr.f32.gmra.mrb[0].mxu0 %v56
  %v155 = vpop.f32.mrb[0].mxu0
  %v156 = vadd.f32 %v38, %v155
  %v157 = vpop.f32.mrb[0].mxu0
  %158 = vmatprep.mubr.f32.mxu0 0.0
  %159 = vmatmul.mubr.f32.gmra.mrb[0].mxu0 %v59
  %v160 = vpop.f32.mrb[0].mxu0
  %v161 = vadd.f32 %v38, %v160
  %v162 = vpop.f32.mrb[0].mxu0
  %163 = vmatprep.mubr.f32.mxu0 0.0
  %164 = vmatmul.mubr.f32.gmra.mrb[0].mxu0 %v62
  %v165 = vpop.f32.mrb[0].mxu0
  %v166 = vadd.f32 %v38, %v165
  %v167 = vpop.f32.mrb[0].mxu0
  %168 = vdwg.mxu0
  %v169 = vmax.f32 %v131, 0.0
  %v170 = vmax.f32 %v136, 0.0
  %v171 = vmax.f32 %v141, 0.0
  %v172 = vmax.f32 %v146, 0.0
  %v173 = vmax.f32 %v151, 0.0
  %v174 = vmax.f32 %v156, 0.0
  %v175 = vmax.f32 %v161, 0.0
  %v176 = vmax.f32 %v166, 0.0
  %v177 = vld [vmem:[%s3 + $0x28] sm:$0xff]
  %v178 = vld [vmem:[%s3 + $0x30] sm:$0xff]
  %v179 = vld [vmem:[%s3 + $0x38] sm:$0xff]
  %v180 = vld [vmem:[%s3 + $0x40] sm:$0xff]
  %vm181 = vcmask 261120
  %v183 = vsel %vm181, %v169, 0
  %v186 = vsel %vm181, %v170, 0
  %v189 = vsel %vm181, %v171, 0
  %v192 = vsel %vm181, %v172, 0
  %v195 = vsel %vm181, %v173, 0
  %v198 = vsel %vm181, %v174, 0
  %v201 = vsel %vm181, %v175, 0
  %v204 = vsel %vm181, %v176, 0
  %206 = vmatprep.subr.mxu0 0.0
  %207 = vmatpush1.msra.mxu0 %v177
  %208 = vmatprep.subr.mxu0 0.0
  %209 = vmatpush1.msra.mxu0 %v178
  %210 = vmatprep.subr.mxu0 0.0
  %211 = vmatpush1.msra.mxu0 %v179
  %212 = vmatprep.subr.mxu0 0.0
  %213 = vmatpush1.msra.mxu0 %v180
  %214 = vmatprep.subr.mxu0 0.0
  %215 = vmatpush1.msra.mxu0 0.0
  %216 = vmatprep.subr.mxu0 0.0
  %217 = vmatpush1.msra.mxu0 0.0
  %218 = vmatprep.subr.mxu0 0.0
  %219 = vmatpush1.msra.mxu0 0.0
  %220 = vmatprep.subr.mxu0 0.0
  %221 = vmatpush1.msra.mxu0 0.0
  %222 = vmatprep.subr.mxu0 0.0
  %223 = vmatpush1.msra.mxu0 0.0
  %224 = vmatprep.subr.mxu0 0.0
  %225 = vmatpush1.msra.mxu0 0.0
  %226 = vmatprep.subr.mxu0 0.0
  %227 = vmatpush1.msra.mxu0 0.0
  %228 = vmatprep.subr.mxu0 0.0
  %229 = vmatpush1.msra.mxu0 0.0
  %230 = vmatprep.subr.mxu0 0.0
  %231 = vmatpush1.msra.mxu0 0.0
  %232 = vmatprep.subr.mxu0 0.0
  %233 = vmatpush1.msra.mxu0 0.0
  %234 = vmatprep.subr.mxu0 0.0
  %235 = vmatpush1.msra.mxu0 0.0
  %236 = vmatprep.subr.mxu0 0.0
  %237 = vmatpush1.msra.mxu0 0.0
  %238 = vmatprep.subr.mxu0 0.0
  %239 = vmatpush1.msra.mxu0 0.0
  %240 = vmatprep.subr.mxu0 0.0
  %241 = vmatpush1.msra.mxu0 0.0
  %242 = vmatprep.subr.mxu0 0.0
  %243 = vmatpush1.msra.mxu0 0.0
  %244 = vmatprep.subr.mxu0 0.0
  %245 = vmatpush1.msra.mxu0 0.0
  %246 = vmatprep.subr.mxu0 0.0
  %247 = vmatpush1.msra.mxu0 0.0
  %248 = vmatprep.subr.mxu0 0.0
  %249 = vmatpush1.msra.mxu0 0.0
  %250 = vmatprep.subr.mxu0 0.0
  %251 = vmatpush1.msra.mxu0 0.0
  %252 = vmatprep.subr.mxu0 0.0
  %253 = vmatpush1.msra.mxu0 0.0
  %254 = vmatprep.subr.mxu0 0.0
  %255 = vmatpush1.msra.mxu0 0.0
  %256 = vmatprep.subr.mxu0 0.0
  %257 = vmatpush1.msra.mxu0 0.0
  %258 = vmatprep.subr.mxu0 0.0
  %259 = vmatpush1.msra.mxu0 0.0
  %260 = vmatprep.subr.mxu0 0.0
  %261 = vmatpush1.msra.mxu0 0.0
  %262 = vmatprep.subr.mxu0 0.0
  %263 = vmatpush1.msra.mxu0 0.0
  %264 = vmatprep.subr.mxu0 0.0
  %265 = vmatpush1.msra.mxu0 0.0
  %266 = vmatprep.subr.mxu0 0.0
  %267 = vmatpush1.msra.mxu0 0.0
  %268 = vmatprep.subr.mxu0 0.0
  %269 = vmatpush1.msra.mxu0 0.0
  %270 = vmatprep.mubr.f32.mxu0 0.0
  %271 = vmatmul.mubr.f32.gmra.mrb[0].mxu0 %v183
  %v272 = vpop.f32.mrb[0].mxu0
  %v273 = vadd.f32 0.0, %v272
  %v274 = vpop.f32.mrb[0].mxu0
  %275 = vmatprep.mubr.f32.mxu0 0.0
  %276 = vmatmul.mubr.f32.gmra.mrb[0].mxu0 %v186
  %v277 = vpop.f32.mrb[0].mxu0
  %v278 = vadd.f32 0.0, %v277
  %v279 = vpop.f32.mrb[0].mxu0
  %280 = vmatprep.mubr.f32.mxu0 0.0
  %281 = vmatmul.mubr.f32.gmra.mrb[0].mxu0 %v189
  %v282 = vpop.f32.mrb[0].mxu0
  %v283 = vadd.f32 0.0, %v282
  %v284 = vpop.f32.mrb[0].mxu0
  %285 = vmatprep.mubr.f32.mxu0 0.0
  %286 = vmatmul.mubr.f32.gmra.mrb[0].mxu0 %v192
  %v287 = vpop.f32.mrb[0].mxu0
  %v288 = vadd.f32 0.0, %v287
  %v289 = vpop.f32.mrb[0].mxu0
  %290 = vmatprep.mubr.f32.mxu0 0.0
  %291 = vmatmul.mubr.f32.gmra.mrb[0].mxu0 %v195
  %v292 = vpop.f32.mrb[0].mxu0
  %v293 = vadd.f32 0.0, %v292
  %v294 = vpop.f32.mrb[0].mxu0
  %295 = vmatprep.mubr.f32.mxu0 0.0
  %296 = vmatmul.mubr.f32.gmra.mrb[0].mxu0 %v198
  %v297 = vpop.f32.mrb[0].mxu0
  %v298 = vadd.f32 0.0, %v297
  %v299 = vpop.f32.mrb[0].mxu0
  %300 = vmatprep.mubr.f32.mxu0 0.0
  %301 = vmatmul.mubr.f32.gmra.mrb[0].mxu0 %v201
  %v302 = vpop.f32.mrb[0].mxu0
  %v303 = vadd.f32 0.0, %v302
  %v304 = vpop.f32.mrb[0].mxu0
  %305 = vmatprep.mubr.f32.mxu0 0.0
  %306 = vmatmul.mubr.f32.gmra.mrb[0].mxu0 %v204
  %v307 = vpop.f32.mrb[0].mxu0
  %v308 = vadd.f32 0.0, %v307
  %v309 = vpop.f32.mrb[0].mxu0
  %310 = vdwg.mxu0
  %v311 = vld [vmem:[%s3 + $0x129] sm:$0x1]
  %v312 = vlaneseq
  %v313 = vshrl.u32 %v312, 7
  %v314 = vsub.s32 0, %v313
  %v315 = vrot.slane %v311, %v314
  %vm316 = vcmask 523264
  %v318 = vsel %vm316, %v25, 0
  %v321 = vsel %vm316, %v26, 0
  %v324 = vsel %vm316, %v27, 0
  %v327 = vsel %vm316, %v28, 0
  %v330 = vsel %vm316, %v29, 0
  %v333 = vsel %vm316, %v30, 0
  %v336 = vsel %vm316, %v31, 0
  %v339 = vsel %vm316, %v32, 0
  %341 = vmatprep.subr.mxu0 0.0
  %342 = vmatpush1.msra.mxu0 %v273
  %343 = vmatprep.subr.mxu0 0.0
  %344 = vmatpush1.msra.mxu0 %v278
  %345 = vmatprep.subr.mxu0 0.0
  %346 = vmatpush1.msra.mxu0 %v283
  %347 = vmatprep.subr.mxu0 0.0
  %348 = vmatpush1.msra.mxu0 %v288
  %349 = vmatprep.subr.mxu0 0.0
  %350 = vmatpush1.msra.mxu0 %v293
  %351 = vmatprep.subr.mxu0 0.0
  %352 = vmatpush1.msra.mxu0 %v298
  %353 = vmatprep.subr.mxu0 0.0
  %354 = vmatpush1.msra.mxu0 %v303
  %355 = vmatprep.subr.mxu0 0.0
  %356 = vmatpush1.msra.mxu0 %v308
  %357 = vmatprep.subr.mxu0 0.0
  %358 = vmatpush1.msra.mxu0 0.0
  %359 = vmatprep.subr.mxu0 0.0
  %360 = vmatpush1.msra.mxu0 0.0
  %361 = vmatprep.subr.mxu0 0.0
  %362 = vmatpush1.msra.mxu0 0.0
  %363 = vmatprep.subr.mxu0 0.0
  %364 = vmatpush1.msra.mxu0 0.0
  %365 = vmatprep.subr.mxu0 0.0
  %366 = vmatpush1.msra.mxu0 0.0
  %367 = vmatprep.subr.mxu0 0.0
  %368 = vmatpush1.msra.mxu0 0.0
  %369 = vmatprep.subr.mxu0 0.0
  %370 = vmatpush1.msra.mxu0 0.0
  %371 = vmatprep.subr.mxu0 0.0
  %372 = vmatpush1.msra.mxu0 0.0
  %373 = vmatprep.subr.mxu0 0.0
  %374 = vmatpush1.msra.mxu0 0.0
  %375 = vmatprep.subr.mxu0 0.0
  %376 = vmatpush1.msra.mxu0 0.0
  %377 = vmatprep.subr.mxu0 0.0
  %378 = vmatpush1.msra.mxu0 0.0
  %379 = vmatprep.subr.mxu0 0.0
  %380 = vmatpush1.msra.mxu0 0.0
  %381 = vmatprep.subr.mxu0 0.0
  %382 = vmatpush1.msra.mxu0 0.0
  %383 = vmatprep.subr.mxu0 0.0
  %384 = vmatpush1.msra.mxu0 0.0
  %385 = vmatprep.subr.mxu0 0.0
  %386 = vmatpush1.msra.mxu0 0.0
  %387 = vmatprep.subr.mxu0 0.0
  %388 = vmatpush1.msra.mxu0 0.0
  %389 = vmatprep.subr.mxu0 0.0
  %390 = vmatpush1.msra.mxu0 0.0
  %391 = vmatprep.subr.mxu0 0.0
  %392 = vmatpush1.msra.mxu0 0.0
  %393 = vmatprep.subr.mxu0 0.0
  %394 = vmatpush1.msra.mxu0 0.0
  %395 = vmatprep.subr.mxu0 0.0
  %396 = vmatpush1.msra.mxu0 0.0
  %397 = vmatprep.subr.mxu0 0.0
  %398 = vmatpush1.msra.mxu0 0.0
  %399 = vmatprep.subr.mxu0 0.0
  %400 = vmatpush1.msra.mxu0 0.0
  %401 = vmatprep.subr.mxu0 0.0
  %402 = vmatpush1.msra.mxu0 0.0
  %403 = vmatprep.subr.mxu0 0.0
  %404 = vmatpush1.msra.mxu0 0.0
  %405 = vmatprep.mubr.f32.mxu0 0.0
  %406 = vmatmul.mubr.f32.gmra.mrb[0].mxu0 %v318
  %v407 = vpop.f32.mrb[0].mxu0
  %v408 = vadd.f32 %v315, %v407
  %v409 = vpop.f32.mrb[0].mxu0
  %410 = vmatprep.mubr.f32.mxu0 0.0
  %411 = vmatmul.mubr.f32.gmra.mrb[0].mxu0 %v321
  %v412 = vpop.f32.mrb[0].mxu0
  %v413 = vadd.f32 %v315, %v412
  %v414 = vpop.f32.mrb[0].mxu0
  %415 = vmatprep.mubr.f32.mxu0 0.0
  %416 = vmatmul.mubr.f32.gmra.mrb[0].mxu0 %v324
  %v417 = vpop.f32.mrb[0].mxu0
  %v418 = vadd.f32 %v315, %v417
  %v419 = vpop.f32.mrb[0].mxu0
  %420 = vmatprep.mubr.f32.mxu0 0.0
  %421 = vmatmul.mubr.f32.gmra.mrb[0].mxu0 %v327
  %v422 = vpop.f32.mrb[0].mxu0
  %v423 = vadd.f32 %v315, %v422
  %v424 = vpop.f32.mrb[0].mxu0
  %425 = vmatprep.mubr.f32.mxu0 0.0
  %426 = vmatmul.mubr.f32.gmra.mrb[0].mxu0 %v330
  %v427 = vpop.f32.mrb[0].mxu0
  %v428 = vadd.f32 %v315, %v427
  %v429 = vpop.f32.mrb[0].mxu0
  %430 = vmatprep.mubr.f32.mxu0 0.0
  %431 = vmatmul.mubr.f32.gmra.mrb[0].mxu0 %v333
  %v432 = vpop.f32.mrb[0].mxu0
  %v433 = vadd.f32 %v315, %v432
  %v434 = vpop.f32.mrb[0].mxu0
  %435 = vmatprep.mubr.f32.mxu0 0.0
  %436 = vmatmul.mubr.f32.gmra.mrb[0].mxu0 %v336
  %v437 = vpop.f32.mrb[0].mxu0
  %v438 = vadd.f32 %v315, %v437
  %v439 = vpop.f32.mrb[0].mxu0
  %440 = vmatprep.mubr.f32.mxu0 0.0
  %441 = vmatmul.mubr.f32.gmra.mrb[0].mxu0 %v339
  %v442 = vpop.f32.mrb[0].mxu0
  %v443 = vadd.f32 %v315, %v442
  %v444 = vpop.f32.mrb[0].mxu0
  %445 = vdwg.mxu0
  %v446 = vadd.f32 %v408, %v169
  %v447 = vadd.f32 %v413, %v170
  %v448 = vadd.f32 %v418, %v171
  %v449 = vadd.f32 %v423, %v172
  %v450 = vadd.f32 %v428, %v173
  %v451 = vadd.f32 %v433, %v174
  %v452 = vadd.f32 %v438, %v175
  %v453 = vadd.f32 %v443, %v176
  %v454 = vmax.f32 %v446, 0.0
  %v455 = vmax.f32 %v447, 0.0
  %v456 = vmax.f32 %v448, 0.0
  %v457 = vmax.f32 %v449, 0.0
  %v458 = vmax.f32 %v450, 0.0
  %v459 = vmax.f32 %v451, 0.0
  %v460 = vmax.f32 %v452, 0.0
  %v461 = vmax.f32 %v453, 0.0
  %v462 = vsel %vm181, %v454, 0.0
  %463 = vadd.xlane.f32.xlu0 %v462
  %v464 = vpop.xlane.xlu0 %463
  %v465 = vsel %vm181, %v455, 0.0
  %466 = vadd.xlane.f32.xlu0 %v465
  %v467 = vpop.xlane.xlu0 %466
  %v468 = vsel %vm181, %v456, 0.0
  %469 = vadd.xlane.f32.xlu0 %v468
  %v470 = vpop.xlane.xlu0 %469
  %v471 = vsel %vm181, %v457, 0.0
  %472 = vadd.xlane.f32.xlu0 %v471
  %v473 = vpop.xlane.xlu0 %472
  %v474 = vsel %vm181, %v458, 0.0
  %475 = vadd.xlane.f32.xlu0 %v474
  %v476 = vpop.xlane.xlu0 %475
  %v477 = vsel %vm181, %v459, 0.0
  %478 = vadd.xlane.f32.xlu0 %v477
  %v479 = vpop.xlane.xlu0 %478
  %v480 = vsel %vm181, %v460, 0.0
  %481 = vadd.xlane.f32.xlu0 %v480
  %v482 = vpop.xlane.xlu0 %481
  %v483 = vsel %vm181, %v461, 0.0
  %484 = vadd.xlane.f32.xlu0 %v483
  %v485 = vpop.xlane.xlu0 %484
  %v486 = vrcp.pop 32.0
  %v487 = vmul.f32 %v464, %v486
  %v488 = vmul.f32 %v467, %v486
  %v489 = vmul.f32 %v470, %v486
  %v490 = vmul.f32 %v473, %v486
  %v491 = vmul.f32 %v476, %v486
  %v492 = vmul.f32 %v479, %v486
  %v493 = vmul.f32 %v482, %v486
  %v494 = vmul.f32 %v485, %v486
  %v495 = vsub.f32 %v454, %v487
  %v496 = vsub.f32 %v455, %v488
  %v497 = vsub.f32 %v456, %v489
  %v498 = vsub.f32 %v457, %v490
  %v499 = vsub.f32 %v458, %v491
  %v500 = vsub.f32 %v459, %v492
  %v501 = vsub.f32 %v460, %v493
  %v502 = vsub.f32 %v461, %v494
  %v503 = vmul.f32 %v495, %v495
  %v504 = vmul.f32 %v496, %v496
  %v505 = vmul.f32 %v497, %v497
  %v506 = vmul.f32 %v498, %v498
  %v507 = vmul.f32 %v499, %v499
  %v508 = vmul.f32 %v500, %v500
  %v509 = vmul.f32 %v501, %v501
  %v510 = vmul.f32 %v502, %v502
  %v511 = vsel %vm181, %v503, 0.0
  %512 = vadd.xlane.f32.xlu0 %v511
  %v513 = vpop.xlane.xlu0 %512
  %v514 = vsel %vm181, %v504, 0.0
  %515 = vadd.xlane.f32.xlu0 %v514
  %v516 = vpop.xlane.xlu0 %515
  %v517 = vsel %vm181, %v505, 0.0
  %518 = vadd.xlane.f32.xlu0 %v517
  %v519 = vpop.xlane.xlu0 %518
  %v520 = vsel %vm181, %v506, 0.0
  %521 = vadd.xlane.f32.xlu0 %v520
  %v522 = vpop.xlane.xlu0 %521
  %v523 = vsel %vm181, %v507, 0.0
  %524 = vadd.xlane.f32.xlu0 %v523
  %v525 = vpop.xlane.xlu0 %524
  %v526 = vsel %vm181, %v508, 0.0
  %527 = vadd.xlane.f32.xlu0 %v526
  %v528 = vpop.xlane.xlu0 %527
  %v529 = vsel %vm181, %v509, 0.0
  %530 = vadd.xlane.f32.xlu0 %v529
  %v531 = vpop.xlane.xlu0 %530
  %v532 = vsel %vm181, %v510, 0.0
  %533 = vadd.xlane.f32.xlu0 %v532
  %v534 = vpop.xlane.xlu0 %533
  %v535 = vmul.f32 %v513, %v486
  %v536 = vmul.f32 %v516, %v486
  %v537 = vmul.f32 %v519, %v486
  %v538 = vmul.f32 %v522, %v486
  %v539 = vmul.f32 %v525, %v486
  %v540 = vmul.f32 %v528, %v486
  %v541 = vmul.f32 %v531, %v486
  %v542 = vmul.f32 %v534, %v486
  %v543 = vadd.f32 %v535, 1e-05
  %v544 = vadd.f32 %v536, 1e-05
  %v545 = vadd.f32 %v537, 1e-05
  %v546 = vadd.f32 %v538, 1e-05
  %v547 = vadd.f32 %v539, 1e-05
  %v548 = vadd.f32 %v540, 1e-05
  %v549 = vadd.f32 %v541, 1e-05
  %v550 = vadd.f32 %v542, 1e-05
  %v551 = vrsqrt.pop %v543
  %v552 = vrsqrt.pop %v544
  %v553 = vrsqrt.pop %v545
  %v554 = vrsqrt.pop %v546
  %v555 = vrsqrt.pop %v547
  %v556 = vrsqrt.pop %v548
  %v557 = vrsqrt.pop %v549
  %v558 = vrsqrt.pop %v550
  %v559 = vmul.f32 %v495, %v551
  %v560 = vmul.f32 %v496, %v552
  %v561 = vmul.f32 %v497, %v553
  %v562 = vmul.f32 %v498, %v554
  %v563 = vmul.f32 %v499, %v555
  %v564 = vmul.f32 %v500, %v556
  %v565 = vmul.f32 %v501, %v557
  %v566 = vmul.f32 %v502, %v558
  %v567 = vld [vmem:[%s3 + $0x12f] sm:$0x1]
  %v568 = vlaneseq
  %v569 = vshrl.u32 %v568, 7
  %v570 = vsub.s32 0, %v569
  %v571 = vrot.slane %v567, %v570
  %v572 = vmul.f32 %v559, %v571
  %v573 = vmul.f32 %v560, %v571
  %v574 = vmul.f32 %v561, %v571
  %v575 = vmul.f32 %v562, %v571
  %v576 = vmul.f32 %v563, %v571
  %v577 = vmul.f32 %v564, %v571
  %v578 = vmul.f32 %v565, %v571
  %v579 = vmul.f32 %v566, %v571
  %v580 = vld [vmem:[%s3 + $0x135] sm:$0x1]
  %v581 = vlaneseq
  %v582 = vshrl.u32 %v581, 7
  %v583 = vsub.s32 0, %v582
  %v584 = vrot.slane %v580, %v583
  %v585 = vadd.f32 %v572, %v584
  %v586 = vadd.f32 %v573, %v584
  %v587 = vadd.f32 %v574, %v584
  %v588 = vadd.f32 %v575, %v584
  %v589 = vadd.f32 %v576, %v584
  %v590 = vadd.f32 %v577, %v584
  %v591 = vadd.f32 %v578, %v584
  %v592 = vadd.f32 %v579, %v584
  %v593 = vld [vmem:[%s3 + $0x48] sm:$0xff]
  %v594 = vld [vmem:[%s3 + $0x50] sm:$0xff]
  %v595 = vld [vmem:[%s3 + $0x58] sm:$0xff]
  %v596 = vld [vmem:[%s3 + $0x60] sm:$0xff]
  %v598 = vsel %vm181, %v585, 0
  %v601 = vsel %vm181, %v586, 0
  %v604 = vsel %vm181, %v587, 0
  %v607 = vsel %vm181, %v588, 0
  %v610 = vsel %vm181, %v589, 0
  %v613 = vsel %vm181, %v590, 0
  %v616 = vsel %vm181, %v591, 0
  %v619 = vsel %vm181, %v592, 0
  %621 = vmatprep.subr.mxu0 0.0
  %622 = vmatpush1.msra.mxu0 %v593
  %623 = vmatprep.subr.mxu0 0.0
  %624 = vmatpush1.msra.mxu0 %v594
  %625 = vmatprep.subr.mxu0 0.0
  %626 = vmatpush1.msra.mxu0 %v595
  %627 = vmatprep.subr.mxu0 0.0
  %628 = vmatpush1.msra.mxu0 %v596
  %629 = vmatprep.subr.mxu0 0.0
  %630 = vmatpush1.msra.mxu0 0.0
  %631 = vmatprep.subr.mxu0 0.0
  %632 = vmatpush1.msra.mxu0 0.0
  %633 = vmatprep.subr.mxu0 0.0
  %634 = vmatpush1.msra.mxu0 0.0
  %635 = vmatprep.subr.mxu0 0.0
  %636 = vmatpush1.msra.mxu0 0.0
  %637 = vmatprep.subr.mxu0 0.0
  %638 = vmatpush1.msra.mxu0 0.0
  %639 = vmatprep.subr.mxu0 0.0
  %640 = vmatpush1.msra.mxu0 0.0
  %641 = vmatprep.subr.mxu0 0.0
  %642 = vmatpush1.msra.mxu0 0.0
  %643 = vmatprep.subr.mxu0 0.0
  %644 = vmatpush1.msra.mxu0 0.0
  %645 = vmatprep.subr.mxu0 0.0
  %646 = vmatpush1.msra.mxu0 0.0
  %647 = vmatprep.subr.mxu0 0.0
  %648 = vmatpush1.msra.mxu0 0.0
  %649 = vmatprep.subr.mxu0 0.0
  %650 = vmatpush1.msra.mxu0 0.0
  %651 = vmatprep.subr.mxu0 0.0
  %652 = vmatpush1.msra.mxu0 0.0
  %653 = vmatprep.subr.mxu0 0.0
  %654 = vmatpush1.msra.mxu0 0.0
  %655 = vmatprep.subr.mxu0 0.0
  %656 = vmatpush1.msra.mxu0 0.0
  %657 = vmatprep.subr.mxu0 0.0
  %658 = vmatpush1.msra.mxu0 0.0
  %659 = vmatprep.subr.mxu0 0.0
  %660 = vmatpush1.msra.mxu0 0.0
  %661 = vmatprep.subr.mxu0 0.0
  %662 = vmatpush1.msra.mxu0 0.0
  %663 = vmatprep.subr.mxu0 0.0
  %664 = vmatpush1.msra.mxu0 0.0
  %665 = vmatprep.subr.mxu0 0.0
  %666 = vmatpush1.msra.mxu0 0.0
  %667 = vmatprep.subr.mxu0 0.0
  %668 = vmatpush1.msra.mxu0 0.0
  %669 = vmatprep.subr.mxu0 0.0
  %670 = vmatpush1.msra.mxu0 0.0
  %671 = vmatprep.subr.mxu0 0.0
  %672 = vmatpush1.msra.mxu0 0.0
  %673 = vmatprep.subr.mxu0 0.0
  %674 = vmatpush1.msra.mxu0 0.0
  %675 = vmatprep.subr.mxu0 0.0
  %676 = vmatpush1.msra.mxu0 0.0
  %677 = vmatprep.subr.mxu0 0.0
  %678 = vmatpush1.msra.mxu0 0.0
  %679 = vmatprep.subr.mxu0 0.0
  %680 = vmatpush1.msra.mxu0 0.0
  %681 = vmatprep.subr.mxu0 0.0
  %682 = vmatpush1.msra.mxu0 0.0
  %683 = vmatprep.subr.mxu0 0.0
  %684 = vmatpush1.msra.mxu0 0.0
  %685 = vmatprep.mubr.f32.mxu0 0.0
  %686 = vmatmul.mubr.f32.gmra.mrb[0].mxu0 %v598
  %v687 = vpop.f32.mrb[0].mxu0
  %v688 = vadd.f32 0.0, %v687
  %v689 = vpop.f32.mrb[0].mxu0
  %690 = vmatprep.mubr.f32.mxu0 0.0
  %691 = vmatmul.mubr.f32.gmra.mrb[0].mxu0 %v601
  %v692 = vpop.f32.mrb[0].mxu0
  %v693 = vadd.f32 0.0, %v692
  %v694 = vpop.f32.mrb[0].mxu0
  %695 = vmatprep.mubr.f32.mxu0 0.0
  %696 = vmatmul.mubr.f32.gmra.mrb[0].mxu0 %v604
  %v697 = vpop.f32.mrb[0].mxu0
  %v698 = vadd.f32 0.0, %v697
  %v699 = vpop.f32.mrb[0].mxu0
  %700 = vmatprep.mubr.f32.mxu0 0.0
  %701 = vmatmul.mubr.f32.gmra.mrb[0].mxu0 %v607
  %v702 = vpop.f32.mrb[0].mxu0
  %v703 = vadd.f32 0.0, %v702
  %v704 = vpop.f32.mrb[0].mxu0
  %705 = vmatprep.mubr.f32.mxu0 0.0
  %706 = vmatmul.mubr.f32.gmra.mrb[0].mxu0 %v610
  %v707 = vpop.f32.mrb[0].mxu0
  %v708 = vadd.f32 0.0, %v707
  %v709 = vpop.f32.mrb[0].mxu0
  %710 = vmatprep.mubr.f32.mxu0 0.0
  %711 = vmatmul.mubr.f32.gmra.mrb[0].mxu0 %v613
  %v712 = vpop.f32.mrb[0].mxu0
  %v713 = vadd.f32 0.0, %v712
  %v714 = vpop.f32.mrb[0].mxu0
  %715 = vmatprep.mubr.f32.mxu0 0.0
  %716 = vmatmul.mubr.f32.gmra.mrb[0].mxu0 %v616
  %v717 = vpop.f32.mrb[0].mxu0
  %v718 = vadd.f32 0.0, %v717
  %v719 = vpop.f32.mrb[0].mxu0
  %720 = vmatprep.mubr.f32.mxu0 0.0
  %721 = vmatmul.mubr.f32.gmra.mrb[0].mxu0 %v619
  %v722 = vpop.f32.mrb[0].mxu0
  %v723 = vadd.f32 0.0, %v722
  %v724 = vpop.f32.mrb[0].mxu0
  %725 = vdwg.mxu0
  %v726 = vld [vmem:[%s3 + $0x12a] sm:$0x1]
  %v727 = vlaneseq
  %v728 = vshrl.u32 %v727, 7
  %v729 = vsub.s32 0, %v728
  %v730 = vrot.slane %v726, %v729
  %731 = vmatprep.subr.mxu0 0.0
  %732 = vmatpush1.msra.mxu0 %v688
  %733 = vmatprep.subr.mxu0 0.0
  %734 = vmatpush1.msra.mxu0 %v693
  %735 = vmatprep.subr.mxu0 0.0
  %736 = vmatpush1.msra.mxu0 %v698
  %737 = vmatprep.subr.mxu0 0.0
  %738 = vmatpush1.msra.mxu0 %v703
  %739 = vmatprep.subr.mxu0 0.0
  %740 = vmatpush1.msra.mxu0 %v708
  %741 = vmatprep.subr.mxu0 0.0
  %742 = vmatpush1.msra.mxu0 %v713
  %743 = vmatprep.subr.mxu0 0.0
  %744 = vmatpush1.msra.mxu0 %v718
  %745 = vmatprep.subr.mxu0 0.0
  %746 = vmatpush1.msra.mxu0 %v723
  %747 = vmatprep.subr.mxu0 0.0
  %748 = vmatpush1.msra.mxu0 0.0
  %749 = vmatprep.subr.mxu0 0.0
  %750 = vmatpush1.msra.mxu0 0.0
  %751 = vmatprep.subr.mxu0 0.0
  %752 = vmatpush1.msra.mxu0 0.0
  %753 = vmatprep.subr.mxu0 0.0
  %754 = vmatpush1.msra.mxu0 0.0
  %755 = vmatprep.subr.mxu0 0.0
  %756 = vmatpush1.msra.mxu0 0.0
  %757 = vmatprep.subr.mxu0 0.0
  %758 = vmatpush1.msra.mxu0 0.0
  %759 = vmatprep.subr.mxu0 0.0
  %760 = vmatpush1.msra.mxu0 0.0
  %761 = vmatprep.subr.mxu0 0.0
  %762 = vmatpush1.msra.mxu0 0.0
  %763 = vmatprep.subr.mxu0 0.0
  %764 = vmatpush1.msra.mxu0 0.0
  %765 = vmatprep.subr.mxu0 0.0
  %766 = vmatpush1.msra.mxu0 0.0
  %767 = vmatprep.subr.mxu0 0.0
  %768 = vmatpush1.msra.mxu0 0.0
  %769 = vmatprep.subr.mxu0 0.0
  %770 = vmatpush1.msra.mxu0 0.0
  %771 = vmatprep.subr.mxu0 0.0
  %772 = vmatpush1.msra.mxu0 0.0
  %773 = vmatprep.subr.mxu0 0.0
  %774 = vmatpush1.msra.mxu0 0.0
  %775 = vmatprep.subr.mxu0 0.0
  %776 = vmatpush1.msra.mxu0 0.0
  %777 = vmatprep.subr.mxu0 0.0
  %778 = vmatpush1.msra.mxu0 0.0
  %779 = vmatprep.subr.mxu0 0.0
  %780 = vmatpush1.msra.mxu0 0.0
  %781 = vmatprep.subr.mxu0 0.0
  %782 = vmatpush1.msra.mxu0 0.0
  %783 = vmatprep.subr.mxu0 0.0
  %784 = vmatpush1.msra.mxu0 0.0
  %785 = vmatprep.subr.mxu0 0.0
  %786 = vmatpush1.msra.mxu0 0.0
  %787 = vmatprep.subr.mxu0 0.0
  %788 = vmatpush1.msra.mxu0 0.0
  %789 = vmatprep.subr.mxu0 0.0
  %790 = vmatpush1.msra.mxu0 0.0
  %791 = vmatprep.subr.mxu0 0.0
  %792 = vmatpush1.msra.mxu0 0.0
  %793 = vmatprep.subr.mxu0 0.0
  %794 = vmatpush1.msra.mxu0 0.0
  %795 = vmatprep.mubr.f32.mxu0 0.0
  %796 = vmatmul.mubr.f32.gmra.mrb[0].mxu0 %v318
  %v797 = vpop.f32.mrb[0].mxu0
  %v798 = vadd.f32 %v730, %v797
  %v799 = vpop.f32.mrb[0].mxu0
  %800 = vmatprep.mubr.f32.mxu0 0.0
  %801 = vmatmul.mubr.f32.gmra.mrb[0].mxu0 %v321
  %v802 = vpop.f32.mrb[0].mxu0
  %v803 = vadd.f32 %v730, %v802
  %v804 = vpop.f32.mrb[0].mxu0
  %805 = vmatprep.mubr.f32.mxu0 0.0
  %806 = vmatmul.mubr.f32.gmra.mrb[0].mxu0 %v324
  %v807 = vpop.f32.mrb[0].mxu0
  %v808 = vadd.f32 %v730, %v807
  %v809 = vpop.f32.mrb[0].mxu0
  %810 = vmatprep.mubr.f32.mxu0 0.0
  %811 = vmatmul.mubr.f32.gmra.mrb[0].mxu0 %v327
  %v812 = vpop.f32.mrb[0].mxu0
  %v813 = vadd.f32 %v730, %v812
  %v814 = vpop.f32.mrb[0].mxu0
  %815 = vmatprep.mubr.f32.mxu0 0.0
  %816 = vmatmul.mubr.f32.gmra.mrb[0].mxu0 %v330
  %v817 = vpop.f32.mrb[0].mxu0
  %v818 = vadd.f32 %v730, %v817
  %v819 = vpop.f32.mrb[0].mxu0
  %820 = vmatprep.mubr.f32.mxu0 0.0
  %821 = vmatmul.mubr.f32.gmra.mrb[0].mxu0 %v333
  %v822 = vpop.f32.mrb[0].mxu0
  %v823 = vadd.f32 %v730, %v822
  %v824 = vpop.f32.mrb[0].mxu0
  %825 = vmatprep.mubr.f32.mxu0 0.0
  %826 = vmatmul.mubr.f32.gmra.mrb[0].mxu0 %v336
  %v827 = vpop.f32.mrb[0].mxu0
  %v828 = vadd.f32 %v730, %v827
  %v829 = vpop.f32.mrb[0].mxu0
  %830 = vmatprep.mubr.f32.mxu0 0.0
  %831 = vmatmul.mubr.f32.gmra.mrb[0].mxu0 %v339
  %v832 = vpop.f32.mrb[0].mxu0
  %v833 = vadd.f32 %v730, %v832
  %v834 = vpop.f32.mrb[0].mxu0
  %835 = vdwg.mxu0
  %v836 = vadd.f32 %v798, %v585
  %v837 = vadd.f32 %v803, %v586
  %v838 = vadd.f32 %v808, %v587
  %v839 = vadd.f32 %v813, %v588
  %v840 = vadd.f32 %v818, %v589
  %v841 = vadd.f32 %v823, %v590
  %v842 = vadd.f32 %v828, %v591
  %v843 = vadd.f32 %v833, %v592
  %v844 = vmax.f32 %v836, 0.0
  %v845 = vmax.f32 %v837, 0.0
  %v846 = vmax.f32 %v838, 0.0
  %v847 = vmax.f32 %v839, 0.0
  %v848 = vmax.f32 %v840, 0.0
  %v849 = vmax.f32 %v841, 0.0
  %v850 = vmax.f32 %v842, 0.0
  %v851 = vmax.f32 %v843, 0.0
  %v852 = vsel %vm181, %v844, 0.0
  %853 = vadd.xlane.f32.xlu0 %v852
  %v854 = vpop.xlane.xlu0 %853
  %v855 = vsel %vm181, %v845, 0.0
  %856 = vadd.xlane.f32.xlu0 %v855
  %v857 = vpop.xlane.xlu0 %856
  %v858 = vsel %vm181, %v846, 0.0
  %859 = vadd.xlane.f32.xlu0 %v858
  %v860 = vpop.xlane.xlu0 %859
  %v861 = vsel %vm181, %v847, 0.0
  %862 = vadd.xlane.f32.xlu0 %v861
  %v863 = vpop.xlane.xlu0 %862
  %v864 = vsel %vm181, %v848, 0.0
  %865 = vadd.xlane.f32.xlu0 %v864
  %v866 = vpop.xlane.xlu0 %865
  %v867 = vsel %vm181, %v849, 0.0
  %868 = vadd.xlane.f32.xlu0 %v867
  %v869 = vpop.xlane.xlu0 %868
  %v870 = vsel %vm181, %v850, 0.0
  %871 = vadd.xlane.f32.xlu0 %v870
  %v872 = vpop.xlane.xlu0 %871
  %v873 = vsel %vm181, %v851, 0.0
  %874 = vadd.xlane.f32.xlu0 %v873
  %v875 = vpop.xlane.xlu0 %874
  %v876 = vmul.f32 %v854, %v486
  %v877 = vmul.f32 %v857, %v486
  %v878 = vmul.f32 %v860, %v486
  %v879 = vmul.f32 %v863, %v486
  %v880 = vmul.f32 %v866, %v486
  %v881 = vmul.f32 %v869, %v486
  %v882 = vmul.f32 %v872, %v486
  %v883 = vmul.f32 %v875, %v486
  %v884 = vsub.f32 %v844, %v876
  %v885 = vsub.f32 %v845, %v877
  %v886 = vsub.f32 %v846, %v878
  %v887 = vsub.f32 %v847, %v879
  %v888 = vsub.f32 %v848, %v880
  %v889 = vsub.f32 %v849, %v881
  %v890 = vsub.f32 %v850, %v882
  %v891 = vsub.f32 %v851, %v883
  %v892 = vmul.f32 %v884, %v884
  %v893 = vmul.f32 %v885, %v885
  %v894 = vmul.f32 %v886, %v886
  %v895 = vmul.f32 %v887, %v887
  %v896 = vmul.f32 %v888, %v888
  %v897 = vmul.f32 %v889, %v889
  %v898 = vmul.f32 %v890, %v890
  %v899 = vmul.f32 %v891, %v891
  %v900 = vsel %vm181, %v892, 0.0
  %901 = vadd.xlane.f32.xlu0 %v900
  %v902 = vpop.xlane.xlu0 %901
  %v903 = vsel %vm181, %v893, 0.0
  %904 = vadd.xlane.f32.xlu0 %v903
  %v905 = vpop.xlane.xlu0 %904
  %v906 = vsel %vm181, %v894, 0.0
  %907 = vadd.xlane.f32.xlu0 %v906
  %v908 = vpop.xlane.xlu0 %907
  %v909 = vsel %vm181, %v895, 0.0
  %910 = vadd.xlane.f32.xlu0 %v909
  %v911 = vpop.xlane.xlu0 %910
  %v912 = vsel %vm181, %v896, 0.0
  %913 = vadd.xlane.f32.xlu0 %v912
  %v914 = vpop.xlane.xlu0 %913
  %v915 = vsel %vm181, %v897, 0.0
  %916 = vadd.xlane.f32.xlu0 %v915
  %v917 = vpop.xlane.xlu0 %916
  %v918 = vsel %vm181, %v898, 0.0
  %919 = vadd.xlane.f32.xlu0 %v918
  %v920 = vpop.xlane.xlu0 %919
  %v921 = vsel %vm181, %v899, 0.0
  %922 = vadd.xlane.f32.xlu0 %v921
  %v923 = vpop.xlane.xlu0 %922
  %v924 = vmul.f32 %v902, %v486
  %v925 = vmul.f32 %v905, %v486
  %v926 = vmul.f32 %v908, %v486
  %v927 = vmul.f32 %v911, %v486
  %v928 = vmul.f32 %v914, %v486
  %v929 = vmul.f32 %v917, %v486
  %v930 = vmul.f32 %v920, %v486
  %v931 = vmul.f32 %v923, %v486
  %v932 = vadd.f32 %v924, 1e-05
  %v933 = vadd.f32 %v925, 1e-05
  %v934 = vadd.f32 %v926, 1e-05
  %v935 = vadd.f32 %v927, 1e-05
  %v936 = vadd.f32 %v928, 1e-05
  %v937 = vadd.f32 %v929, 1e-05
  %v938 = vadd.f32 %v930, 1e-05
  %v939 = vadd.f32 %v931, 1e-05
  %v940 = vrsqrt.pop %v932
  %v941 = vrsqrt.pop %v933
  %v942 = vrsqrt.pop %v934
  %v943 = vrsqrt.pop %v935
  %v944 = vrsqrt.pop %v936
  %v945 = vrsqrt.pop %v937
  %v946 = vrsqrt.pop %v938
  %v947 = vrsqrt.pop %v939
  %v948 = vmul.f32 %v884, %v940
  %v949 = vmul.f32 %v885, %v941
  %v950 = vmul.f32 %v886, %v942
  %v951 = vmul.f32 %v887, %v943
  %v952 = vmul.f32 %v888, %v944
  %v953 = vmul.f32 %v889, %v945
  %v954 = vmul.f32 %v890, %v946
  %v955 = vmul.f32 %v891, %v947
  %v956 = vld [vmem:[%s3 + $0x130] sm:$0x1]
  %v957 = vlaneseq
  %v958 = vshrl.u32 %v957, 7
  %v959 = vsub.s32 0, %v958
  %v960 = vrot.slane %v956, %v959
  %v961 = vmul.f32 %v948, %v960
  %v962 = vmul.f32 %v949, %v960
  %v963 = vmul.f32 %v950, %v960
  %v964 = vmul.f32 %v951, %v960
  %v965 = vmul.f32 %v952, %v960
  %v966 = vmul.f32 %v953, %v960
  %v967 = vmul.f32 %v954, %v960
  %v968 = vmul.f32 %v955, %v960
  %v969 = vld [vmem:[%s3 + $0x136] sm:$0x1]
  %v970 = vlaneseq
  %v971 = vshrl.u32 %v970, 7
  %v972 = vsub.s32 0, %v971
  %v973 = vrot.slane %v969, %v972
  %v974 = vadd.f32 %v961, %v973
  %v975 = vadd.f32 %v962, %v973
  %v976 = vadd.f32 %v963, %v973
  %v977 = vadd.f32 %v964, %v973
  %v978 = vadd.f32 %v965, %v973
  %v979 = vadd.f32 %v966, %v973
  %v980 = vadd.f32 %v967, %v973
  %v981 = vadd.f32 %v968, %v973
  %v982 = vld [vmem:[%s3 + $0x68] sm:$0xff]
  %v983 = vld [vmem:[%s3 + $0x70] sm:$0xff]
  %v984 = vld [vmem:[%s3 + $0x78] sm:$0xff]
  %v985 = vld [vmem:[%s3 + $0x80] sm:$0xff]
  %v987 = vsel %vm181, %v974, 0
  %v990 = vsel %vm181, %v975, 0
  %v993 = vsel %vm181, %v976, 0
  %v996 = vsel %vm181, %v977, 0
  %v999 = vsel %vm181, %v978, 0
  %v1002 = vsel %vm181, %v979, 0
  %v1005 = vsel %vm181, %v980, 0
  %v1008 = vsel %vm181, %v981, 0
  %1010 = vmatprep.subr.mxu0 0.0
  %1011 = vmatpush1.msra.mxu0 %v982
  %1012 = vmatprep.subr.mxu0 0.0
  %1013 = vmatpush1.msra.mxu0 %v983
  %1014 = vmatprep.subr.mxu0 0.0
  %1015 = vmatpush1.msra.mxu0 %v984
  %1016 = vmatprep.subr.mxu0 0.0
  %1017 = vmatpush1.msra.mxu0 %v985
  %1018 = vmatprep.subr.mxu0 0.0
  %1019 = vmatpush1.msra.mxu0 0.0
  %1020 = vmatprep.subr.mxu0 0.0
  %1021 = vmatpush1.msra.mxu0 0.0
  %1022 = vmatprep.subr.mxu0 0.0
  %1023 = vmatpush1.msra.mxu0 0.0
  %1024 = vmatprep.subr.mxu0 0.0
  %1025 = vmatpush1.msra.mxu0 0.0
  %1026 = vmatprep.subr.mxu0 0.0
  %1027 = vmatpush1.msra.mxu0 0.0
  %1028 = vmatprep.subr.mxu0 0.0
  %1029 = vmatpush1.msra.mxu0 0.0
  %1030 = vmatprep.subr.mxu0 0.0
  %1031 = vmatpush1.msra.mxu0 0.0
  %1032 = vmatprep.subr.mxu0 0.0
  %1033 = vmatpush1.msra.mxu0 0.0
  %1034 = vmatprep.subr.mxu0 0.0
  %1035 = vmatpush1.msra.mxu0 0.0
  %1036 = vmatprep.subr.mxu0 0.0
  %1037 = vmatpush1.msra.mxu0 0.0
  %1038 = vmatprep.subr.mxu0 0.0
  %1039 = vmatpush1.msra.mxu0 0.0
  %1040 = vmatprep.subr.mxu0 0.0
  %1041 = vmatpush1.msra.mxu0 0.0
  %1042 = vmatprep.subr.mxu0 0.0
  %1043 = vmatpush1.msra.mxu0 0.0
  %1044 = vmatprep.subr.mxu0 0.0
  %1045 = vmatpush1.msra.mxu0 0.0
  %1046 = vmatprep.subr.mxu0 0.0
  %1047 = vmatpush1.msra.mxu0 0.0
  %1048 = vmatprep.subr.mxu0 0.0
  %1049 = vmatpush1.msra.mxu0 0.0
  %1050 = vmatprep.subr.mxu0 0.0
  %1051 = vmatpush1.msra.mxu0 0.0
  %1052 = vmatprep.subr.mxu0 0.0
  %1053 = vmatpush1.msra.mxu0 0.0
  %1054 = vmatprep.subr.mxu0 0.0
  %1055 = vmatpush1.msra.mxu0 0.0
  %1056 = vmatprep.subr.mxu0 0.0
  %1057 = vmatpush1.msra.mxu0 0.0
  %1058 = vmatprep.subr.mxu0 0.0
  %1059 = vmatpush1.msra.mxu0 0.0
  %1060 = vmatprep.subr.mxu0 0.0
  %1061 = vmatpush1.msra.mxu0 0.0
  %1062 = vmatprep.subr.mxu0 0.0
  %1063 = vmatpush1.msra.mxu0 0.0
  %1064 = vmatprep.subr.mxu0 0.0
  %1065 = vmatpush1.msra.mxu0 0.0
  %1066 = vmatprep.subr.mxu0 0.0
  %1067 = vmatpush1.msra.mxu0 0.0
  %1068 = vmatprep.subr.mxu0 0.0
  %1069 = vmatpush1.msra.mxu0 0.0
  %1070 = vmatprep.subr.mxu0 0.0
  %1071 = vmatpush1.msra.mxu0 0.0
  %1072 = vmatprep.subr.mxu0 0.0
  %1073 = vmatpush1.msra.mxu0 0.0
  %1074 = vmatprep.mubr.f32.mxu0 0.0
  %1075 = vmatmul.mubr.f32.gmra.mrb[0].mxu0 %v987
  %v1076 = vpop.f32.mrb[0].mxu0
  %v1077 = vadd.f32 0.0, %v1076
  %v1078 = vpop.f32.mrb[0].mxu0
  %1079 = vmatprep.mubr.f32.mxu0 0.0
  %1080 = vmatmul.mubr.f32.gmra.mrb[0].mxu0 %v990
  %v1081 = vpop.f32.mrb[0].mxu0
  %v1082 = vadd.f32 0.0, %v1081
  %v1083 = vpop.f32.mrb[0].mxu0
  %1084 = vmatprep.mubr.f32.mxu0 0.0
  %1085 = vmatmul.mubr.f32.gmra.mrb[0].mxu0 %v993
  %v1086 = vpop.f32.mrb[0].mxu0
  %v1087 = vadd.f32 0.0, %v1086
  %v1088 = vpop.f32.mrb[0].mxu0
  %1089 = vmatprep.mubr.f32.mxu0 0.0
  %1090 = vmatmul.mubr.f32.gmra.mrb[0].mxu0 %v996
  %v1091 = vpop.f32.mrb[0].mxu0
  %v1092 = vadd.f32 0.0, %v1091
  %v1093 = vpop.f32.mrb[0].mxu0
  %1094 = vmatprep.mubr.f32.mxu0 0.0
  %1095 = vmatmul.mubr.f32.gmra.mrb[0].mxu0 %v999
  %v1096 = vpop.f32.mrb[0].mxu0
  %v1097 = vadd.f32 0.0, %v1096
  %v1098 = vpop.f32.mrb[0].mxu0
  %1099 = vmatprep.mubr.f32.mxu0 0.0
  %1100 = vmatmul.mubr.f32.gmra.mrb[0].mxu0 %v1002
  %v1101 = vpop.f32.mrb[0].mxu0
  %v1102 = vadd.f32 0.0, %v1101
  %v1103 = vpop.f32.mrb[0].mxu0
  %1104 = vmatprep.mubr.f32.mxu0 0.0
  %1105 = vmatmul.mubr.f32.gmra.mrb[0].mxu0 %v1005
  %v1106 = vpop.f32.mrb[0].mxu0
  %v1107 = vadd.f32 0.0, %v1106
  %v1108 = vpop.f32.mrb[0].mxu0
  %1109 = vmatprep.mubr.f32.mxu0 0.0
  %1110 = vmatmul.mubr.f32.gmra.mrb[0].mxu0 %v1008
  %v1111 = vpop.f32.mrb[0].mxu0
  %v1112 = vadd.f32 0.0, %v1111
  %v1113 = vpop.f32.mrb[0].mxu0
  %1114 = vdwg.mxu0
  %v1115 = vld [vmem:[%s3 + $0x12b] sm:$0x1]
  %v1116 = vlaneseq
  %v1117 = vshrl.u32 %v1116, 7
  %v1118 = vsub.s32 0, %v1117
  %v1119 = vrot.slane %v1115, %v1118
  %1120 = vmatprep.subr.mxu0 0.0
  %1121 = vmatpush1.msra.mxu0 %v1077
  %1122 = vmatprep.subr.mxu0 0.0
  %1123 = vmatpush1.msra.mxu0 %v1082
  %1124 = vmatprep.subr.mxu0 0.0
  %1125 = vmatpush1.msra.mxu0 %v1087
  %1126 = vmatprep.subr.mxu0 0.0
  %1127 = vmatpush1.msra.mxu0 %v1092
  %1128 = vmatprep.subr.mxu0 0.0
  %1129 = vmatpush1.msra.mxu0 %v1097
  %1130 = vmatprep.subr.mxu0 0.0
  %1131 = vmatpush1.msra.mxu0 %v1102
  %1132 = vmatprep.subr.mxu0 0.0
  %1133 = vmatpush1.msra.mxu0 %v1107
  %1134 = vmatprep.subr.mxu0 0.0
  %1135 = vmatpush1.msra.mxu0 %v1112
  %1136 = vmatprep.subr.mxu0 0.0
  %1137 = vmatpush1.msra.mxu0 0.0
  %1138 = vmatprep.subr.mxu0 0.0
  %1139 = vmatpush1.msra.mxu0 0.0
  %1140 = vmatprep.subr.mxu0 0.0
  %1141 = vmatpush1.msra.mxu0 0.0
  %1142 = vmatprep.subr.mxu0 0.0
  %1143 = vmatpush1.msra.mxu0 0.0
  %1144 = vmatprep.subr.mxu0 0.0
  %1145 = vmatpush1.msra.mxu0 0.0
  %1146 = vmatprep.subr.mxu0 0.0
  %1147 = vmatpush1.msra.mxu0 0.0
  %1148 = vmatprep.subr.mxu0 0.0
  %1149 = vmatpush1.msra.mxu0 0.0
  %1150 = vmatprep.subr.mxu0 0.0
  %1151 = vmatpush1.msra.mxu0 0.0
  %1152 = vmatprep.subr.mxu0 0.0
  %1153 = vmatpush1.msra.mxu0 0.0
  %1154 = vmatprep.subr.mxu0 0.0
  %1155 = vmatpush1.msra.mxu0 0.0
  %1156 = vmatprep.subr.mxu0 0.0
  %1157 = vmatpush1.msra.mxu0 0.0
  %1158 = vmatprep.subr.mxu0 0.0
  %1159 = vmatpush1.msra.mxu0 0.0
  %1160 = vmatprep.subr.mxu0 0.0
  %1161 = vmatpush1.msra.mxu0 0.0
  %1162 = vmatprep.subr.mxu0 0.0
  %1163 = vmatpush1.msra.mxu0 0.0
  %1164 = vmatprep.subr.mxu0 0.0
  %1165 = vmatpush1.msra.mxu0 0.0
  %1166 = vmatprep.subr.mxu0 0.0
  %1167 = vmatpush1.msra.mxu0 0.0
  %1168 = vmatprep.subr.mxu0 0.0
  %1169 = vmatpush1.msra.mxu0 0.0
  %1170 = vmatprep.subr.mxu0 0.0
  %1171 = vmatpush1.msra.mxu0 0.0
  %1172 = vmatprep.subr.mxu0 0.0
  %1173 = vmatpush1.msra.mxu0 0.0
  %1174 = vmatprep.subr.mxu0 0.0
  %1175 = vmatpush1.msra.mxu0 0.0
  %1176 = vmatprep.subr.mxu0 0.0
  %1177 = vmatpush1.msra.mxu0 0.0
  %1178 = vmatprep.subr.mxu0 0.0
  %1179 = vmatpush1.msra.mxu0 0.0
  %1180 = vmatprep.subr.mxu0 0.0
  %1181 = vmatpush1.msra.mxu0 0.0
  %1182 = vmatprep.subr.mxu0 0.0
  %1183 = vmatpush1.msra.mxu0 0.0
  %1184 = vmatprep.mubr.f32.mxu0 0.0
  %1185 = vmatmul.mubr.f32.gmra.mrb[0].mxu0 %v318
  %v1186 = vpop.f32.mrb[0].mxu0
  %v1187 = vadd.f32 %v1119, %v1186
  %v1188 = vpop.f32.mrb[0].mxu0
  %1189 = vmatprep.mubr.f32.mxu0 0.0
  %1190 = vmatmul.mubr.f32.gmra.mrb[0].mxu0 %v321
  %v1191 = vpop.f32.mrb[0].mxu0
  %v1192 = vadd.f32 %v1119, %v1191
  %v1193 = vpop.f32.mrb[0].mxu0
  %1194 = vmatprep.mubr.f32.mxu0 0.0
  %1195 = vmatmul.mubr.f32.gmra.mrb[0].mxu0 %v324
  %v1196 = vpop.f32.mrb[0].mxu0
  %v1197 = vadd.f32 %v1119, %v1196
  %v1198 = vpop.f32.mrb[0].mxu0
  %1199 = vmatprep.mubr.f32.mxu0 0.0
  %1200 = vmatmul.mubr.f32.gmra.mrb[0].mxu0 %v327
  %v1201 = vpop.f32.mrb[0].mxu0
  %v1202 = vadd.f32 %v1119, %v1201
  %v1203 = vpop.f32.mrb[0].mxu0
  %1204 = vmatprep.mubr.f32.mxu0 0.0
  %1205 = vmatmul.mubr.f32.gmra.mrb[0].mxu0 %v330
  %v1206 = vpop.f32.mrb[0].mxu0
  %v1207 = vadd.f32 %v1119, %v1206
  %v1208 = vpop.f32.mrb[0].mxu0
  %1209 = vmatprep.mubr.f32.mxu0 0.0
  %1210 = vmatmul.mubr.f32.gmra.mrb[0].mxu0 %v333
  %v1211 = vpop.f32.mrb[0].mxu0
  %v1212 = vadd.f32 %v1119, %v1211
  %v1213 = vpop.f32.mrb[0].mxu0
  %1214 = vmatprep.mubr.f32.mxu0 0.0
  %1215 = vmatmul.mubr.f32.gmra.mrb[0].mxu0 %v336
  %v1216 = vpop.f32.mrb[0].mxu0
  %v1217 = vadd.f32 %v1119, %v1216
  %v1218 = vpop.f32.mrb[0].mxu0
  %1219 = vmatprep.mubr.f32.mxu0 0.0
  %1220 = vmatmul.mubr.f32.gmra.mrb[0].mxu0 %v339
  %v1221 = vpop.f32.mrb[0].mxu0
  %v1222 = vadd.f32 %v1119, %v1221
  %v1223 = vpop.f32.mrb[0].mxu0
  %1224 = vdwg.mxu0
  %v1225 = vadd.f32 %v1187, %v974
  %v1226 = vadd.f32 %v1192, %v975
  %v1227 = vadd.f32 %v1197, %v976
  %v1228 = vadd.f32 %v1202, %v977
  %v1229 = vadd.f32 %v1207, %v978
  %v1230 = vadd.f32 %v1212, %v979
  %v1231 = vadd.f32 %v1217, %v980
  %v1232 = vadd.f32 %v1222, %v981
  %v1233 = vmax.f32 %v1225, 0.0
  %v1234 = vmax.f32 %v1226, 0.0
  %v1235 = vmax.f32 %v1227, 0.0
  %v1236 = vmax.f32 %v1228, 0.0
  %v1237 = vmax.f32 %v1229, 0.0
  %v1238 = vmax.f32 %v1230, 0.0
  %v1239 = vmax.f32 %v1231, 0.0
  %v1240 = vmax.f32 %v1232, 0.0
  %v1241 = vsel %vm181, %v1233, 0.0
  %1242 = vadd.xlane.f32.xlu0 %v1241
  %v1243 = vpop.xlane.xlu0 %1242
  %v1244 = vsel %vm181, %v1234, 0.0
  %1245 = vadd.xlane.f32.xlu0 %v1244
  %v1246 = vpop.xlane.xlu0 %1245
  %v1247 = vsel %vm181, %v1235, 0.0
  %1248 = vadd.xlane.f32.xlu0 %v1247
  %v1249 = vpop.xlane.xlu0 %1248
  %v1250 = vsel %vm181, %v1236, 0.0
  %1251 = vadd.xlane.f32.xlu0 %v1250
  %v1252 = vpop.xlane.xlu0 %1251
  %v1253 = vsel %vm181, %v1237, 0.0
  %1254 = vadd.xlane.f32.xlu0 %v1253
  %v1255 = vpop.xlane.xlu0 %1254
  %v1256 = vsel %vm181, %v1238, 0.0
  %1257 = vadd.xlane.f32.xlu0 %v1256
  %v1258 = vpop.xlane.xlu0 %1257
  %v1259 = vsel %vm181, %v1239, 0.0
  %1260 = vadd.xlane.f32.xlu0 %v1259
  %v1261 = vpop.xlane.xlu0 %1260
  %v1262 = vsel %vm181, %v1240, 0.0
  %1263 = vadd.xlane.f32.xlu0 %v1262
  %v1264 = vpop.xlane.xlu0 %1263
  %v1265 = vmul.f32 %v1243, %v486
  %v1266 = vmul.f32 %v1246, %v486
  %v1267 = vmul.f32 %v1249, %v486
  %v1268 = vmul.f32 %v1252, %v486
  %v1269 = vmul.f32 %v1255, %v486
  %v1270 = vmul.f32 %v1258, %v486
  %v1271 = vmul.f32 %v1261, %v486
  %v1272 = vmul.f32 %v1264, %v486
  %v1273 = vsub.f32 %v1233, %v1265
  %v1274 = vsub.f32 %v1234, %v1266
  %v1275 = vsub.f32 %v1235, %v1267
  %v1276 = vsub.f32 %v1236, %v1268
  %v1277 = vsub.f32 %v1237, %v1269
  %v1278 = vsub.f32 %v1238, %v1270
  %v1279 = vsub.f32 %v1239, %v1271
  %v1280 = vsub.f32 %v1240, %v1272
  %v1281 = vmul.f32 %v1273, %v1273
  %v1282 = vmul.f32 %v1274, %v1274
  %v1283 = vmul.f32 %v1275, %v1275
  %v1284 = vmul.f32 %v1276, %v1276
  %v1285 = vmul.f32 %v1277, %v1277
  %v1286 = vmul.f32 %v1278, %v1278
  %v1287 = vmul.f32 %v1279, %v1279
  %v1288 = vmul.f32 %v1280, %v1280
  %v1289 = vsel %vm181, %v1281, 0.0
  %1290 = vadd.xlane.f32.xlu0 %v1289
  %v1291 = vpop.xlane.xlu0 %1290
  %v1292 = vsel %vm181, %v1282, 0.0
  %1293 = vadd.xlane.f32.xlu0 %v1292
  %v1294 = vpop.xlane.xlu0 %1293
  %v1295 = vsel %vm181, %v1283, 0.0
  %1296 = vadd.xlane.f32.xlu0 %v1295
  %v1297 = vpop.xlane.xlu0 %1296
  %v1298 = vsel %vm181, %v1284, 0.0
  %1299 = vadd.xlane.f32.xlu0 %v1298
  %v1300 = vpop.xlane.xlu0 %1299
  %v1301 = vsel %vm181, %v1285, 0.0
  %1302 = vadd.xlane.f32.xlu0 %v1301
  %v1303 = vpop.xlane.xlu0 %1302
  %v1304 = vsel %vm181, %v1286, 0.0
  %1305 = vadd.xlane.f32.xlu0 %v1304
  %v1306 = vpop.xlane.xlu0 %1305
  %v1307 = vsel %vm181, %v1287, 0.0
  %1308 = vadd.xlane.f32.xlu0 %v1307
  %v1309 = vpop.xlane.xlu0 %1308
  %v1310 = vsel %vm181, %v1288, 0.0
  %1311 = vadd.xlane.f32.xlu0 %v1310
  %v1312 = vpop.xlane.xlu0 %1311
  %v1313 = vmul.f32 %v1291, %v486
  %v1314 = vmul.f32 %v1294, %v486
  %v1315 = vmul.f32 %v1297, %v486
  %v1316 = vmul.f32 %v1300, %v486
  %v1317 = vmul.f32 %v1303, %v486
  %v1318 = vmul.f32 %v1306, %v486
  %v1319 = vmul.f32 %v1309, %v486
  %v1320 = vmul.f32 %v1312, %v486
  %v1321 = vadd.f32 %v1313, 1e-05
  %v1322 = vadd.f32 %v1314, 1e-05
  %v1323 = vadd.f32 %v1315, 1e-05
  %v1324 = vadd.f32 %v1316, 1e-05
  %v1325 = vadd.f32 %v1317, 1e-05
  %v1326 = vadd.f32 %v1318, 1e-05
  %v1327 = vadd.f32 %v1319, 1e-05
  %v1328 = vadd.f32 %v1320, 1e-05
  %v1329 = vrsqrt.pop %v1321
  %v1330 = vrsqrt.pop %v1322
  %v1331 = vrsqrt.pop %v1323
  %v1332 = vrsqrt.pop %v1324
  %v1333 = vrsqrt.pop %v1325
  %v1334 = vrsqrt.pop %v1326
  %v1335 = vrsqrt.pop %v1327
  %v1336 = vrsqrt.pop %v1328
  %v1337 = vmul.f32 %v1273, %v1329
  %v1338 = vmul.f32 %v1274, %v1330
  %v1339 = vmul.f32 %v1275, %v1331
  %v1340 = vmul.f32 %v1276, %v1332
  %v1341 = vmul.f32 %v1277, %v1333
  %v1342 = vmul.f32 %v1278, %v1334
  %v1343 = vmul.f32 %v1279, %v1335
  %v1344 = vmul.f32 %v1280, %v1336
  %v1345 = vld [vmem:[%s3 + $0x131] sm:$0x1]
  %v1346 = vlaneseq
  %v1347 = vshrl.u32 %v1346, 7
  %v1348 = vsub.s32 0, %v1347
  %v1349 = vrot.slane %v1345, %v1348
  %v1350 = vmul.f32 %v1337, %v1349
  %v1351 = vmul.f32 %v1338, %v1349
  %v1352 = vmul.f32 %v1339, %v1349
  %v1353 = vmul.f32 %v1340, %v1349
  %v1354 = vmul.f32 %v1341, %v1349
  %v1355 = vmul.f32 %v1342, %v1349
  %v1356 = vmul.f32 %v1343, %v1349
  %v1357 = vmul.f32 %v1344, %v1349
  %v1358 = vld [vmem:[%s3 + $0x137] sm:$0x1]
  %v1359 = vlaneseq
  %v1360 = vshrl.u32 %v1359, 7
  %v1361 = vsub.s32 0, %v1360
  %v1362 = vrot.slane %v1358, %v1361
  %v1363 = vadd.f32 %v1350, %v1362
  %v1364 = vadd.f32 %v1351, %v1362
  %v1365 = vadd.f32 %v1352, %v1362
  %v1366 = vadd.f32 %v1353, %v1362
  %v1367 = vadd.f32 %v1354, %v1362
  %v1368 = vadd.f32 %v1355, %v1362
  %v1369 = vadd.f32 %v1356, %v1362
  %v1370 = vadd.f32 %v1357, %v1362
  %v1371 = vld [vmem:[%s3 + $0x88] sm:$0xff]
  %v1372 = vld [vmem:[%s3 + $0x90] sm:$0xff]
  %v1373 = vld [vmem:[%s3 + $0x98] sm:$0xff]
  %v1374 = vld [vmem:[%s3 + $0xa0] sm:$0xff]
  %v1376 = vsel %vm181, %v1363, 0
  %v1379 = vsel %vm181, %v1364, 0
  %v1382 = vsel %vm181, %v1365, 0
  %v1385 = vsel %vm181, %v1366, 0
  %v1388 = vsel %vm181, %v1367, 0
  %v1391 = vsel %vm181, %v1368, 0
  %v1394 = vsel %vm181, %v1369, 0
  %v1397 = vsel %vm181, %v1370, 0
  %1399 = vmatprep.subr.mxu0 0.0
  %1400 = vmatpush1.msra.mxu0 %v1371
  %1401 = vmatprep.subr.mxu0 0.0
  %1402 = vmatpush1.msra.mxu0 %v1372
  %1403 = vmatprep.subr.mxu0 0.0
  %1404 = vmatpush1.msra.mxu0 %v1373
  %1405 = vmatprep.subr.mxu0 0.0
  %1406 = vmatpush1.msra.mxu0 %v1374
  %1407 = vmatprep.subr.mxu0 0.0
  %1408 = vmatpush1.msra.mxu0 0.0
  %1409 = vmatprep.subr.mxu0 0.0
  %1410 = vmatpush1.msra.mxu0 0.0
  %1411 = vmatprep.subr.mxu0 0.0
  %1412 = vmatpush1.msra.mxu0 0.0
  %1413 = vmatprep.subr.mxu0 0.0
  %1414 = vmatpush1.msra.mxu0 0.0
  %1415 = vmatprep.subr.mxu0 0.0
  %1416 = vmatpush1.msra.mxu0 0.0
  %1417 = vmatprep.subr.mxu0 0.0
  %1418 = vmatpush1.msra.mxu0 0.0
  %1419 = vmatprep.subr.mxu0 0.0
  %1420 = vmatpush1.msra.mxu0 0.0
  %1421 = vmatprep.subr.mxu0 0.0
  %1422 = vmatpush1.msra.mxu0 0.0
  %1423 = vmatprep.subr.mxu0 0.0
  %1424 = vmatpush1.msra.mxu0 0.0
  %1425 = vmatprep.subr.mxu0 0.0
  %1426 = vmatpush1.msra.mxu0 0.0
  %1427 = vmatprep.subr.mxu0 0.0
  %1428 = vmatpush1.msra.mxu0 0.0
  %1429 = vmatprep.subr.mxu0 0.0
  %1430 = vmatpush1.msra.mxu0 0.0
  %1431 = vmatprep.subr.mxu0 0.0
  %1432 = vmatpush1.msra.mxu0 0.0
  %1433 = vmatprep.subr.mxu0 0.0
  %1434 = vmatpush1.msra.mxu0 0.0
  %1435 = vmatprep.subr.mxu0 0.0
  %1436 = vmatpush1.msra.mxu0 0.0
  %1437 = vmatprep.subr.mxu0 0.0
  %1438 = vmatpush1.msra.mxu0 0.0
  %1439 = vmatprep.subr.mxu0 0.0
  %1440 = vmatpush1.msra.mxu0 0.0
  %1441 = vmatprep.subr.mxu0 0.0
  %1442 = vmatpush1.msra.mxu0 0.0
  %1443 = vmatprep.subr.mxu0 0.0
  %1444 = vmatpush1.msra.mxu0 0.0
  %1445 = vmatprep.subr.mxu0 0.0
  %1446 = vmatpush1.msra.mxu0 0.0
  %1447 = vmatprep.subr.mxu0 0.0
  %1448 = vmatpush1.msra.mxu0 0.0
  %1449 = vmatprep.subr.mxu0 0.0
  %1450 = vmatpush1.msra.mxu0 0.0
  %1451 = vmatprep.subr.mxu0 0.0
  %1452 = vmatpush1.msra.mxu0 0.0
  %1453 = vmatprep.subr.mxu0 0.0
  %1454 = vmatpush1.msra.mxu0 0.0
  %1455 = vmatprep.subr.mxu0 0.0
  %1456 = vmatpush1.msra.mxu0 0.0
  %1457 = vmatprep.subr.mxu0 0.0
  %1458 = vmatpush1.msra.mxu0 0.0
  %1459 = vmatprep.subr.mxu0 0.0
  %1460 = vmatpush1.msra.mxu0 0.0
  %1461 = vmatprep.subr.mxu0 0.0
  %1462 = vmatpush1.msra.mxu0 0.0
  %1463 = vmatprep.mubr.f32.mxu0 0.0
  %1464 = vmatmul.mubr.f32.gmra.mrb[0].mxu0 %v1376
  %v1465 = vpop.f32.mrb[0].mxu0
  %v1466 = vadd.f32 0.0, %v1465
  %v1467 = vpop.f32.mrb[0].mxu0
  %1468 = vmatprep.mubr.f32.mxu0 0.0
  %1469 = vmatmul.mubr.f32.gmra.mrb[0].mxu0 %v1379
  %v1470 = vpop.f32.mrb[0].mxu0
  %v1471 = vadd.f32 0.0, %v1470
  %v1472 = vpop.f32.mrb[0].mxu0
  %1473 = vmatprep.mubr.f32.mxu0 0.0
  %1474 = vmatmul.mubr.f32.gmra.mrb[0].mxu0 %v1382
  %v1475 = vpop.f32.mrb[0].mxu0
  %v1476 = vadd.f32 0.0, %v1475
  %v1477 = vpop.f32.mrb[0].mxu0
  %1478 = vmatprep.mubr.f32.mxu0 0.0
  %1479 = vmatmul.mubr.f32.gmra.mrb[0].mxu0 %v1385
  %v1480 = vpop.f32.mrb[0].mxu0
  %v1481 = vadd.f32 0.0, %v1480
  %v1482 = vpop.f32.mrb[0].mxu0
  %1483 = vmatprep.mubr.f32.mxu0 0.0
  %1484 = vmatmul.mubr.f32.gmra.mrb[0].mxu0 %v1388
  %v1485 = vpop.f32.mrb[0].mxu0
  %v1486 = vadd.f32 0.0, %v1485
  %v1487 = vpop.f32.mrb[0].mxu0
  %1488 = vmatprep.mubr.f32.mxu0 0.0
  %1489 = vmatmul.mubr.f32.gmra.mrb[0].mxu0 %v1391
  %v1490 = vpop.f32.mrb[0].mxu0
  %v1491 = vadd.f32 0.0, %v1490
  %v1492 = vpop.f32.mrb[0].mxu0
  %1493 = vmatprep.mubr.f32.mxu0 0.0
  %1494 = vmatmul.mubr.f32.gmra.mrb[0].mxu0 %v1394
  %v1495 = vpop.f32.mrb[0].mxu0
  %v1496 = vadd.f32 0.0, %v1495
  %v1497 = vpop.f32.mrb[0].mxu0
  %1498 = vmatprep.mubr.f32.mxu0 0.0
  %1499 = vmatmul.mubr.f32.gmra.mrb[0].mxu0 %v1397
  %v1500 = vpop.f32.mrb[0].mxu0
  %v1501 = vadd.f32 0.0, %v1500
  %v1502 = vpop.f32.mrb[0].mxu0
  %1503 = vdwg.mxu0
  %v1504 = vld [vmem:[%s3 + $0x12c] sm:$0x1]
  %v1505 = vlaneseq
  %v1506 = vshrl.u32 %v1505, 7
  %v1507 = vsub.s32 0, %v1506
  %v1508 = vrot.slane %v1504, %v1507
  %1509 = vmatprep.subr.mxu0 0.0
  %1510 = vmatpush1.msra.mxu0 %v1466
  %1511 = vmatprep.subr.mxu0 0.0
  %1512 = vmatpush1.msra.mxu0 %v1471
  %1513 = vmatprep.subr.mxu0 0.0
  %1514 = vmatpush1.msra.mxu0 %v1476
  %1515 = vmatprep.subr.mxu0 0.0
  %1516 = vmatpush1.msra.mxu0 %v1481
  %1517 = vmatprep.subr.mxu0 0.0
  %1518 = vmatpush1.msra.mxu0 %v1486
  %1519 = vmatprep.subr.mxu0 0.0
  %1520 = vmatpush1.msra.mxu0 %v1491
  %1521 = vmatprep.subr.mxu0 0.0
  %1522 = vmatpush1.msra.mxu0 %v1496
  %1523 = vmatprep.subr.mxu0 0.0
  %1524 = vmatpush1.msra.mxu0 %v1501
  %1525 = vmatprep.subr.mxu0 0.0
  %1526 = vmatpush1.msra.mxu0 0.0
  %1527 = vmatprep.subr.mxu0 0.0
  %1528 = vmatpush1.msra.mxu0 0.0
  %1529 = vmatprep.subr.mxu0 0.0
  %1530 = vmatpush1.msra.mxu0 0.0
  %1531 = vmatprep.subr.mxu0 0.0
  %1532 = vmatpush1.msra.mxu0 0.0
  %1533 = vmatprep.subr.mxu0 0.0
  %1534 = vmatpush1.msra.mxu0 0.0
  %1535 = vmatprep.subr.mxu0 0.0
  %1536 = vmatpush1.msra.mxu0 0.0
  %1537 = vmatprep.subr.mxu0 0.0
  %1538 = vmatpush1.msra.mxu0 0.0
  %1539 = vmatprep.subr.mxu0 0.0
  %1540 = vmatpush1.msra.mxu0 0.0
  %1541 = vmatprep.subr.mxu0 0.0
  %1542 = vmatpush1.msra.mxu0 0.0
  %1543 = vmatprep.subr.mxu0 0.0
  %1544 = vmatpush1.msra.mxu0 0.0
  %1545 = vmatprep.subr.mxu0 0.0
  %1546 = vmatpush1.msra.mxu0 0.0
  %1547 = vmatprep.subr.mxu0 0.0
  %1548 = vmatpush1.msra.mxu0 0.0
  %1549 = vmatprep.subr.mxu0 0.0
  %1550 = vmatpush1.msra.mxu0 0.0
  %1551 = vmatprep.subr.mxu0 0.0
  %1552 = vmatpush1.msra.mxu0 0.0
  %1553 = vmatprep.subr.mxu0 0.0
  %1554 = vmatpush1.msra.mxu0 0.0
  %1555 = vmatprep.subr.mxu0 0.0
  %1556 = vmatpush1.msra.mxu0 0.0
  %1557 = vmatprep.subr.mxu0 0.0
  %1558 = vmatpush1.msra.mxu0 0.0
  %1559 = vmatprep.subr.mxu0 0.0
  %1560 = vmatpush1.msra.mxu0 0.0
  %1561 = vmatprep.subr.mxu0 0.0
  %1562 = vmatpush1.msra.mxu0 0.0
  %1563 = vmatprep.subr.mxu0 0.0
  %1564 = vmatpush1.msra.mxu0 0.0
  %1565 = vmatprep.subr.mxu0 0.0
  %1566 = vmatpush1.msra.mxu0 0.0
  %1567 = vmatprep.subr.mxu0 0.0
  %1568 = vmatpush1.msra.mxu0 0.0
  %1569 = vmatprep.subr.mxu0 0.0
  %1570 = vmatpush1.msra.mxu0 0.0
  %1571 = vmatprep.subr.mxu0 0.0
  %1572 = vmatpush1.msra.mxu0 0.0
  %1573 = vmatprep.mubr.f32.mxu0 0.0
  %1574 = vmatmul.mubr.f32.gmra.mrb[0].mxu0 %v318
  %v1575 = vpop.f32.mrb[0].mxu0
  %v1576 = vadd.f32 %v1508, %v1575
  %v1577 = vpop.f32.mrb[0].mxu0
  %1578 = vmatprep.mubr.f32.mxu0 0.0
  %1579 = vmatmul.mubr.f32.gmra.mrb[0].mxu0 %v321
  %v1580 = vpop.f32.mrb[0].mxu0
  %v1581 = vadd.f32 %v1508, %v1580
  %v1582 = vpop.f32.mrb[0].mxu0
  %1583 = vmatprep.mubr.f32.mxu0 0.0
  %1584 = vmatmul.mubr.f32.gmra.mrb[0].mxu0 %v324
  %v1585 = vpop.f32.mrb[0].mxu0
  %v1586 = vadd.f32 %v1508, %v1585
  %v1587 = vpop.f32.mrb[0].mxu0
  %1588 = vmatprep.mubr.f32.mxu0 0.0
  %1589 = vmatmul.mubr.f32.gmra.mrb[0].mxu0 %v327
  %v1590 = vpop.f32.mrb[0].mxu0
  %v1591 = vadd.f32 %v1508, %v1590
  %v1592 = vpop.f32.mrb[0].mxu0
  %1593 = vmatprep.mubr.f32.mxu0 0.0
  %1594 = vmatmul.mubr.f32.gmra.mrb[0].mxu0 %v330
  %v1595 = vpop.f32.mrb[0].mxu0
  %v1596 = vadd.f32 %v1508, %v1595
  %v1597 = vpop.f32.mrb[0].mxu0
  %1598 = vmatprep.mubr.f32.mxu0 0.0
  %1599 = vmatmul.mubr.f32.gmra.mrb[0].mxu0 %v333
  %v1600 = vpop.f32.mrb[0].mxu0
  %v1601 = vadd.f32 %v1508, %v1600
  %v1602 = vpop.f32.mrb[0].mxu0
  %1603 = vmatprep.mubr.f32.mxu0 0.0
  %1604 = vmatmul.mubr.f32.gmra.mrb[0].mxu0 %v336
  %v1605 = vpop.f32.mrb[0].mxu0
  %v1606 = vadd.f32 %v1508, %v1605
  %v1607 = vpop.f32.mrb[0].mxu0
  %1608 = vmatprep.mubr.f32.mxu0 0.0
  %1609 = vmatmul.mubr.f32.gmra.mrb[0].mxu0 %v339
  %v1610 = vpop.f32.mrb[0].mxu0
  %v1611 = vadd.f32 %v1508, %v1610
  %v1612 = vpop.f32.mrb[0].mxu0
  %1613 = vdwg.mxu0
  %v1614 = vadd.f32 %v1576, %v1363
  %v1615 = vadd.f32 %v1581, %v1364
  %v1616 = vadd.f32 %v1586, %v1365
  %v1617 = vadd.f32 %v1591, %v1366
  %v1618 = vadd.f32 %v1596, %v1367
  %v1619 = vadd.f32 %v1601, %v1368
  %v1620 = vadd.f32 %v1606, %v1369
  %v1621 = vadd.f32 %v1611, %v1370
  %v1622 = vmax.f32 %v1614, 0.0
  %v1623 = vmax.f32 %v1615, 0.0
  %v1624 = vmax.f32 %v1616, 0.0
  %v1625 = vmax.f32 %v1617, 0.0
  %v1626 = vmax.f32 %v1618, 0.0
  %v1627 = vmax.f32 %v1619, 0.0
  %v1628 = vmax.f32 %v1620, 0.0
  %v1629 = vmax.f32 %v1621, 0.0
  %v1630 = vsel %vm181, %v1622, 0.0
  %1631 = vadd.xlane.f32.xlu0 %v1630
  %v1632 = vpop.xlane.xlu0 %1631
  %v1633 = vsel %vm181, %v1623, 0.0
  %1634 = vadd.xlane.f32.xlu0 %v1633
  %v1635 = vpop.xlane.xlu0 %1634
  %v1636 = vsel %vm181, %v1624, 0.0
  %1637 = vadd.xlane.f32.xlu0 %v1636
  %v1638 = vpop.xlane.xlu0 %1637
  %v1639 = vsel %vm181, %v1625, 0.0
  %1640 = vadd.xlane.f32.xlu0 %v1639
  %v1641 = vpop.xlane.xlu0 %1640
  %v1642 = vsel %vm181, %v1626, 0.0
  %1643 = vadd.xlane.f32.xlu0 %v1642
  %v1644 = vpop.xlane.xlu0 %1643
  %v1645 = vsel %vm181, %v1627, 0.0
  %1646 = vadd.xlane.f32.xlu0 %v1645
  %v1647 = vpop.xlane.xlu0 %1646
  %v1648 = vsel %vm181, %v1628, 0.0
  %1649 = vadd.xlane.f32.xlu0 %v1648
  %v1650 = vpop.xlane.xlu0 %1649
  %v1651 = vsel %vm181, %v1629, 0.0
  %1652 = vadd.xlane.f32.xlu0 %v1651
  %v1653 = vpop.xlane.xlu0 %1652
  %v1654 = vmul.f32 %v1632, %v486
  %v1655 = vmul.f32 %v1635, %v486
  %v1656 = vmul.f32 %v1638, %v486
  %v1657 = vmul.f32 %v1641, %v486
  %v1658 = vmul.f32 %v1644, %v486
  %v1659 = vmul.f32 %v1647, %v486
  %v1660 = vmul.f32 %v1650, %v486
  %v1661 = vmul.f32 %v1653, %v486
  %v1662 = vsub.f32 %v1622, %v1654
  %v1663 = vsub.f32 %v1623, %v1655
  %v1664 = vsub.f32 %v1624, %v1656
  %v1665 = vsub.f32 %v1625, %v1657
  %v1666 = vsub.f32 %v1626, %v1658
  %v1667 = vsub.f32 %v1627, %v1659
  %v1668 = vsub.f32 %v1628, %v1660
  %v1669 = vsub.f32 %v1629, %v1661
  %v1670 = vmul.f32 %v1662, %v1662
  %v1671 = vmul.f32 %v1663, %v1663
  %v1672 = vmul.f32 %v1664, %v1664
  %v1673 = vmul.f32 %v1665, %v1665
  %v1674 = vmul.f32 %v1666, %v1666
  %v1675 = vmul.f32 %v1667, %v1667
  %v1676 = vmul.f32 %v1668, %v1668
  %v1677 = vmul.f32 %v1669, %v1669
  %v1678 = vsel %vm181, %v1670, 0.0
  %1679 = vadd.xlane.f32.xlu0 %v1678
  %v1680 = vpop.xlane.xlu0 %1679
  %v1681 = vsel %vm181, %v1671, 0.0
  %1682 = vadd.xlane.f32.xlu0 %v1681
  %v1683 = vpop.xlane.xlu0 %1682
  %v1684 = vsel %vm181, %v1672, 0.0
  %1685 = vadd.xlane.f32.xlu0 %v1684
  %v1686 = vpop.xlane.xlu0 %1685
  %v1687 = vsel %vm181, %v1673, 0.0
  %1688 = vadd.xlane.f32.xlu0 %v1687
  %v1689 = vpop.xlane.xlu0 %1688
  %v1690 = vsel %vm181, %v1674, 0.0
  %1691 = vadd.xlane.f32.xlu0 %v1690
  %v1692 = vpop.xlane.xlu0 %1691
  %v1693 = vsel %vm181, %v1675, 0.0
  %1694 = vadd.xlane.f32.xlu0 %v1693
  %v1695 = vpop.xlane.xlu0 %1694
  %v1696 = vsel %vm181, %v1676, 0.0
  %1697 = vadd.xlane.f32.xlu0 %v1696
  %v1698 = vpop.xlane.xlu0 %1697
  %v1699 = vsel %vm181, %v1677, 0.0
  %1700 = vadd.xlane.f32.xlu0 %v1699
  %v1701 = vpop.xlane.xlu0 %1700
  %v1702 = vmul.f32 %v1680, %v486
  %v1703 = vmul.f32 %v1683, %v486
  %v1704 = vmul.f32 %v1686, %v486
  %v1705 = vmul.f32 %v1689, %v486
  %v1706 = vmul.f32 %v1692, %v486
  %v1707 = vmul.f32 %v1695, %v486
  %v1708 = vmul.f32 %v1698, %v486
  %v1709 = vmul.f32 %v1701, %v486
  %v1710 = vadd.f32 %v1702, 1e-05
  %v1711 = vadd.f32 %v1703, 1e-05
  %v1712 = vadd.f32 %v1704, 1e-05
  %v1713 = vadd.f32 %v1705, 1e-05
  %v1714 = vadd.f32 %v1706, 1e-05
  %v1715 = vadd.f32 %v1707, 1e-05
  %v1716 = vadd.f32 %v1708, 1e-05
  %v1717 = vadd.f32 %v1709, 1e-05
  %v1718 = vrsqrt.pop %v1710
  %v1719 = vrsqrt.pop %v1711
  %v1720 = vrsqrt.pop %v1712
  %v1721 = vrsqrt.pop %v1713
  %v1722 = vrsqrt.pop %v1714
  %v1723 = vrsqrt.pop %v1715
  %v1724 = vrsqrt.pop %v1716
  %v1725 = vrsqrt.pop %v1717
  %v1726 = vmul.f32 %v1662, %v1718
  %v1727 = vmul.f32 %v1663, %v1719
  %v1728 = vmul.f32 %v1664, %v1720
  %v1729 = vmul.f32 %v1665, %v1721
  %v1730 = vmul.f32 %v1666, %v1722
  %v1731 = vmul.f32 %v1667, %v1723
  %v1732 = vmul.f32 %v1668, %v1724
  %v1733 = vmul.f32 %v1669, %v1725
  %v1734 = vld [vmem:[%s3 + $0x132] sm:$0x1]
  %v1735 = vlaneseq
  %v1736 = vshrl.u32 %v1735, 7
  %v1737 = vsub.s32 0, %v1736
  %v1738 = vrot.slane %v1734, %v1737
  %v1739 = vmul.f32 %v1726, %v1738
  %v1740 = vmul.f32 %v1727, %v1738
  %v1741 = vmul.f32 %v1728, %v1738
  %v1742 = vmul.f32 %v1729, %v1738
  %v1743 = vmul.f32 %v1730, %v1738
  %v1744 = vmul.f32 %v1731, %v1738
  %v1745 = vmul.f32 %v1732, %v1738
  %v1746 = vmul.f32 %v1733, %v1738
  %v1747 = vld [vmem:[%s3 + $0x138] sm:$0x1]
  %v1748 = vlaneseq
  %v1749 = vshrl.u32 %v1748, 7
  %v1750 = vsub.s32 0, %v1749
  %v1751 = vrot.slane %v1747, %v1750
  %v1752 = vadd.f32 %v1739, %v1751
  %v1753 = vadd.f32 %v1740, %v1751
  %v1754 = vadd.f32 %v1741, %v1751
  %v1755 = vadd.f32 %v1742, %v1751
  %v1756 = vadd.f32 %v1743, %v1751
  %v1757 = vadd.f32 %v1744, %v1751
  %v1758 = vadd.f32 %v1745, %v1751
  %v1759 = vadd.f32 %v1746, %v1751
  %v1760 = vld [vmem:[%s3 + $0xa8] sm:$0xff]
  %v1761 = vld [vmem:[%s3 + $0xb0] sm:$0xff]
  %v1762 = vld [vmem:[%s3 + $0xb8] sm:$0xff]
  %v1763 = vld [vmem:[%s3 + $0xc0] sm:$0xff]
  %v1765 = vsel %vm181, %v1752, 0
  %v1768 = vsel %vm181, %v1753, 0
  %v1771 = vsel %vm181, %v1754, 0
  %v1774 = vsel %vm181, %v1755, 0
  %v1777 = vsel %vm181, %v1756, 0
  %v1780 = vsel %vm181, %v1757, 0
  %v1783 = vsel %vm181, %v1758, 0
  %v1786 = vsel %vm181, %v1759, 0
  %1788 = vmatprep.subr.mxu0 0.0
  %1789 = vmatpush1.msra.mxu0 %v1760
  %1790 = vmatprep.subr.mxu0 0.0
  %1791 = vmatpush1.msra.mxu0 %v1761
  %1792 = vmatprep.subr.mxu0 0.0
  %1793 = vmatpush1.msra.mxu0 %v1762
  %1794 = vmatprep.subr.mxu0 0.0
  %1795 = vmatpush1.msra.mxu0 %v1763
  %1796 = vmatprep.subr.mxu0 0.0
  %1797 = vmatpush1.msra.mxu0 0.0
  %1798 = vmatprep.subr.mxu0 0.0
  %1799 = vmatpush1.msra.mxu0 0.0
  %1800 = vmatprep.subr.mxu0 0.0
  %1801 = vmatpush1.msra.mxu0 0.0
  %1802 = vmatprep.subr.mxu0 0.0
  %1803 = vmatpush1.msra.mxu0 0.0
  %1804 = vmatprep.subr.mxu0 0.0
  %1805 = vmatpush1.msra.mxu0 0.0
  %1806 = vmatprep.subr.mxu0 0.0
  %1807 = vmatpush1.msra.mxu0 0.0
  %1808 = vmatprep.subr.mxu0 0.0
  %1809 = vmatpush1.msra.mxu0 0.0
  %1810 = vmatprep.subr.mxu0 0.0
  %1811 = vmatpush1.msra.mxu0 0.0
  %1812 = vmatprep.subr.mxu0 0.0
  %1813 = vmatpush1.msra.mxu0 0.0
  %1814 = vmatprep.subr.mxu0 0.0
  %1815 = vmatpush1.msra.mxu0 0.0
  %1816 = vmatprep.subr.mxu0 0.0
  %1817 = vmatpush1.msra.mxu0 0.0
  %1818 = vmatprep.subr.mxu0 0.0
  %1819 = vmatpush1.msra.mxu0 0.0
  %1820 = vmatprep.subr.mxu0 0.0
  %1821 = vmatpush1.msra.mxu0 0.0
  %1822 = vmatprep.subr.mxu0 0.0
  %1823 = vmatpush1.msra.mxu0 0.0
  %1824 = vmatprep.subr.mxu0 0.0
  %1825 = vmatpush1.msra.mxu0 0.0
  %1826 = vmatprep.subr.mxu0 0.0
  %1827 = vmatpush1.msra.mxu0 0.0
  %1828 = vmatprep.subr.mxu0 0.0
  %1829 = vmatpush1.msra.mxu0 0.0
  %1830 = vmatprep.subr.mxu0 0.0
  %1831 = vmatpush1.msra.mxu0 0.0
  %1832 = vmatprep.subr.mxu0 0.0
  %1833 = vmatpush1.msra.mxu0 0.0
  %1834 = vmatprep.subr.mxu0 0.0
  %1835 = vmatpush1.msra.mxu0 0.0
  %1836 = vmatprep.subr.mxu0 0.0
  %1837 = vmatpush1.msra.mxu0 0.0
  %1838 = vmatprep.subr.mxu0 0.0
  %1839 = vmatpush1.msra.mxu0 0.0
  %1840 = vmatprep.subr.mxu0 0.0
  %1841 = vmatpush1.msra.mxu0 0.0
  %1842 = vmatprep.subr.mxu0 0.0
  %1843 = vmatpush1.msra.mxu0 0.0
  %1844 = vmatprep.subr.mxu0 0.0
  %1845 = vmatpush1.msra.mxu0 0.0
  %1846 = vmatprep.subr.mxu0 0.0
  %1847 = vmatpush1.msra.mxu0 0.0
  %1848 = vmatprep.subr.mxu0 0.0
  %1849 = vmatpush1.msra.mxu0 0.0
  %1850 = vmatprep.subr.mxu0 0.0
  %1851 = vmatpush1.msra.mxu0 0.0
  %1852 = vmatprep.mubr.f32.mxu0 0.0
  %1853 = vmatmul.mubr.f32.gmra.mrb[0].mxu0 %v1765
  %v1854 = vpop.f32.mrb[0].mxu0
  %v1855 = vadd.f32 0.0, %v1854
  %v1856 = vpop.f32.mrb[0].mxu0
  %1857 = vmatprep.mubr.f32.mxu0 0.0
  %1858 = vmatmul.mubr.f32.gmra.mrb[0].mxu0 %v1768
  %v1859 = vpop.f32.mrb[0].mxu0
  %v1860 = vadd.f32 0.0, %v1859
  %v1861 = vpop.f32.mrb[0].mxu0
  %1862 = vmatprep.mubr.f32.mxu0 0.0
  %1863 = vmatmul.mubr.f32.gmra.mrb[0].mxu0 %v1771
  %v1864 = vpop.f32.mrb[0].mxu0
  %v1865 = vadd.f32 0.0, %v1864
  %v1866 = vpop.f32.mrb[0].mxu0
  %1867 = vmatprep.mubr.f32.mxu0 0.0
  %1868 = vmatmul.mubr.f32.gmra.mrb[0].mxu0 %v1774
  %v1869 = vpop.f32.mrb[0].mxu0
  %v1870 = vadd.f32 0.0, %v1869
  %v1871 = vpop.f32.mrb[0].mxu0
  %1872 = vmatprep.mubr.f32.mxu0 0.0
  %1873 = vmatmul.mubr.f32.gmra.mrb[0].mxu0 %v1777
  %v1874 = vpop.f32.mrb[0].mxu0
  %v1875 = vadd.f32 0.0, %v1874
  %v1876 = vpop.f32.mrb[0].mxu0
  %1877 = vmatprep.mubr.f32.mxu0 0.0
  %1878 = vmatmul.mubr.f32.gmra.mrb[0].mxu0 %v1780
  %v1879 = vpop.f32.mrb[0].mxu0
  %v1880 = vadd.f32 0.0, %v1879
  %v1881 = vpop.f32.mrb[0].mxu0
  %1882 = vmatprep.mubr.f32.mxu0 0.0
  %1883 = vmatmul.mubr.f32.gmra.mrb[0].mxu0 %v1783
  %v1884 = vpop.f32.mrb[0].mxu0
  %v1885 = vadd.f32 0.0, %v1884
  %v1886 = vpop.f32.mrb[0].mxu0
  %1887 = vmatprep.mubr.f32.mxu0 0.0
  %1888 = vmatmul.mubr.f32.gmra.mrb[0].mxu0 %v1786
  %v1889 = vpop.f32.mrb[0].mxu0
  %v1890 = vadd.f32 0.0, %v1889
  %v1891 = vpop.f32.mrb[0].mxu0
  %1892 = vdwg.mxu0
  %v1893 = vld [vmem:[%s3 + $0x12d] sm:$0x1]
  %v1894 = vlaneseq
  %v1895 = vshrl.u32 %v1894, 7
  %v1896 = vsub.s32 0, %v1895
  %v1897 = vrot.slane %v1893, %v1896
  %1898 = vmatprep.subr.mxu0 0.0
  %1899 = vmatpush1.msra.mxu0 %v1855
  %1900 = vmatprep.subr.mxu0 0.0
  %1901 = vmatpush1.msra.mxu0 %v1860
  %1902 = vmatprep.subr.mxu0 0.0
  %1903 = vmatpush1.msra.mxu0 %v1865
  %1904 = vmatprep.subr.mxu0 0.0
  %1905 = vmatpush1.msra.mxu0 %v1870
  %1906 = vmatprep.subr.mxu0 0.0
  %1907 = vmatpush1.msra.mxu0 %v1875
  %1908 = vmatprep.subr.mxu0 0.0
  %1909 = vmatpush1.msra.mxu0 %v1880
  %1910 = vmatprep.subr.mxu0 0.0
  %1911 = vmatpush1.msra.mxu0 %v1885
  %1912 = vmatprep.subr.mxu0 0.0
  %1913 = vmatpush1.msra.mxu0 %v1890
  %1914 = vmatprep.subr.mxu0 0.0
  %1915 = vmatpush1.msra.mxu0 0.0
  %1916 = vmatprep.subr.mxu0 0.0
  %1917 = vmatpush1.msra.mxu0 0.0
  %1918 = vmatprep.subr.mxu0 0.0
  %1919 = vmatpush1.msra.mxu0 0.0
  %1920 = vmatprep.subr.mxu0 0.0
  %1921 = vmatpush1.msra.mxu0 0.0
  %1922 = vmatprep.subr.mxu0 0.0
  %1923 = vmatpush1.msra.mxu0 0.0
  %1924 = vmatprep.subr.mxu0 0.0
  %1925 = vmatpush1.msra.mxu0 0.0
  %1926 = vmatprep.subr.mxu0 0.0
  %1927 = vmatpush1.msra.mxu0 0.0
  %1928 = vmatprep.subr.mxu0 0.0
  %1929 = vmatpush1.msra.mxu0 0.0
  %1930 = vmatprep.subr.mxu0 0.0
  %1931 = vmatpush1.msra.mxu0 0.0
  %1932 = vmatprep.subr.mxu0 0.0
  %1933 = vmatpush1.msra.mxu0 0.0
  %1934 = vmatprep.subr.mxu0 0.0
  %1935 = vmatpush1.msra.mxu0 0.0
  %1936 = vmatprep.subr.mxu0 0.0
  %1937 = vmatpush1.msra.mxu0 0.0
  %1938 = vmatprep.subr.mxu0 0.0
  %1939 = vmatpush1.msra.mxu0 0.0
  %1940 = vmatprep.subr.mxu0 0.0
  %1941 = vmatpush1.msra.mxu0 0.0
  %1942 = vmatprep.subr.mxu0 0.0
  %1943 = vmatpush1.msra.mxu0 0.0
  %1944 = vmatprep.subr.mxu0 0.0
  %1945 = vmatpush1.msra.mxu0 0.0
  %1946 = vmatprep.subr.mxu0 0.0
  %1947 = vmatpush1.msra.mxu0 0.0
  %1948 = vmatprep.subr.mxu0 0.0
  %1949 = vmatpush1.msra.mxu0 0.0
  %1950 = vmatprep.subr.mxu0 0.0
  %1951 = vmatpush1.msra.mxu0 0.0
  %1952 = vmatprep.subr.mxu0 0.0
  %1953 = vmatpush1.msra.mxu0 0.0
  %1954 = vmatprep.subr.mxu0 0.0
  %1955 = vmatpush1.msra.mxu0 0.0
  %1956 = vmatprep.subr.mxu0 0.0
  %1957 = vmatpush1.msra.mxu0 0.0
  %1958 = vmatprep.subr.mxu0 0.0
  %1959 = vmatpush1.msra.mxu0 0.0
  %1960 = vmatprep.subr.mxu0 0.0
  %1961 = vmatpush1.msra.mxu0 0.0
  %1962 = vmatprep.mubr.f32.mxu0 0.0
  %1963 = vmatmul.mubr.f32.gmra.mrb[0].mxu0 %v318
  %v1964 = vpop.f32.mrb[0].mxu0
  %v1965 = vadd.f32 %v1897, %v1964
  %v1966 = vpop.f32.mrb[0].mxu0
  %1967 = vmatprep.mubr.f32.mxu0 0.0
  %1968 = vmatmul.mubr.f32.gmra.mrb[0].mxu0 %v321
  %v1969 = vpop.f32.mrb[0].mxu0
  %v1970 = vadd.f32 %v1897, %v1969
  %v1971 = vpop.f32.mrb[0].mxu0
  %1972 = vmatprep.mubr.f32.mxu0 0.0
  %1973 = vmatmul.mubr.f32.gmra.mrb[0].mxu0 %v324
  %v1974 = vpop.f32.mrb[0].mxu0
  %v1975 = vadd.f32 %v1897, %v1974
  %v1976 = vpop.f32.mrb[0].mxu0
  %1977 = vmatprep.mubr.f32.mxu0 0.0
  %1978 = vmatmul.mubr.f32.gmra.mrb[0].mxu0 %v327
  %v1979 = vpop.f32.mrb[0].mxu0
  %v1980 = vadd.f32 %v1897, %v1979
  %v1981 = vpop.f32.mrb[0].mxu0
  %1982 = vmatprep.mubr.f32.mxu0 0.0
  %1983 = vmatmul.mubr.f32.gmra.mrb[0].mxu0 %v330
  %v1984 = vpop.f32.mrb[0].mxu0
  %v1985 = vadd.f32 %v1897, %v1984
  %v1986 = vpop.f32.mrb[0].mxu0
  %1987 = vmatprep.mubr.f32.mxu0 0.0
  %1988 = vmatmul.mubr.f32.gmra.mrb[0].mxu0 %v333
  %v1989 = vpop.f32.mrb[0].mxu0
  %v1990 = vadd.f32 %v1897, %v1989
  %v1991 = vpop.f32.mrb[0].mxu0
  %1992 = vmatprep.mubr.f32.mxu0 0.0
  %1993 = vmatmul.mubr.f32.gmra.mrb[0].mxu0 %v336
  %v1994 = vpop.f32.mrb[0].mxu0
  %v1995 = vadd.f32 %v1897, %v1994
  %v1996 = vpop.f32.mrb[0].mxu0
  %1997 = vmatprep.mubr.f32.mxu0 0.0
  %1998 = vmatmul.mubr.f32.gmra.mrb[0].mxu0 %v339
  %v1999 = vpop.f32.mrb[0].mxu0
  %v2000 = vadd.f32 %v1897, %v1999
  %v2001 = vpop.f32.mrb[0].mxu0
  %2002 = vdwg.mxu0
  %v2003 = vadd.f32 %v1965, %v1752
  %v2004 = vadd.f32 %v1970, %v1753
  %v2005 = vadd.f32 %v1975, %v1754
  %v2006 = vadd.f32 %v1980, %v1755
  %v2007 = vadd.f32 %v1985, %v1756
  %v2008 = vadd.f32 %v1990, %v1757
  %v2009 = vadd.f32 %v1995, %v1758
  %v2010 = vadd.f32 %v2000, %v1759
  %v2011 = vmax.f32 %v2003, 0.0
  %v2012 = vmax.f32 %v2004, 0.0
  %v2013 = vmax.f32 %v2005, 0.0
  %v2014 = vmax.f32 %v2006, 0.0
  %v2015 = vmax.f32 %v2007, 0.0
  %v2016 = vmax.f32 %v2008, 0.0
  %v2017 = vmax.f32 %v2009, 0.0
  %v2018 = vmax.f32 %v2010, 0.0
  %v2019 = vsel %vm181, %v2011, 0.0
  %2020 = vadd.xlane.f32.xlu0 %v2019
  %v2021 = vpop.xlane.xlu0 %2020
  %v2022 = vsel %vm181, %v2012, 0.0
  %2023 = vadd.xlane.f32.xlu0 %v2022
  %v2024 = vpop.xlane.xlu0 %2023
  %v2025 = vsel %vm181, %v2013, 0.0
  %2026 = vadd.xlane.f32.xlu0 %v2025
  %v2027 = vpop.xlane.xlu0 %2026
  %v2028 = vsel %vm181, %v2014, 0.0
  %2029 = vadd.xlane.f32.xlu0 %v2028
  %v2030 = vpop.xlane.xlu0 %2029
  %v2031 = vsel %vm181, %v2015, 0.0
  %2032 = vadd.xlane.f32.xlu0 %v2031
  %v2033 = vpop.xlane.xlu0 %2032
  %v2034 = vsel %vm181, %v2016, 0.0
  %2035 = vadd.xlane.f32.xlu0 %v2034
  %v2036 = vpop.xlane.xlu0 %2035
  %v2037 = vsel %vm181, %v2017, 0.0
  %2038 = vadd.xlane.f32.xlu0 %v2037
  %v2039 = vpop.xlane.xlu0 %2038
  %v2040 = vsel %vm181, %v2018, 0.0
  %2041 = vadd.xlane.f32.xlu0 %v2040
  %v2042 = vpop.xlane.xlu0 %2041
  %v2043 = vmul.f32 %v2021, %v486
  %v2044 = vmul.f32 %v2024, %v486
  %v2045 = vmul.f32 %v2027, %v486
  %v2046 = vmul.f32 %v2030, %v486
  %v2047 = vmul.f32 %v2033, %v486
  %v2048 = vmul.f32 %v2036, %v486
  %v2049 = vmul.f32 %v2039, %v486
  %v2050 = vmul.f32 %v2042, %v486
  %v2051 = vsub.f32 %v2011, %v2043
  %v2052 = vsub.f32 %v2012, %v2044
  %v2053 = vsub.f32 %v2013, %v2045
  %v2054 = vsub.f32 %v2014, %v2046
  %v2055 = vsub.f32 %v2015, %v2047
  %v2056 = vsub.f32 %v2016, %v2048
  %v2057 = vsub.f32 %v2017, %v2049
  %v2058 = vsub.f32 %v2018, %v2050
  %v2059 = vmul.f32 %v2051, %v2051
  %v2060 = vmul.f32 %v2052, %v2052
  %v2061 = vmul.f32 %v2053, %v2053
  %v2062 = vmul.f32 %v2054, %v2054
  %v2063 = vmul.f32 %v2055, %v2055
  %v2064 = vmul.f32 %v2056, %v2056
  %v2065 = vmul.f32 %v2057, %v2057
  %v2066 = vmul.f32 %v2058, %v2058
  %v2067 = vsel %vm181, %v2059, 0.0
  %2068 = vadd.xlane.f32.xlu0 %v2067
  %v2069 = vpop.xlane.xlu0 %2068
  %v2070 = vsel %vm181, %v2060, 0.0
  %2071 = vadd.xlane.f32.xlu0 %v2070
  %v2072 = vpop.xlane.xlu0 %2071
  %v2073 = vsel %vm181, %v2061, 0.0
  %2074 = vadd.xlane.f32.xlu0 %v2073
  %v2075 = vpop.xlane.xlu0 %2074
  %v2076 = vsel %vm181, %v2062, 0.0
  %2077 = vadd.xlane.f32.xlu0 %v2076
  %v2078 = vpop.xlane.xlu0 %2077
  %v2079 = vsel %vm181, %v2063, 0.0
  %2080 = vadd.xlane.f32.xlu0 %v2079
  %v2081 = vpop.xlane.xlu0 %2080
  %v2082 = vsel %vm181, %v2064, 0.0
  %2083 = vadd.xlane.f32.xlu0 %v2082
  %v2084 = vpop.xlane.xlu0 %2083
  %v2085 = vsel %vm181, %v2065, 0.0
  %2086 = vadd.xlane.f32.xlu0 %v2085
  %v2087 = vpop.xlane.xlu0 %2086
  %v2088 = vsel %vm181, %v2066, 0.0
  %2089 = vadd.xlane.f32.xlu0 %v2088
  %v2090 = vpop.xlane.xlu0 %2089
  %v2091 = vmul.f32 %v2069, %v486
  %v2092 = vmul.f32 %v2072, %v486
  %v2093 = vmul.f32 %v2075, %v486
  %v2094 = vmul.f32 %v2078, %v486
  %v2095 = vmul.f32 %v2081, %v486
  %v2096 = vmul.f32 %v2084, %v486
  %v2097 = vmul.f32 %v2087, %v486
  %v2098 = vmul.f32 %v2090, %v486
  %v2099 = vadd.f32 %v2091, 1e-05
  %v2100 = vadd.f32 %v2092, 1e-05
  %v2101 = vadd.f32 %v2093, 1e-05
  %v2102 = vadd.f32 %v2094, 1e-05
  %v2103 = vadd.f32 %v2095, 1e-05
  %v2104 = vadd.f32 %v2096, 1e-05
  %v2105 = vadd.f32 %v2097, 1e-05
  %v2106 = vadd.f32 %v2098, 1e-05
  %v2107 = vrsqrt.pop %v2099
  %v2108 = vrsqrt.pop %v2100
  %v2109 = vrsqrt.pop %v2101
  %v2110 = vrsqrt.pop %v2102
  %v2111 = vrsqrt.pop %v2103
  %v2112 = vrsqrt.pop %v2104
  %v2113 = vrsqrt.pop %v2105
  %v2114 = vrsqrt.pop %v2106
  %v2115 = vmul.f32 %v2051, %v2107
  %v2116 = vmul.f32 %v2052, %v2108
  %v2117 = vmul.f32 %v2053, %v2109
  %v2118 = vmul.f32 %v2054, %v2110
  %v2119 = vmul.f32 %v2055, %v2111
  %v2120 = vmul.f32 %v2056, %v2112
  %v2121 = vmul.f32 %v2057, %v2113
  %v2122 = vmul.f32 %v2058, %v2114
  %v2123 = vld [vmem:[%s3 + $0x133] sm:$0x1]
  %v2124 = vlaneseq
  %v2125 = vshrl.u32 %v2124, 7
  %v2126 = vsub.s32 0, %v2125
  %v2127 = vrot.slane %v2123, %v2126
  %v2128 = vmul.f32 %v2115, %v2127
  %v2129 = vmul.f32 %v2116, %v2127
  %v2130 = vmul.f32 %v2117, %v2127
  %v2131 = vmul.f32 %v2118, %v2127
  %v2132 = vmul.f32 %v2119, %v2127
  %v2133 = vmul.f32 %v2120, %v2127
  %v2134 = vmul.f32 %v2121, %v2127
  %v2135 = vmul.f32 %v2122, %v2127
  %v2136 = vld [vmem:[%s3 + $0x139] sm:$0x1]
  %v2137 = vlaneseq
  %v2138 = vshrl.u32 %v2137, 7
  %v2139 = vsub.s32 0, %v2138
  %v2140 = vrot.slane %v2136, %v2139
  %v2141 = vadd.f32 %v2128, %v2140
  %v2142 = vadd.f32 %v2129, %v2140
  %v2143 = vadd.f32 %v2130, %v2140
  %v2144 = vadd.f32 %v2131, %v2140
  %v2145 = vadd.f32 %v2132, %v2140
  %v2146 = vadd.f32 %v2133, %v2140
  %v2147 = vadd.f32 %v2134, %v2140
  %v2148 = vadd.f32 %v2135, %v2140
  %v2149 = vld [vmem:[%s3 + $0xc8] sm:$0xff]
  %v2150 = vld [vmem:[%s3 + $0xd0] sm:$0xff]
  %v2151 = vld [vmem:[%s3 + $0xd8] sm:$0xff]
  %v2152 = vld [vmem:[%s3 + $0xe0] sm:$0xff]
  %v2154 = vsel %vm181, %v2141, 0
  %v2157 = vsel %vm181, %v2142, 0
  %v2160 = vsel %vm181, %v2143, 0
  %v2163 = vsel %vm181, %v2144, 0
  %v2166 = vsel %vm181, %v2145, 0
  %v2169 = vsel %vm181, %v2146, 0
  %v2172 = vsel %vm181, %v2147, 0
  %v2175 = vsel %vm181, %v2148, 0
  %2177 = vmatprep.subr.mxu0 0.0
  %2178 = vmatpush1.msra.mxu0 %v2149
  %2179 = vmatprep.subr.mxu0 0.0
  %2180 = vmatpush1.msra.mxu0 %v2150
  %2181 = vmatprep.subr.mxu0 0.0
  %2182 = vmatpush1.msra.mxu0 %v2151
  %2183 = vmatprep.subr.mxu0 0.0
  %2184 = vmatpush1.msra.mxu0 %v2152
  %2185 = vmatprep.subr.mxu0 0.0
  %2186 = vmatpush1.msra.mxu0 0.0
  %2187 = vmatprep.subr.mxu0 0.0
  %2188 = vmatpush1.msra.mxu0 0.0
  %2189 = vmatprep.subr.mxu0 0.0
  %2190 = vmatpush1.msra.mxu0 0.0
  %2191 = vmatprep.subr.mxu0 0.0
  %2192 = vmatpush1.msra.mxu0 0.0
  %2193 = vmatprep.subr.mxu0 0.0
  %2194 = vmatpush1.msra.mxu0 0.0
  %2195 = vmatprep.subr.mxu0 0.0
  %2196 = vmatpush1.msra.mxu0 0.0
  %2197 = vmatprep.subr.mxu0 0.0
  %2198 = vmatpush1.msra.mxu0 0.0
  %2199 = vmatprep.subr.mxu0 0.0
  %2200 = vmatpush1.msra.mxu0 0.0
  %2201 = vmatprep.subr.mxu0 0.0
  %2202 = vmatpush1.msra.mxu0 0.0
  %2203 = vmatprep.subr.mxu0 0.0
  %2204 = vmatpush1.msra.mxu0 0.0
  %2205 = vmatprep.subr.mxu0 0.0
  %2206 = vmatpush1.msra.mxu0 0.0
  %2207 = vmatprep.subr.mxu0 0.0
  %2208 = vmatpush1.msra.mxu0 0.0
  %2209 = vmatprep.subr.mxu0 0.0
  %2210 = vmatpush1.msra.mxu0 0.0
  %2211 = vmatprep.subr.mxu0 0.0
  %2212 = vmatpush1.msra.mxu0 0.0
  %2213 = vmatprep.subr.mxu0 0.0
  %2214 = vmatpush1.msra.mxu0 0.0
  %2215 = vmatprep.subr.mxu0 0.0
  %2216 = vmatpush1.msra.mxu0 0.0
  %2217 = vmatprep.subr.mxu0 0.0
  %2218 = vmatpush1.msra.mxu0 0.0
  %2219 = vmatprep.subr.mxu0 0.0
  %2220 = vmatpush1.msra.mxu0 0.0
  %2221 = vmatprep.subr.mxu0 0.0
  %2222 = vmatpush1.msra.mxu0 0.0
  %2223 = vmatprep.subr.mxu0 0.0
  %2224 = vmatpush1.msra.mxu0 0.0
  %2225 = vmatprep.subr.mxu0 0.0
  %2226 = vmatpush1.msra.mxu0 0.0
  %2227 = vmatprep.subr.mxu0 0.0
  %2228 = vmatpush1.msra.mxu0 0.0
  %2229 = vmatprep.subr.mxu0 0.0
  %2230 = vmatpush1.msra.mxu0 0.0
  %2231 = vmatprep.subr.mxu0 0.0
  %2232 = vmatpush1.msra.mxu0 0.0
  %2233 = vmatprep.subr.mxu0 0.0
  %2234 = vmatpush1.msra.mxu0 0.0
  %2235 = vmatprep.subr.mxu0 0.0
  %2236 = vmatpush1.msra.mxu0 0.0
  %2237 = vmatprep.subr.mxu0 0.0
  %2238 = vmatpush1.msra.mxu0 0.0
  %2239 = vmatprep.subr.mxu0 0.0
  %2240 = vmatpush1.msra.mxu0 0.0
  %2241 = vmatprep.mubr.f32.mxu0 0.0
  %2242 = vmatmul.mubr.f32.gmra.mrb[0].mxu0 %v2154
  %v2243 = vpop.f32.mrb[0].mxu0
  %v2244 = vadd.f32 0.0, %v2243
  %v2245 = vpop.f32.mrb[0].mxu0
  %2246 = vmatprep.mubr.f32.mxu0 0.0
  %2247 = vmatmul.mubr.f32.gmra.mrb[0].mxu0 %v2157
  %v2248 = vpop.f32.mrb[0].mxu0
  %v2249 = vadd.f32 0.0, %v2248
  %v2250 = vpop.f32.mrb[0].mxu0
  %2251 = vmatprep.mubr.f32.mxu0 0.0
  %2252 = vmatmul.mubr.f32.gmra.mrb[0].mxu0 %v2160
  %v2253 = vpop.f32.mrb[0].mxu0
  %v2254 = vadd.f32 0.0, %v2253
  %v2255 = vpop.f32.mrb[0].mxu0
  %2256 = vmatprep.mubr.f32.mxu0 0.0
  %2257 = vmatmul.mubr.f32.gmra.mrb[0].mxu0 %v2163
  %v2258 = vpop.f32.mrb[0].mxu0
  %v2259 = vadd.f32 0.0, %v2258
  %v2260 = vpop.f32.mrb[0].mxu0
  %2261 = vmatprep.mubr.f32.mxu0 0.0
  %2262 = vmatmul.mubr.f32.gmra.mrb[0].mxu0 %v2166
  %v2263 = vpop.f32.mrb[0].mxu0
  %v2264 = vadd.f32 0.0, %v2263
  %v2265 = vpop.f32.mrb[0].mxu0
  %2266 = vmatprep.mubr.f32.mxu0 0.0
  %2267 = vmatmul.mubr.f32.gmra.mrb[0].mxu0 %v2169
  %v2268 = vpop.f32.mrb[0].mxu0
  %v2269 = vadd.f32 0.0, %v2268
  %v2270 = vpop.f32.mrb[0].mxu0
  %2271 = vmatprep.mubr.f32.mxu0 0.0
  %2272 = vmatmul.mubr.f32.gmra.mrb[0].mxu0 %v2172
  %v2273 = vpop.f32.mrb[0].mxu0
  %v2274 = vadd.f32 0.0, %v2273
  %v2275 = vpop.f32.mrb[0].mxu0
  %2276 = vmatprep.mubr.f32.mxu0 0.0
  %2277 = vmatmul.mubr.f32.gmra.mrb[0].mxu0 %v2175
  %v2278 = vpop.f32.mrb[0].mxu0
  %v2279 = vadd.f32 0.0, %v2278
  %v2280 = vpop.f32.mrb[0].mxu0
  %2281 = vdwg.mxu0
  %v2282 = vld [vmem:[%s3 + $0x12e] sm:$0x1]
  %v2283 = vlaneseq
  %v2284 = vshrl.u32 %v2283, 7
  %v2285 = vsub.s32 0, %v2284
  %v2286 = vrot.slane %v2282, %v2285
  %2287 = vmatprep.subr.mxu0 0.0
  %2288 = vmatpush1.msra.mxu0 %v2244
  %2289 = vmatprep.subr.mxu0 0.0
  %2290 = vmatpush1.msra.mxu0 %v2249
  %2291 = vmatprep.subr.mxu0 0.0
  %2292 = vmatpush1.msra.mxu0 %v2254
  %2293 = vmatprep.subr.mxu0 0.0
  %2294 = vmatpush1.msra.mxu0 %v2259
  %2295 = vmatprep.subr.mxu0 0.0
  %2296 = vmatpush1.msra.mxu0 %v2264
  %2297 = vmatprep.subr.mxu0 0.0
  %2298 = vmatpush1.msra.mxu0 %v2269
  %2299 = vmatprep.subr.mxu0 0.0
  %2300 = vmatpush1.msra.mxu0 %v2274
  %2301 = vmatprep.subr.mxu0 0.0
  %2302 = vmatpush1.msra.mxu0 %v2279
  %2303 = vmatprep.subr.mxu0 0.0
  %2304 = vmatpush1.msra.mxu0 0.0
  %2305 = vmatprep.subr.mxu0 0.0
  %2306 = vmatpush1.msra.mxu0 0.0
  %2307 = vmatprep.subr.mxu0 0.0
  %2308 = vmatpush1.msra.mxu0 0.0
  %2309 = vmatprep.subr.mxu0 0.0
  %2310 = vmatpush1.msra.mxu0 0.0
  %2311 = vmatprep.subr.mxu0 0.0
  %2312 = vmatpush1.msra.mxu0 0.0
  %2313 = vmatprep.subr.mxu0 0.0
  %2314 = vmatpush1.msra.mxu0 0.0
  %2315 = vmatprep.subr.mxu0 0.0
  %2316 = vmatpush1.msra.mxu0 0.0
  %2317 = vmatprep.subr.mxu0 0.0
  %2318 = vmatpush1.msra.mxu0 0.0
  %2319 = vmatprep.subr.mxu0 0.0
  %2320 = vmatpush1.msra.mxu0 0.0
  %2321 = vmatprep.subr.mxu0 0.0
  %2322 = vmatpush1.msra.mxu0 0.0
  %2323 = vmatprep.subr.mxu0 0.0
  %2324 = vmatpush1.msra.mxu0 0.0
  %2325 = vmatprep.subr.mxu0 0.0
  %2326 = vmatpush1.msra.mxu0 0.0
  %2327 = vmatprep.subr.mxu0 0.0
  %2328 = vmatpush1.msra.mxu0 0.0
  %2329 = vmatprep.subr.mxu0 0.0
  %2330 = vmatpush1.msra.mxu0 0.0
  %2331 = vmatprep.subr.mxu0 0.0
  %2332 = vmatpush1.msra.mxu0 0.0
  %2333 = vmatprep.subr.mxu0 0.0
  %2334 = vmatpush1.msra.mxu0 0.0
  %2335 = vmatprep.subr.mxu0 0.0
  %2336 = vmatpush1.msra.mxu0 0.0
  %2337 = vmatprep.subr.mxu0 0.0
  %2338 = vmatpush1.msra.mxu0 0.0
  %2339 = vmatprep.subr.mxu0 0.0
  %2340 = vmatpush1.msra.mxu0 0.0
  %2341 = vmatprep.subr.mxu0 0.0
  %2342 = vmatpush1.msra.mxu0 0.0
  %2343 = vmatprep.subr.mxu0 0.0
  %2344 = vmatpush1.msra.mxu0 0.0
  %2345 = vmatprep.subr.mxu0 0.0
  %2346 = vmatpush1.msra.mxu0 0.0
  %2347 = vmatprep.subr.mxu0 0.0
  %2348 = vmatpush1.msra.mxu0 0.0
  %2349 = vmatprep.subr.mxu0 0.0
  %2350 = vmatpush1.msra.mxu0 0.0
  %2351 = vmatprep.mubr.f32.mxu0 0.0
  %2352 = vmatmul.mubr.f32.gmra.mrb[0].mxu0 %v318
  %v2353 = vpop.f32.mrb[0].mxu0
  %v2354 = vadd.f32 %v2286, %v2353
  %v2355 = vpop.f32.mrb[0].mxu0
  %2356 = vmatprep.mubr.f32.mxu0 0.0
  %2357 = vmatmul.mubr.f32.gmra.mrb[0].mxu0 %v321
  %v2358 = vpop.f32.mrb[0].mxu0
  %v2359 = vadd.f32 %v2286, %v2358
  %v2360 = vpop.f32.mrb[0].mxu0
  %2361 = vmatprep.mubr.f32.mxu0 0.0
  %2362 = vmatmul.mubr.f32.gmra.mrb[0].mxu0 %v324
  %v2363 = vpop.f32.mrb[0].mxu0
  %v2364 = vadd.f32 %v2286, %v2363
  %v2365 = vpop.f32.mrb[0].mxu0
  %2366 = vmatprep.mubr.f32.mxu0 0.0
  %2367 = vmatmul.mubr.f32.gmra.mrb[0].mxu0 %v327
  %v2368 = vpop.f32.mrb[0].mxu0
  %v2369 = vadd.f32 %v2286, %v2368
  %v2370 = vpop.f32.mrb[0].mxu0
  %2371 = vmatprep.mubr.f32.mxu0 0.0
  %2372 = vmatmul.mubr.f32.gmra.mrb[0].mxu0 %v330
  %v2373 = vpop.f32.mrb[0].mxu0
  %v2374 = vadd.f32 %v2286, %v2373
  %v2375 = vpop.f32.mrb[0].mxu0
  %2376 = vmatprep.mubr.f32.mxu0 0.0
  %2377 = vmatmul.mubr.f32.gmra.mrb[0].mxu0 %v333
  %v2378 = vpop.f32.mrb[0].mxu0
  %v2379 = vadd.f32 %v2286, %v2378
  %v2380 = vpop.f32.mrb[0].mxu0
  %2381 = vmatprep.mubr.f32.mxu0 0.0
  %2382 = vmatmul.mubr.f32.gmra.mrb[0].mxu0 %v336
  %v2383 = vpop.f32.mrb[0].mxu0
  %v2384 = vadd.f32 %v2286, %v2383
  %v2385 = vpop.f32.mrb[0].mxu0
  %2386 = vmatprep.mubr.f32.mxu0 0.0
  %2387 = vmatmul.mubr.f32.gmra.mrb[0].mxu0 %v339
  %v2388 = vpop.f32.mrb[0].mxu0
  %v2389 = vadd.f32 %v2286, %v2388
  %v2390 = vpop.f32.mrb[0].mxu0
  %2391 = vdwg.mxu0
  %v2392 = vadd.f32 %v2354, %v2141
  %v2393 = vadd.f32 %v2359, %v2142
  %v2394 = vadd.f32 %v2364, %v2143
  %v2395 = vadd.f32 %v2369, %v2144
  %v2396 = vadd.f32 %v2374, %v2145
  %v2397 = vadd.f32 %v2379, %v2146
  %v2398 = vadd.f32 %v2384, %v2147
  %v2399 = vadd.f32 %v2389, %v2148
  %v2400 = vmax.f32 %v2392, 0.0
  %v2401 = vmax.f32 %v2393, 0.0
  %v2402 = vmax.f32 %v2394, 0.0
  %v2403 = vmax.f32 %v2395, 0.0
  %v2404 = vmax.f32 %v2396, 0.0
  %v2405 = vmax.f32 %v2397, 0.0
  %v2406 = vmax.f32 %v2398, 0.0
  %v2407 = vmax.f32 %v2399, 0.0
  %v2408 = vsel %vm181, %v2400, 0.0
  %2409 = vadd.xlane.f32.xlu0 %v2408
  %v2410 = vpop.xlane.xlu0 %2409
  %v2411 = vsel %vm181, %v2401, 0.0
  %2412 = vadd.xlane.f32.xlu0 %v2411
  %v2413 = vpop.xlane.xlu0 %2412
  %v2414 = vsel %vm181, %v2402, 0.0
  %2415 = vadd.xlane.f32.xlu0 %v2414
  %v2416 = vpop.xlane.xlu0 %2415
  %v2417 = vsel %vm181, %v2403, 0.0
  %2418 = vadd.xlane.f32.xlu0 %v2417
  %v2419 = vpop.xlane.xlu0 %2418
  %v2420 = vsel %vm181, %v2404, 0.0
  %2421 = vadd.xlane.f32.xlu0 %v2420
  %v2422 = vpop.xlane.xlu0 %2421
  %v2423 = vsel %vm181, %v2405, 0.0
  %2424 = vadd.xlane.f32.xlu0 %v2423
  %v2425 = vpop.xlane.xlu0 %2424
  %v2426 = vsel %vm181, %v2406, 0.0
  %2427 = vadd.xlane.f32.xlu0 %v2426
  %v2428 = vpop.xlane.xlu0 %2427
  %v2429 = vsel %vm181, %v2407, 0.0
  %2430 = vadd.xlane.f32.xlu0 %v2429
  %v2431 = vpop.xlane.xlu0 %2430
  %v2432 = vmul.f32 %v2410, %v486
  %v2433 = vmul.f32 %v2413, %v486
  %v2434 = vmul.f32 %v2416, %v486
  %v2435 = vmul.f32 %v2419, %v486
  %v2436 = vmul.f32 %v2422, %v486
  %v2437 = vmul.f32 %v2425, %v486
  %v2438 = vmul.f32 %v2428, %v486
  %v2439 = vmul.f32 %v2431, %v486
  %v2440 = vsub.f32 %v2400, %v2432
  %v2441 = vsub.f32 %v2401, %v2433
  %v2442 = vsub.f32 %v2402, %v2434
  %v2443 = vsub.f32 %v2403, %v2435
  %v2444 = vsub.f32 %v2404, %v2436
  %v2445 = vsub.f32 %v2405, %v2437
  %v2446 = vsub.f32 %v2406, %v2438
  %v2447 = vsub.f32 %v2407, %v2439
  %v2448 = vmul.f32 %v2440, %v2440
  %v2449 = vmul.f32 %v2441, %v2441
  %v2450 = vmul.f32 %v2442, %v2442
  %v2451 = vmul.f32 %v2443, %v2443
  %v2452 = vmul.f32 %v2444, %v2444
  %v2453 = vmul.f32 %v2445, %v2445
  %v2454 = vmul.f32 %v2446, %v2446
  %v2455 = vmul.f32 %v2447, %v2447
  %v2456 = vsel %vm181, %v2448, 0.0
  %2457 = vadd.xlane.f32.xlu0 %v2456
  %v2458 = vpop.xlane.xlu0 %2457
  %v2459 = vsel %vm181, %v2449, 0.0
  %2460 = vadd.xlane.f32.xlu0 %v2459
  %v2461 = vpop.xlane.xlu0 %2460
  %v2462 = vsel %vm181, %v2450, 0.0
  %2463 = vadd.xlane.f32.xlu0 %v2462
  %v2464 = vpop.xlane.xlu0 %2463
  %v2465 = vsel %vm181, %v2451, 0.0
  %2466 = vadd.xlane.f32.xlu0 %v2465
  %v2467 = vpop.xlane.xlu0 %2466
  %v2468 = vsel %vm181, %v2452, 0.0
  %2469 = vadd.xlane.f32.xlu0 %v2468
  %v2470 = vpop.xlane.xlu0 %2469
  %v2471 = vsel %vm181, %v2453, 0.0
  %2472 = vadd.xlane.f32.xlu0 %v2471
  %v2473 = vpop.xlane.xlu0 %2472
  %v2474 = vsel %vm181, %v2454, 0.0
  %2475 = vadd.xlane.f32.xlu0 %v2474
  %v2476 = vpop.xlane.xlu0 %2475
  %v2477 = vsel %vm181, %v2455, 0.0
  %2478 = vadd.xlane.f32.xlu0 %v2477
  %v2479 = vpop.xlane.xlu0 %2478
  %v2480 = vmul.f32 %v2458, %v486
  %v2481 = vmul.f32 %v2461, %v486
  %v2482 = vmul.f32 %v2464, %v486
  %v2483 = vmul.f32 %v2467, %v486
  %v2484 = vmul.f32 %v2470, %v486
  %v2485 = vmul.f32 %v2473, %v486
  %v2486 = vmul.f32 %v2476, %v486
  %v2487 = vmul.f32 %v2479, %v486
  %v2488 = vadd.f32 %v2480, 1e-05
  %v2489 = vadd.f32 %v2481, 1e-05
  %v2490 = vadd.f32 %v2482, 1e-05
  %v2491 = vadd.f32 %v2483, 1e-05
  %v2492 = vadd.f32 %v2484, 1e-05
  %v2493 = vadd.f32 %v2485, 1e-05
  %v2494 = vadd.f32 %v2486, 1e-05
  %v2495 = vadd.f32 %v2487, 1e-05
  %v2496 = vrsqrt.pop %v2488
  %v2497 = vrsqrt.pop %v2489
  %v2498 = vrsqrt.pop %v2490
  %v2499 = vrsqrt.pop %v2491
  %v2500 = vrsqrt.pop %v2492
  %v2501 = vrsqrt.pop %v2493
  %v2502 = vrsqrt.pop %v2494
  %v2503 = vrsqrt.pop %v2495
  %v2504 = vmul.f32 %v2440, %v2496
  %v2505 = vmul.f32 %v2441, %v2497
  %v2506 = vmul.f32 %v2442, %v2498
  %v2507 = vmul.f32 %v2443, %v2499
  %v2508 = vmul.f32 %v2444, %v2500
  %v2509 = vmul.f32 %v2445, %v2501
  %v2510 = vmul.f32 %v2446, %v2502
  %v2511 = vmul.f32 %v2447, %v2503
  %v2512 = vld [vmem:[%s3 + $0x134] sm:$0x1]
  %v2513 = vlaneseq
  %v2514 = vshrl.u32 %v2513, 7
  %v2515 = vsub.s32 0, %v2514
  %v2516 = vrot.slane %v2512, %v2515
  %v2517 = vmul.f32 %v2504, %v2516
  %v2518 = vmul.f32 %v2505, %v2516
  %v2519 = vmul.f32 %v2506, %v2516
  %v2520 = vmul.f32 %v2507, %v2516
  %v2521 = vmul.f32 %v2508, %v2516
  %v2522 = vmul.f32 %v2509, %v2516
  %v2523 = vmul.f32 %v2510, %v2516
  %v2524 = vmul.f32 %v2511, %v2516
  %v2525 = vld [vmem:[%s3 + $0x13a] sm:$0x1]
  %v2526 = vlaneseq
  %v2527 = vshrl.u32 %v2526, 7
  %v2528 = vsub.s32 0, %v2527
  %v2529 = vrot.slane %v2525, %v2528
  %v2530 = vadd.f32 %v2517, %v2529
  %v2531 = vadd.f32 %v2518, %v2529
  %v2532 = vadd.f32 %v2519, %v2529
  %v2533 = vadd.f32 %v2520, %v2529
  %v2534 = vadd.f32 %v2521, %v2529
  %v2535 = vadd.f32 %v2522, %v2529
  %v2536 = vadd.f32 %v2523, %v2529
  %v2537 = vadd.f32 %v2524, %v2529
  %v2538 = vld [vmem:[%s3 + $0x8] sm:$0xff]
  %v2539 = vld [vmem:[%s3 + $0x10] sm:$0xff]
  %v2540 = vld [vmem:[%s3 + $0x18] sm:$0xff]
  %v2541 = vld [vmem:[%s3 + $0x20] sm:$0xff]
  %v2542 = vld [vmem:[%s3 + $0x13b] sm:$0x1]
  %v2543 = vlaneseq
  %v2544 = vshrl.u32 %v2543, 7
  %v2545 = vsub.s32 0, %v2544
  %v2546 = vrot.slane %v2542, %v2545
  %v2548 = vsel %vm181, %v2530, 0
  %v2551 = vsel %vm181, %v2531, 0
  %v2554 = vsel %vm181, %v2532, 0
  %v2557 = vsel %vm181, %v2533, 0
  %v2560 = vsel %vm181, %v2534, 0
  %v2563 = vsel %vm181, %v2535, 0
  %v2566 = vsel %vm181, %v2536, 0
  %v2569 = vsel %vm181, %v2537, 0
  %2571 = vmatprep.subr.mxu0 0.0
  %2572 = vmatpush1.msra.mxu0 %v2538
  %2573 = vmatprep.subr.mxu0 0.0
  %2574 = vmatpush1.msra.mxu0 %v2539
  %2575 = vmatprep.subr.mxu0 0.0
  %2576 = vmatpush1.msra.mxu0 %v2540
  %2577 = vmatprep.subr.mxu0 0.0
  %2578 = vmatpush1.msra.mxu0 %v2541
  %2579 = vmatprep.subr.mxu0 0.0
  %2580 = vmatpush1.msra.mxu0 0.0
  %2581 = vmatprep.subr.mxu0 0.0
  %2582 = vmatpush1.msra.mxu0 0.0
  %2583 = vmatprep.subr.mxu0 0.0
  %2584 = vmatpush1.msra.mxu0 0.0
  %2585 = vmatprep.subr.mxu0 0.0
  %2586 = vmatpush1.msra.mxu0 0.0
  %2587 = vmatprep.subr.mxu0 0.0
  %2588 = vmatpush1.msra.mxu0 0.0
  %2589 = vmatprep.subr.mxu0 0.0
  %2590 = vmatpush1.msra.mxu0 0.0
  %2591 = vmatprep.subr.mxu0 0.0
  %2592 = vmatpush1.msra.mxu0 0.0
  %2593 = vmatprep.subr.mxu0 0.0
  %2594 = vmatpush1.msra.mxu0 0.0
  %2595 = vmatprep.subr.mxu0 0.0
  %2596 = vmatpush1.msra.mxu0 0.0
  %2597 = vmatprep.subr.mxu0 0.0
  %2598 = vmatpush1.msra.mxu0 0.0
  %2599 = vmatprep.subr.mxu0 0.0
  %2600 = vmatpush1.msra.mxu0 0.0
  %2601 = vmatprep.subr.mxu0 0.0
  %2602 = vmatpush1.msra.mxu0 0.0
  %2603 = vmatprep.subr.mxu0 0.0
  %2604 = vmatpush1.msra.mxu0 0.0
  %2605 = vmatprep.subr.mxu0 0.0
  %2606 = vmatpush1.msra.mxu0 0.0
  %2607 = vmatprep.subr.mxu0 0.0
  %2608 = vmatpush1.msra.mxu0 0.0
  %2609 = vmatprep.subr.mxu0 0.0
  %2610 = vmatpush1.msra.mxu0 0.0
  %2611 = vmatprep.subr.mxu0 0.0
  %2612 = vmatpush1.msra.mxu0 0.0
  %2613 = vmatprep.subr.mxu0 0.0
  %2614 = vmatpush1.msra.mxu0 0.0
  %2615 = vmatprep.subr.mxu0 0.0
  %2616 = vmatpush1.msra.mxu0 0.0
  %2617 = vmatprep.subr.mxu0 0.0
  %2618 = vmatpush1.msra.mxu0 0.0
  %2619 = vmatprep.subr.mxu0 0.0
  %2620 = vmatpush1.msra.mxu0 0.0
  %2621 = vmatprep.subr.mxu0 0.0
  %2622 = vmatpush1.msra.mxu0 0.0
  %2623 = vmatprep.subr.mxu0 0.0
  %2624 = vmatpush1.msra.mxu0 0.0
  %2625 = vmatprep.subr.mxu0 0.0
  %2626 = vmatpush1.msra.mxu0 0.0
  %2627 = vmatprep.subr.mxu0 0.0
  %2628 = vmatpush1.msra.mxu0 0.0
  %2629 = vmatprep.subr.mxu0 0.0
  %2630 = vmatpush1.msra.mxu0 0.0
  %2631 = vmatprep.subr.mxu0 0.0
  %2632 = vmatpush1.msra.mxu0 0.0
  %2633 = vmatprep.subr.mxu0 0.0
  %2634 = vmatpush1.msra.mxu0 0.0
  %2635 = vmatprep.mubr.f32.mxu0 0.0
  %2636 = vmatmul.mubr.f32.gmra.mrb[0].mxu0 %v2548
  %v2637 = vpop.f32.mrb[0].mxu0
  %v2638 = vadd.f32 %v2546, %v2637
  %v2639 = vpop.f32.mrb[0].mxu0
  %2640 = vmatprep.mubr.f32.mxu0 0.0
  %2641 = vmatmul.mubr.f32.gmra.mrb[0].mxu0 %v2551
  %v2642 = vpop.f32.mrb[0].mxu0
  %v2643 = vadd.f32 %v2546, %v2642
  %v2644 = vpop.f32.mrb[0].mxu0
  %2645 = vmatprep.mubr.f32.mxu0 0.0
  %2646 = vmatmul.mubr.f32.gmra.mrb[0].mxu0 %v2554
  %v2647 = vpop.f32.mrb[0].mxu0
  %v2648 = vadd.f32 %v2546, %v2647
  %v2649 = vpop.f32.mrb[0].mxu0
  %2650 = vmatprep.mubr.f32.mxu0 0.0
  %2651 = vmatmul.mubr.f32.gmra.mrb[0].mxu0 %v2557
  %v2652 = vpop.f32.mrb[0].mxu0
  %v2653 = vadd.f32 %v2546, %v2652
  %v2654 = vpop.f32.mrb[0].mxu0
  %2655 = vmatprep.mubr.f32.mxu0 0.0
  %2656 = vmatmul.mubr.f32.gmra.mrb[0].mxu0 %v2560
  %v2657 = vpop.f32.mrb[0].mxu0
  %v2658 = vadd.f32 %v2546, %v2657
  %v2659 = vpop.f32.mrb[0].mxu0
  %2660 = vmatprep.mubr.f32.mxu0 0.0
  %2661 = vmatmul.mubr.f32.gmra.mrb[0].mxu0 %v2563
  %v2662 = vpop.f32.mrb[0].mxu0
  %v2663 = vadd.f32 %v2546, %v2662
  %v2664 = vpop.f32.mrb[0].mxu0
  %2665 = vmatprep.mubr.f32.mxu0 0.0
  %2666 = vmatmul.mubr.f32.gmra.mrb[0].mxu0 %v2566
  %v2667 = vpop.f32.mrb[0].mxu0
  %v2668 = vadd.f32 %v2546, %v2667
  %v2669 = vpop.f32.mrb[0].mxu0
  %2670 = vmatprep.mubr.f32.mxu0 0.0
  %2671 = vmatmul.mubr.f32.gmra.mrb[0].mxu0 %v2569
  %v2672 = vpop.f32.mrb[0].mxu0
  %v2673 = vadd.f32 %v2546, %v2672
  %v2674 = vpop.f32.mrb[0].mxu0
  %2675 = vdwg.mxu0
  %v2676 = vld [vmem:[%s3 + $0x13c] sm:$0x1]
  %v2677 = vld [vmem:[%s3 + $0x13e] sm:$0x1]
  %v2678 = vld [vmem:[%s3 + $0x108] sm:$0xff]
  %v2679 = vld [vmem:[%s3 + $0x110] sm:$0xff]
  %v2680 = vld [vmem:[%s3 + $0x118] sm:$0xff]
  %v2681 = vld [vmem:[%s3 + $0x120] sm:$0xff]
  %v2682 = vld [vmem:[%s3 + $0x13d] sm:$0x1]
  %v2683 = vld [vmem:[%s3 + $0x13f] sm:$0x1]
  %v2685 = vcombine.high %v2638, %v2638
  %v2687 = vunpack.c.l.s4 1966171168
  %v2688 = vunpack.c.0.s8 %v2687
  %v2689 = vlaneseq
  %v2690 = vshrl.u32 %v2689, 7
  %v2691 = vsub.s32 %v2688, %v2690
  %v2692 = vrot.slane %v2638, %v2691
  %v2694 = vunpack.c.l.s4 1966171168
  %v2695 = vunpack.c.0.s8 %v2694
  %v2696 = vlaneseq
  %v2697 = vshrl.u32 %v2696, 7
  %v2698 = vsub.s32 %v2695, %v2697
  %v2699 = vrot.slane %v2685, %v2698
  %v2700 = vcombine.high %v2692, %v2692
  %v2701 = vcombine.high %v2699, %v2699
  %v2703 = vunpack.c.l.s4 1966171168
  %v2704 = vunpack.c.0.s8 %v2703
  %v2705 = vlaneseq
  %v2706 = vshrl.u32 %v2705, 7
  %v2707 = vsub.s32 %v2704, %v2706
  %v2708 = vrot.slane %v2692, %v2707
  %v2710 = vunpack.c.l.s4 1966171168
  %v2711 = vunpack.c.0.s8 %v2710
  %v2712 = vlaneseq
  %v2713 = vshrl.u32 %v2712, 7
  %v2714 = vsub.s32 %v2711, %v2713
  %v2715 = vrot.slane %v2699, %v2714
  %v2717 = vunpack.c.l.s4 1966171168
  %v2718 = vunpack.c.0.s8 %v2717
  %v2719 = vlaneseq
  %v2720 = vshrl.u32 %v2719, 7
  %v2721 = vsub.s32 %v2718, %v2720
  %v2722 = vrot.slane %v2700, %v2721
  %v2724 = vunpack.c.l.s4 1966171168
  %v2725 = vunpack.c.0.s8 %v2724
  %v2726 = vlaneseq
  %v2727 = vshrl.u32 %v2726, 7
  %v2728 = vsub.s32 %v2725, %v2727
  %v2729 = vrot.slane %v2701, %v2728
  %v2730 = vcombine.high %v2708, %v2708
  %v2731 = vcombine.high %v2715, %v2715
  %v2732 = vcombine.high %v2722, %v2722
  %v2733 = vcombine.high %v2729, %v2729
  %v2734 = vlaneseq
  %v2735 = vshrl.u32 %v2734, 7
  %v2736 = vsub.s32 0, %v2735
  %v2737 = vrot.slane %v2708, %v2736
  %v2738 = vlaneseq
  %v2739 = vshrl.u32 %v2738, 7
  %v2740 = vsub.s32 0, %v2739
  %v2741 = vrot.slane %v2722, %v2740
  %v2742 = vlaneseq
  %v2743 = vshrl.u32 %v2742, 7
  %v2744 = vsub.s32 0, %v2743
  %v2745 = vrot.slane %v2730, %v2744
  %v2746 = vlaneseq
  %v2747 = vshrl.u32 %v2746, 7
  %v2748 = vsub.s32 0, %v2747
  %v2749 = vrot.slane %v2732, %v2748
  %v2750 = vlaneseq
  %v2751 = vshrl.u32 %v2750, 7
  %v2752 = vsub.s32 0, %v2751
  %v2753 = vrot.slane %v2715, %v2752
  %v2754 = vlaneseq
  %v2755 = vshrl.u32 %v2754, 7
  %v2756 = vsub.s32 0, %v2755
  %v2757 = vrot.slane %v2729, %v2756
  %v2758 = vlaneseq
  %v2759 = vshrl.u32 %v2758, 7
  %v2760 = vsub.s32 0, %v2759
  %v2761 = vrot.slane %v2731, %v2760
  %v2762 = vlaneseq
  %v2763 = vshrl.u32 %v2762, 7
  %v2764 = vsub.s32 0, %v2763
  %v2765 = vrot.slane %v2733, %v2764
  %2775 = vrot.lane.b32.xlu0 %v2643, 96
  %v2776 = vpop.permute.xlu0 %2775
  %v2778 = vadd.f32 %v2737, %v2776
  %v2779 = vadd.f32 %v2741, %v2776
  %v2780 = vadd.f32 %v2745, %v2776
  %v2781 = vadd.f32 %v2749, %v2776
  %v2782 = vadd.f32 %v2753, %v2776
  %v2783 = vadd.f32 %v2757, %v2776
  %v2784 = vadd.f32 %v2761, %v2776
  %v2785 = vadd.f32 %v2765, %v2776
  %v2786 = vtanh.pop %v2778
  %v2787 = vtanh.pop %v2779
  %v2788 = vtanh.pop %v2780
  %v2789 = vtanh.pop %v2781
  %v2790 = vtanh.pop %v2782
  %v2791 = vtanh.pop %v2783
  %v2792 = vtanh.pop %v2784
  %v2793 = vtanh.pop %v2785
  %v2794 = vlaneseq
  %v2795 = vshrl.u32 %v2794, 7
  %v2796 = vsub.s32 0, %v2795
  %v2797 = vrot.slane %v2676, %v2796
  %v2798 = vmul.f32 %v2786, %v2797
  %v2799 = vmul.f32 %v2787, %v2797
  %v2800 = vmul.f32 %v2788, %v2797
  %v2801 = vmul.f32 %v2789, %v2797
  %v2802 = vmul.f32 %v2790, %v2797
  %v2803 = vmul.f32 %v2791, %v2797
  %v2804 = vmul.f32 %v2792, %v2797
  %v2805 = vmul.f32 %v2793, %v2797
  %v2806 = vsel %vm181, %v2798, 0.0
  %2807 = vadd.xlane.f32.xlu0 %v2806
  %v2808 = vpop.xlane.xlu0 %2807
  %v2809 = vsel %vm181, %v2799, 0.0
  %2810 = vadd.xlane.f32.xlu0 %v2809
  %v2811 = vpop.xlane.xlu0 %2810
  %v2812 = vsel %vm181, %v2800, 0.0
  %2813 = vadd.xlane.f32.xlu0 %v2812
  %v2814 = vpop.xlane.xlu0 %2813
  %v2815 = vsel %vm181, %v2801, 0.0
  %2816 = vadd.xlane.f32.xlu0 %v2815
  %v2817 = vpop.xlane.xlu0 %2816
  %v2818 = vsel %vm181, %v2802, 0.0
  %2819 = vadd.xlane.f32.xlu0 %v2818
  %v2820 = vpop.xlane.xlu0 %2819
  %v2821 = vsel %vm181, %v2803, 0.0
  %2822 = vadd.xlane.f32.xlu0 %v2821
  %v2823 = vpop.xlane.xlu0 %2822
  %v2824 = vsel %vm181, %v2804, 0.0
  %2825 = vadd.xlane.f32.xlu0 %v2824
  %v2826 = vpop.xlane.xlu0 %2825
  %v2827 = vsel %vm181, %v2805, 0.0
  %2828 = vadd.xlane.f32.xlu0 %v2827
  %v2829 = vpop.xlane.xlu0 %2828
  %s2831 = vtos %v2677
  %v2832 = vstv %s2831
  %v2834 = vadd.f32 %v2808, %v2832
  %v2835 = vadd.f32 %v2811, %v2832
  %v2836 = vadd.f32 %v2814, %v2832
  %v2837 = vadd.f32 %v2817, %v2832
  %v2838 = vadd.f32 %v2820, %v2832
  %v2839 = vadd.f32 %v2823, %v2832
  %v2840 = vadd.f32 %v2826, %v2832
  %v2841 = vadd.f32 %v2829, %v2832
  %v2850 = vlaneseq
  %v2851 = vand.u32 %v2850, 127
  %v2852 = vlaneseq
  %v2853 = vshrl.u32 %v2852, 7
  %v2854 = vsub.s32 %v2851, %v2853
  %v2855 = vrot.slane %v2834, %v2854
  %v2856 = vlaneseq
  %v2857 = vshrl.u32 %v2856, 7
  %v2858 = vsub.s32 %v2851, %v2857
  %v2859 = vrot.slane %v2835, %v2858
  %v2860 = vlaneseq
  %v2861 = vshrl.u32 %v2860, 7
  %v2862 = vsub.s32 %v2851, %v2861
  %v2863 = vrot.slane %v2836, %v2862
  %v2864 = vlaneseq
  %v2865 = vshrl.u32 %v2864, 7
  %v2866 = vsub.s32 %v2851, %v2865
  %v2867 = vrot.slane %v2837, %v2866
  %v2868 = vlaneseq
  %v2869 = vshrl.u32 %v2868, 7
  %v2870 = vsub.s32 %v2851, %v2869
  %v2871 = vrot.slane %v2838, %v2870
  %v2872 = vlaneseq
  %v2873 = vshrl.u32 %v2872, 7
  %v2874 = vsub.s32 %v2851, %v2873
  %v2875 = vrot.slane %v2839, %v2874
  %v2876 = vlaneseq
  %v2877 = vshrl.u32 %v2876, 7
  %v2878 = vsub.s32 %v2851, %v2877
  %v2879 = vrot.slane %v2840, %v2878
  %v2880 = vlaneseq
  %v2881 = vshrl.u32 %v2880, 7
  %v2882 = vsub.s32 %v2851, %v2881
  %v2883 = vrot.slane %v2841, %v2882
  %vm2884 = vcmask 1041409
  %v2885 = vsel %vm2884, %v2859, %v2855
  %vm2886 = vcmask 1042434
  %v2887 = vsel %vm2886, %v2863, %v2885
  %vm2888 = vcmask 1043459
  %v2889 = vsel %vm2888, %v2867, %v2887
  %vm2890 = vcmask 1044484
  %v2891 = vsel %vm2890, %v2871, %v2889
  %vm2892 = vcmask 1045509
  %v2893 = vsel %vm2892, %v2875, %v2891
  %vm2894 = vcmask 1046534
  %v2895 = vsel %vm2894, %v2879, %v2893
  %vm2896 = vcmask 1047559
  %v2897 = vsel %vm2896, %v2883, %v2895
  %v2899 = vsel %vm39, %v2897, -inf
  %2900 = vmax.xlane.f32.xlu0 %v2899
  %v2901 = vpop.xlane.xlu0 %2900
  %v2903 = vlaneseq
  %v2904 = vshrl.u32 %v2903, 7
  %v2905 = vsub.s32 0, %v2904
  %v2906 = vrot.slane %v2901, %v2905
  %v2907 = vlaneseq
  %v2908 = vshrl.u32 %v2907, 7
  %v2909 = vsub.s32 1, %v2908
  %v2910 = vrot.slane %v2901, %v2909
  %v2911 = vlaneseq
  %v2912 = vshrl.u32 %v2911, 7
  %v2913 = vsub.s32 2, %v2912
  %v2914 = vrot.slane %v2901, %v2913
  %v2915 = vlaneseq
  %v2916 = vshrl.u32 %v2915, 7
  %v2917 = vsub.s32 3, %v2916
  %v2918 = vrot.slane %v2901, %v2917
  %v2919 = vlaneseq
  %v2920 = vshrl.u32 %v2919, 7
  %v2921 = vsub.s32 4, %v2920
  %v2922 = vrot.slane %v2901, %v2921
  %v2923 = vlaneseq
  %v2924 = vshrl.u32 %v2923, 7
  %v2925 = vsub.s32 5, %v2924
  %v2926 = vrot.slane %v2901, %v2925
  %v2927 = vlaneseq
  %v2928 = vshrl.u32 %v2927, 7
  %v2929 = vsub.s32 6, %v2928
  %v2930 = vrot.slane %v2901, %v2929
  %v2931 = vlaneseq
  %v2932 = vshrl.u32 %v2931, 7
  %v2933 = vsub.s32 7, %v2932
  %v2934 = vrot.slane %v2901, %v2933
  %v2943 = vsub.f32 %v2834, %v2906
  %v2944 = vsub.f32 %v2835, %v2910
  %v2945 = vsub.f32 %v2836, %v2914
  %v2946 = vsub.f32 %v2837, %v2918
  %v2947 = vsub.f32 %v2838, %v2922
  %v2948 = vsub.f32 %v2839, %v2926
  %v2949 = vsub.f32 %v2840, %v2930
  %v2950 = vsub.f32 %v2841, %v2934
  %v2951 = vmul.f32 %v2943, 1.442695
  %v2952 = vpow.pop %v2951
  %v2953 = vmul.f32 %v2944, 1.442695
  %v2954 = vpow.pop %v2953
  %v2955 = vmul.f32 %v2945, 1.442695
  %v2956 = vpow.pop %v2955
  %v2957 = vmul.f32 %v2946, 1.442695
  %v2958 = vpow.pop %v2957
  %v2959 = vmul.f32 %v2947, 1.442695
  %v2960 = vpow.pop %v2959
  %v2961 = vmul.f32 %v2948, 1.442695
  %v2962 = vpow.pop %v2961
  %v2963 = vmul.f32 %v2949, 1.442695
  %v2964 = vpow.pop %v2963
  %v2965 = vmul.f32 %v2950, 1.442695
  %v2966 = vpow.pop %v2965
  %2975 = vset.pattern.permute.xlu0 0
  %2976 = vperm.xlu0 %2975, %v2952
  %v2977 = vpop.permute.xlu0 %2976
  %2978 = vset.pattern.permute.xlu0 0
  %2979 = vperm.xlu0 %2978, %v2954
  %v2980 = vpop.permute.xlu0 %2979
  %2981 = vset.pattern.permute.xlu0 0
  %2982 = vperm.xlu0 %2981, %v2956
  %v2983 = vpop.permute.xlu0 %2982
  %2984 = vset.pattern.permute.xlu0 0
  %2985 = vperm.xlu0 %2984, %v2958
  %v2986 = vpop.permute.xlu0 %2985
  %2987 = vset.pattern.permute.xlu0 0
  %2988 = vperm.xlu0 %2987, %v2960
  %v2989 = vpop.permute.xlu0 %2988
  %2990 = vset.pattern.permute.xlu0 0
  %2991 = vperm.xlu0 %2990, %v2962
  %v2992 = vpop.permute.xlu0 %2991
  %2993 = vset.pattern.permute.xlu0 0
  %2994 = vperm.xlu0 %2993, %v2964
  %v2995 = vpop.permute.xlu0 %2994
  %2996 = vset.pattern.permute.xlu0 0
  %2997 = vperm.xlu0 %2996, %v2966
  %v2998 = vpop.permute.xlu0 %2997
  %v2999 = vlaneseq
  %v3000 = vshrl.u32 %v2999, 7
  %v3001 = vsub.s32 %v2851, %v3000
  %v3002 = vrot.slane %v2977, %v3001
  %v3003 = vlaneseq
  %v3004 = vshrl.u32 %v3003, 7
  %v3005 = vsub.s32 %v2851, %v3004
  %v3006 = vrot.slane %v2980, %v3005
  %v3007 = vlaneseq
  %v3008 = vshrl.u32 %v3007, 7
  %v3009 = vsub.s32 %v2851, %v3008
  %v3010 = vrot.slane %v2983, %v3009
  %v3011 = vlaneseq
  %v3012 = vshrl.u32 %v3011, 7
  %v3013 = vsub.s32 %v2851, %v3012
  %v3014 = vrot.slane %v2986, %v3013
  %v3015 = vlaneseq
  %v3016 = vshrl.u32 %v3015, 7
  %v3017 = vsub.s32 %v2851, %v3016
  %v3018 = vrot.slane %v2989, %v3017
  %v3019 = vlaneseq
  %v3020 = vshrl.u32 %v3019, 7
  %v3021 = vsub.s32 %v2851, %v3020
  %v3022 = vrot.slane %v2992, %v3021
  %v3023 = vlaneseq
  %v3024 = vshrl.u32 %v3023, 7
  %v3025 = vsub.s32 %v2851, %v3024
  %v3026 = vrot.slane %v2995, %v3025
  %v3027 = vlaneseq
  %v3028 = vshrl.u32 %v3027, 7
  %v3029 = vsub.s32 %v2851, %v3028
  %v3030 = vrot.slane %v2998, %v3029
  %v3031 = vsel %vm2884, %v3006, %v3002
  %v3032 = vsel %vm2886, %v3010, %v3031
  %v3033 = vsel %vm2888, %v3014, %v3032
  %v3034 = vsel %vm2890, %v3018, %v3033
  %v3035 = vsel %vm2892, %v3022, %v3034
  %v3036 = vsel %vm2894, %v3026, %v3035
  %v3037 = vsel %vm2896, %v3030, %v3036
  %v3039 = vsel %vm39, %v3037, 0.0
  %3040 = vadd.xlane.f32.xlu0 %v3039
  %v3041 = vpop.xlane.xlu0 %3040
  %v3042 = vrcp.pop %v3041
  %v3044 = vlaneseq
  %v3045 = vshrl.u32 %v3044, 7
  %v3046 = vsub.s32 0, %v3045
  %v3047 = vrot.slane %v3042, %v3046
  %v3048 = vlaneseq
  %v3049 = vshrl.u32 %v3048, 7
  %v3050 = vsub.s32 1, %v3049
  %v3051 = vrot.slane %v3042, %v3050
  %v3052 = vlaneseq
  %v3053 = vshrl.u32 %v3052, 7
  %v3054 = vsub.s32 2, %v3053
  %v3055 = vrot.slane %v3042, %v3054
  %v3056 = vlaneseq
  %v3057 = vshrl.u32 %v3056, 7
  %v3058 = vsub.s32 3, %v3057
  %v3059 = vrot.slane %v3042, %v3058
  %v3060 = vlaneseq
  %v3061 = vshrl.u32 %v3060, 7
  %v3062 = vsub.s32 4, %v3061
  %v3063 = vrot.slane %v3042, %v3062
  %v3064 = vlaneseq
  %v3065 = vshrl.u32 %v3064, 7
  %v3066 = vsub.s32 5, %v3065
  %v3067 = vrot.slane %v3042, %v3066
  %v3068 = vlaneseq
  %v3069 = vshrl.u32 %v3068, 7
  %v3070 = vsub.s32 6, %v3069
  %v3071 = vrot.slane %v3042, %v3070
  %v3072 = vlaneseq
  %v3073 = vshrl.u32 %v3072, 7
  %v3074 = vsub.s32 7, %v3073
  %v3075 = vrot.slane %v3042, %v3074
  %v3084 = vmul.f32 %v2952, %v3047
  %v3085 = vmul.f32 %v2954, %v3051
  %v3086 = vmul.f32 %v2956, %v3055
  %v3087 = vmul.f32 %v2958, %v3059
  %v3088 = vmul.f32 %v2960, %v3063
  %v3089 = vmul.f32 %v2962, %v3067
  %v3090 = vmul.f32 %v2964, %v3071
  %v3091 = vmul.f32 %v2966, %v3075
  %3100 = vset.pattern.permute.xlu0 0
  %3101 = vperm.xlu0 %3100, %v3084
  %v3102 = vpop.permute.xlu0 %3101
  %3103 = vset.pattern.permute.xlu0 0
  %3104 = vperm.xlu0 %3103, %v3085
  %v3105 = vpop.permute.xlu0 %3104
  %3106 = vset.pattern.permute.xlu0 0
  %3107 = vperm.xlu0 %3106, %v3086
  %v3108 = vpop.permute.xlu0 %3107
  %3109 = vset.pattern.permute.xlu0 0
  %3110 = vperm.xlu0 %3109, %v3087
  %v3111 = vpop.permute.xlu0 %3110
  %3112 = vset.pattern.permute.xlu0 0
  %3113 = vperm.xlu0 %3112, %v3088
  %v3114 = vpop.permute.xlu0 %3113
  %3115 = vset.pattern.permute.xlu0 0
  %3116 = vperm.xlu0 %3115, %v3089
  %v3117 = vpop.permute.xlu0 %3116
  %3118 = vset.pattern.permute.xlu0 0
  %3119 = vperm.xlu0 %3118, %v3090
  %v3120 = vpop.permute.xlu0 %3119
  %3121 = vset.pattern.permute.xlu0 0
  %3122 = vperm.xlu0 %3121, %v3091
  %v3123 = vpop.permute.xlu0 %3122
  %v3124 = vlaneseq
  %v3125 = vshrl.u32 %v3124, 7
  %v3126 = vsub.s32 %v2851, %v3125
  %v3127 = vrot.slane %v3102, %v3126
  %v3128 = vlaneseq
  %v3129 = vshrl.u32 %v3128, 7
  %v3130 = vsub.s32 %v2851, %v3129
  %v3131 = vrot.slane %v3105, %v3130
  %v3132 = vlaneseq
  %v3133 = vshrl.u32 %v3132, 7
  %v3134 = vsub.s32 %v2851, %v3133
  %v3135 = vrot.slane %v3108, %v3134
  %v3136 = vlaneseq
  %v3137 = vshrl.u32 %v3136, 7
  %v3138 = vsub.s32 %v2851, %v3137
  %v3139 = vrot.slane %v3111, %v3138
  %v3140 = vlaneseq
  %v3141 = vshrl.u32 %v3140, 7
  %v3142 = vsub.s32 %v2851, %v3141
  %v3143 = vrot.slane %v3114, %v3142
  %v3144 = vlaneseq
  %v3145 = vshrl.u32 %v3144, 7
  %v3146 = vsub.s32 %v2851, %v3145
  %v3147 = vrot.slane %v3117, %v3146
  %v3148 = vlaneseq
  %v3149 = vshrl.u32 %v3148, 7
  %v3150 = vsub.s32 %v2851, %v3149
  %v3151 = vrot.slane %v3120, %v3150
  %v3152 = vlaneseq
  %v3153 = vshrl.u32 %v3152, 7
  %v3154 = vsub.s32 %v2851, %v3153
  %v3155 = vrot.slane %v3123, %v3154
  %v3156 = vsel %vm2884, %v3131, %v3127
  %v3157 = vsel %vm2886, %v3135, %v3156
  %v3158 = vsel %vm2888, %v3139, %v3157
  %v3159 = vsel %vm2890, %v3143, %v3158
  %v3160 = vsel %vm2892, %v3147, %v3159
  %v3161 = vsel %vm2894, %v3151, %v3160
  %v3162 = vsel %vm2896, %v3155, %v3161
  %v3163 = vsel %vm39, %v3162, 0
  %3165 = vmatprep.subr.mxu0 0.0
  %3166 = vmatpush1.msra.mxu0 %v2531
  %3167 = vmatprep.subr.mxu0 0.0
  %3168 = vmatpush1.msra.mxu0 0.0
  %3169 = vmatprep.subr.mxu0 0.0
  %3170 = vmatpush1.msra.mxu0 0.0
  %3171 = vmatprep.subr.mxu0 0.0
  %3172 = vmatpush1.msra.mxu0 0.0
  %3173 = vmatprep.subr.mxu0 0.0
  %3174 = vmatpush1.msra.mxu0 0.0
  %3175 = vmatprep.subr.mxu0 0.0
  %3176 = vmatpush1.msra.mxu0 0.0
  %3177 = vmatprep.subr.mxu0 0.0
  %3178 = vmatpush1.msra.mxu0 0.0
  %3179 = vmatprep.subr.mxu0 0.0
  %3180 = vmatpush1.msra.mxu0 0.0
  %3181 = vmatprep.subr.mxu0 0.0
  %3182 = vmatpush1.msra.mxu0 0.0
  %3183 = vmatprep.subr.mxu0 0.0
  %3184 = vmatpush1.msra.mxu0 0.0
  %3185 = vmatprep.subr.mxu0 0.0
  %3186 = vmatpush1.msra.mxu0 0.0
  %3187 = vmatprep.subr.mxu0 0.0
  %3188 = vmatpush1.msra.mxu0 0.0
  %3189 = vmatprep.subr.mxu0 0.0
  %3190 = vmatpush1.msra.mxu0 0.0
  %3191 = vmatprep.subr.mxu0 0.0
  %3192 = vmatpush1.msra.mxu0 0.0
  %3193 = vmatprep.subr.mxu0 0.0
  %3194 = vmatpush1.msra.mxu0 0.0
  %3195 = vmatprep.subr.mxu0 0.0
  %3196 = vmatpush1.msra.mxu0 0.0
  %3197 = vmatprep.subr.mxu0 0.0
  %3198 = vmatpush1.msra.mxu0 0.0
  %3199 = vmatprep.subr.mxu0 0.0
  %3200 = vmatpush1.msra.mxu0 0.0
  %3201 = vmatprep.subr.mxu0 0.0
  %3202 = vmatpush1.msra.mxu0 0.0
  %3203 = vmatprep.subr.mxu0 0.0
  %3204 = vmatpush1.msra.mxu0 0.0
  %3205 = vmatprep.subr.mxu0 0.0
  %3206 = vmatpush1.msra.mxu0 0.0
  %3207 = vmatprep.subr.mxu0 0.0
  %3208 = vmatpush1.msra.mxu0 0.0
  %3209 = vmatprep.subr.mxu0 0.0
  %3210 = vmatpush1.msra.mxu0 0.0
  %3211 = vmatprep.subr.mxu0 0.0
  %3212 = vmatpush1.msra.mxu0 0.0
  %3213 = vmatprep.subr.mxu0 0.0
  %3214 = vmatpush1.msra.mxu0 0.0
  %3215 = vmatprep.subr.mxu0 0.0
  %3216 = vmatpush1.msra.mxu0 0.0
  %3217 = vmatprep.subr.mxu0 0.0
  %3218 = vmatpush1.msra.mxu0 0.0
  %3219 = vmatprep.subr.mxu0 0.0
  %3220 = vmatpush1.msra.mxu0 0.0
  %3221 = vmatprep.subr.mxu0 0.0
  %3222 = vmatpush1.msra.mxu0 0.0
  %3223 = vmatprep.subr.mxu0 0.0
  %3224 = vmatpush1.msra.mxu0 0.0
  %3225 = vmatprep.subr.mxu0 0.0
  %3226 = vmatpush1.msra.mxu0 0.0
  %3227 = vmatprep.subr.mxu0 0.0
  %3228 = vmatpush1.msra.mxu0 0.0
  %3229 = vmatprep.mubr.f32.mxu0 0.0
  %3230 = vmatmul.mubr.f32.gmra.mrb[0].mxu0 %v3163
  %v3231 = vpop.f32.mrb[0].mxu0
  %v3232 = vadd.f32 0.0, %v3231
  %v3233 = vpop.f32.mrb[0].mxu0
  %3234 = vdwg.mxu0
  %v3236 = vsel %vm181, %v3232, 0
  %3238 = vmatprep.subr.mxu0 0.0
  %3239 = vmatpush1.msra.mxu0 %v2678
  %3240 = vmatprep.subr.mxu0 0.0
  %3241 = vmatpush1.msra.mxu0 %v2679
  %3242 = vmatprep.subr.mxu0 0.0
  %3243 = vmatpush1.msra.mxu0 %v2680
  %3244 = vmatprep.subr.mxu0 0.0
  %3245 = vmatpush1.msra.mxu0 %v2681
  %3246 = vmatprep.subr.mxu0 0.0
  %3247 = vmatpush1.msra.mxu0 0.0
  %3248 = vmatprep.subr.mxu0 0.0
  %3249 = vmatpush1.msra.mxu0 0.0
  %3250 = vmatprep.subr.mxu0 0.0
  %3251 = vmatpush1.msra.mxu0 0.0
  %3252 = vmatprep.subr.mxu0 0.0
  %3253 = vmatpush1.msra.mxu0 0.0
  %3254 = vmatprep.subr.mxu0 0.0
  %3255 = vmatpush1.msra.mxu0 0.0
  %3256 = vmatprep.subr.mxu0 0.0
  %3257 = vmatpush1.msra.mxu0 0.0
  %3258 = vmatprep.subr.mxu0 0.0
  %3259 = vmatpush1.msra.mxu0 0.0
  %3260 = vmatprep.subr.mxu0 0.0
  %3261 = vmatpush1.msra.mxu0 0.0
  %3262 = vmatprep.subr.mxu0 0.0
  %3263 = vmatpush1.msra.mxu0 0.0
  %3264 = vmatprep.subr.mxu0 0.0
  %3265 = vmatpush1.msra.mxu0 0.0
  %3266 = vmatprep.subr.mxu0 0.0
  %3267 = vmatpush1.msra.mxu0 0.0
  %3268 = vmatprep.subr.mxu0 0.0
  %3269 = vmatpush1.msra.mxu0 0.0
  %3270 = vmatprep.subr.mxu0 0.0
  %3271 = vmatpush1.msra.mxu0 0.0
  %3272 = vmatprep.subr.mxu0 0.0
  %3273 = vmatpush1.msra.mxu0 0.0
  %3274 = vmatprep.subr.mxu0 0.0
  %3275 = vmatpush1.msra.mxu0 0.0
  %3276 = vmatprep.subr.mxu0 0.0
  %3277 = vmatpush1.msra.mxu0 0.0
  %3278 = vmatprep.subr.mxu0 0.0
  %3279 = vmatpush1.msra.mxu0 0.0
  %3280 = vmatprep.subr.mxu0 0.0
  %3281 = vmatpush1.msra.mxu0 0.0
  %3282 = vmatprep.subr.mxu0 0.0
  %3283 = vmatpush1.msra.mxu0 0.0
  %3284 = vmatprep.subr.mxu0 0.0
  %3285 = vmatpush1.msra.mxu0 0.0
  %3286 = vmatprep.subr.mxu0 0.0
  %3287 = vmatpush1.msra.mxu0 0.0
  %3288 = vmatprep.subr.mxu0 0.0
  %3289 = vmatpush1.msra.mxu0 0.0
  %3290 = vmatprep.subr.mxu0 0.0
  %3291 = vmatpush1.msra.mxu0 0.0
  %3292 = vmatprep.subr.mxu0 0.0
  %3293 = vmatpush1.msra.mxu0 0.0
  %3294 = vmatprep.subr.mxu0 0.0
  %3295 = vmatpush1.msra.mxu0 0.0
  %3296 = vmatprep.subr.mxu0 0.0
  %3297 = vmatpush1.msra.mxu0 0.0
  %3298 = vmatprep.subr.mxu0 0.0
  %3299 = vmatpush1.msra.mxu0 0.0
  %3300 = vmatprep.subr.mxu0 0.0
  %3301 = vmatpush1.msra.mxu0 0.0
  %3302 = vmatprep.mubr.f32.mxu0 0.0
  %3303 = vmatmul.mubr.f32.gmra.mrb[0].mxu0 %v3236
  %v3304 = vpop.f32.mrb[0].mxu0
  %v3305 = vadd.f32 0.0, %v3304
  %v3306 = vpop.f32.mrb[0].mxu0
  %3307 = vdwg.mxu0
  %v3309 = vsel %vm181, %v2682, 0
  %3311 = vmatprep.subr.mxu0 0.0
  %3312 = vmatpush1.xpose.msra.mxu0 %v2551
  %3313 = vmatprep.subr.mxu0 0.0
  %3314 = vmatpush1.xpose.msra.mxu0 0.0
  %3315 = vmatprep.subr.mxu0 0.0
  %3316 = vmatpush1.xpose.msra.mxu0 0.0
  %3317 = vmatprep.subr.mxu0 0.0
  %3318 = vmatpush1.xpose.msra.mxu0 0.0
  %3319 = vmatprep.subr.mxu0 0.0
  %3320 = vmatpush1.xpose.msra.mxu0 0.0
  %3321 = vmatprep.subr.mxu0 0.0
  %3322 = vmatpush1.xpose.msra.mxu0 0.0
  %3323 = vmatprep.subr.mxu0 0.0
  %3324 = vmatpush1.xpose.msra.mxu0 0.0
  %3325 = vmatprep.subr.mxu0 0.0
  %3326 = vmatpush1.xpose.msra.mxu0 0.0
  %3327 = vmatprep.subr.mxu0 0.0
  %3328 = vmatpush1.xpose.msra.mxu0 0.0
  %3329 = vmatprep.subr.mxu0 0.0
  %3330 = vmatpush1.xpose.msra.mxu0 0.0
  %3331 = vmatprep.subr.mxu0 0.0
  %3332 = vmatpush1.xpose.msra.mxu0 0.0
  %3333 = vmatprep.subr.mxu0 0.0
  %3334 = vmatpush1.xpose.msra.mxu0 0.0
  %3335 = vmatprep.subr.mxu0 0.0
  %3336 = vmatpush1.xpose.msra.mxu0 0.0
  %3337 = vmatprep.subr.mxu0 0.0
  %3338 = vmatpush1.xpose.msra.mxu0 0.0
  %3339 = vmatprep.subr.mxu0 0.0
  %3340 = vmatpush1.xpose.msra.mxu0 0.0
  %3341 = vmatprep.subr.mxu0 0.0
  %3342 = vmatpush1.xpose.msra.mxu0 0.0
  %3343 = vmatprep.subr.mxu0 0.0
  %3344 = vmatpush1.xpose.msra.mxu0 0.0
  %3345 = vmatprep.subr.mxu0 0.0
  %3346 = vmatpush1.xpose.msra.mxu0 0.0
  %3347 = vmatprep.subr.mxu0 0.0
  %3348 = vmatpush1.xpose.msra.mxu0 0.0
  %3349 = vmatprep.subr.mxu0 0.0
  %3350 = vmatpush1.xpose.msra.mxu0 0.0
  %3351 = vmatprep.subr.mxu0 0.0
  %3352 = vmatpush1.xpose.msra.mxu0 0.0
  %3353 = vmatprep.subr.mxu0 0.0
  %3354 = vmatpush1.xpose.msra.mxu0 0.0
  %3355 = vmatprep.subr.mxu0 0.0
  %3356 = vmatpush1.xpose.msra.mxu0 0.0
  %3357 = vmatprep.subr.mxu0 0.0
  %3358 = vmatpush1.xpose.msra.mxu0 0.0
  %3359 = vmatprep.subr.mxu0 0.0
  %3360 = vmatpush1.xpose.msra.mxu0 0.0
  %3361 = vmatprep.subr.mxu0 0.0
  %3362 = vmatpush1.xpose.msra.mxu0 0.0
  %3363 = vmatprep.subr.mxu0 0.0
  %3364 = vmatpush1.xpose.msra.mxu0 0.0
  %3365 = vmatprep.subr.mxu0 0.0
  %3366 = vmatpush1.xpose.msra.mxu0 0.0
  %3367 = vmatprep.subr.mxu0 0.0
  %3368 = vmatpush1.xpose.msra.mxu0 0.0
  %3369 = vmatprep.subr.mxu0 0.0
  %3370 = vmatpush1.xpose.msra.mxu0 0.0
  %3371 = vmatprep.subr.mxu0 0.0
  %3372 = vmatpush1.xpose.msra.mxu0 0.0
  %3373 = vmatprep.subr.mxu0 0.0
  %3374 = vmatpush1.xpose.msra.mxu0 0.0
  %3375 = vmatprep.mubr.f32.mxu0 0.0
  %3376 = vmatmul.mubr.f32.gmra.mrb[0].mxu0 %v3309
  %v3377 = vpop.f32.mrb[0].mxu0
  %v3378 = vadd.f32 0.0, %v3377
  %v3379 = vpop.f32.mrb[0].mxu0
  %3380 = vdwg.mxu0
  %3382 = vset.pattern.permute.xlu0 0
  %3383 = vperm.xlu0 %3382, %v3305
  %v3384 = vpop.permute.xlu0 %3383
  %v3386 = vlaneseq
  %v3387 = vshrl.u32 %v3386, 7
  %v3388 = vsub.s32 0, %v3387
  %v3389 = vrot.slane %v3378, %v3388
  %v3390 = vadd.f32 %v3384, %v3389
  %v3392 = vcombine.high %v2648, %v2648
  %v3394 = vunpack.c.l.s4 1966171168
  %v3395 = vunpack.c.0.s8 %v3394
  %v3396 = vlaneseq
  %v3397 = vshrl.u32 %v3396, 7
  %v3398 = vsub.s32 %v3395, %v3397
  %v3399 = vrot.slane %v2648, %v3398
  %v3401 = vunpack.c.l.s4 1966171168
  %v3402 = vunpack.c.0.s8 %v3401
  %v3403 = vlaneseq
  %v3404 = vshrl.u32 %v3403, 7
  %v3405 = vsub.s32 %v3402, %v3404
  %v3406 = vrot.slane %v3392, %v3405
  %v3407 = vcombine.high %v3399, %v3399
  %v3408 = vcombine.high %v3406, %v3406
  %v3410 = vunpack.c.l.s4 1966171168
  %v3411 = vunpack.c.0.s8 %v3410
  %v3412 = vlaneseq
  %v3413 = vshrl.u32 %v3412, 7
  %v3414 = vsub.s32 %v3411, %v3413
  %v3415 = vrot.slane %v3399, %v3414
  %v3417 = vunpack.c.l.s4 1966171168
  %v3418 = vunpack.c.0.s8 %v3417
  %v3419 = vlaneseq
  %v3420 = vshrl.u32 %v3419, 7
  %v3421 = vsub.s32 %v3418, %v3420
  %v3422 = vrot.slane %v3406, %v3421
  %v3424 = vunpack.c.l.s4 1966171168
  %v3425 = vunpack.c.0.s8 %v3424
  %v3426 = vlaneseq
  %v3427 = vshrl.u32 %v3426, 7
  %v3428 = vsub.s32 %v3425, %v3427
  %v3429 = vrot.slane %v3407, %v3428
  %v3431 = vunpack.c.l.s4 1966171168
  %v3432 = vunpack.c.0.s8 %v3431
  %v3433 = vlaneseq
  %v3434 = vshrl.u32 %v3433, 7
  %v3435 = vsub.s32 %v3432, %v3434
  %v3436 = vrot.slane %v3408, %v3435
  %v3437 = vcombine.high %v3415, %v3415
  %v3438 = vcombine.high %v3422, %v3422
  %v3439 = vcombine.high %v3429, %v3429
  %v3440 = vcombine.high %v3436, %v3436
  %v3441 = vlaneseq
  %v3442 = vshrl.u32 %v3441, 7
  %v3443 = vsub.s32 0, %v3442
  %v3444 = vrot.slane %v3415, %v3443
  %v3445 = vlaneseq
  %v3446 = vshrl.u32 %v3445, 7
  %v3447 = vsub.s32 0, %v3446
  %v3448 = vrot.slane %v3429, %v3447
  %v3449 = vlaneseq
  %v3450 = vshrl.u32 %v3449, 7
  %v3451 = vsub.s32 0, %v3450
  %v3452 = vrot.slane %v3437, %v3451
  %v3453 = vlaneseq
  %v3454 = vshrl.u32 %v3453, 7
  %v3455 = vsub.s32 0, %v3454
  %v3456 = vrot.slane %v3439, %v3455
  %v3457 = vlaneseq
  %v3458 = vshrl.u32 %v3457, 7
  %v3459 = vsub.s32 0, %v3458
  %v3460 = vrot.slane %v3422, %v3459
  %v3461 = vlaneseq
  %v3462 = vshrl.u32 %v3461, 7
  %v3463 = vsub.s32 0, %v3462
  %v3464 = vrot.slane %v3436, %v3463
  %v3465 = vlaneseq
  %v3466 = vshrl.u32 %v3465, 7
  %v3467 = vsub.s32 0, %v3466
  %v3468 = vrot.slane %v3438, %v3467
  %v3469 = vlaneseq
  %v3470 = vshrl.u32 %v3469, 7
  %v3471 = vsub.s32 0, %v3470
  %v3472 = vrot.slane %v3440, %v3471
  %3482 = vrot.lane.b32.xlu0 %v2653, 96
  %v3483 = vpop.permute.xlu0 %3482
  %v3485 = vadd.f32 %v3444, %v3483
  %v3486 = vadd.f32 %v3448, %v3483
  %v3487 = vadd.f32 %v3452, %v3483
  %v3488 = vadd.f32 %v3456, %v3483
  %v3489 = vadd.f32 %v3460, %v3483
  %v3490 = vadd.f32 %v3464, %v3483
  %v3491 = vadd.f32 %v3468, %v3483
  %v3492 = vadd.f32 %v3472, %v3483
  %v3493 = vtanh.pop %v3485
  %v3494 = vtanh.pop %v3486
  %v3495 = vtanh.pop %v3487
  %v3496 = vtanh.pop %v3488
  %v3497 = vtanh.pop %v3489
  %v3498 = vtanh.pop %v3490
  %v3499 = vtanh.pop %v3491
  %v3500 = vtanh.pop %v3492
  %v3501 = vmul.f32 %v3493, %v2797
  %v3502 = vmul.f32 %v3494, %v2797
  %v3503 = vmul.f32 %v3495, %v2797
  %v3504 = vmul.f32 %v3496, %v2797
  %v3505 = vmul.f32 %v3497, %v2797
  %v3506 = vmul.f32 %v3498, %v2797
  %v3507 = vmul.f32 %v3499, %v2797
  %v3508 = vmul.f32 %v3500, %v2797
  %v3509 = vsel %vm181, %v3501, 0.0
  %3510 = vadd.xlane.f32.xlu0 %v3509
  %v3511 = vpop.xlane.xlu0 %3510
  %v3512 = vsel %vm181, %v3502, 0.0
  %3513 = vadd.xlane.f32.xlu0 %v3512
  %v3514 = vpop.xlane.xlu0 %3513
  %v3515 = vsel %vm181, %v3503, 0.0
  %3516 = vadd.xlane.f32.xlu0 %v3515
  %v3517 = vpop.xlane.xlu0 %3516
  %v3518 = vsel %vm181, %v3504, 0.0
  %3519 = vadd.xlane.f32.xlu0 %v3518
  %v3520 = vpop.xlane.xlu0 %3519
  %v3521 = vsel %vm181, %v3505, 0.0
  %3522 = vadd.xlane.f32.xlu0 %v3521
  %v3523 = vpop.xlane.xlu0 %3522
  %v3524 = vsel %vm181, %v3506, 0.0
  %3525 = vadd.xlane.f32.xlu0 %v3524
  %v3526 = vpop.xlane.xlu0 %3525
  %v3527 = vsel %vm181, %v3507, 0.0
  %3528 = vadd.xlane.f32.xlu0 %v3527
  %v3529 = vpop.xlane.xlu0 %3528
  %v3530 = vsel %vm181, %v3508, 0.0
  %3531 = vadd.xlane.f32.xlu0 %v3530
  %v3532 = vpop.xlane.xlu0 %3531
  %v3533 = vadd.f32 %v3511, %v2832
  %v3534 = vadd.f32 %v3514, %v2832
  %v3535 = vadd.f32 %v3517, %v2832
  %v3536 = vadd.f32 %v3520, %v2832
  %v3537 = vadd.f32 %v3523, %v2832
  %v3538 = vadd.f32 %v3526, %v2832
  %v3539 = vadd.f32 %v3529, %v2832
  %v3540 = vadd.f32 %v3532, %v2832
  %v3549 = vlaneseq
  %v3550 = vshrl.u32 %v3549, 7
  %v3551 = vsub.s32 %v2851, %v3550
  %v3552 = vrot.slane %v3533, %v3551
  %v3553 = vlaneseq
  %v3554 = vshrl.u32 %v3553, 7
  %v3555 = vsub.s32 %v2851, %v3554
  %v3556 = vrot.slane %v3534, %v3555
  %v3557 = vlaneseq
  %v3558 = vshrl.u32 %v3557, 7
  %v3559 = vsub.s32 %v2851, %v3558
  %v3560 = vrot.slane %v3535, %v3559
  %v3561 = vlaneseq
  %v3562 = vshrl.u32 %v3561, 7
  %v3563 = vsub.s32 %v2851, %v3562
  %v3564 = vrot.slane %v3536, %v3563
  %v3565 = vlaneseq
  %v3566 = vshrl.u32 %v3565, 7
  %v3567 = vsub.s32 %v2851, %v3566
  %v3568 = vrot.slane %v3537, %v3567
  %v3569 = vlaneseq
  %v3570 = vshrl.u32 %v3569, 7
  %v3571 = vsub.s32 %v2851, %v3570
  %v3572 = vrot.slane %v3538, %v3571
  %v3573 = vlaneseq
  %v3574 = vshrl.u32 %v3573, 7
  %v3575 = vsub.s32 %v2851, %v3574
  %v3576 = vrot.slane %v3539, %v3575
  %v3577 = vlaneseq
  %v3578 = vshrl.u32 %v3577, 7
  %v3579 = vsub.s32 %v2851, %v3578
  %v3580 = vrot.slane %v3540, %v3579
  %v3581 = vsel %vm2884, %v3556, %v3552
  %v3582 = vsel %vm2886, %v3560, %v3581
  %v3583 = vsel %vm2888, %v3564, %v3582
  %v3584 = vsel %vm2890, %v3568, %v3583
  %v3585 = vsel %vm2892, %v3572, %v3584
  %v3586 = vsel %vm2894, %v3576, %v3585
  %v3587 = vsel %vm2896, %v3580, %v3586
  %v3589 = vsel %vm39, %v3587, -inf
  %3590 = vmax.xlane.f32.xlu0 %v3589
  %v3591 = vpop.xlane.xlu0 %3590
  %v3593 = vlaneseq
  %v3594 = vshrl.u32 %v3593, 7
  %v3595 = vsub.s32 0, %v3594
  %v3596 = vrot.slane %v3591, %v3595
  %v3597 = vlaneseq
  %v3598 = vshrl.u32 %v3597, 7
  %v3599 = vsub.s32 1, %v3598
  %v3600 = vrot.slane %v3591, %v3599
  %v3601 = vlaneseq
  %v3602 = vshrl.u32 %v3601, 7
  %v3603 = vsub.s32 2, %v3602
  %v3604 = vrot.slane %v3591, %v3603
  %v3605 = vlaneseq
  %v3606 = vshrl.u32 %v3605, 7
  %v3607 = vsub.s32 3, %v3606
  %v3608 = vrot.slane %v3591, %v3607
  %v3609 = vlaneseq
  %v3610 = vshrl.u32 %v3609, 7
  %v3611 = vsub.s32 4, %v3610
  %v3612 = vrot.slane %v3591, %v3611
  %v3613 = vlaneseq
  %v3614 = vshrl.u32 %v3613, 7
  %v3615 = vsub.s32 5, %v3614
  %v3616 = vrot.slane %v3591, %v3615
  %v3617 = vlaneseq
  %v3618 = vshrl.u32 %v3617, 7
  %v3619 = vsub.s32 6, %v3618
  %v3620 = vrot.slane %v3591, %v3619
  %v3621 = vlaneseq
  %v3622 = vshrl.u32 %v3621, 7
  %v3623 = vsub.s32 7, %v3622
  %v3624 = vrot.slane %v3591, %v3623
  %v3633 = vsub.f32 %v3533, %v3596
  %v3634 = vsub.f32 %v3534, %v3600
  %v3635 = vsub.f32 %v3535, %v3604
  %v3636 = vsub.f32 %v3536, %v3608
  %v3637 = vsub.f32 %v3537, %v3612
  %v3638 = vsub.f32 %v3538, %v3616
  %v3639 = vsub.f32 %v3539, %v3620
  %v3640 = vsub.f32 %v3540, %v3624
  %v3641 = vmul.f32 %v3633, 1.442695
  %v3642 = vpow.pop %v3641
  %v3643 = vmul.f32 %v3634, 1.442695
  %v3644 = vpow.pop %v3643
  %v3645 = vmul.f32 %v3635, 1.442695
  %v3646 = vpow.pop %v3645
  %v3647 = vmul.f32 %v3636, 1.442695
  %v3648 = vpow.pop %v3647
  %v3649 = vmul.f32 %v3637, 1.442695
  %v3650 = vpow.pop %v3649
  %v3651 = vmul.f32 %v3638, 1.442695
  %v3652 = vpow.pop %v3651
  %v3653 = vmul.f32 %v3639, 1.442695
  %v3654 = vpow.pop %v3653
  %v3655 = vmul.f32 %v3640, 1.442695
  %v3656 = vpow.pop %v3655
  %3665 = vset.pattern.permute.xlu0 0
  %3666 = vperm.xlu0 %3665, %v3642
  %v3667 = vpop.permute.xlu0 %3666
  %3668 = vset.pattern.permute.xlu0 0
  %3669 = vperm.xlu0 %3668, %v3644
  %v3670 = vpop.permute.xlu0 %3669
  %3671 = vset.pattern.permute.xlu0 0
  %3672 = vperm.xlu0 %3671, %v3646
  %v3673 = vpop.permute.xlu0 %3672
  %3674 = vset.pattern.permute.xlu0 0
  %3675 = vperm.xlu0 %3674, %v3648
  %v3676 = vpop.permute.xlu0 %3675
  %3677 = vset.pattern.permute.xlu0 0
  %3678 = vperm.xlu0 %3677, %v3650
  %v3679 = vpop.permute.xlu0 %3678
  %3680 = vset.pattern.permute.xlu0 0
  %3681 = vperm.xlu0 %3680, %v3652
  %v3682 = vpop.permute.xlu0 %3681
  %3683 = vset.pattern.permute.xlu0 0
  %3684 = vperm.xlu0 %3683, %v3654
  %v3685 = vpop.permute.xlu0 %3684
  %3686 = vset.pattern.permute.xlu0 0
  %3687 = vperm.xlu0 %3686, %v3656
  %v3688 = vpop.permute.xlu0 %3687
  %v3689 = vlaneseq
  %v3690 = vshrl.u32 %v3689, 7
  %v3691 = vsub.s32 %v2851, %v3690
  %v3692 = vrot.slane %v3667, %v3691
  %v3693 = vlaneseq
  %v3694 = vshrl.u32 %v3693, 7
  %v3695 = vsub.s32 %v2851, %v3694
  %v3696 = vrot.slane %v3670, %v3695
  %v3697 = vlaneseq
  %v3698 = vshrl.u32 %v3697, 7
  %v3699 = vsub.s32 %v2851, %v3698
  %v3700 = vrot.slane %v3673, %v3699
  %v3701 = vlaneseq
  %v3702 = vshrl.u32 %v3701, 7
  %v3703 = vsub.s32 %v2851, %v3702
  %v3704 = vrot.slane %v3676, %v3703
  %v3705 = vlaneseq
  %v3706 = vshrl.u32 %v3705, 7
  %v3707 = vsub.s32 %v2851, %v3706
  %v3708 = vrot.slane %v3679, %v3707
  %v3709 = vlaneseq
  %v3710 = vshrl.u32 %v3709, 7
  %v3711 = vsub.s32 %v2851, %v3710
  %v3712 = vrot.slane %v3682, %v3711
  %v3713 = vlaneseq
  %v3714 = vshrl.u32 %v3713, 7
  %v3715 = vsub.s32 %v2851, %v3714
  %v3716 = vrot.slane %v3685, %v3715
  %v3717 = vlaneseq
  %v3718 = vshrl.u32 %v3717, 7
  %v3719 = vsub.s32 %v2851, %v3718
  %v3720 = vrot.slane %v3688, %v3719
  %v3721 = vsel %vm2884, %v3696, %v3692
  %v3722 = vsel %vm2886, %v3700, %v3721
  %v3723 = vsel %vm2888, %v3704, %v3722
  %v3724 = vsel %vm2890, %v3708, %v3723
  %v3725 = vsel %vm2892, %v3712, %v3724
  %v3726 = vsel %vm2894, %v3716, %v3725
  %v3727 = vsel %vm2896, %v3720, %v3726
  %v3729 = vsel %vm39, %v3727, 0.0
  %3730 = vadd.xlane.f32.xlu0 %v3729
  %v3731 = vpop.xlane.xlu0 %3730
  %v3732 = vrcp.pop %v3731
  %v3734 = vlaneseq
  %v3735 = vshrl.u32 %v3734, 7
  %v3736 = vsub.s32 0, %v3735
  %v3737 = vrot.slane %v3732, %v3736
  %v3738 = vlaneseq
  %v3739 = vshrl.u32 %v3738, 7
  %v3740 = vsub.s32 1, %v3739
  %v3741 = vrot.slane %v3732, %v3740
  %v3742 = vlaneseq
  %v3743 = vshrl.u32 %v3742, 7
  %v3744 = vsub.s32 2, %v3743
  %v3745 = vrot.slane %v3732, %v3744
  %v3746 = vlaneseq
  %v3747 = vshrl.u32 %v3746, 7
  %v3748 = vsub.s32 3, %v3747
  %v3749 = vrot.slane %v3732, %v3748
  %v3750 = vlaneseq
  %v3751 = vshrl.u32 %v3750, 7
  %v3752 = vsub.s32 4, %v3751
  %v3753 = vrot.slane %v3732, %v3752
  %v3754 = vlaneseq
  %v3755 = vshrl.u32 %v3754, 7
  %v3756 = vsub.s32 5, %v3755
  %v3757 = vrot.slane %v3732, %v3756
  %v3758 = vlaneseq
  %v3759 = vshrl.u32 %v3758, 7
  %v3760 = vsub.s32 6, %v3759
  %v3761 = vrot.slane %v3732, %v3760
  %v3762 = vlaneseq
  %v3763 = vshrl.u32 %v3762, 7
  %v3764 = vsub.s32 7, %v3763
  %v3765 = vrot.slane %v3732, %v3764
  %v3774 = vmul.f32 %v3642, %v3737
  %v3775 = vmul.f32 %v3644, %v3741
  %v3776 = vmul.f32 %v3646, %v3745
  %v3777 = vmul.f32 %v3648, %v3749
  %v3778 = vmul.f32 %v3650, %v3753
  %v3779 = vmul.f32 %v3652, %v3757
  %v3780 = vmul.f32 %v3654, %v3761
  %v3781 = vmul.f32 %v3656, %v3765
  %3790 = vset.pattern.permute.xlu0 0
  %3791 = vperm.xlu0 %3790, %v3774
  %v3792 = vpop.permute.xlu0 %3791
  %3793 = vset.pattern.permute.xlu0 0
  %3794 = vperm.xlu0 %3793, %v3775
  %v3795 = vpop.permute.xlu0 %3794
  %3796 = vset.pattern.permute.xlu0 0
  %3797 = vperm.xlu0 %3796, %v3776
  %v3798 = vpop.permute.xlu0 %3797
  %3799 = vset.pattern.permute.xlu0 0
  %3800 = vperm.xlu0 %3799, %v3777
  %v3801 = vpop.permute.xlu0 %3800
  %3802 = vset.pattern.permute.xlu0 0
  %3803 = vperm.xlu0 %3802, %v3778
  %v3804 = vpop.permute.xlu0 %3803
  %3805 = vset.pattern.permute.xlu0 0
  %3806 = vperm.xlu0 %3805, %v3779
  %v3807 = vpop.permute.xlu0 %3806
  %3808 = vset.pattern.permute.xlu0 0
  %3809 = vperm.xlu0 %3808, %v3780
  %v3810 = vpop.permute.xlu0 %3809
  %3811 = vset.pattern.permute.xlu0 0
  %3812 = vperm.xlu0 %3811, %v3781
  %v3813 = vpop.permute.xlu0 %3812
  %v3814 = vlaneseq
  %v3815 = vshrl.u32 %v3814, 7
  %v3816 = vsub.s32 %v2851, %v3815
  %v3817 = vrot.slane %v3792, %v3816
  %v3818 = vlaneseq
  %v3819 = vshrl.u32 %v3818, 7
  %v3820 = vsub.s32 %v2851, %v3819
  %v3821 = vrot.slane %v3795, %v3820
  %v3822 = vlaneseq
  %v3823 = vshrl.u32 %v3822, 7
  %v3824 = vsub.s32 %v2851, %v3823
  %v3825 = vrot.slane %v3798, %v3824
  %v3826 = vlaneseq
  %v3827 = vshrl.u32 %v3826, 7
  %v3828 = vsub.s32 %v2851, %v3827
  %v3829 = vrot.slane %v3801, %v3828
  %v3830 = vlaneseq
  %v3831 = vshrl.u32 %v3830, 7
  %v3832 = vsub.s32 %v2851, %v3831
  %v3833 = vrot.slane %v3804, %v3832
  %v3834 = vlaneseq
  %v3835 = vshrl.u32 %v3834, 7
  %v3836 = vsub.s32 %v2851, %v3835
  %v3837 = vrot.slane %v3807, %v3836
  %v3838 = vlaneseq
  %v3839 = vshrl.u32 %v3838, 7
  %v3840 = vsub.s32 %v2851, %v3839
  %v3841 = vrot.slane %v3810, %v3840
  %v3842 = vlaneseq
  %v3843 = vshrl.u32 %v3842, 7
  %v3844 = vsub.s32 %v2851, %v3843
  %v3845 = vrot.slane %v3813, %v3844
  %v3846 = vsel %vm2884, %v3821, %v3817
  %v3847 = vsel %vm2886, %v3825, %v3846
  %v3848 = vsel %vm2888, %v3829, %v3847
  %v3849 = vsel %vm2890, %v3833, %v3848
  %v3850 = vsel %vm2892, %v3837, %v3849
  %v3851 = vsel %vm2894, %v3841, %v3850
  %v3852 = vsel %vm2896, %v3845, %v3851
  %v3853 = vsel %vm39, %v3852, 0
  %3855 = vmatprep.subr.mxu0 0.0
  %3856 = vmatpush1.msra.mxu0 %v2533
  %3857 = vmatprep.subr.mxu0 0.0
  %3858 = vmatpush1.msra.mxu0 0.0
  %3859 = vmatprep.subr.mxu0 0.0
  %3860 = vmatpush1.msra.mxu0 0.0
  %3861 = vmatprep.subr.mxu0 0.0
  %3862 = vmatpush1.msra.mxu0 0.0
  %3863 = vmatprep.subr.mxu0 0.0
  %3864 = vmatpush1.msra.mxu0 0.0
  %3865 = vmatprep.subr.mxu0 0.0
  %3866 = vmatpush1.msra.mxu0 0.0
  %3867 = vmatprep.subr.mxu0 0.0
  %3868 = vmatpush1.msra.mxu0 0.0
  %3869 = vmatprep.subr.mxu0 0.0
  %3870 = vmatpush1.msra.mxu0 0.0
  %3871 = vmatprep.subr.mxu0 0.0
  %3872 = vmatpush1.msra.mxu0 0.0
  %3873 = vmatprep.subr.mxu0 0.0
  %3874 = vmatpush1.msra.mxu0 0.0
  %3875 = vmatprep.subr.mxu0 0.0
  %3876 = vmatpush1.msra.mxu0 0.0
  %3877 = vmatprep.subr.mxu0 0.0
  %3878 = vmatpush1.msra.mxu0 0.0
  %3879 = vmatprep.subr.mxu0 0.0
  %3880 = vmatpush1.msra.mxu0 0.0
  %3881 = vmatprep.subr.mxu0 0.0
  %3882 = vmatpush1.msra.mxu0 0.0
  %3883 = vmatprep.subr.mxu0 0.0
  %3884 = vmatpush1.msra.mxu0 0.0
  %3885 = vmatprep.subr.mxu0 0.0
  %3886 = vmatpush1.msra.mxu0 0.0
  %3887 = vmatprep.subr.mxu0 0.0
  %3888 = vmatpush1.msra.mxu0 0.0
  %3889 = vmatprep.subr.mxu0 0.0
  %3890 = vmatpush1.msra.mxu0 0.0
  %3891 = vmatprep.subr.mxu0 0.0
  %3892 = vmatpush1.msra.mxu0 0.0
  %3893 = vmatprep.subr.mxu0 0.0
  %3894 = vmatpush1.msra.mxu0 0.0
  %3895 = vmatprep.subr.mxu0 0.0
  %3896 = vmatpush1.msra.mxu0 0.0
  %3897 = vmatprep.subr.mxu0 0.0
  %3898 = vmatpush1.msra.mxu0 0.0
  %3899 = vmatprep.subr.mxu0 0.0
  %3900 = vmatpush1.msra.mxu0 0.0
  %3901 = vmatprep.subr.mxu0 0.0
  %3902 = vmatpush1.msra.mxu0 0.0
  %3903 = vmatprep.subr.mxu0 0.0
  %3904 = vmatpush1.msra.mxu0 0.0
  %3905 = vmatprep.subr.mxu0 0.0
  %3906 = vmatpush1.msra.mxu0 0.0
  %3907 = vmatprep.subr.mxu0 0.0
  %3908 = vmatpush1.msra.mxu0 0.0
  %3909 = vmatprep.subr.mxu0 0.0
  %3910 = vmatpush1.msra.mxu0 0.0
  %3911 = vmatprep.subr.mxu0 0.0
  %3912 = vmatpush1.msra.mxu0 0.0
  %3913 = vmatprep.subr.mxu0 0.0
  %3914 = vmatpush1.msra.mxu0 0.0
  %3915 = vmatprep.subr.mxu0 0.0
  %3916 = vmatpush1.msra.mxu0 0.0
  %3917 = vmatprep.subr.mxu0 0.0
  %3918 = vmatpush1.msra.mxu0 0.0
  %3919 = vmatprep.mubr.f32.mxu0 0.0
  %3920 = vmatmul.mubr.f32.gmra.mrb[0].mxu0 %v3853
  %v3921 = vpop.f32.mrb[0].mxu0
  %v3922 = vadd.f32 0.0, %v3921
  %v3923 = vpop.f32.mrb[0].mxu0
  %3924 = vdwg.mxu0
  %v3926 = vsel %vm181, %v3922, 0
  %3928 = vmatprep.subr.mxu0 0.0
  %3929 = vmatpush1.msra.mxu0 %v2678
  %3930 = vmatprep.subr.mxu0 0.0
  %3931 = vmatpush1.msra.mxu0 %v2679
  %3932 = vmatprep.subr.mxu0 0.0
  %3933 = vmatpush1.msra.mxu0 %v2680
  %3934 = vmatprep.subr.mxu0 0.0
  %3935 = vmatpush1.msra.mxu0 %v2681
  %3936 = vmatprep.subr.mxu0 0.0
  %3937 = vmatpush1.msra.mxu0 0.0
  %3938 = vmatprep.subr.mxu0 0.0
  %3939 = vmatpush1.msra.mxu0 0.0
  %3940 = vmatprep.subr.mxu0 0.0
  %3941 = vmatpush1.msra.mxu0 0.0
  %3942 = vmatprep.subr.mxu0 0.0
  %3943 = vmatpush1.msra.mxu0 0.0
  %3944 = vmatprep.subr.mxu0 0.0
  %3945 = vmatpush1.msra.mxu0 0.0
  %3946 = vmatprep.subr.mxu0 0.0
  %3947 = vmatpush1.msra.mxu0 0.0
  %3948 = vmatprep.subr.mxu0 0.0
  %3949 = vmatpush1.msra.mxu0 0.0
  %3950 = vmatprep.subr.mxu0 0.0
  %3951 = vmatpush1.msra.mxu0 0.0
  %3952 = vmatprep.subr.mxu0 0.0
  %3953 = vmatpush1.msra.mxu0 0.0
  %3954 = vmatprep.subr.mxu0 0.0
  %3955 = vmatpush1.msra.mxu0 0.0
  %3956 = vmatprep.subr.mxu0 0.0
  %3957 = vmatpush1.msra.mxu0 0.0
  %3958 = vmatprep.subr.mxu0 0.0
  %3959 = vmatpush1.msra.mxu0 0.0
  %3960 = vmatprep.subr.mxu0 0.0
  %3961 = vmatpush1.msra.mxu0 0.0
  %3962 = vmatprep.subr.mxu0 0.0
  %3963 = vmatpush1.msra.mxu0 0.0
  %3964 = vmatprep.subr.mxu0 0.0
  %3965 = vmatpush1.msra.mxu0 0.0
  %3966 = vmatprep.subr.mxu0 0.0
  %3967 = vmatpush1.msra.mxu0 0.0
  %3968 = vmatprep.subr.mxu0 0.0
  %3969 = vmatpush1.msra.mxu0 0.0
  %3970 = vmatprep.subr.mxu0 0.0
  %3971 = vmatpush1.msra.mxu0 0.0
  %3972 = vmatprep.subr.mxu0 0.0
  %3973 = vmatpush1.msra.mxu0 0.0
  %3974 = vmatprep.subr.mxu0 0.0
  %3975 = vmatpush1.msra.mxu0 0.0
  %3976 = vmatprep.subr.mxu0 0.0
  %3977 = vmatpush1.msra.mxu0 0.0
  %3978 = vmatprep.subr.mxu0 0.0
  %3979 = vmatpush1.msra.mxu0 0.0
  %3980 = vmatprep.subr.mxu0 0.0
  %3981 = vmatpush1.msra.mxu0 0.0
  %3982 = vmatprep.subr.mxu0 0.0
  %3983 = vmatpush1.msra.mxu0 0.0
  %3984 = vmatprep.subr.mxu0 0.0
  %3985 = vmatpush1.msra.mxu0 0.0
  %3986 = vmatprep.subr.mxu0 0.0
  %3987 = vmatpush1.msra.mxu0 0.0
  %3988 = vmatprep.subr.mxu0 0.0
  %3989 = vmatpush1.msra.mxu0 0.0
  %3990 = vmatprep.subr.mxu0 0.0
  %3991 = vmatpush1.msra.mxu0 0.0
  %3992 = vmatprep.mubr.f32.mxu0 0.0
  %3993 = vmatmul.mubr.f32.gmra.mrb[0].mxu0 %v3926
  %v3994 = vpop.f32.mrb[0].mxu0
  %v3995 = vadd.f32 0.0, %v3994
  %v3996 = vpop.f32.mrb[0].mxu0
  %3997 = vdwg.mxu0
  %3998 = vmatprep.subr.mxu0 0.0
  %3999 = vmatpush1.xpose.msra.mxu0 %v2557
  %4000 = vmatprep.subr.mxu0 0.0
  %4001 = vmatpush1.xpose.msra.mxu0 0.0
  %4002 = vmatprep.subr.mxu0 0.0
  %4003 = vmatpush1.xpose.msra.mxu0 0.0
  %4004 = vmatprep.subr.mxu0 0.0
  %4005 = vmatpush1.xpose.msra.mxu0 0.0
  %4006 = vmatprep.subr.mxu0 0.0
  %4007 = vmatpush1.xpose.msra.mxu0 0.0
  %4008 = vmatprep.subr.mxu0 0.0
  %4009 = vmatpush1.xpose.msra.mxu0 0.0
  %4010 = vmatprep.subr.mxu0 0.0
  %4011 = vmatpush1.xpose.msra.mxu0 0.0
  %4012 = vmatprep.subr.mxu0 0.0
  %4013 = vmatpush1.xpose.msra.mxu0 0.0
  %4014 = vmatprep.subr.mxu0 0.0
  %4015 = vmatpush1.xpose.msra.mxu0 0.0
  %4016 = vmatprep.subr.mxu0 0.0
  %4017 = vmatpush1.xpose.msra.mxu0 0.0
  %4018 = vmatprep.subr.mxu0 0.0
  %4019 = vmatpush1.xpose.msra.mxu0 0.0
  %4020 = vmatprep.subr.mxu0 0.0
  %4021 = vmatpush1.xpose.msra.mxu0 0.0
  %4022 = vmatprep.subr.mxu0 0.0
  %4023 = vmatpush1.xpose.msra.mxu0 0.0
  %4024 = vmatprep.subr.mxu0 0.0
  %4025 = vmatpush1.xpose.msra.mxu0 0.0
  %4026 = vmatprep.subr.mxu0 0.0
  %4027 = vmatpush1.xpose.msra.mxu0 0.0
  %4028 = vmatprep.subr.mxu0 0.0
  %4029 = vmatpush1.xpose.msra.mxu0 0.0
  %4030 = vmatprep.subr.mxu0 0.0
  %4031 = vmatpush1.xpose.msra.mxu0 0.0
  %4032 = vmatprep.subr.mxu0 0.0
  %4033 = vmatpush1.xpose.msra.mxu0 0.0
  %4034 = vmatprep.subr.mxu0 0.0
  %4035 = vmatpush1.xpose.msra.mxu0 0.0
  %4036 = vmatprep.subr.mxu0 0.0
  %4037 = vmatpush1.xpose.msra.mxu0 0.0
  %4038 = vmatprep.subr.mxu0 0.0
  %4039 = vmatpush1.xpose.msra.mxu0 0.0
  %4040 = vmatprep.subr.mxu0 0.0
  %4041 = vmatpush1.xpose.msra.mxu0 0.0
  %4042 = vmatprep.subr.mxu0 0.0
  %4043 = vmatpush1.xpose.msra.mxu0 0.0
  %4044 = vmatprep.subr.mxu0 0.0
  %4045 = vmatpush1.xpose.msra.mxu0 0.0
  %4046 = vmatprep.subr.mxu0 0.0
  %4047 = vmatpush1.xpose.msra.mxu0 0.0
  %4048 = vmatprep.subr.mxu0 0.0
  %4049 = vmatpush1.xpose.msra.mxu0 0.0
  %4050 = vmatprep.subr.mxu0 0.0
  %4051 = vmatpush1.xpose.msra.mxu0 0.0
  %4052 = vmatprep.subr.mxu0 0.0
  %4053 = vmatpush1.xpose.msra.mxu0 0.0
  %4054 = vmatprep.subr.mxu0 0.0
  %4055 = vmatpush1.xpose.msra.mxu0 0.0
  %4056 = vmatprep.subr.mxu0 0.0
  %4057 = vmatpush1.xpose.msra.mxu0 0.0
  %4058 = vmatprep.subr.mxu0 0.0
  %4059 = vmatpush1.xpose.msra.mxu0 0.0
  %4060 = vmatprep.subr.mxu0 0.0
  %4061 = vmatpush1.xpose.msra.mxu0 0.0
  %4062 = vmatprep.mubr.f32.mxu0 0.0
  %4063 = vmatmul.mubr.f32.gmra.mrb[0].mxu0 %v3309
  %v4064 = vpop.f32.mrb[0].mxu0
  %v4065 = vadd.f32 0.0, %v4064
  %v4066 = vpop.f32.mrb[0].mxu0
  %4067 = vdwg.mxu0
  %4069 = vset.pattern.permute.xlu0 0
  %4070 = vperm.xlu0 %4069, %v3995
  %v4071 = vpop.permute.xlu0 %4070
  %v4073 = vlaneseq
  %v4074 = vshrl.u32 %v4073, 7
  %v4075 = vsub.s32 0, %v4074
  %v4076 = vrot.slane %v4065, %v4075
  %v4077 = vadd.f32 %v4071, %v4076
  %v4079 = vcombine.high %v2658, %v2658
  %v4081 = vunpack.c.l.s4 1966171168
  %v4082 = vunpack.c.0.s8 %v4081
  %v4083 = vlaneseq
  %v4084 = vshrl.u32 %v4083, 7
  %v4085 = vsub.s32 %v4082, %v4084
  %v4086 = vrot.slane %v2658, %v4085
  %v4088 = vunpack.c.l.s4 1966171168
  %v4089 = vunpack.c.0.s8 %v4088
  %v4090 = vlaneseq
  %v4091 = vshrl.u32 %v4090, 7
  %v4092 = vsub.s32 %v4089, %v4091
  %v4093 = vrot.slane %v4079, %v4092
  %v4094 = vcombine.high %v4086, %v4086
  %v4095 = vcombine.high %v4093, %v4093
  %v4097 = vunpack.c.l.s4 1966171168
  %v4098 = vunpack.c.0.s8 %v4097
  %v4099 = vlaneseq
  %v4100 = vshrl.u32 %v4099, 7
  %v4101 = vsub.s32 %v4098, %v4100
  %v4102 = vrot.slane %v4086, %v4101
  %v4104 = vunpack.c.l.s4 1966171168
  %v4105 = vunpack.c.0.s8 %v4104
  %v4106 = vlaneseq
  %v4107 = vshrl.u32 %v4106, 7
  %v4108 = vsub.s32 %v4105, %v4107
  %v4109 = vrot.slane %v4093, %v4108
  %v4111 = vunpack.c.l.s4 1966171168
  %v4112 = vunpack.c.0.s8 %v4111
  %v4113 = vlaneseq
  %v4114 = vshrl.u32 %v4113, 7
  %v4115 = vsub.s32 %v4112, %v4114
  %v4116 = vrot.slane %v4094, %v4115
  %v4118 = vunpack.c.l.s4 1966171168
  %v4119 = vunpack.c.0.s8 %v4118
  %v4120 = vlaneseq
  %v4121 = vshrl.u32 %v4120, 7
  %v4122 = vsub.s32 %v4119, %v4121
  %v4123 = vrot.slane %v4095, %v4122
  %v4124 = vcombine.high %v4102, %v4102
  %v4125 = vcombine.high %v4109, %v4109
  %v4126 = vcombine.high %v4116, %v4116
  %v4127 = vcombine.high %v4123, %v4123
  %v4128 = vlaneseq
  %v4129 = vshrl.u32 %v4128, 7
  %v4130 = vsub.s32 0, %v4129
  %v4131 = vrot.slane %v4102, %v4130
  %v4132 = vlaneseq
  %v4133 = vshrl.u32 %v4132, 7
  %v4134 = vsub.s32 0, %v4133
  %v4135 = vrot.slane %v4116, %v4134
  %v4136 = vlaneseq
  %v4137 = vshrl.u32 %v4136, 7
  %v4138 = vsub.s32 0, %v4137
  %v4139 = vrot.slane %v4124, %v4138
  %v4140 = vlaneseq
  %v4141 = vshrl.u32 %v4140, 7
  %v4142 = vsub.s32 0, %v4141
  %v4143 = vrot.slane %v4126, %v4142
  %v4144 = vlaneseq
  %v4145 = vshrl.u32 %v4144, 7
  %v4146 = vsub.s32 0, %v4145
  %v4147 = vrot.slane %v4109, %v4146
  %v4148 = vlaneseq
  %v4149 = vshrl.u32 %v4148, 7
  %v4150 = vsub.s32 0, %v4149
  %v4151 = vrot.slane %v4123, %v4150
  %v4152 = vlaneseq
  %v4153 = vshrl.u32 %v4152, 7
  %v4154 = vsub.s32 0, %v4153
  %v4155 = vrot.slane %v4125, %v4154
  %v4156 = vlaneseq
  %v4157 = vshrl.u32 %v4156, 7
  %v4158 = vsub.s32 0, %v4157
  %v4159 = vrot.slane %v4127, %v4158
  %4169 = vrot.lane.b32.xlu0 %v2663, 96
  %v4170 = vpop.permute.xlu0 %4169
  %v4172 = vadd.f32 %v4131, %v4170
  %v4173 = vadd.f32 %v4135, %v4170
  %v4174 = vadd.f32 %v4139, %v4170
  %v4175 = vadd.f32 %v4143, %v4170
  %v4176 = vadd.f32 %v4147, %v4170
  %v4177 = vadd.f32 %v4151, %v4170
  %v4178 = vadd.f32 %v4155, %v4170
  %v4179 = vadd.f32 %v4159, %v4170
  %v4180 = vtanh.pop %v4172
  %v4181 = vtanh.pop %v4173
  %v4182 = vtanh.pop %v4174
  %v4183 = vtanh.pop %v4175
  %v4184 = vtanh.pop %v4176
  %v4185 = vtanh.pop %v4177
  %v4186 = vtanh.pop %v4178
  %v4187 = vtanh.pop %v4179
  %v4188 = vmul.f32 %v4180, %v2797
  %v4189 = vmul.f32 %v4181, %v2797
  %v4190 = vmul.f32 %v4182, %v2797
  %v4191 = vmul.f32 %v4183, %v2797
  %v4192 = vmul.f32 %v4184, %v2797
  %v4193 = vmul.f32 %v4185, %v2797
  %v4194 = vmul.f32 %v4186, %v2797
  %v4195 = vmul.f32 %v4187, %v2797
  %v4196 = vsel %vm181, %v4188, 0.0
  %4197 = vadd.xlane.f32.xlu0 %v4196
  %v4198 = vpop.xlane.xlu0 %4197
  %v4199 = vsel %vm181, %v4189, 0.0
  %4200 = vadd.xlane.f32.xlu0 %v4199
  %v4201 = vpop.xlane.xlu0 %4200
  %v4202 = vsel %vm181, %v4190, 0.0
  %4203 = vadd.xlane.f32.xlu0 %v4202
  %v4204 = vpop.xlane.xlu0 %4203
  %v4205 = vsel %vm181, %v4191, 0.0
  %4206 = vadd.xlane.f32.xlu0 %v4205
  %v4207 = vpop.xlane.xlu0 %4206
  %v4208 = vsel %vm181, %v4192, 0.0
  %4209 = vadd.xlane.f32.xlu0 %v4208
  %v4210 = vpop.xlane.xlu0 %4209
  %v4211 = vsel %vm181, %v4193, 0.0
  %4212 = vadd.xlane.f32.xlu0 %v4211
  %v4213 = vpop.xlane.xlu0 %4212
  %v4214 = vsel %vm181, %v4194, 0.0
  %4215 = vadd.xlane.f32.xlu0 %v4214
  %v4216 = vpop.xlane.xlu0 %4215
  %v4217 = vsel %vm181, %v4195, 0.0
  %4218 = vadd.xlane.f32.xlu0 %v4217
  %v4219 = vpop.xlane.xlu0 %4218
  %v4220 = vadd.f32 %v4198, %v2832
  %v4221 = vadd.f32 %v4201, %v2832
  %v4222 = vadd.f32 %v4204, %v2832
  %v4223 = vadd.f32 %v4207, %v2832
  %v4224 = vadd.f32 %v4210, %v2832
  %v4225 = vadd.f32 %v4213, %v2832
  %v4226 = vadd.f32 %v4216, %v2832
  %v4227 = vadd.f32 %v4219, %v2832
  %v4236 = vlaneseq
  %v4237 = vshrl.u32 %v4236, 7
  %v4238 = vsub.s32 %v2851, %v4237
  %v4239 = vrot.slane %v4220, %v4238
  %v4240 = vlaneseq
  %v4241 = vshrl.u32 %v4240, 7
  %v4242 = vsub.s32 %v2851, %v4241
  %v4243 = vrot.slane %v4221, %v4242
  %v4244 = vlaneseq
  %v4245 = vshrl.u32 %v4244, 7
  %v4246 = vsub.s32 %v2851, %v4245
  %v4247 = vrot.slane %v4222, %v4246
  %v4248 = vlaneseq
  %v4249 = vshrl.u32 %v4248, 7
  %v4250 = vsub.s32 %v2851, %v4249
  %v4251 = vrot.slane %v4223, %v4250
  %v4252 = vlaneseq
  %v4253 = vshrl.u32 %v4252, 7
  %v4254 = vsub.s32 %v2851, %v4253
  %v4255 = vrot.slane %v4224, %v4254
  %v4256 = vlaneseq
  %v4257 = vshrl.u32 %v4256, 7
  %v4258 = vsub.s32 %v2851, %v4257
  %v4259 = vrot.slane %v4225, %v4258
  %v4260 = vlaneseq
  %v4261 = vshrl.u32 %v4260, 7
  %v4262 = vsub.s32 %v2851, %v4261
  %v4263 = vrot.slane %v4226, %v4262
  %v4264 = vlaneseq
  %v4265 = vshrl.u32 %v4264, 7
  %v4266 = vsub.s32 %v2851, %v4265
  %v4267 = vrot.slane %v4227, %v4266
  %v4268 = vsel %vm2884, %v4243, %v4239
  %v4269 = vsel %vm2886, %v4247, %v4268
  %v4270 = vsel %vm2888, %v4251, %v4269
  %v4271 = vsel %vm2890, %v4255, %v4270
  %v4272 = vsel %vm2892, %v4259, %v4271
  %v4273 = vsel %vm2894, %v4263, %v4272
  %v4274 = vsel %vm2896, %v4267, %v4273
  %v4276 = vsel %vm39, %v4274, -inf
  %4277 = vmax.xlane.f32.xlu0 %v4276
  %v4278 = vpop.xlane.xlu0 %4277
  %v4280 = vlaneseq
  %v4281 = vshrl.u32 %v4280, 7
  %v4282 = vsub.s32 0, %v4281
  %v4283 = vrot.slane %v4278, %v4282
  %v4284 = vlaneseq
  %v4285 = vshrl.u32 %v4284, 7
  %v4286 = vsub.s32 1, %v4285
  %v4287 = vrot.slane %v4278, %v4286
  %v4288 = vlaneseq
  %v4289 = vshrl.u32 %v4288, 7
  %v4290 = vsub.s32 2, %v4289
  %v4291 = vrot.slane %v4278, %v4290
  %v4292 = vlaneseq
  %v4293 = vshrl.u32 %v4292, 7
  %v4294 = vsub.s32 3, %v4293
  %v4295 = vrot.slane %v4278, %v4294
  %v4296 = vlaneseq
  %v4297 = vshrl.u32 %v4296, 7
  %v4298 = vsub.s32 4, %v4297
  %v4299 = vrot.slane %v4278, %v4298
  %v4300 = vlaneseq
  %v4301 = vshrl.u32 %v4300, 7
  %v4302 = vsub.s32 5, %v4301
  %v4303 = vrot.slane %v4278, %v4302
  %v4304 = vlaneseq
  %v4305 = vshrl.u32 %v4304, 7
  %v4306 = vsub.s32 6, %v4305
  %v4307 = vrot.slane %v4278, %v4306
  %v4308 = vlaneseq
  %v4309 = vshrl.u32 %v4308, 7
  %v4310 = vsub.s32 7, %v4309
  %v4311 = vrot.slane %v4278, %v4310
  %v4320 = vsub.f32 %v4220, %v4283
  %v4321 = vsub.f32 %v4221, %v4287
  %v4322 = vsub.f32 %v4222, %v4291
  %v4323 = vsub.f32 %v4223, %v4295
  %v4324 = vsub.f32 %v4224, %v4299
  %v4325 = vsub.f32 %v4225, %v4303
  %v4326 = vsub.f32 %v4226, %v4307
  %v4327 = vsub.f32 %v4227, %v4311
  %v4328 = vmul.f32 %v4320, 1.442695
  %v4329 = vpow.pop %v4328
  %v4330 = vmul.f32 %v4321, 1.442695
  %v4331 = vpow.pop %v4330
  %v4332 = vmul.f32 %v4322, 1.442695
  %v4333 = vpow.pop %v4332
  %v4334 = vmul.f32 %v4323, 1.442695
  %v4335 = vpow.pop %v4334
  %v4336 = vmul.f32 %v4324, 1.442695
  %v4337 = vpow.pop %v4336
  %v4338 = vmul.f32 %v4325, 1.442695
  %v4339 = vpow.pop %v4338
  %v4340 = vmul.f32 %v4326, 1.442695
  %v4341 = vpow.pop %v4340
  %v4342 = vmul.f32 %v4327, 1.442695
  %v4343 = vpow.pop %v4342
  %4352 = vset.pattern.permute.xlu0 0
  %4353 = vperm.xlu0 %4352, %v4329
  %v4354 = vpop.permute.xlu0 %4353
  %4355 = vset.pattern.permute.xlu0 0
  %4356 = vperm.xlu0 %4355, %v4331
  %v4357 = vpop.permute.xlu0 %4356
  %4358 = vset.pattern.permute.xlu0 0
  %4359 = vperm.xlu0 %4358, %v4333
  %v4360 = vpop.permute.xlu0 %4359
  %4361 = vset.pattern.permute.xlu0 0
  %4362 = vperm.xlu0 %4361, %v4335
  %v4363 = vpop.permute.xlu0 %4362
  %4364 = vset.pattern.permute.xlu0 0
  %4365 = vperm.xlu0 %4364, %v4337
  %v4366 = vpop.permute.xlu0 %4365
  %4367 = vset.pattern.permute.xlu0 0
  %4368 = vperm.xlu0 %4367, %v4339
  %v4369 = vpop.permute.xlu0 %4368
  %4370 = vset.pattern.permute.xlu0 0
  %4371 = vperm.xlu0 %4370, %v4341
  %v4372 = vpop.permute.xlu0 %4371
  %4373 = vset.pattern.permute.xlu0 0
  %4374 = vperm.xlu0 %4373, %v4343
  %v4375 = vpop.permute.xlu0 %4374
  %v4376 = vlaneseq
  %v4377 = vshrl.u32 %v4376, 7
  %v4378 = vsub.s32 %v2851, %v4377
  %v4379 = vrot.slane %v4354, %v4378
  %v4380 = vlaneseq
  %v4381 = vshrl.u32 %v4380, 7
  %v4382 = vsub.s32 %v2851, %v4381
  %v4383 = vrot.slane %v4357, %v4382
  %v4384 = vlaneseq
  %v4385 = vshrl.u32 %v4384, 7
  %v4386 = vsub.s32 %v2851, %v4385
  %v4387 = vrot.slane %v4360, %v4386
  %v4388 = vlaneseq
  %v4389 = vshrl.u32 %v4388, 7
  %v4390 = vsub.s32 %v2851, %v4389
  %v4391 = vrot.slane %v4363, %v4390
  %v4392 = vlaneseq
  %v4393 = vshrl.u32 %v4392, 7
  %v4394 = vsub.s32 %v2851, %v4393
  %v4395 = vrot.slane %v4366, %v4394
  %v4396 = vlaneseq
  %v4397 = vshrl.u32 %v4396, 7
  %v4398 = vsub.s32 %v2851, %v4397
  %v4399 = vrot.slane %v4369, %v4398
  %v4400 = vlaneseq
  %v4401 = vshrl.u32 %v4400, 7
  %v4402 = vsub.s32 %v2851, %v4401
  %v4403 = vrot.slane %v4372, %v4402
  %v4404 = vlaneseq
  %v4405 = vshrl.u32 %v4404, 7
  %v4406 = vsub.s32 %v2851, %v4405
  %v4407 = vrot.slane %v4375, %v4406
  %v4408 = vsel %vm2884, %v4383, %v4379
  %v4409 = vsel %vm2886, %v4387, %v4408
  %v4410 = vsel %vm2888, %v4391, %v4409
  %v4411 = vsel %vm2890, %v4395, %v4410
  %v4412 = vsel %vm2892, %v4399, %v4411
  %v4413 = vsel %vm2894, %v4403, %v4412
  %v4414 = vsel %vm2896, %v4407, %v4413
  %v4416 = vsel %vm39, %v4414, 0.0
  %4417 = vadd.xlane.f32.xlu0 %v4416
  %v4418 = vpop.xlane.xlu0 %4417
  %v4419 = vrcp.pop %v4418
  %v4421 = vlaneseq
  %v4422 = vshrl.u32 %v4421, 7
  %v4423 = vsub.s32 0, %v4422
  %v4424 = vrot.slane %v4419, %v4423
  %v4425 = vlaneseq
  %v4426 = vshrl.u32 %v4425, 7
  %v4427 = vsub.s32 1, %v4426
  %v4428 = vrot.slane %v4419, %v4427
  %v4429 = vlaneseq
  %v4430 = vshrl.u32 %v4429, 7
  %v4431 = vsub.s32 2, %v4430
  %v4432 = vrot.slane %v4419, %v4431
  %v4433 = vlaneseq
  %v4434 = vshrl.u32 %v4433, 7
  %v4435 = vsub.s32 3, %v4434
  %v4436 = vrot.slane %v4419, %v4435
  %v4437 = vlaneseq
  %v4438 = vshrl.u32 %v4437, 7
  %v4439 = vsub.s32 4, %v4438
  %v4440 = vrot.slane %v4419, %v4439
  %v4441 = vlaneseq
  %v4442 = vshrl.u32 %v4441, 7
  %v4443 = vsub.s32 5, %v4442
  %v4444 = vrot.slane %v4419, %v4443
  %v4445 = vlaneseq
  %v4446 = vshrl.u32 %v4445, 7
  %v4447 = vsub.s32 6, %v4446
  %v4448 = vrot.slane %v4419, %v4447
  %v4449 = vlaneseq
  %v4450 = vshrl.u32 %v4449, 7
  %v4451 = vsub.s32 7, %v4450
  %v4452 = vrot.slane %v4419, %v4451
  %v4461 = vmul.f32 %v4329, %v4424
  %v4462 = vmul.f32 %v4331, %v4428
  %v4463 = vmul.f32 %v4333, %v4432
  %v4464 = vmul.f32 %v4335, %v4436
  %v4465 = vmul.f32 %v4337, %v4440
  %v4466 = vmul.f32 %v4339, %v4444
  %v4467 = vmul.f32 %v4341, %v4448
  %v4468 = vmul.f32 %v4343, %v4452
  %4477 = vset.pattern.permute.xlu0 0
  %4478 = vperm.xlu0 %4477, %v4461
  %v4479 = vpop.permute.xlu0 %4478
  %4480 = vset.pattern.permute.xlu0 0
  %4481 = vperm.xlu0 %4480, %v4462
  %v4482 = vpop.permute.xlu0 %4481
  %4483 = vset.pattern.permute.xlu0 0
  %4484 = vperm.xlu0 %4483, %v4463
  %v4485 = vpop.permute.xlu0 %4484
  %4486 = vset.pattern.permute.xlu0 0
  %4487 = vperm.xlu0 %4486, %v4464
  %v4488 = vpop.permute.xlu0 %4487
  %4489 = vset.pattern.permute.xlu0 0
  %4490 = vperm.xlu0 %4489, %v4465
  %v4491 = vpop.permute.xlu0 %4490
  %4492 = vset.pattern.permute.xlu0 0
  %4493 = vperm.xlu0 %4492, %v4466
  %v4494 = vpop.permute.xlu0 %4493
  %4495 = vset.pattern.permute.xlu0 0
  %4496 = vperm.xlu0 %4495, %v4467
  %v4497 = vpop.permute.xlu0 %4496
  %4498 = vset.pattern.permute.xlu0 0
  %4499 = vperm.xlu0 %4498, %v4468
  %v4500 = vpop.permute.xlu0 %4499
  %v4501 = vlaneseq
  %v4502 = vshrl.u32 %v4501, 7
  %v4503 = vsub.s32 %v2851, %v4502
  %v4504 = vrot.slane %v4479, %v4503
  %v4505 = vlaneseq
  %v4506 = vshrl.u32 %v4505, 7
  %v4507 = vsub.s32 %v2851, %v4506
  %v4508 = vrot.slane %v4482, %v4507
  %v4509 = vlaneseq
  %v4510 = vshrl.u32 %v4509, 7
  %v4511 = vsub.s32 %v2851, %v4510
  %v4512 = vrot.slane %v4485, %v4511
  %v4513 = vlaneseq
  %v4514 = vshrl.u32 %v4513, 7
  %v4515 = vsub.s32 %v2851, %v4514
  %v4516 = vrot.slane %v4488, %v4515
  %v4517 = vlaneseq
  %v4518 = vshrl.u32 %v4517, 7
  %v4519 = vsub.s32 %v2851, %v4518
  %v4520 = vrot.slane %v4491, %v4519
  %v4521 = vlaneseq
  %v4522 = vshrl.u32 %v4521, 7
  %v4523 = vsub.s32 %v2851, %v4522
  %v4524 = vrot.slane %v4494, %v4523
  %v4525 = vlaneseq
  %v4526 = vshrl.u32 %v4525, 7
  %v4527 = vsub.s32 %v2851, %v4526
  %v4528 = vrot.slane %v4497, %v4527
  %v4529 = vlaneseq
  %v4530 = vshrl.u32 %v4529, 7
  %v4531 = vsub.s32 %v2851, %v4530
  %v4532 = vrot.slane %v4500, %v4531
  %v4533 = vsel %vm2884, %v4508, %v4504
  %v4534 = vsel %vm2886, %v4512, %v4533
  %v4535 = vsel %vm2888, %v4516, %v4534
  %v4536 = vsel %vm2890, %v4520, %v4535
  %v4537 = vsel %vm2892, %v4524, %v4536
  %v4538 = vsel %vm2894, %v4528, %v4537
  %v4539 = vsel %vm2896, %v4532, %v4538
  %v4540 = vsel %vm39, %v4539, 0
  %4542 = vmatprep.subr.mxu0 0.0
  %4543 = vmatpush1.msra.mxu0 %v2535
  %4544 = vmatprep.subr.mxu0 0.0
  %4545 = vmatpush1.msra.mxu0 0.0
  %4546 = vmatprep.subr.mxu0 0.0
  %4547 = vmatpush1.msra.mxu0 0.0
  %4548 = vmatprep.subr.mxu0 0.0
  %4549 = vmatpush1.msra.mxu0 0.0
  %4550 = vmatprep.subr.mxu0 0.0
  %4551 = vmatpush1.msra.mxu0 0.0
  %4552 = vmatprep.subr.mxu0 0.0
  %4553 = vmatpush1.msra.mxu0 0.0
  %4554 = vmatprep.subr.mxu0 0.0
  %4555 = vmatpush1.msra.mxu0 0.0
  %4556 = vmatprep.subr.mxu0 0.0
  %4557 = vmatpush1.msra.mxu0 0.0
  %4558 = vmatprep.subr.mxu0 0.0
  %4559 = vmatpush1.msra.mxu0 0.0
  %4560 = vmatprep.subr.mxu0 0.0
  %4561 = vmatpush1.msra.mxu0 0.0
  %4562 = vmatprep.subr.mxu0 0.0
  %4563 = vmatpush1.msra.mxu0 0.0
  %4564 = vmatprep.subr.mxu0 0.0
  %4565 = vmatpush1.msra.mxu0 0.0
  %4566 = vmatprep.subr.mxu0 0.0
  %4567 = vmatpush1.msra.mxu0 0.0
  %4568 = vmatprep.subr.mxu0 0.0
  %4569 = vmatpush1.msra.mxu0 0.0
  %4570 = vmatprep.subr.mxu0 0.0
  %4571 = vmatpush1.msra.mxu0 0.0
  %4572 = vmatprep.subr.mxu0 0.0
  %4573 = vmatpush1.msra.mxu0 0.0
  %4574 = vmatprep.subr.mxu0 0.0
  %4575 = vmatpush1.msra.mxu0 0.0
  %4576 = vmatprep.subr.mxu0 0.0
  %4577 = vmatpush1.msra.mxu0 0.0
  %4578 = vmatprep.subr.mxu0 0.0
  %4579 = vmatpush1.msra.mxu0 0.0
  %4580 = vmatprep.subr.mxu0 0.0
  %4581 = vmatpush1.msra.mxu0 0.0
  %4582 = vmatprep.subr.mxu0 0.0
  %4583 = vmatpush1.msra.mxu0 0.0
  %4584 = vmatprep.subr.mxu0 0.0
  %4585 = vmatpush1.msra.mxu0 0.0
  %4586 = vmatprep.subr.mxu0 0.0
  %4587 = vmatpush1.msra.mxu0 0.0
  %4588 = vmatprep.subr.mxu0 0.0
  %4589 = vmatpush1.msra.mxu0 0.0
  %4590 = vmatprep.subr.mxu0 0.0
  %4591 = vmatpush1.msra.mxu0 0.0
  %4592 = vmatprep.subr.mxu0 0.0
  %4593 = vmatpush1.msra.mxu0 0.0
  %4594 = vmatprep.subr.mxu0 0.0
  %4595 = vmatpush1.msra.mxu0 0.0
  %4596 = vmatprep.subr.mxu0 0.0
  %4597 = vmatpush1.msra.mxu0 0.0
  %4598 = vmatprep.subr.mxu0 0.0
  %4599 = vmatpush1.msra.mxu0 0.0
  %4600 = vmatprep.subr.mxu0 0.0
  %4601 = vmatpush1.msra.mxu0 0.0
  %4602 = vmatprep.subr.mxu0 0.0
  %4603 = vmatpush1.msra.mxu0 0.0
  %4604 = vmatprep.subr.mxu0 0.0
  %4605 = vmatpush1.msra.mxu0 0.0
  %4606 = vmatprep.mubr.f32.mxu0 0.0
  %4607 = vmatmul.mubr.f32.gmra.mrb[0].mxu0 %v4540
  %v4608 = vpop.f32.mrb[0].mxu0
  %v4609 = vadd.f32 0.0, %v4608
  %v4610 = vpop.f32.mrb[0].mxu0
  %4611 = vdwg.mxu0
  %v4613 = vsel %vm181, %v4609, 0
  %4615 = vmatprep.subr.mxu0 0.0
  %4616 = vmatpush1.msra.mxu0 %v2678
  %4617 = vmatprep.subr.mxu0 0.0
  %4618 = vmatpush1.msra.mxu0 %v2679
  %4619 = vmatprep.subr.mxu0 0.0
  %4620 = vmatpush1.msra.mxu0 %v2680
  %4621 = vmatprep.subr.mxu0 0.0
  %4622 = vmatpush1.msra.mxu0 %v2681
  %4623 = vmatprep.subr.mxu0 0.0
  %4624 = vmatpush1.msra.mxu0 0.0
  %4625 = vmatprep.subr.mxu0 0.0
  %4626 = vmatpush1.msra.mxu0 0.0
  %4627 = vmatprep.subr.mxu0 0.0
  %4628 = vmatpush1.msra.mxu0 0.0
  %4629 = vmatprep.subr.mxu0 0.0
  %4630 = vmatpush1.msra.mxu0 0.0
  %4631 = vmatprep.subr.mxu0 0.0
  %4632 = vmatpush1.msra.mxu0 0.0
  %4633 = vmatprep.subr.mxu0 0.0
  %4634 = vmatpush1.msra.mxu0 0.0
  %4635 = vmatprep.subr.mxu0 0.0
  %4636 = vmatpush1.msra.mxu0 0.0
  %4637 = vmatprep.subr.mxu0 0.0
  %4638 = vmatpush1.msra.mxu0 0.0
  %4639 = vmatprep.subr.mxu0 0.0
  %4640 = vmatpush1.msra.mxu0 0.0
  %4641 = vmatprep.subr.mxu0 0.0
  %4642 = vmatpush1.msra.mxu0 0.0
  %4643 = vmatprep.subr.mxu0 0.0
  %4644 = vmatpush1.msra.mxu0 0.0
  %4645 = vmatprep.subr.mxu0 0.0
  %4646 = vmatpush1.msra.mxu0 0.0
  %4647 = vmatprep.subr.mxu0 0.0
  %4648 = vmatpush1.msra.mxu0 0.0
  %4649 = vmatprep.subr.mxu0 0.0
  %4650 = vmatpush1.msra.mxu0 0.0
  %4651 = vmatprep.subr.mxu0 0.0
  %4652 = vmatpush1.msra.mxu0 0.0
  %4653 = vmatprep.subr.mxu0 0.0
  %4654 = vmatpush1.msra.mxu0 0.0
  %4655 = vmatprep.subr.mxu0 0.0
  %4656 = vmatpush1.msra.mxu0 0.0
  %4657 = vmatprep.subr.mxu0 0.0
  %4658 = vmatpush1.msra.mxu0 0.0
  %4659 = vmatprep.subr.mxu0 0.0
  %4660 = vmatpush1.msra.mxu0 0.0
  %4661 = vmatprep.subr.mxu0 0.0
  %4662 = vmatpush1.msra.mxu0 0.0
  %4663 = vmatprep.subr.mxu0 0.0
  %4664 = vmatpush1.msra.mxu0 0.0
  %4665 = vmatprep.subr.mxu0 0.0
  %4666 = vmatpush1.msra.mxu0 0.0
  %4667 = vmatprep.subr.mxu0 0.0
  %4668 = vmatpush1.msra.mxu0 0.0
  %4669 = vmatprep.subr.mxu0 0.0
  %4670 = vmatpush1.msra.mxu0 0.0
  %4671 = vmatprep.subr.mxu0 0.0
  %4672 = vmatpush1.msra.mxu0 0.0
  %4673 = vmatprep.subr.mxu0 0.0
  %4674 = vmatpush1.msra.mxu0 0.0
  %4675 = vmatprep.subr.mxu0 0.0
  %4676 = vmatpush1.msra.mxu0 0.0
  %4677 = vmatprep.subr.mxu0 0.0
  %4678 = vmatpush1.msra.mxu0 0.0
  %4679 = vmatprep.mubr.f32.mxu0 0.0
  %4680 = vmatmul.mubr.f32.gmra.mrb[0].mxu0 %v4613
  %v4681 = vpop.f32.mrb[0].mxu0
  %v4682 = vadd.f32 0.0, %v4681
  %v4683 = vpop.f32.mrb[0].mxu0
  %4684 = vdwg.mxu0
  %4685 = vmatprep.subr.mxu0 0.0
  %4686 = vmatpush1.xpose.msra.mxu0 %v2563
  %4687 = vmatprep.subr.mxu0 0.0
  %4688 = vmatpush1.xpose.msra.mxu0 0.0
  %4689 = vmatprep.subr.mxu0 0.0
  %4690 = vmatpush1.xpose.msra.mxu0 0.0
  %4691 = vmatprep.subr.mxu0 0.0
  %4692 = vmatpush1.xpose.msra.mxu0 0.0
  %4693 = vmatprep.subr.mxu0 0.0
  %4694 = vmatpush1.xpose.msra.mxu0 0.0
  %4695 = vmatprep.subr.mxu0 0.0
  %4696 = vmatpush1.xpose.msra.mxu0 0.0
  %4697 = vmatprep.subr.mxu0 0.0
  %4698 = vmatpush1.xpose.msra.mxu0 0.0
  %4699 = vmatprep.subr.mxu0 0.0
  %4700 = vmatpush1.xpose.msra.mxu0 0.0
  %4701 = vmatprep.subr.mxu0 0.0
  %4702 = vmatpush1.xpose.msra.mxu0 0.0
  %4703 = vmatprep.subr.mxu0 0.0
  %4704 = vmatpush1.xpose.msra.mxu0 0.0
  %4705 = vmatprep.subr.mxu0 0.0
  %4706 = vmatpush1.xpose.msra.mxu0 0.0
  %4707 = vmatprep.subr.mxu0 0.0
  %4708 = vmatpush1.xpose.msra.mxu0 0.0
  %4709 = vmatprep.subr.mxu0 0.0
  %4710 = vmatpush1.xpose.msra.mxu0 0.0
  %4711 = vmatprep.subr.mxu0 0.0
  %4712 = vmatpush1.xpose.msra.mxu0 0.0
  %4713 = vmatprep.subr.mxu0 0.0
  %4714 = vmatpush1.xpose.msra.mxu0 0.0
  %4715 = vmatprep.subr.mxu0 0.0
  %4716 = vmatpush1.xpose.msra.mxu0 0.0
  %4717 = vmatprep.subr.mxu0 0.0
  %4718 = vmatpush1.xpose.msra.mxu0 0.0
  %4719 = vmatprep.subr.mxu0 0.0
  %4720 = vmatpush1.xpose.msra.mxu0 0.0
  %4721 = vmatprep.subr.mxu0 0.0
  %4722 = vmatpush1.xpose.msra.mxu0 0.0
  %4723 = vmatprep.subr.mxu0 0.0
  %4724 = vmatpush1.xpose.msra.mxu0 0.0
  %4725 = vmatprep.subr.mxu0 0.0
  %4726 = vmatpush1.xpose.msra.mxu0 0.0
  %4727 = vmatprep.subr.mxu0 0.0
  %4728 = vmatpush1.xpose.msra.mxu0 0.0
  %4729 = vmatprep.subr.mxu0 0.0
  %4730 = vmatpush1.xpose.msra.mxu0 0.0
  %4731 = vmatprep.subr.mxu0 0.0
  %4732 = vmatpush1.xpose.msra.mxu0 0.0
  %4733 = vmatprep.subr.mxu0 0.0
  %4734 = vmatpush1.xpose.msra.mxu0 0.0
  %4735 = vmatprep.subr.mxu0 0.0
  %4736 = vmatpush1.xpose.msra.mxu0 0.0
  %4737 = vmatprep.subr.mxu0 0.0
  %4738 = vmatpush1.xpose.msra.mxu0 0.0
  %4739 = vmatprep.subr.mxu0 0.0
  %4740 = vmatpush1.xpose.msra.mxu0 0.0
  %4741 = vmatprep.subr.mxu0 0.0
  %4742 = vmatpush1.xpose.msra.mxu0 0.0
  %4743 = vmatprep.subr.mxu0 0.0
  %4744 = vmatpush1.xpose.msra.mxu0 0.0
  %4745 = vmatprep.subr.mxu0 0.0
  %4746 = vmatpush1.xpose.msra.mxu0 0.0
  %4747 = vmatprep.subr.mxu0 0.0
  %4748 = vmatpush1.xpose.msra.mxu0 0.0
  %4749 = vmatprep.mubr.f32.mxu0 0.0
  %4750 = vmatmul.mubr.f32.gmra.mrb[0].mxu0 %v3309
  %v4751 = vpop.f32.mrb[0].mxu0
  %v4752 = vadd.f32 0.0, %v4751
  %v4753 = vpop.f32.mrb[0].mxu0
  %4754 = vdwg.mxu0
  %4756 = vset.pattern.permute.xlu0 0
  %4757 = vperm.xlu0 %4756, %v4682
  %v4758 = vpop.permute.xlu0 %4757
  %v4760 = vlaneseq
  %v4761 = vshrl.u32 %v4760, 7
  %v4762 = vsub.s32 0, %v4761
  %v4763 = vrot.slane %v4752, %v4762
  %v4764 = vadd.f32 %v4758, %v4763
  %v4766 = vcombine.high %v2668, %v2668
  %v4768 = vunpack.c.l.s4 1966171168
  %v4769 = vunpack.c.0.s8 %v4768
  %v4770 = vlaneseq
  %v4771 = vshrl.u32 %v4770, 7
  %v4772 = vsub.s32 %v4769, %v4771
  %v4773 = vrot.slane %v2668, %v4772
  %v4775 = vunpack.c.l.s4 1966171168
  %v4776 = vunpack.c.0.s8 %v4775
  %v4777 = vlaneseq
  %v4778 = vshrl.u32 %v4777, 7
  %v4779 = vsub.s32 %v4776, %v4778
  %v4780 = vrot.slane %v4766, %v4779
  %v4781 = vcombine.high %v4773, %v4773
  %v4782 = vcombine.high %v4780, %v4780
  %v4784 = vunpack.c.l.s4 1966171168
  %v4785 = vunpack.c.0.s8 %v4784
  %v4786 = vlaneseq
  %v4787 = vshrl.u32 %v4786, 7
  %v4788 = vsub.s32 %v4785, %v4787
  %v4789 = vrot.slane %v4773, %v4788
  %v4791 = vunpack.c.l.s4 1966171168
  %v4792 = vunpack.c.0.s8 %v4791
  %v4793 = vlaneseq
  %v4794 = vshrl.u32 %v4793, 7
  %v4795 = vsub.s32 %v4792, %v4794
  %v4796 = vrot.slane %v4780, %v4795
  %v4798 = vunpack.c.l.s4 1966171168
  %v4799 = vunpack.c.0.s8 %v4798
  %v4800 = vlaneseq
  %v4801 = vshrl.u32 %v4800, 7
  %v4802 = vsub.s32 %v4799, %v4801
  %v4803 = vrot.slane %v4781, %v4802
  %v4805 = vunpack.c.l.s4 1966171168
  %v4806 = vunpack.c.0.s8 %v4805
  %v4807 = vlaneseq
  %v4808 = vshrl.u32 %v4807, 7
  %v4809 = vsub.s32 %v4806, %v4808
  %v4810 = vrot.slane %v4782, %v4809
  %v4811 = vcombine.high %v4789, %v4789
  %v4812 = vcombine.high %v4796, %v4796
  %v4813 = vcombine.high %v4803, %v4803
  %v4814 = vcombine.high %v4810, %v4810
  %v4815 = vlaneseq
  %v4816 = vshrl.u32 %v4815, 7
  %v4817 = vsub.s32 0, %v4816
  %v4818 = vrot.slane %v4789, %v4817
  %v4819 = vlaneseq
  %v4820 = vshrl.u32 %v4819, 7
  %v4821 = vsub.s32 0, %v4820
  %v4822 = vrot.slane %v4803, %v4821
  %v4823 = vlaneseq
  %v4824 = vshrl.u32 %v4823, 7
  %v4825 = vsub.s32 0, %v4824
  %v4826 = vrot.slane %v4811, %v4825
  %v4827 = vlaneseq
  %v4828 = vshrl.u32 %v4827, 7
  %v4829 = vsub.s32 0, %v4828
  %v4830 = vrot.slane %v4813, %v4829
  %v4831 = vlaneseq
  %v4832 = vshrl.u32 %v4831, 7
  %v4833 = vsub.s32 0, %v4832
  %v4834 = vrot.slane %v4796, %v4833
  %v4835 = vlaneseq
  %v4836 = vshrl.u32 %v4835, 7
  %v4837 = vsub.s32 0, %v4836
  %v4838 = vrot.slane %v4810, %v4837
  %v4839 = vlaneseq
  %v4840 = vshrl.u32 %v4839, 7
  %v4841 = vsub.s32 0, %v4840
  %v4842 = vrot.slane %v4812, %v4841
  %v4843 = vlaneseq
  %v4844 = vshrl.u32 %v4843, 7
  %v4845 = vsub.s32 0, %v4844
  %v4846 = vrot.slane %v4814, %v4845
  %4856 = vrot.lane.b32.xlu0 %v2673, 96
  %v4857 = vpop.permute.xlu0 %4856
  %v4859 = vadd.f32 %v4818, %v4857
  %v4860 = vadd.f32 %v4822, %v4857
  %v4861 = vadd.f32 %v4826, %v4857
  %v4862 = vadd.f32 %v4830, %v4857
  %v4863 = vadd.f32 %v4834, %v4857
  %v4864 = vadd.f32 %v4838, %v4857
  %v4865 = vadd.f32 %v4842, %v4857
  %v4866 = vadd.f32 %v4846, %v4857
  %v4867 = vtanh.pop %v4859
  %v4868 = vtanh.pop %v4860
  %v4869 = vtanh.pop %v4861
  %v4870 = vtanh.pop %v4862
  %v4871 = vtanh.pop %v4863
  %v4872 = vtanh.pop %v4864
  %v4873 = vtanh.pop %v4865
  %v4874 = vtanh.pop %v4866
  %v4875 = vmul.f32 %v4867, %v2797
  %v4876 = vmul.f32 %v4868, %v2797
  %v4877 = vmul.f32 %v4869, %v2797
  %v4878 = vmul.f32 %v4870, %v2797
  %v4879 = vmul.f32 %v4871, %v2797
  %v4880 = vmul.f32 %v4872, %v2797
  %v4881 = vmul.f32 %v4873, %v2797
  %v4882 = vmul.f32 %v4874, %v2797
  %v4883 = vsel %vm181, %v4875, 0.0
  %4884 = vadd.xlane.f32.xlu0 %v4883
  %v4885 = vpop.xlane.xlu0 %4884
  %v4886 = vsel %vm181, %v4876, 0.0
  %4887 = vadd.xlane.f32.xlu0 %v4886
  %v4888 = vpop.xlane.xlu0 %4887
  %v4889 = vsel %vm181, %v4877, 0.0
  %4890 = vadd.xlane.f32.xlu0 %v4889
  %v4891 = vpop.xlane.xlu0 %4890
  %v4892 = vsel %vm181, %v4878, 0.0
  %4893 = vadd.xlane.f32.xlu0 %v4892
  %v4894 = vpop.xlane.xlu0 %4893
  %v4895 = vsel %vm181, %v4879, 0.0
  %4896 = vadd.xlane.f32.xlu0 %v4895
  %v4897 = vpop.xlane.xlu0 %4896
  %v4898 = vsel %vm181, %v4880, 0.0
  %4899 = vadd.xlane.f32.xlu0 %v4898
  %v4900 = vpop.xlane.xlu0 %4899
  %v4901 = vsel %vm181, %v4881, 0.0
  %4902 = vadd.xlane.f32.xlu0 %v4901
  %v4903 = vpop.xlane.xlu0 %4902
  %v4904 = vsel %vm181, %v4882, 0.0
  %4905 = vadd.xlane.f32.xlu0 %v4904
  %v4906 = vpop.xlane.xlu0 %4905
  %v4907 = vadd.f32 %v4885, %v2832
  %v4908 = vadd.f32 %v4888, %v2832
  %v4909 = vadd.f32 %v4891, %v2832
  %v4910 = vadd.f32 %v4894, %v2832
  %v4911 = vadd.f32 %v4897, %v2832
  %v4912 = vadd.f32 %v4900, %v2832
  %v4913 = vadd.f32 %v4903, %v2832
  %v4914 = vadd.f32 %v4906, %v2832
  %v4923 = vlaneseq
  %v4924 = vshrl.u32 %v4923, 7
  %v4925 = vsub.s32 %v2851, %v4924
  %v4926 = vrot.slane %v4907, %v4925
  %v4927 = vlaneseq
  %v4928 = vshrl.u32 %v4927, 7
  %v4929 = vsub.s32 %v2851, %v4928
  %v4930 = vrot.slane %v4908, %v4929
  %v4931 = vlaneseq
  %v4932 = vshrl.u32 %v4931, 7
  %v4933 = vsub.s32 %v2851, %v4932
  %v4934 = vrot.slane %v4909, %v4933
  %v4935 = vlaneseq
  %v4936 = vshrl.u32 %v4935, 7
  %v4937 = vsub.s32 %v2851, %v4936
  %v4938 = vrot.slane %v4910, %v4937
  %v4939 = vlaneseq
  %v4940 = vshrl.u32 %v4939, 7
  %v4941 = vsub.s32 %v2851, %v4940
  %v4942 = vrot.slane %v4911, %v4941
  %v4943 = vlaneseq
  %v4944 = vshrl.u32 %v4943, 7
  %v4945 = vsub.s32 %v2851, %v4944
  %v4946 = vrot.slane %v4912, %v4945
  %v4947 = vlaneseq
  %v4948 = vshrl.u32 %v4947, 7
  %v4949 = vsub.s32 %v2851, %v4948
  %v4950 = vrot.slane %v4913, %v4949
  %v4951 = vlaneseq
  %v4952 = vshrl.u32 %v4951, 7
  %v4953 = vsub.s32 %v2851, %v4952
  %v4954 = vrot.slane %v4914, %v4953
  %v4955 = vsel %vm2884, %v4930, %v4926
  %v4956 = vsel %vm2886, %v4934, %v4955
  %v4957 = vsel %vm2888, %v4938, %v4956
  %v4958 = vsel %vm2890, %v4942, %v4957
  %v4959 = vsel %vm2892, %v4946, %v4958
  %v4960 = vsel %vm2894, %v4950, %v4959
  %v4961 = vsel %vm2896, %v4954, %v4960
  %v4963 = vsel %vm39, %v4961, -inf
  %4964 = vmax.xlane.f32.xlu0 %v4963
  %v4965 = vpop.xlane.xlu0 %4964
  %v4967 = vlaneseq
  %v4968 = vshrl.u32 %v4967, 7
  %v4969 = vsub.s32 0, %v4968
  %v4970 = vrot.slane %v4965, %v4969
  %v4971 = vlaneseq
  %v4972 = vshrl.u32 %v4971, 7
  %v4973 = vsub.s32 1, %v4972
  %v4974 = vrot.slane %v4965, %v4973
  %v4975 = vlaneseq
  %v4976 = vshrl.u32 %v4975, 7
  %v4977 = vsub.s32 2, %v4976
  %v4978 = vrot.slane %v4965, %v4977
  %v4979 = vlaneseq
  %v4980 = vshrl.u32 %v4979, 7
  %v4981 = vsub.s32 3, %v4980
  %v4982 = vrot.slane %v4965, %v4981
  %v4983 = vlaneseq
  %v4984 = vshrl.u32 %v4983, 7
  %v4985 = vsub.s32 4, %v4984
  %v4986 = vrot.slane %v4965, %v4985
  %v4987 = vlaneseq
  %v4988 = vshrl.u32 %v4987, 7
  %v4989 = vsub.s32 5, %v4988
  %v4990 = vrot.slane %v4965, %v4989
  %v4991 = vlaneseq
  %v4992 = vshrl.u32 %v4991, 7
  %v4993 = vsub.s32 6, %v4992
  %v4994 = vrot.slane %v4965, %v4993
  %v4995 = vlaneseq
  %v4996 = vshrl.u32 %v4995, 7
  %v4997 = vsub.s32 7, %v4996
  %v4998 = vrot.slane %v4965, %v4997
  %v5007 = vsub.f32 %v4907, %v4970
  %v5008 = vsub.f32 %v4908, %v4974
  %v5009 = vsub.f32 %v4909, %v4978
  %v5010 = vsub.f32 %v4910, %v4982
  %v5011 = vsub.f32 %v4911, %v4986
  %v5012 = vsub.f32 %v4912, %v4990
  %v5013 = vsub.f32 %v4913, %v4994
  %v5014 = vsub.f32 %v4914, %v4998
  %v5015 = vmul.f32 %v5007, 1.442695
  %v5016 = vpow.pop %v5015
  %v5017 = vmul.f32 %v5008, 1.442695
  %v5018 = vpow.pop %v5017
  %v5019 = vmul.f32 %v5009, 1.442695
  %v5020 = vpow.pop %v5019
  %v5021 = vmul.f32 %v5010, 1.442695
  %v5022 = vpow.pop %v5021
  %v5023 = vmul.f32 %v5011, 1.442695
  %v5024 = vpow.pop %v5023
  %v5025 = vmul.f32 %v5012, 1.442695
  %v5026 = vpow.pop %v5025
  %v5027 = vmul.f32 %v5013, 1.442695
  %v5028 = vpow.pop %v5027
  %v5029 = vmul.f32 %v5014, 1.442695
  %v5030 = vpow.pop %v5029
  %5039 = vset.pattern.permute.xlu0 0
  %5040 = vperm.xlu0 %5039, %v5016
  %v5041 = vpop.permute.xlu0 %5040
  %5042 = vset.pattern.permute.xlu0 0
  %5043 = vperm.xlu0 %5042, %v5018
  %v5044 = vpop.permute.xlu0 %5043
  %5045 = vset.pattern.permute.xlu0 0
  %5046 = vperm.xlu0 %5045, %v5020
  %v5047 = vpop.permute.xlu0 %5046
  %5048 = vset.pattern.permute.xlu0 0
  %5049 = vperm.xlu0 %5048, %v5022
  %v5050 = vpop.permute.xlu0 %5049
  %5051 = vset.pattern.permute.xlu0 0
  %5052 = vperm.xlu0 %5051, %v5024
  %v5053 = vpop.permute.xlu0 %5052
  %5054 = vset.pattern.permute.xlu0 0
  %5055 = vperm.xlu0 %5054, %v5026
  %v5056 = vpop.permute.xlu0 %5055
  %5057 = vset.pattern.permute.xlu0 0
  %5058 = vperm.xlu0 %5057, %v5028
  %v5059 = vpop.permute.xlu0 %5058
  %5060 = vset.pattern.permute.xlu0 0
  %5061 = vperm.xlu0 %5060, %v5030
  %v5062 = vpop.permute.xlu0 %5061
  %v5063 = vlaneseq
  %v5064 = vshrl.u32 %v5063, 7
  %v5065 = vsub.s32 %v2851, %v5064
  %v5066 = vrot.slane %v5041, %v5065
  %v5067 = vlaneseq
  %v5068 = vshrl.u32 %v5067, 7
  %v5069 = vsub.s32 %v2851, %v5068
  %v5070 = vrot.slane %v5044, %v5069
  %v5071 = vlaneseq
  %v5072 = vshrl.u32 %v5071, 7
  %v5073 = vsub.s32 %v2851, %v5072
  %v5074 = vrot.slane %v5047, %v5073
  %v5075 = vlaneseq
  %v5076 = vshrl.u32 %v5075, 7
  %v5077 = vsub.s32 %v2851, %v5076
  %v5078 = vrot.slane %v5050, %v5077
  %v5079 = vlaneseq
  %v5080 = vshrl.u32 %v5079, 7
  %v5081 = vsub.s32 %v2851, %v5080
  %v5082 = vrot.slane %v5053, %v5081
  %v5083 = vlaneseq
  %v5084 = vshrl.u32 %v5083, 7
  %v5085 = vsub.s32 %v2851, %v5084
  %v5086 = vrot.slane %v5056, %v5085
  %v5087 = vlaneseq
  %v5088 = vshrl.u32 %v5087, 7
  %v5089 = vsub.s32 %v2851, %v5088
  %v5090 = vrot.slane %v5059, %v5089
  %v5091 = vlaneseq
  %v5092 = vshrl.u32 %v5091, 7
  %v5093 = vsub.s32 %v2851, %v5092
  %v5094 = vrot.slane %v5062, %v5093
  %v5095 = vsel %vm2884, %v5070, %v5066
  %v5096 = vsel %vm2886, %v5074, %v5095
  %v5097 = vsel %vm2888, %v5078, %v5096
  %v5098 = vsel %vm2890, %v5082, %v5097
  %v5099 = vsel %vm2892, %v5086, %v5098
  %v5100 = vsel %vm2894, %v5090, %v5099
  %v5101 = vsel %vm2896, %v5094, %v5100
  %v5103 = vsel %vm39, %v5101, 0.0
  %5104 = vadd.xlane.f32.xlu0 %v5103
  %v5105 = vpop.xlane.xlu0 %5104
  %v5106 = vrcp.pop %v5105
  %v5108 = vlaneseq
  %v5109 = vshrl.u32 %v5108, 7
  %v5110 = vsub.s32 0, %v5109
  %v5111 = vrot.slane %v5106, %v5110
  %v5112 = vlaneseq
  %v5113 = vshrl.u32 %v5112, 7
  %v5114 = vsub.s32 1, %v5113
  %v5115 = vrot.slane %v5106, %v5114
  %v5116 = vlaneseq
  %v5117 = vshrl.u32 %v5116, 7
  %v5118 = vsub.s32 2, %v5117
  %v5119 = vrot.slane %v5106, %v5118
  %v5120 = vlaneseq
  %v5121 = vshrl.u32 %v5120, 7
  %v5122 = vsub.s32 3, %v5121
  %v5123 = vrot.slane %v5106, %v5122
  %v5124 = vlaneseq
  %v5125 = vshrl.u32 %v5124, 7
  %v5126 = vsub.s32 4, %v5125
  %v5127 = vrot.slane %v5106, %v5126
  %v5128 = vlaneseq
  %v5129 = vshrl.u32 %v5128, 7
  %v5130 = vsub.s32 5, %v5129
  %v5131 = vrot.slane %v5106, %v5130
  %v5132 = vlaneseq
  %v5133 = vshrl.u32 %v5132, 7
  %v5134 = vsub.s32 6, %v5133
  %v5135 = vrot.slane %v5106, %v5134
  %v5136 = vlaneseq
  %v5137 = vshrl.u32 %v5136, 7
  %v5138 = vsub.s32 7, %v5137
  %v5139 = vrot.slane %v5106, %v5138
  %v5148 = vmul.f32 %v5016, %v5111
  %v5149 = vmul.f32 %v5018, %v5115
  %v5150 = vmul.f32 %v5020, %v5119
  %v5151 = vmul.f32 %v5022, %v5123
  %v5152 = vmul.f32 %v5024, %v5127
  %v5153 = vmul.f32 %v5026, %v5131
  %v5154 = vmul.f32 %v5028, %v5135
  %v5155 = vmul.f32 %v5030, %v5139
  %5164 = vset.pattern.permute.xlu0 0
  %5165 = vperm.xlu0 %5164, %v5148
  %v5166 = vpop.permute.xlu0 %5165
  %5167 = vset.pattern.permute.xlu0 0
  %5168 = vperm.xlu0 %5167, %v5149
  %v5169 = vpop.permute.xlu0 %5168
  %5170 = vset.pattern.permute.xlu0 0
  %5171 = vperm.xlu0 %5170, %v5150
  %v5172 = vpop.permute.xlu0 %5171
  %5173 = vset.pattern.permute.xlu0 0
  %5174 = vperm.xlu0 %5173, %v5151
  %v5175 = vpop.permute.xlu0 %5174
  %5176 = vset.pattern.permute.xlu0 0
  %5177 = vperm.xlu0 %5176, %v5152
  %v5178 = vpop.permute.xlu0 %5177
  %5179 = vset.pattern.permute.xlu0 0
  %5180 = vperm.xlu0 %5179, %v5153
  %v5181 = vpop.permute.xlu0 %5180
  %5182 = vset.pattern.permute.xlu0 0
  %5183 = vperm.xlu0 %5182, %v5154
  %v5184 = vpop.permute.xlu0 %5183
  %5185 = vset.pattern.permute.xlu0 0
  %5186 = vperm.xlu0 %5185, %v5155
  %v5187 = vpop.permute.xlu0 %5186
  %v5188 = vlaneseq
  %v5189 = vshrl.u32 %v5188, 7
  %v5190 = vsub.s32 %v2851, %v5189
  %v5191 = vrot.slane %v5166, %v5190
  %v5192 = vlaneseq
  %v5193 = vshrl.u32 %v5192, 7
  %v5194 = vsub.s32 %v2851, %v5193
  %v5195 = vrot.slane %v5169, %v5194
  %v5196 = vlaneseq
  %v5197 = vshrl.u32 %v5196, 7
  %v5198 = vsub.s32 %v2851, %v5197
  %v5199 = vrot.slane %v5172, %v5198
  %v5200 = vlaneseq
  %v5201 = vshrl.u32 %v5200, 7
  %v5202 = vsub.s32 %v2851, %v5201
  %v5203 = vrot.slane %v5175, %v5202
  %v5204 = vlaneseq
  %v5205 = vshrl.u32 %v5204, 7
  %v5206 = vsub.s32 %v2851, %v5205
  %v5207 = vrot.slane %v5178, %v5206
  %v5208 = vlaneseq
  %v5209 = vshrl.u32 %v5208, 7
  %v5210 = vsub.s32 %v2851, %v5209
  %v5211 = vrot.slane %v5181, %v5210
  %v5212 = vlaneseq
  %v5213 = vshrl.u32 %v5212, 7
  %v5214 = vsub.s32 %v2851, %v5213
  %v5215 = vrot.slane %v5184, %v5214
  %v5216 = vlaneseq
  %v5217 = vshrl.u32 %v5216, 7
  %v5218 = vsub.s32 %v2851, %v5217
  %v5219 = vrot.slane %v5187, %v5218
  %v5220 = vsel %vm2884, %v5195, %v5191
  %v5221 = vsel %vm2886, %v5199, %v5220
  %v5222 = vsel %vm2888, %v5203, %v5221
  %v5223 = vsel %vm2890, %v5207, %v5222
  %v5224 = vsel %vm2892, %v5211, %v5223
  %v5225 = vsel %vm2894, %v5215, %v5224
  %v5226 = vsel %vm2896, %v5219, %v5225
  %v5227 = vsel %vm39, %v5226, 0
  %5229 = vmatprep.subr.mxu0 0.0
  %5230 = vmatpush1.msra.mxu0 %v2537
  %5231 = vmatprep.subr.mxu0 0.0
  %5232 = vmatpush1.msra.mxu0 0.0
  %5233 = vmatprep.subr.mxu0 0.0
  %5234 = vmatpush1.msra.mxu0 0.0
  %5235 = vmatprep.subr.mxu0 0.0
  %5236 = vmatpush1.msra.mxu0 0.0
  %5237 = vmatprep.subr.mxu0 0.0
  %5238 = vmatpush1.msra.mxu0 0.0
  %5239 = vmatprep.subr.mxu0 0.0
  %5240 = vmatpush1.msra.mxu0 0.0
  %5241 = vmatprep.subr.mxu0 0.0
  %5242 = vmatpush1.msra.mxu0 0.0
  %5243 = vmatprep.subr.mxu0 0.0
  %5244 = vmatpush1.msra.mxu0 0.0
  %5245 = vmatprep.subr.mxu0 0.0
  %5246 = vmatpush1.msra.mxu0 0.0
  %5247 = vmatprep.subr.mxu0 0.0
  %5248 = vmatpush1.msra.mxu0 0.0
  %5249 = vmatprep.subr.mxu0 0.0
  %5250 = vmatpush1.msra.mxu0 0.0
  %5251 = vmatprep.subr.mxu0 0.0
  %5252 = vmatpush1.msra.mxu0 0.0
  %5253 = vmatprep.subr.mxu0 0.0
  %5254 = vmatpush1.msra.mxu0 0.0
  %5255 = vmatprep.subr.mxu0 0.0
  %5256 = vmatpush1.msra.mxu0 0.0
  %5257 = vmatprep.subr.mxu0 0.0
  %5258 = vmatpush1.msra.mxu0 0.0
  %5259 = vmatprep.subr.mxu0 0.0
  %5260 = vmatpush1.msra.mxu0 0.0
  %5261 = vmatprep.subr.mxu0 0.0
  %5262 = vmatpush1.msra.mxu0 0.0
  %5263 = vmatprep.subr.mxu0 0.0
  %5264 = vmatpush1.msra.mxu0 0.0
  %5265 = vmatprep.subr.mxu0 0.0
  %5266 = vmatpush1.msra.mxu0 0.0
  %5267 = vmatprep.subr.mxu0 0.0
  %5268 = vmatpush1.msra.mxu0 0.0
  %5269 = vmatprep.subr.mxu0 0.0
  %5270 = vmatpush1.msra.mxu0 0.0
  %5271 = vmatprep.subr.mxu0 0.0
  %5272 = vmatpush1.msra.mxu0 0.0
  %5273 = vmatprep.subr.mxu0 0.0
  %5274 = vmatpush1.msra.mxu0 0.0
  %5275 = vmatprep.subr.mxu0 0.0
  %5276 = vmatpush1.msra.mxu0 0.0
  %5277 = vmatprep.subr.mxu0 0.0
  %5278 = vmatpush1.msra.mxu0 0.0
  %5279 = vmatprep.subr.mxu0 0.0
  %5280 = vmatpush1.msra.mxu0 0.0
  %5281 = vmatprep.subr.mxu0 0.0
  %5282 = vmatpush1.msra.mxu0 0.0
  %5283 = vmatprep.subr.mxu0 0.0
  %5284 = vmatpush1.msra.mxu0 0.0
  %5285 = vmatprep.subr.mxu0 0.0
  %5286 = vmatpush1.msra.mxu0 0.0
  %5287 = vmatprep.subr.mxu0 0.0
  %5288 = vmatpush1.msra.mxu0 0.0
  %5289 = vmatprep.subr.mxu0 0.0
  %5290 = vmatpush1.msra.mxu0 0.0
  %5291 = vmatprep.subr.mxu0 0.0
  %5292 = vmatpush1.msra.mxu0 0.0
  %5293 = vmatprep.mubr.f32.mxu0 0.0
  %5294 = vmatmul.mubr.f32.gmra.mrb[0].mxu0 %v5227
  %v5295 = vpop.f32.mrb[0].mxu0
  %v5296 = vadd.f32 0.0, %v5295
  %v5297 = vpop.f32.mrb[0].mxu0
  %5298 = vdwg.mxu0
  %v5300 = vsel %vm181, %v5296, 0
  %5302 = vmatprep.subr.mxu0 0.0
  %5303 = vmatpush1.msra.mxu0 %v2678
  %5304 = vmatprep.subr.mxu0 0.0
  %5305 = vmatpush1.msra.mxu0 %v2679
  %5306 = vmatprep.subr.mxu0 0.0
  %5307 = vmatpush1.msra.mxu0 %v2680
  %5308 = vmatprep.subr.mxu0 0.0
  %5309 = vmatpush1.msra.mxu0 %v2681
  %5310 = vmatprep.subr.mxu0 0.0
  %5311 = vmatpush1.msra.mxu0 0.0
  %5312 = vmatprep.subr.mxu0 0.0
  %5313 = vmatpush1.msra.mxu0 0.0
  %5314 = vmatprep.subr.mxu0 0.0
  %5315 = vmatpush1.msra.mxu0 0.0
  %5316 = vmatprep.subr.mxu0 0.0
  %5317 = vmatpush1.msra.mxu0 0.0
  %5318 = vmatprep.subr.mxu0 0.0
  %5319 = vmatpush1.msra.mxu0 0.0
  %5320 = vmatprep.subr.mxu0 0.0
  %5321 = vmatpush1.msra.mxu0 0.0
  %5322 = vmatprep.subr.mxu0 0.0
  %5323 = vmatpush1.msra.mxu0 0.0
  %5324 = vmatprep.subr.mxu0 0.0
  %5325 = vmatpush1.msra.mxu0 0.0
  %5326 = vmatprep.subr.mxu0 0.0
  %5327 = vmatpush1.msra.mxu0 0.0
  %5328 = vmatprep.subr.mxu0 0.0
  %5329 = vmatpush1.msra.mxu0 0.0
  %5330 = vmatprep.subr.mxu0 0.0
  %5331 = vmatpush1.msra.mxu0 0.0
  %5332 = vmatprep.subr.mxu0 0.0
  %5333 = vmatpush1.msra.mxu0 0.0
  %5334 = vmatprep.subr.mxu0 0.0
  %5335 = vmatpush1.msra.mxu0 0.0
  %5336 = vmatprep.subr.mxu0 0.0
  %5337 = vmatpush1.msra.mxu0 0.0
  %5338 = vmatprep.subr.mxu0 0.0
  %5339 = vmatpush1.msra.mxu0 0.0
  %5340 = vmatprep.subr.mxu0 0.0
  %5341 = vmatpush1.msra.mxu0 0.0
  %5342 = vmatprep.subr.mxu0 0.0
  %5343 = vmatpush1.msra.mxu0 0.0
  %5344 = vmatprep.subr.mxu0 0.0
  %5345 = vmatpush1.msra.mxu0 0.0
  %5346 = vmatprep.subr.mxu0 0.0
  %5347 = vmatpush1.msra.mxu0 0.0
  %5348 = vmatprep.subr.mxu0 0.0
  %5349 = vmatpush1.msra.mxu0 0.0
  %5350 = vmatprep.subr.mxu0 0.0
  %5351 = vmatpush1.msra.mxu0 0.0
  %5352 = vmatprep.subr.mxu0 0.0
  %5353 = vmatpush1.msra.mxu0 0.0
  %5354 = vmatprep.subr.mxu0 0.0
  %5355 = vmatpush1.msra.mxu0 0.0
  %5356 = vmatprep.subr.mxu0 0.0
  %5357 = vmatpush1.msra.mxu0 0.0
  %5358 = vmatprep.subr.mxu0 0.0
  %5359 = vmatpush1.msra.mxu0 0.0
  %5360 = vmatprep.subr.mxu0 0.0
  %5361 = vmatpush1.msra.mxu0 0.0
  %5362 = vmatprep.subr.mxu0 0.0
  %5363 = vmatpush1.msra.mxu0 0.0
  %5364 = vmatprep.subr.mxu0 0.0
  %5365 = vmatpush1.msra.mxu0 0.0
  %5366 = vmatprep.mubr.f32.mxu0 0.0
  %5367 = vmatmul.mubr.f32.gmra.mrb[0].mxu0 %v5300
  %v5368 = vpop.f32.mrb[0].mxu0
  %v5369 = vadd.f32 0.0, %v5368
  %v5370 = vpop.f32.mrb[0].mxu0
  %5371 = vdwg.mxu0
  %5372 = vmatprep.subr.mxu0 0.0
  %5373 = vmatpush1.xpose.msra.mxu0 %v2569
  %5374 = vmatprep.subr.mxu0 0.0
  %5375 = vmatpush1.xpose.msra.mxu0 0.0
  %5376 = vmatprep.subr.mxu0 0.0
  %5377 = vmatpush1.xpose.msra.mxu0 0.0
  %5378 = vmatprep.subr.mxu0 0.0
  %5379 = vmatpush1.xpose.msra.mxu0 0.0
  %5380 = vmatprep.subr.mxu0 0.0
  %5381 = vmatpush1.xpose.msra.mxu0 0.0
  %5382 = vmatprep.subr.mxu0 0.0
  %5383 = vmatpush1.xpose.msra.mxu0 0.0
  %5384 = vmatprep.subr.mxu0 0.0
  %5385 = vmatpush1.xpose.msra.mxu0 0.0
  %5386 = vmatprep.subr.mxu0 0.0
  %5387 = vmatpush1.xpose.msra.mxu0 0.0
  %5388 = vmatprep.subr.mxu0 0.0
  %5389 = vmatpush1.xpose.msra.mxu0 0.0
  %5390 = vmatprep.subr.mxu0 0.0
  %5391 = vmatpush1.xpose.msra.mxu0 0.0
  %5392 = vmatprep.subr.mxu0 0.0
  %5393 = vmatpush1.xpose.msra.mxu0 0.0
  %5394 = vmatprep.subr.mxu0 0.0
  %5395 = vmatpush1.xpose.msra.mxu0 0.0
  %5396 = vmatprep.subr.mxu0 0.0
  %5397 = vmatpush1.xpose.msra.mxu0 0.0
  %5398 = vmatprep.subr.mxu0 0.0
  %5399 = vmatpush1.xpose.msra.mxu0 0.0
  %5400 = vmatprep.subr.mxu0 0.0
  %5401 = vmatpush1.xpose.msra.mxu0 0.0
  %5402 = vmatprep.subr.mxu0 0.0
  %5403 = vmatpush1.xpose.msra.mxu0 0.0
  %5404 = vmatprep.subr.mxu0 0.0
  %5405 = vmatpush1.xpose.msra.mxu0 0.0
  %5406 = vmatprep.subr.mxu0 0.0
  %5407 = vmatpush1.xpose.msra.mxu0 0.0
  %5408 = vmatprep.subr.mxu0 0.0
  %5409 = vmatpush1.xpose.msra.mxu0 0.0
  %5410 = vmatprep.subr.mxu0 0.0
  %5411 = vmatpush1.xpose.msra.mxu0 0.0
  %5412 = vmatprep.subr.mxu0 0.0
  %5413 = vmatpush1.xpose.msra.mxu0 0.0
  %5414 = vmatprep.subr.mxu0 0.0
  %5415 = vmatpush1.xpose.msra.mxu0 0.0
  %5416 = vmatprep.subr.mxu0 0.0
  %5417 = vmatpush1.xpose.msra.mxu0 0.0
  %5418 = vmatprep.subr.mxu0 0.0
  %5419 = vmatpush1.xpose.msra.mxu0 0.0
  %5420 = vmatprep.subr.mxu0 0.0
  %5421 = vmatpush1.xpose.msra.mxu0 0.0
  %5422 = vmatprep.subr.mxu0 0.0
  %5423 = vmatpush1.xpose.msra.mxu0 0.0
  %5424 = vmatprep.subr.mxu0 0.0
  %5425 = vmatpush1.xpose.msra.mxu0 0.0
  %5426 = vmatprep.subr.mxu0 0.0
  %5427 = vmatpush1.xpose.msra.mxu0 0.0
  %5428 = vmatprep.subr.mxu0 0.0
  %5429 = vmatpush1.xpose.msra.mxu0 0.0
  %5430 = vmatprep.subr.mxu0 0.0
  %5431 = vmatpush1.xpose.msra.mxu0 0.0
  %5432 = vmatprep.subr.mxu0 0.0
  %5433 = vmatpush1.xpose.msra.mxu0 0.0
  %5434 = vmatprep.subr.mxu0 0.0
  %5435 = vmatpush1.xpose.msra.mxu0 0.0
  %5436 = vmatprep.mubr.f32.mxu0 0.0
  %5437 = vmatmul.mubr.f32.gmra.mrb[0].mxu0 %v3309
  %v5438 = vpop.f32.mrb[0].mxu0
  %v5439 = vadd.f32 0.0, %v5438
  %v5440 = vpop.f32.mrb[0].mxu0
  %5441 = vdwg.mxu0
  %5443 = vset.pattern.permute.xlu0 0
  %5444 = vperm.xlu0 %5443, %v5369
  %v5445 = vpop.permute.xlu0 %5444
  %v5447 = vlaneseq
  %v5448 = vshrl.u32 %v5447, 7
  %v5449 = vsub.s32 0, %v5448
  %v5450 = vrot.slane %v5439, %v5449
  %v5451 = vadd.f32 %v5445, %v5450
  %v5452 = vld [vmem:[%s3 + $0xe8] sm:$0xff]
  %v5453 = vld [vmem:[%s3 + $0xf0] sm:$0xff]
  %v5454 = vld [vmem:[%s3 + $0xf8] sm:$0xff]
  %v5455 = vld [vmem:[%s3 + $0x100] sm:$0xff]
  %v5456 = vld [vmem:[%s2] sm:$0xff]
  %v5457 = vld [vmem:[%s2 + $0x8] sm:$0xff]
  %v5458 = vld [vmem:[%s2 + $0x10] sm:$0xff]
  %v5459 = vld [vmem:[%s2 + $0x18] sm:$0xff]
  %v5461 = vsel %vm181, %v5456, 0
  %v5464 = vsel %vm181, %v5457, 0
  %v5467 = vsel %vm181, %v5458, 0
  %v5470 = vsel %vm181, %v5459, 0
  %5472 = vmatprep.subr.mxu0 0.0
  %5473 = vmatpush1.msra.mxu0 %v5452
  %5474 = vmatprep.subr.mxu0 0.0
  %5475 = vmatpush1.msra.mxu0 %v5453
  %5476 = vmatprep.subr.mxu0 0.0
  %5477 = vmatpush1.msra.mxu0 %v5454
  %5478 = vmatprep.subr.mxu0 0.0
  %5479 = vmatpush1.msra.mxu0 %v5455
  %5480 = vmatprep.subr.mxu0 0.0
  %5481 = vmatpush1.msra.mxu0 0.0
  %5482 = vmatprep.subr.mxu0 0.0
  %5483 = vmatpush1.msra.mxu0 0.0
  %5484 = vmatprep.subr.mxu0 0.0
  %5485 = vmatpush1.msra.mxu0 0.0
  %5486 = vmatprep.subr.mxu0 0.0
  %5487 = vmatpush1.msra.mxu0 0.0
  %5488 = vmatprep.subr.mxu0 0.0
  %5489 = vmatpush1.msra.mxu0 0.0
  %5490 = vmatprep.subr.mxu0 0.0
  %5491 = vmatpush1.msra.mxu0 0.0
  %5492 = vmatprep.subr.mxu0 0.0
  %5493 = vmatpush1.msra.mxu0 0.0
  %5494 = vmatprep.subr.mxu0 0.0
  %5495 = vmatpush1.msra.mxu0 0.0
  %5496 = vmatprep.subr.mxu0 0.0
  %5497 = vmatpush1.msra.mxu0 0.0
  %5498 = vmatprep.subr.mxu0 0.0
  %5499 = vmatpush1.msra.mxu0 0.0
  %5500 = vmatprep.subr.mxu0 0.0
  %5501 = vmatpush1.msra.mxu0 0.0
  %5502 = vmatprep.subr.mxu0 0.0
  %5503 = vmatpush1.msra.mxu0 0.0
  %5504 = vmatprep.subr.mxu0 0.0
  %5505 = vmatpush1.msra.mxu0 0.0
  %5506 = vmatprep.subr.mxu0 0.0
  %5507 = vmatpush1.msra.mxu0 0.0
  %5508 = vmatprep.subr.mxu0 0.0
  %5509 = vmatpush1.msra.mxu0 0.0
  %5510 = vmatprep.subr.mxu0 0.0
  %5511 = vmatpush1.msra.mxu0 0.0
  %5512 = vmatprep.subr.mxu0 0.0
  %5513 = vmatpush1.msra.mxu0 0.0
  %5514 = vmatprep.subr.mxu0 0.0
  %5515 = vmatpush1.msra.mxu0 0.0
  %5516 = vmatprep.subr.mxu0 0.0
  %5517 = vmatpush1.msra.mxu0 0.0
  %5518 = vmatprep.subr.mxu0 0.0
  %5519 = vmatpush1.msra.mxu0 0.0
  %5520 = vmatprep.subr.mxu0 0.0
  %5521 = vmatpush1.msra.mxu0 0.0
  %5522 = vmatprep.subr.mxu0 0.0
  %5523 = vmatpush1.msra.mxu0 0.0
  %5524 = vmatprep.subr.mxu0 0.0
  %5525 = vmatpush1.msra.mxu0 0.0
  %5526 = vmatprep.subr.mxu0 0.0
  %5527 = vmatpush1.msra.mxu0 0.0
  %5528 = vmatprep.subr.mxu0 0.0
  %5529 = vmatpush1.msra.mxu0 0.0
  %5530 = vmatprep.subr.mxu0 0.0
  %5531 = vmatpush1.msra.mxu0 0.0
  %5532 = vmatprep.subr.mxu0 0.0
  %5533 = vmatpush1.msra.mxu0 0.0
  %5534 = vmatprep.subr.mxu0 0.0
  %5535 = vmatpush1.msra.mxu0 0.0
  %5536 = vmatprep.mubr.f32.mxu0 0.0
  %5537 = vmatmul.mubr.f32.gmra.mrb[0].mxu0 %v5461
  %v5538 = vpop.f32.mrb[0].mxu0
  %v5539 = vadd.f32 0.0, %v5538
  %v5540 = vpop.f32.mrb[0].mxu0
  %5541 = vmatprep.mubr.f32.mxu0 0.0
  %5542 = vmatmul.mubr.f32.gmra.mrb[0].mxu0 %v5464
  %v5543 = vpop.f32.mrb[0].mxu0
  %v5544 = vadd.f32 0.0, %v5543
  %v5545 = vpop.f32.mrb[0].mxu0
  %5546 = vmatprep.mubr.f32.mxu0 0.0
  %5547 = vmatmul.mubr.f32.gmra.mrb[0].mxu0 %v5467
  %v5548 = vpop.f32.mrb[0].mxu0
  %v5549 = vadd.f32 0.0, %v5548
  %v5550 = vpop.f32.mrb[0].mxu0
  %5551 = vmatprep.mubr.f32.mxu0 0.0
  %5552 = vmatmul.mubr.f32.gmra.mrb[0].mxu0 %v5470
  %v5553 = vpop.f32.mrb[0].mxu0
  %v5554 = vadd.f32 0.0, %v5553
  %v5555 = vpop.f32.mrb[0].mxu0
  %5556 = vdwg.mxu0
  %v5557 = vadd.f32 %v3390, %v5539
  %v5558 = vadd.f32 %v4077, %v5544
  %v5559 = vadd.f32 %v4764, %v5549
  %v5560 = vadd.f32 %v5451, %v5554
  %s5562 = vtos %v2683
  %v5563 = vstv %s5562
  %v5565 = vadd.f32 %v5557, %v5563
  %v5566 = vadd.f32 %v5558, %v5563
  %v5567 = vadd.f32 %v5559, %v5563
  %v5568 = vadd.f32 %v5560, %v5563
  %v5569 = vsel %vm39, %v5565, -inf
  %5570 = vmax.xlane.f32.xlu0 %v5569
  %v5571 = vpop.xlane.xlu0 %5570
  %v5572 = vsel %vm39, %v5566, -inf
  %5573 = vmax.xlane.f32.xlu0 %v5572
  %v5574 = vpop.xlane.xlu0 %5573
  %v5575 = vsel %vm39, %v5567, -inf
  %5576 = vmax.xlane.f32.xlu0 %v5575
  %v5577 = vpop.xlane.xlu0 %5576
  %v5578 = vsel %vm39, %v5568, -inf
  %5579 = vmax.xlane.f32.xlu0 %v5578
  %v5580 = vpop.xlane.xlu0 %5579
  %v5581 = vsub.f32 %v5565, %v5571
  %v5582 = vsub.f32 %v5566, %v5574
  %v5583 = vsub.f32 %v5567, %v5577
  %v5584 = vsub.f32 %v5568, %v5580
  %v5585 = vmul.f32 %v5581, 1.442695
  %v5586 = vpow.pop %v5585
  %v5587 = vmul.f32 %v5582, 1.442695
  %v5588 = vpow.pop %v5587
  %v5589 = vmul.f32 %v5583, 1.442695
  %v5590 = vpow.pop %v5589
  %v5591 = vmul.f32 %v5584, 1.442695
  %v5592 = vpow.pop %v5591
  %v5593 = vsel %vm39, %v5586, 0.0
  %5594 = vadd.xlane.f32.xlu0 %v5593
  %v5595 = vpop.xlane.xlu0 %5594
  %v5596 = vsel %vm39, %v5588, 0.0
  %5597 = vadd.xlane.f32.xlu0 %v5596
  %v5598 = vpop.xlane.xlu0 %5597
  %v5599 = vsel %vm39, %v5590, 0.0
  %5600 = vadd.xlane.f32.xlu0 %v5599
  %v5601 = vpop.xlane.xlu0 %5600
  %v5602 = vsel %vm39, %v5592, 0.0
  %5603 = vadd.xlane.f32.xlu0 %v5602
  %v5604 = vpop.xlane.xlu0 %5603
  %v5605 = vlog2.pop %v5595
  %v5606 = vmul.f32 %v5605, 0.6931472
  %v5607 = vlog2.pop %v5598
  %v5608 = vmul.f32 %v5607, 0.6931472
  %v5609 = vlog2.pop %v5601
  %v5610 = vmul.f32 %v5609, 0.6931472
  %v5611 = vlog2.pop %v5604
  %v5612 = vmul.f32 %v5611, 0.6931472
  %v5613 = vadd.f32 %v5571, %v5606
  %v5614 = vadd.f32 %v5574, %v5608
  %v5615 = vadd.f32 %v5577, %v5610
  %v5616 = vadd.f32 %v5580, %v5612
  %v5617 = vsub.f32 %v5565, %v5613
  %v5618 = vsub.f32 %v5566, %v5614
  %v5619 = vsub.f32 %v5567, %v5615
  %v5620 = vsub.f32 %v5568, %v5616
  %v5621 = vsel %vm39, %v5617, -inf
  %v5622 = vrot.slane %v5621, 4
  %v5623 = vmax.f32 %v5621, %v5622
  %v5624 = vrot.slane %v5623, 2
  %v5625 = vmax.f32 %v5623, %v5624
  %v5626 = vrot.slane %v5625, 1
  %v5627 = vmax.f32 %v5625, %v5626
  %v5628 = vsel %vm39, %v5618, -inf
  %v5629 = vrot.slane %v5628, 4
  %v5630 = vmax.f32 %v5628, %v5629
  %v5631 = vrot.slane %v5630, 2
  %v5632 = vmax.f32 %v5630, %v5631
  %v5633 = vrot.slane %v5632, 1
  %v5634 = vmax.f32 %v5632, %v5633
  %v5635 = vsel %vm39, %v5619, -inf
  %v5636 = vrot.slane %v5635, 4
  %v5637 = vmax.f32 %v5635, %v5636
  %v5638 = vrot.slane %v5637, 2
  %v5639 = vmax.f32 %v5637, %v5638
  %v5640 = vrot.slane %v5639, 1
  %v5641 = vmax.f32 %v5639, %v5640
  %v5642 = vsel %vm39, %v5620, -inf
  %v5643 = vrot.slane %v5642, 4
  %v5644 = vmax.f32 %v5642, %v5643
  %v5645 = vrot.slane %v5644, 2
  %v5646 = vmax.f32 %v5644, %v5645
  %v5647 = vrot.slane %v5646, 1
  %v5648 = vmax.f32 %v5646, %v5647
  %v5649 = vsub.f32 %v5617, %v5627
  %v5650 = vsub.f32 %v5618, %v5634
  %v5651 = vsub.f32 %v5619, %v5641
  %v5652 = vsub.f32 %v5620, %v5648
  %v5653 = vmul.f32 %v5649, 1.442695
  %v5654 = vpow.pop %v5653
  %v5655 = vmul.f32 %v5650, 1.442695
  %v5656 = vpow.pop %v5655
  %v5657 = vmul.f32 %v5651, 1.442695
  %v5658 = vpow.pop %v5657
  %v5659 = vmul.f32 %v5652, 1.442695
  %v5660 = vpow.pop %v5659
  %v5661 = vsel %vm39, %v5654, 0.0
  %v5662 = vrot.slane %v5661, 4
  %v5663 = vadd.f32 %v5661, %v5662
  %v5664 = vrot.slane %v5663, 2
  %v5665 = vadd.f32 %v5663, %v5664
  %v5666 = vrot.slane %v5665, 1
  %v5667 = vadd.f32 %v5665, %v5666
  %v5668 = vsel %vm39, %v5656, 0.0
  %v5669 = vrot.slane %v5668, 4
  %v5670 = vadd.f32 %v5668, %v5669
  %v5671 = vrot.slane %v5670, 2
  %v5672 = vadd.f32 %v5670, %v5671
  %v5673 = vrot.slane %v5672, 1
  %v5674 = vadd.f32 %v5672, %v5673
  %v5675 = vsel %vm39, %v5658, 0.0
  %v5676 = vrot.slane %v5675, 4
  %v5677 = vadd.f32 %v5675, %v5676
  %v5678 = vrot.slane %v5677, 2
  %v5679 = vadd.f32 %v5677, %v5678
  %v5680 = vrot.slane %v5679, 1
  %v5681 = vadd.f32 %v5679, %v5680
  %v5682 = vsel %vm39, %v5660, 0.0
  %v5683 = vrot.slane %v5682, 4
  %v5684 = vadd.f32 %v5682, %v5683
  %v5685 = vrot.slane %v5684, 2
  %v5686 = vadd.f32 %v5684, %v5685
  %v5687 = vrot.slane %v5686, 1
  %v5688 = vadd.f32 %v5686, %v5687
  %v5689 = vlog2.pop %v5667
  %v5690 = vmul.f32 %v5689, 0.6931472
  %v5691 = vlog2.pop %v5674
  %v5692 = vmul.f32 %v5691, 0.6931472
  %v5693 = vlog2.pop %v5681
  %v5694 = vmul.f32 %v5693, 0.6931472
  %v5695 = vlog2.pop %v5688
  %v5696 = vmul.f32 %v5695, 0.6931472
  %v5697 = vadd.f32 %v5627, %v5690
  %v5698 = vadd.f32 %v5634, %v5692
  %v5699 = vadd.f32 %v5641, %v5694
  %v5700 = vadd.f32 %v5648, %v5696
  %v5701 = vsub.f32 %v5617, %v5697
  %v5702 = vsub.f32 %v5618, %v5698
  %v5703 = vsub.f32 %v5619, %v5699
  %v5704 = vsub.f32 %v5620, %v5700
  %v5705 = vsel %vm39, %v5701, -inf
  %5706 = vmax.xlane.f32.xlu0 %v5705
  %v5707 = vpop.xlane.xlu0 %5706
  %v5708 = vsel %vm39, %v5702, -inf
  %5709 = vmax.xlane.f32.xlu0 %v5708
  %v5710 = vpop.xlane.xlu0 %5709
  %v5711 = vsel %vm39, %v5703, -inf
  %5712 = vmax.xlane.f32.xlu0 %v5711
  %v5713 = vpop.xlane.xlu0 %5712
  %v5714 = vsel %vm39, %v5704, -inf
  %5715 = vmax.xlane.f32.xlu0 %v5714
  %v5716 = vpop.xlane.xlu0 %5715
  %v5717 = vsub.f32 %v5701, %v5707
  %v5718 = vsub.f32 %v5702, %v5710
  %v5719 = vsub.f32 %v5703, %v5713
  %v5720 = vsub.f32 %v5704, %v5716
  %v5721 = vmul.f32 %v5717, 1.442695
  %v5722 = vpow.pop %v5721
  %v5723 = vmul.f32 %v5718, 1.442695
  %v5724 = vpow.pop %v5723
  %v5725 = vmul.f32 %v5719, 1.442695
  %v5726 = vpow.pop %v5725
  %v5727 = vmul.f32 %v5720, 1.442695
  %v5728 = vpow.pop %v5727
  %v5729 = vsel %vm39, %v5722, 0.0
  %5730 = vadd.xlane.f32.xlu0 %v5729
  %v5731 = vpop.xlane.xlu0 %5730
  %v5732 = vsel %vm39, %v5724, 0.0
  %5733 = vadd.xlane.f32.xlu0 %v5732
  %v5734 = vpop.xlane.xlu0 %5733
  %v5735 = vsel %vm39, %v5726, 0.0
  %5736 = vadd.xlane.f32.xlu0 %v5735
  %v5737 = vpop.xlane.xlu0 %5736
  %v5738 = vsel %vm39, %v5728, 0.0
  %5739 = vadd.xlane.f32.xlu0 %v5738
  %v5740 = vpop.xlane.xlu0 %5739
  %v5741 = vlog2.pop %v5731
  %v5742 = vmul.f32 %v5741, 0.6931472
  %v5743 = vlog2.pop %v5734
  %v5744 = vmul.f32 %v5743, 0.6931472
  %v5745 = vlog2.pop %v5737
  %v5746 = vmul.f32 %v5745, 0.6931472
  %v5747 = vlog2.pop %v5740
  %v5748 = vmul.f32 %v5747, 0.6931472
  %v5749 = vadd.f32 %v5707, %v5742
  %v5750 = vadd.f32 %v5710, %v5744
  %v5751 = vadd.f32 %v5713, %v5746
  %v5752 = vadd.f32 %v5716, %v5748
  %v5753 = vsub.f32 %v5701, %v5749
  %v5754 = vsub.f32 %v5702, %v5750
  %v5755 = vsub.f32 %v5703, %v5751
  %v5756 = vsub.f32 %v5704, %v5752
  %v5757 = vsel %vm39, %v5753, -inf
  %v5758 = vrot.slane %v5757, 4
  %v5759 = vmax.f32 %v5757, %v5758
  %v5760 = vrot.slane %v5759, 2
  %v5761 = vmax.f32 %v5759, %v5760
  %v5762 = vrot.slane %v5761, 1
  %v5763 = vmax.f32 %v5761, %v5762
  %v5764 = vsel %vm39, %v5754, -inf
  %v5765 = vrot.slane %v5764, 4
  %v5766 = vmax.f32 %v5764, %v5765
  %v5767 = vrot.slane %v5766, 2
  %v5768 = vmax.f32 %v5766, %v5767
  %v5769 = vrot.slane %v5768, 1
  %v5770 = vmax.f32 %v5768, %v5769
  %v5771 = vsel %vm39, %v5755, -inf
  %v5772 = vrot.slane %v5771, 4
  %v5773 = vmax.f32 %v5771, %v5772
  %v5774 = vrot.slane %v5773, 2
  %v5775 = vmax.f32 %v5773, %v5774
  %v5776 = vrot.slane %v5775, 1
  %v5777 = vmax.f32 %v5775, %v5776
  %v5778 = vsel %vm39, %v5756, -inf
  %v5779 = vrot.slane %v5778, 4
  %v5780 = vmax.f32 %v5778, %v5779
  %v5781 = vrot.slane %v5780, 2
  %v5782 = vmax.f32 %v5780, %v5781
  %v5783 = vrot.slane %v5782, 1
  %v5784 = vmax.f32 %v5782, %v5783
  %v5785 = vsub.f32 %v5753, %v5763
  %v5786 = vsub.f32 %v5754, %v5770
  %v5787 = vsub.f32 %v5755, %v5777
  %v5788 = vsub.f32 %v5756, %v5784
  %v5789 = vmul.f32 %v5785, 1.442695
  %v5790 = vpow.pop %v5789
  %v5791 = vmul.f32 %v5786, 1.442695
  %v5792 = vpow.pop %v5791
  %v5793 = vmul.f32 %v5787, 1.442695
  %v5794 = vpow.pop %v5793
  %v5795 = vmul.f32 %v5788, 1.442695
  %v5796 = vpow.pop %v5795
  %v5797 = vsel %vm39, %v5790, 0.0
  %v5798 = vrot.slane %v5797, 4
  %v5799 = vadd.f32 %v5797, %v5798
  %v5800 = vrot.slane %v5799, 2
  %v5801 = vadd.f32 %v5799, %v5800
  %v5802 = vrot.slane %v5801, 1
  %v5803 = vadd.f32 %v5801, %v5802
  %v5804 = vsel %vm39, %v5792, 0.0
  %v5805 = vrot.slane %v5804, 4
  %v5806 = vadd.f32 %v5804, %v5805
  %v5807 = vrot.slane %v5806, 2
  %v5808 = vadd.f32 %v5806, %v5807
  %v5809 = vrot.slane %v5808, 1
  %v5810 = vadd.f32 %v5808, %v5809
  %v5811 = vsel %vm39, %v5794, 0.0
  %v5812 = vrot.slane %v5811, 4
  %v5813 = vadd.f32 %v5811, %v5812
  %v5814 = vrot.slane %v5813, 2
  %v5815 = vadd.f32 %v5813, %v5814
  %v5816 = vrot.slane %v5815, 1
  %v5817 = vadd.f32 %v5815, %v5816
  %v5818 = vsel %vm39, %v5796, 0.0
  %v5819 = vrot.slane %v5818, 4
  %v5820 = vadd.f32 %v5818, %v5819
  %v5821 = vrot.slane %v5820, 2
  %v5822 = vadd.f32 %v5820, %v5821
  %v5823 = vrot.slane %v5822, 1
  %v5824 = vadd.f32 %v5822, %v5823
  %v5825 = vlog2.pop %v5803
  %v5826 = vmul.f32 %v5825, 0.6931472
  %v5827 = vlog2.pop %v5810
  %v5828 = vmul.f32 %v5827, 0.6931472
  %v5829 = vlog2.pop %v5817
  %v5830 = vmul.f32 %v5829, 0.6931472
  %v5831 = vlog2.pop %v5824
  %v5832 = vmul.f32 %v5831, 0.6931472
  %v5833 = vadd.f32 %v5763, %v5826
  %v5834 = vadd.f32 %v5770, %v5828
  %v5835 = vadd.f32 %v5777, %v5830
  %v5836 = vadd.f32 %v5784, %v5832
  %v5837 = vsub.f32 %v5753, %v5833
  %v5838 = vsub.f32 %v5754, %v5834
  %v5839 = vsub.f32 %v5755, %v5835
  %v5840 = vsub.f32 %v5756, %v5836
  %v5841 = vsel %vm39, %v5837, -inf
  %5842 = vmax.xlane.f32.xlu0 %v5841
  %v5843 = vpop.xlane.xlu0 %5842
  %v5844 = vsel %vm39, %v5838, -inf
  %5845 = vmax.xlane.f32.xlu0 %v5844
  %v5846 = vpop.xlane.xlu0 %5845
  %v5847 = vsel %vm39, %v5839, -inf
  %5848 = vmax.xlane.f32.xlu0 %v5847
  %v5849 = vpop.xlane.xlu0 %5848
  %v5850 = vsel %vm39, %v5840, -inf
  %5851 = vmax.xlane.f32.xlu0 %v5850
  %v5852 = vpop.xlane.xlu0 %5851
  %v5853 = vsub.f32 %v5837, %v5843
  %v5854 = vsub.f32 %v5838, %v5846
  %v5855 = vsub.f32 %v5839, %v5849
  %v5856 = vsub.f32 %v5840, %v5852
  %v5857 = vmul.f32 %v5853, 1.442695
  %v5858 = vpow.pop %v5857
  %v5859 = vmul.f32 %v5854, 1.442695
  %v5860 = vpow.pop %v5859
  %v5861 = vmul.f32 %v5855, 1.442695
  %v5862 = vpow.pop %v5861
  %v5863 = vmul.f32 %v5856, 1.442695
  %v5864 = vpow.pop %v5863
  %v5865 = vsel %vm39, %v5858, 0.0
  %5866 = vadd.xlane.f32.xlu0 %v5865
  %v5867 = vpop.xlane.xlu0 %5866
  %v5868 = vsel %vm39, %v5860, 0.0
  %5869 = vadd.xlane.f32.xlu0 %v5868
  %v5870 = vpop.xlane.xlu0 %5869
  %v5871 = vsel %vm39, %v5862, 0.0
  %5872 = vadd.xlane.f32.xlu0 %v5871
  %v5873 = vpop.xlane.xlu0 %5872
  %v5874 = vsel %vm39, %v5864, 0.0
  %5875 = vadd.xlane.f32.xlu0 %v5874
  %v5876 = vpop.xlane.xlu0 %5875
  %v5877 = vlog2.pop %v5867
  %v5878 = vmul.f32 %v5877, 0.6931472
  %v5879 = vlog2.pop %v5870
  %v5880 = vmul.f32 %v5879, 0.6931472
  %v5881 = vlog2.pop %v5873
  %v5882 = vmul.f32 %v5881, 0.6931472
  %v5883 = vlog2.pop %v5876
  %v5884 = vmul.f32 %v5883, 0.6931472
  %v5885 = vadd.f32 %v5843, %v5878
  %v5886 = vadd.f32 %v5846, %v5880
  %v5887 = vadd.f32 %v5849, %v5882
  %v5888 = vadd.f32 %v5852, %v5884
  %v5889 = vsub.f32 %v5837, %v5885
  %v5890 = vsub.f32 %v5838, %v5886
  %v5891 = vsub.f32 %v5839, %v5887
  %v5892 = vsub.f32 %v5840, %v5888
  %v5893 = vsel %vm39, %v5889, -inf
  %v5894 = vrot.slane %v5893, 4
  %v5895 = vmax.f32 %v5893, %v5894
  %v5896 = vrot.slane %v5895, 2
  %v5897 = vmax.f32 %v5895, %v5896
  %v5898 = vrot.slane %v5897, 1
  %v5899 = vmax.f32 %v5897, %v5898
  %v5900 = vsel %vm39, %v5890, -inf
  %v5901 = vrot.slane %v5900, 4
  %v5902 = vmax.f32 %v5900, %v5901
  %v5903 = vrot.slane %v5902, 2
  %v5904 = vmax.f32 %v5902, %v5903
  %v5905 = vrot.slane %v5904, 1
  %v5906 = vmax.f32 %v5904, %v5905
  %v5907 = vsel %vm39, %v5891, -inf
  %v5908 = vrot.slane %v5907, 4
  %v5909 = vmax.f32 %v5907, %v5908
  %v5910 = vrot.slane %v5909, 2
  %v5911 = vmax.f32 %v5909, %v5910
  %v5912 = vrot.slane %v5911, 1
  %v5913 = vmax.f32 %v5911, %v5912
  %v5914 = vsel %vm39, %v5892, -inf
  %v5915 = vrot.slane %v5914, 4
  %v5916 = vmax.f32 %v5914, %v5915
  %v5917 = vrot.slane %v5916, 2
  %v5918 = vmax.f32 %v5916, %v5917
  %v5919 = vrot.slane %v5918, 1
  %v5920 = vmax.f32 %v5918, %v5919
  %v5921 = vsub.f32 %v5889, %v5899
  %v5922 = vsub.f32 %v5890, %v5906
  %v5923 = vsub.f32 %v5891, %v5913
  %v5924 = vsub.f32 %v5892, %v5920
  %v5925 = vmul.f32 %v5921, 1.442695
  %v5926 = vpow.pop %v5925
  %v5927 = vmul.f32 %v5922, 1.442695
  %v5928 = vpow.pop %v5927
  %v5929 = vmul.f32 %v5923, 1.442695
  %v5930 = vpow.pop %v5929
  %v5931 = vmul.f32 %v5924, 1.442695
  %v5932 = vpow.pop %v5931
  %v5933 = vsel %vm39, %v5926, 0.0
  %v5934 = vrot.slane %v5933, 4
  %v5935 = vadd.f32 %v5933, %v5934
  %v5936 = vrot.slane %v5935, 2
  %v5937 = vadd.f32 %v5935, %v5936
  %v5938 = vrot.slane %v5937, 1
  %v5939 = vadd.f32 %v5937, %v5938
  %v5940 = vsel %vm39, %v5928, 0.0
  %v5941 = vrot.slane %v5940, 4
  %v5942 = vadd.f32 %v5940, %v5941
  %v5943 = vrot.slane %v5942, 2
  %v5944 = vadd.f32 %v5942, %v5943
  %v5945 = vrot.slane %v5944, 1
  %v5946 = vadd.f32 %v5944, %v5945
  %v5947 = vsel %vm39, %v5930, 0.0
  %v5948 = vrot.slane %v5947, 4
  %v5949 = vadd.f32 %v5947, %v5948
  %v5950 = vrot.slane %v5949, 2
  %v5951 = vadd.f32 %v5949, %v5950
  %v5952 = vrot.slane %v5951, 1
  %v5953 = vadd.f32 %v5951, %v5952
  %v5954 = vsel %vm39, %v5932, 0.0
  %v5955 = vrot.slane %v5954, 4
  %v5956 = vadd.f32 %v5954, %v5955
  %v5957 = vrot.slane %v5956, 2
  %v5958 = vadd.f32 %v5956, %v5957
  %v5959 = vrot.slane %v5958, 1
  %v5960 = vadd.f32 %v5958, %v5959
  %v5961 = vlog2.pop %v5939
  %v5962 = vmul.f32 %v5961, 0.6931472
  %v5963 = vlog2.pop %v5946
  %v5964 = vmul.f32 %v5963, 0.6931472
  %v5965 = vlog2.pop %v5953
  %v5966 = vmul.f32 %v5965, 0.6931472
  %v5967 = vlog2.pop %v5960
  %v5968 = vmul.f32 %v5967, 0.6931472
  %v5969 = vadd.f32 %v5899, %v5962
  %v5970 = vadd.f32 %v5906, %v5964
  %v5971 = vadd.f32 %v5913, %v5966
  %v5972 = vadd.f32 %v5920, %v5968
  %v5973 = vsub.f32 %v5889, %v5969
  %v5974 = vsub.f32 %v5890, %v5970
  %v5975 = vsub.f32 %v5891, %v5971
  %v5976 = vsub.f32 %v5892, %v5972
  %v5977 = vsel %vm39, %v5973, -inf
  %5978 = vmax.xlane.f32.xlu0 %v5977
  %v5979 = vpop.xlane.xlu0 %5978
  %v5980 = vsel %vm39, %v5974, -inf
  %5981 = vmax.xlane.f32.xlu0 %v5980
  %v5982 = vpop.xlane.xlu0 %5981
  %v5983 = vsel %vm39, %v5975, -inf
  %5984 = vmax.xlane.f32.xlu0 %v5983
  %v5985 = vpop.xlane.xlu0 %5984
  %v5986 = vsel %vm39, %v5976, -inf
  %5987 = vmax.xlane.f32.xlu0 %v5986
  %v5988 = vpop.xlane.xlu0 %5987
  %v5989 = vsub.f32 %v5973, %v5979
  %v5990 = vsub.f32 %v5974, %v5982
  %v5991 = vsub.f32 %v5975, %v5985
  %v5992 = vsub.f32 %v5976, %v5988
  %v5993 = vmul.f32 %v5989, 1.442695
  %v5994 = vpow.pop %v5993
  %v5995 = vmul.f32 %v5990, 1.442695
  %v5996 = vpow.pop %v5995
  %v5997 = vmul.f32 %v5991, 1.442695
  %v5998 = vpow.pop %v5997
  %v5999 = vmul.f32 %v5992, 1.442695
  %v6000 = vpow.pop %v5999
  %v6001 = vsel %vm39, %v5994, 0.0
  %6002 = vadd.xlane.f32.xlu0 %v6001
  %v6003 = vpop.xlane.xlu0 %6002
  %v6004 = vsel %vm39, %v5996, 0.0
  %6005 = vadd.xlane.f32.xlu0 %v6004
  %v6006 = vpop.xlane.xlu0 %6005
  %v6007 = vsel %vm39, %v5998, 0.0
  %6008 = vadd.xlane.f32.xlu0 %v6007
  %v6009 = vpop.xlane.xlu0 %6008
  %v6010 = vsel %vm39, %v6000, 0.0
  %6011 = vadd.xlane.f32.xlu0 %v6010
  %v6012 = vpop.xlane.xlu0 %6011
  %v6013 = vlog2.pop %v6003
  %v6014 = vmul.f32 %v6013, 0.6931472
  %v6015 = vlog2.pop %v6006
  %v6016 = vmul.f32 %v6015, 0.6931472
  %v6017 = vlog2.pop %v6009
  %v6018 = vmul.f32 %v6017, 0.6931472
  %v6019 = vlog2.pop %v6012
  %v6020 = vmul.f32 %v6019, 0.6931472
  %v6021 = vadd.f32 %v5979, %v6014
  %v6022 = vadd.f32 %v5982, %v6016
  %v6023 = vadd.f32 %v5985, %v6018
  %v6024 = vadd.f32 %v5988, %v6020
  %v6025 = vsub.f32 %v5973, %v6021
  %v6026 = vsub.f32 %v5974, %v6022
  %v6027 = vsub.f32 %v5975, %v6023
  %v6028 = vsub.f32 %v5976, %v6024
  %v6029 = vsel %vm39, %v6025, -inf
  %v6030 = vrot.slane %v6029, 4
  %v6031 = vmax.f32 %v6029, %v6030
  %v6032 = vrot.slane %v6031, 2
  %v6033 = vmax.f32 %v6031, %v6032
  %v6034 = vrot.slane %v6033, 1
  %v6035 = vmax.f32 %v6033, %v6034
  %v6036 = vsel %vm39, %v6026, -inf
  %v6037 = vrot.slane %v6036, 4
  %v6038 = vmax.f32 %v6036, %v6037
  %v6039 = vrot.slane %v6038, 2
  %v6040 = vmax.f32 %v6038, %v6039
  %v6041 = vrot.slane %v6040, 1
  %v6042 = vmax.f32 %v6040, %v6041
  %v6043 = vsel %vm39, %v6027, -inf
  %v6044 = vrot.slane %v6043, 4
  %v6045 = vmax.f32 %v6043, %v6044
  %v6046 = vrot.slane %v6045, 2
  %v6047 = vmax.f32 %v6045, %v6046
  %v6048 = vrot.slane %v6047, 1
  %v6049 = vmax.f32 %v6047, %v6048
  %v6050 = vsel %vm39, %v6028, -inf
  %v6051 = vrot.slane %v6050, 4
  %v6052 = vmax.f32 %v6050, %v6051
  %v6053 = vrot.slane %v6052, 2
  %v6054 = vmax.f32 %v6052, %v6053
  %v6055 = vrot.slane %v6054, 1
  %v6056 = vmax.f32 %v6054, %v6055
  %v6057 = vsub.f32 %v6025, %v6035
  %v6058 = vsub.f32 %v6026, %v6042
  %v6059 = vsub.f32 %v6027, %v6049
  %v6060 = vsub.f32 %v6028, %v6056
  %v6061 = vmul.f32 %v6057, 1.442695
  %v6062 = vpow.pop %v6061
  %v6063 = vmul.f32 %v6058, 1.442695
  %v6064 = vpow.pop %v6063
  %v6065 = vmul.f32 %v6059, 1.442695
  %v6066 = vpow.pop %v6065
  %v6067 = vmul.f32 %v6060, 1.442695
  %v6068 = vpow.pop %v6067
  %v6069 = vsel %vm39, %v6062, 0.0
  %v6070 = vrot.slane %v6069, 4
  %v6071 = vadd.f32 %v6069, %v6070
  %v6072 = vrot.slane %v6071, 2
  %v6073 = vadd.f32 %v6071, %v6072
  %v6074 = vrot.slane %v6073, 1
  %v6075 = vadd.f32 %v6073, %v6074
  %v6076 = vsel %vm39, %v6064, 0.0
  %v6077 = vrot.slane %v6076, 4
  %v6078 = vadd.f32 %v6076, %v6077
  %v6079 = vrot.slane %v6078, 2
  %v6080 = vadd.f32 %v6078, %v6079
  %v6081 = vrot.slane %v6080, 1
  %v6082 = vadd.f32 %v6080, %v6081
  %v6083 = vsel %vm39, %v6066, 0.0
  %v6084 = vrot.slane %v6083, 4
  %v6085 = vadd.f32 %v6083, %v6084
  %v6086 = vrot.slane %v6085, 2
  %v6087 = vadd.f32 %v6085, %v6086
  %v6088 = vrot.slane %v6087, 1
  %v6089 = vadd.f32 %v6087, %v6088
  %v6090 = vsel %vm39, %v6068, 0.0
  %v6091 = vrot.slane %v6090, 4
  %v6092 = vadd.f32 %v6090, %v6091
  %v6093 = vrot.slane %v6092, 2
  %v6094 = vadd.f32 %v6092, %v6093
  %v6095 = vrot.slane %v6094, 1
  %v6096 = vadd.f32 %v6094, %v6095
  %v6097 = vlog2.pop %v6075
  %v6098 = vmul.f32 %v6097, 0.6931472
  %v6099 = vlog2.pop %v6082
  %v6100 = vmul.f32 %v6099, 0.6931472
  %v6101 = vlog2.pop %v6089
  %v6102 = vmul.f32 %v6101, 0.6931472
  %v6103 = vlog2.pop %v6096
  %v6104 = vmul.f32 %v6103, 0.6931472
  %v6105 = vadd.f32 %v6035, %v6098
  %v6106 = vadd.f32 %v6042, %v6100
  %v6107 = vadd.f32 %v6049, %v6102
  %v6108 = vadd.f32 %v6056, %v6104
  %v6109 = vsub.f32 %v6025, %v6105
  %v6110 = vsub.f32 %v6026, %v6106
  %v6111 = vsub.f32 %v6027, %v6107
  %v6112 = vsub.f32 %v6028, %v6108
  %v6113 = vsel %vm39, %v6109, -inf
  %6114 = vmax.xlane.f32.xlu0 %v6113
  %v6115 = vpop.xlane.xlu0 %6114
  %v6116 = vsel %vm39, %v6110, -inf
  %6117 = vmax.xlane.f32.xlu0 %v6116
  %v6118 = vpop.xlane.xlu0 %6117
  %v6119 = vsel %vm39, %v6111, -inf
  %6120 = vmax.xlane.f32.xlu0 %v6119
  %v6121 = vpop.xlane.xlu0 %6120
  %v6122 = vsel %vm39, %v6112, -inf
  %6123 = vmax.xlane.f32.xlu0 %v6122
  %v6124 = vpop.xlane.xlu0 %6123
  %v6125 = vsub.f32 %v6109, %v6115
  %v6126 = vsub.f32 %v6110, %v6118
  %v6127 = vsub.f32 %v6111, %v6121
  %v6128 = vsub.f32 %v6112, %v6124
  %v6129 = vmul.f32 %v6125, 1.442695
  %v6130 = vpow.pop %v6129
  %v6131 = vmul.f32 %v6126, 1.442695
  %v6132 = vpow.pop %v6131
  %v6133 = vmul.f32 %v6127, 1.442695
  %v6134 = vpow.pop %v6133
  %v6135 = vmul.f32 %v6128, 1.442695
  %v6136 = vpow.pop %v6135
  %v6137 = vsel %vm39, %v6130, 0.0
  %6138 = vadd.xlane.f32.xlu0 %v6137
  %v6139 = vpop.xlane.xlu0 %6138
  %v6140 = vsel %vm39, %v6132, 0.0
  %6141 = vadd.xlane.f32.xlu0 %v6140
  %v6142 = vpop.xlane.xlu0 %6141
  %v6143 = vsel %vm39, %v6134, 0.0
  %6144 = vadd.xlane.f32.xlu0 %v6143
  %v6145 = vpop.xlane.xlu0 %6144
  %v6146 = vsel %vm39, %v6136, 0.0
  %6147 = vadd.xlane.f32.xlu0 %v6146
  %v6148 = vpop.xlane.xlu0 %6147
  %v6149 = vlog2.pop %v6139
  %v6150 = vmul.f32 %v6149, 0.6931472
  %v6151 = vlog2.pop %v6142
  %v6152 = vmul.f32 %v6151, 0.6931472
  %v6153 = vlog2.pop %v6145
  %v6154 = vmul.f32 %v6153, 0.6931472
  %v6155 = vlog2.pop %v6148
  %v6156 = vmul.f32 %v6155, 0.6931472
  %v6157 = vadd.f32 %v6115, %v6150
  %v6158 = vadd.f32 %v6118, %v6152
  %v6159 = vadd.f32 %v6121, %v6154
  %v6160 = vadd.f32 %v6124, %v6156
  %v6161 = vsub.f32 %v6109, %v6157
  %v6162 = vsub.f32 %v6110, %v6158
  %v6163 = vsub.f32 %v6111, %v6159
  %v6164 = vsub.f32 %v6112, %v6160
  %v6165 = vsel %vm39, %v6161, -inf
  %v6166 = vrot.slane %v6165, 4
  %v6167 = vmax.f32 %v6165, %v6166
  %v6168 = vrot.slane %v6167, 2
  %v6169 = vmax.f32 %v6167, %v6168
  %v6170 = vrot.slane %v6169, 1
  %v6171 = vmax.f32 %v6169, %v6170
  %v6172 = vsel %vm39, %v6162, -inf
  %v6173 = vrot.slane %v6172, 4
  %v6174 = vmax.f32 %v6172, %v6173
  %v6175 = vrot.slane %v6174, 2
  %v6176 = vmax.f32 %v6174, %v6175
  %v6177 = vrot.slane %v6176, 1
  %v6178 = vmax.f32 %v6176, %v6177
  %v6179 = vsel %vm39, %v6163, -inf
  %v6180 = vrot.slane %v6179, 4
  %v6181 = vmax.f32 %v6179, %v6180
  %v6182 = vrot.slane %v6181, 2
  %v6183 = vmax.f32 %v6181, %v6182
  %v6184 = vrot.slane %v6183, 1
  %v6185 = vmax.f32 %v6183, %v6184
  %v6186 = vsel %vm39, %v6164, -inf
  %v6187 = vrot.slane %v6186, 4
  %v6188 = vmax.f32 %v6186, %v6187
  %v6189 = vrot.slane %v6188, 2
  %v6190 = vmax.f32 %v6188, %v6189
  %v6191 = vrot.slane %v6190, 1
  %v6192 = vmax.f32 %v6190, %v6191
  %v6193 = vsub.f32 %v6161, %v6171
  %v6194 = vsub.f32 %v6162, %v6178
  %v6195 = vsub.f32 %v6163, %v6185
  %v6196 = vsub.f32 %v6164, %v6192
  %v6197 = vmul.f32 %v6193, 1.442695
  %v6198 = vpow.pop %v6197
  %v6199 = vmul.f32 %v6194, 1.442695
  %v6200 = vpow.pop %v6199
  %v6201 = vmul.f32 %v6195, 1.442695
  %v6202 = vpow.pop %v6201
  %v6203 = vmul.f32 %v6196, 1.442695
  %v6204 = vpow.pop %v6203
  %v6205 = vsel %vm39, %v6198, 0.0
  %v6206 = vrot.slane %v6205, 4
  %v6207 = vadd.f32 %v6205, %v6206
  %v6208 = vrot.slane %v6207, 2
  %v6209 = vadd.f32 %v6207, %v6208
  %v6210 = vrot.slane %v6209, 1
  %v6211 = vadd.f32 %v6209, %v6210
  %v6212 = vsel %vm39, %v6200, 0.0
  %v6213 = vrot.slane %v6212, 4
  %v6214 = vadd.f32 %v6212, %v6213
  %v6215 = vrot.slane %v6214, 2
  %v6216 = vadd.f32 %v6214, %v6215
  %v6217 = vrot.slane %v6216, 1
  %v6218 = vadd.f32 %v6216, %v6217
  %v6219 = vsel %vm39, %v6202, 0.0
  %v6220 = vrot.slane %v6219, 4
  %v6221 = vadd.f32 %v6219, %v6220
  %v6222 = vrot.slane %v6221, 2
  %v6223 = vadd.f32 %v6221, %v6222
  %v6224 = vrot.slane %v6223, 1
  %v6225 = vadd.f32 %v6223, %v6224
  %v6226 = vsel %vm39, %v6204, 0.0
  %v6227 = vrot.slane %v6226, 4
  %v6228 = vadd.f32 %v6226, %v6227
  %v6229 = vrot.slane %v6228, 2
  %v6230 = vadd.f32 %v6228, %v6229
  %v6231 = vrot.slane %v6230, 1
  %v6232 = vadd.f32 %v6230, %v6231
  %v6233 = vlog2.pop %v6211
  %v6234 = vmul.f32 %v6233, 0.6931472
  %v6235 = vlog2.pop %v6218
  %v6236 = vmul.f32 %v6235, 0.6931472
  %v6237 = vlog2.pop %v6225
  %v6238 = vmul.f32 %v6237, 0.6931472
  %v6239 = vlog2.pop %v6232
  %v6240 = vmul.f32 %v6239, 0.6931472
  %v6241 = vadd.f32 %v6171, %v6234
  %v6242 = vadd.f32 %v6178, %v6236
  %v6243 = vadd.f32 %v6185, %v6238
  %v6244 = vadd.f32 %v6192, %v6240
  %v6245 = vsub.f32 %v6161, %v6241
  %v6246 = vsub.f32 %v6162, %v6242
  %v6247 = vsub.f32 %v6163, %v6243
  %v6248 = vsub.f32 %v6164, %v6244
  %v6249 = vsel %vm39, %v6245, -inf
  %6250 = vmax.xlane.f32.xlu0 %v6249
  %v6251 = vpop.xlane.xlu0 %6250
  %v6252 = vsel %vm39, %v6246, -inf
  %6253 = vmax.xlane.f32.xlu0 %v6252
  %v6254 = vpop.xlane.xlu0 %6253
  %v6255 = vsel %vm39, %v6247, -inf
  %6256 = vmax.xlane.f32.xlu0 %v6255
  %v6257 = vpop.xlane.xlu0 %6256
  %v6258 = vsel %vm39, %v6248, -inf
  %6259 = vmax.xlane.f32.xlu0 %v6258
  %v6260 = vpop.xlane.xlu0 %6259
  %v6261 = vsub.f32 %v6245, %v6251
  %v6262 = vsub.f32 %v6246, %v6254
  %v6263 = vsub.f32 %v6247, %v6257
  %v6264 = vsub.f32 %v6248, %v6260
  %v6265 = vmul.f32 %v6261, 1.442695
  %v6266 = vpow.pop %v6265
  %v6267 = vmul.f32 %v6262, 1.442695
  %v6268 = vpow.pop %v6267
  %v6269 = vmul.f32 %v6263, 1.442695
  %v6270 = vpow.pop %v6269
  %v6271 = vmul.f32 %v6264, 1.442695
  %v6272 = vpow.pop %v6271
  %v6273 = vsel %vm39, %v6266, 0.0
  %6274 = vadd.xlane.f32.xlu0 %v6273
  %v6275 = vpop.xlane.xlu0 %6274
  %v6276 = vsel %vm39, %v6268, 0.0
  %6277 = vadd.xlane.f32.xlu0 %v6276
  %v6278 = vpop.xlane.xlu0 %6277
  %v6279 = vsel %vm39, %v6270, 0.0
  %6280 = vadd.xlane.f32.xlu0 %v6279
  %v6281 = vpop.xlane.xlu0 %6280
  %v6282 = vsel %vm39, %v6272, 0.0
  %6283 = vadd.xlane.f32.xlu0 %v6282
  %v6284 = vpop.xlane.xlu0 %6283
  %v6285 = vlog2.pop %v6275
  %v6286 = vmul.f32 %v6285, 0.6931472
  %v6287 = vlog2.pop %v6278
  %v6288 = vmul.f32 %v6287, 0.6931472
  %v6289 = vlog2.pop %v6281
  %v6290 = vmul.f32 %v6289, 0.6931472
  %v6291 = vlog2.pop %v6284
  %v6292 = vmul.f32 %v6291, 0.6931472
  %v6293 = vadd.f32 %v6251, %v6286
  %v6294 = vadd.f32 %v6254, %v6288
  %v6295 = vadd.f32 %v6257, %v6290
  %v6296 = vadd.f32 %v6260, %v6292
  %v6297 = vsub.f32 %v6245, %v6293
  %v6298 = vsub.f32 %v6246, %v6294
  %v6299 = vsub.f32 %v6247, %v6295
  %v6300 = vsub.f32 %v6248, %v6296
  %v6301 = vsel %vm39, %v6297, -inf
  %v6302 = vrot.slane %v6301, 4
  %v6303 = vmax.f32 %v6301, %v6302
  %v6304 = vrot.slane %v6303, 2
  %v6305 = vmax.f32 %v6303, %v6304
  %v6306 = vrot.slane %v6305, 1
  %v6307 = vmax.f32 %v6305, %v6306
  %v6308 = vsel %vm39, %v6298, -inf
  %v6309 = vrot.slane %v6308, 4
  %v6310 = vmax.f32 %v6308, %v6309
  %v6311 = vrot.slane %v6310, 2
  %v6312 = vmax.f32 %v6310, %v6311
  %v6313 = vrot.slane %v6312, 1
  %v6314 = vmax.f32 %v6312, %v6313
  %v6315 = vsel %vm39, %v6299, -inf
  %v6316 = vrot.slane %v6315, 4
  %v6317 = vmax.f32 %v6315, %v6316
  %v6318 = vrot.slane %v6317, 2
  %v6319 = vmax.f32 %v6317, %v6318
  %v6320 = vrot.slane %v6319, 1
  %v6321 = vmax.f32 %v6319, %v6320
  %v6322 = vsel %vm39, %v6300, -inf
  %v6323 = vrot.slane %v6322, 4
  %v6324 = vmax.f32 %v6322, %v6323
  %v6325 = vrot.slane %v6324, 2
  %v6326 = vmax.f32 %v6324, %v6325
  %v6327 = vrot.slane %v6326, 1
  %v6328 = vmax.f32 %v6326, %v6327
  %v6329 = vsub.f32 %v6297, %v6307
  %v6330 = vsub.f32 %v6298, %v6314
  %v6331 = vsub.f32 %v6299, %v6321
  %v6332 = vsub.f32 %v6300, %v6328
  %v6333 = vmul.f32 %v6329, 1.442695
  %v6334 = vpow.pop %v6333
  %v6335 = vmul.f32 %v6330, 1.442695
  %v6336 = vpow.pop %v6335
  %v6337 = vmul.f32 %v6331, 1.442695
  %v6338 = vpow.pop %v6337
  %v6339 = vmul.f32 %v6332, 1.442695
  %v6340 = vpow.pop %v6339
  %v6341 = vsel %vm39, %v6334, 0.0
  %v6342 = vrot.slane %v6341, 4
  %v6343 = vadd.f32 %v6341, %v6342
  %v6344 = vrot.slane %v6343, 2
  %v6345 = vadd.f32 %v6343, %v6344
  %v6346 = vrot.slane %v6345, 1
  %v6347 = vadd.f32 %v6345, %v6346
  %v6348 = vsel %vm39, %v6336, 0.0
  %v6349 = vrot.slane %v6348, 4
  %v6350 = vadd.f32 %v6348, %v6349
  %v6351 = vrot.slane %v6350, 2
  %v6352 = vadd.f32 %v6350, %v6351
  %v6353 = vrot.slane %v6352, 1
  %v6354 = vadd.f32 %v6352, %v6353
  %v6355 = vsel %vm39, %v6338, 0.0
  %v6356 = vrot.slane %v6355, 4
  %v6357 = vadd.f32 %v6355, %v6356
  %v6358 = vrot.slane %v6357, 2
  %v6359 = vadd.f32 %v6357, %v6358
  %v6360 = vrot.slane %v6359, 1
  %v6361 = vadd.f32 %v6359, %v6360
  %v6362 = vsel %vm39, %v6340, 0.0
  %v6363 = vrot.slane %v6362, 4
  %v6364 = vadd.f32 %v6362, %v6363
  %v6365 = vrot.slane %v6364, 2
  %v6366 = vadd.f32 %v6364, %v6365
  %v6367 = vrot.slane %v6366, 1
  %v6368 = vadd.f32 %v6366, %v6367
  %v6369 = vlog2.pop %v6347
  %v6370 = vmul.f32 %v6369, 0.6931472
  %v6371 = vlog2.pop %v6354
  %v6372 = vmul.f32 %v6371, 0.6931472
  %v6373 = vlog2.pop %v6361
  %v6374 = vmul.f32 %v6373, 0.6931472
  %v6375 = vlog2.pop %v6368
  %v6376 = vmul.f32 %v6375, 0.6931472
  %v6377 = vadd.f32 %v6307, %v6370
  %v6378 = vadd.f32 %v6314, %v6372
  %v6379 = vadd.f32 %v6321, %v6374
  %v6380 = vadd.f32 %v6328, %v6376
  %v6381 = vsub.f32 %v6297, %v6377
  %v6382 = vsub.f32 %v6298, %v6378
  %v6383 = vsub.f32 %v6299, %v6379
  %v6384 = vsub.f32 %v6300, %v6380
  %v6385 = vsel %vm39, %v6381, -inf
  %6386 = vmax.xlane.f32.xlu0 %v6385
  %v6387 = vpop.xlane.xlu0 %6386
  %v6388 = vsel %vm39, %v6382, -inf
  %6389 = vmax.xlane.f32.xlu0 %v6388
  %v6390 = vpop.xlane.xlu0 %6389
  %v6391 = vsel %vm39, %v6383, -inf
  %6392 = vmax.xlane.f32.xlu0 %v6391
  %v6393 = vpop.xlane.xlu0 %6392
  %v6394 = vsel %vm39, %v6384, -inf
  %6395 = vmax.xlane.f32.xlu0 %v6394
  %v6396 = vpop.xlane.xlu0 %6395
  %v6397 = vsub.f32 %v6381, %v6387
  %v6398 = vsub.f32 %v6382, %v6390
  %v6399 = vsub.f32 %v6383, %v6393
  %v6400 = vsub.f32 %v6384, %v6396
  %v6401 = vmul.f32 %v6397, 1.442695
  %v6402 = vpow.pop %v6401
  %v6403 = vmul.f32 %v6398, 1.442695
  %v6404 = vpow.pop %v6403
  %v6405 = vmul.f32 %v6399, 1.442695
  %v6406 = vpow.pop %v6405
  %v6407 = vmul.f32 %v6400, 1.442695
  %v6408 = vpow.pop %v6407
  %v6409 = vsel %vm39, %v6402, 0.0
  %6410 = vadd.xlane.f32.xlu0 %v6409
  %v6411 = vpop.xlane.xlu0 %6410
  %v6412 = vsel %vm39, %v6404, 0.0
  %6413 = vadd.xlane.f32.xlu0 %v6412
  %v6414 = vpop.xlane.xlu0 %6413
  %v6415 = vsel %vm39, %v6406, 0.0
  %6416 = vadd.xlane.f32.xlu0 %v6415
  %v6417 = vpop.xlane.xlu0 %6416
  %v6418 = vsel %vm39, %v6408, 0.0
  %6419 = vadd.xlane.f32.xlu0 %v6418
  %v6420 = vpop.xlane.xlu0 %6419
  %v6421 = vlog2.pop %v6411
  %v6422 = vmul.f32 %v6421, 0.6931472
  %v6423 = vlog2.pop %v6414
  %v6424 = vmul.f32 %v6423, 0.6931472
  %v6425 = vlog2.pop %v6417
  %v6426 = vmul.f32 %v6425, 0.6931472
  %v6427 = vlog2.pop %v6420
  %v6428 = vmul.f32 %v6427, 0.6931472
  %v6429 = vadd.f32 %v6387, %v6422
  %v6430 = vadd.f32 %v6390, %v6424
  %v6431 = vadd.f32 %v6393, %v6426
  %v6432 = vadd.f32 %v6396, %v6428
  %v6433 = vsub.f32 %v6381, %v6429
  %v6434 = vsub.f32 %v6382, %v6430
  %v6435 = vsub.f32 %v6383, %v6431
  %v6436 = vsub.f32 %v6384, %v6432
  %v6437 = vsel %vm39, %v6433, -inf
  %v6438 = vrot.slane %v6437, 4
  %v6439 = vmax.f32 %v6437, %v6438
  %v6440 = vrot.slane %v6439, 2
  %v6441 = vmax.f32 %v6439, %v6440
  %v6442 = vrot.slane %v6441, 1
  %v6443 = vmax.f32 %v6441, %v6442
  %v6444 = vsel %vm39, %v6434, -inf
  %v6445 = vrot.slane %v6444, 4
  %v6446 = vmax.f32 %v6444, %v6445
  %v6447 = vrot.slane %v6446, 2
  %v6448 = vmax.f32 %v6446, %v6447
  %v6449 = vrot.slane %v6448, 1
  %v6450 = vmax.f32 %v6448, %v6449
  %v6451 = vsel %vm39, %v6435, -inf
  %v6452 = vrot.slane %v6451, 4
  %v6453 = vmax.f32 %v6451, %v6452
  %v6454 = vrot.slane %v6453, 2
  %v6455 = vmax.f32 %v6453, %v6454
  %v6456 = vrot.slane %v6455, 1
  %v6457 = vmax.f32 %v6455, %v6456
  %v6458 = vsel %vm39, %v6436, -inf
  %v6459 = vrot.slane %v6458, 4
  %v6460 = vmax.f32 %v6458, %v6459
  %v6461 = vrot.slane %v6460, 2
  %v6462 = vmax.f32 %v6460, %v6461
  %v6463 = vrot.slane %v6462, 1
  %v6464 = vmax.f32 %v6462, %v6463
  %v6465 = vsub.f32 %v6433, %v6443
  %v6466 = vsub.f32 %v6434, %v6450
  %v6467 = vsub.f32 %v6435, %v6457
  %v6468 = vsub.f32 %v6436, %v6464
  %v6469 = vmul.f32 %v6465, 1.442695
  %v6470 = vpow.pop %v6469
  %v6471 = vmul.f32 %v6466, 1.442695
  %v6472 = vpow.pop %v6471
  %v6473 = vmul.f32 %v6467, 1.442695
  %v6474 = vpow.pop %v6473
  %v6475 = vmul.f32 %v6468, 1.442695
  %v6476 = vpow.pop %v6475
  %v6477 = vsel %vm39, %v6470, 0.0
  %v6478 = vrot.slane %v6477, 4
  %v6479 = vadd.f32 %v6477, %v6478
  %v6480 = vrot.slane %v6479, 2
  %v6481 = vadd.f32 %v6479, %v6480
  %v6482 = vrot.slane %v6481, 1
  %v6483 = vadd.f32 %v6481, %v6482
  %v6484 = vsel %vm39, %v6472, 0.0
  %v6485 = vrot.slane %v6484, 4
  %v6486 = vadd.f32 %v6484, %v6485
  %v6487 = vrot.slane %v6486, 2
  %v6488 = vadd.f32 %v6486, %v6487
  %v6489 = vrot.slane %v6488, 1
  %v6490 = vadd.f32 %v6488, %v6489
  %v6491 = vsel %vm39, %v6474, 0.0
  %v6492 = vrot.slane %v6491, 4
  %v6493 = vadd.f32 %v6491, %v6492
  %v6494 = vrot.slane %v6493, 2
  %v6495 = vadd.f32 %v6493, %v6494
  %v6496 = vrot.slane %v6495, 1
  %v6497 = vadd.f32 %v6495, %v6496
  %v6498 = vsel %vm39, %v6476, 0.0
  %v6499 = vrot.slane %v6498, 4
  %v6500 = vadd.f32 %v6498, %v6499
  %v6501 = vrot.slane %v6500, 2
  %v6502 = vadd.f32 %v6500, %v6501
  %v6503 = vrot.slane %v6502, 1
  %v6504 = vadd.f32 %v6502, %v6503
  %v6505 = vlog2.pop %v6483
  %v6506 = vmul.f32 %v6505, 0.6931472
  %v6507 = vlog2.pop %v6490
  %v6508 = vmul.f32 %v6507, 0.6931472
  %v6509 = vlog2.pop %v6497
  %v6510 = vmul.f32 %v6509, 0.6931472
  %v6511 = vlog2.pop %v6504
  %v6512 = vmul.f32 %v6511, 0.6931472
  %v6513 = vadd.f32 %v6443, %v6506
  %v6514 = vadd.f32 %v6450, %v6508
  %v6515 = vadd.f32 %v6457, %v6510
  %v6516 = vadd.f32 %v6464, %v6512
  %v6517 = vsub.f32 %v6433, %v6513
  %v6518 = vsub.f32 %v6434, %v6514
  %v6519 = vsub.f32 %v6435, %v6515
  %v6520 = vsub.f32 %v6436, %v6516
  %v6521 = vsel %vm39, %v6517, -inf
  %6522 = vmax.xlane.f32.xlu0 %v6521
  %v6523 = vpop.xlane.xlu0 %6522
  %v6524 = vsel %vm39, %v6518, -inf
  %6525 = vmax.xlane.f32.xlu0 %v6524
  %v6526 = vpop.xlane.xlu0 %6525
  %v6527 = vsel %vm39, %v6519, -inf
  %6528 = vmax.xlane.f32.xlu0 %v6527
  %v6529 = vpop.xlane.xlu0 %6528
  %v6530 = vsel %vm39, %v6520, -inf
  %6531 = vmax.xlane.f32.xlu0 %v6530
  %v6532 = vpop.xlane.xlu0 %6531
  %v6533 = vsub.f32 %v6517, %v6523
  %v6534 = vsub.f32 %v6518, %v6526
  %v6535 = vsub.f32 %v6519, %v6529
  %v6536 = vsub.f32 %v6520, %v6532
  %v6537 = vmul.f32 %v6533, 1.442695
  %v6538 = vpow.pop %v6537
  %v6539 = vmul.f32 %v6534, 1.442695
  %v6540 = vpow.pop %v6539
  %v6541 = vmul.f32 %v6535, 1.442695
  %v6542 = vpow.pop %v6541
  %v6543 = vmul.f32 %v6536, 1.442695
  %v6544 = vpow.pop %v6543
  %v6545 = vsel %vm39, %v6538, 0.0
  %6546 = vadd.xlane.f32.xlu0 %v6545
  %v6547 = vpop.xlane.xlu0 %6546
  %v6548 = vsel %vm39, %v6540, 0.0
  %6549 = vadd.xlane.f32.xlu0 %v6548
  %v6550 = vpop.xlane.xlu0 %6549
  %v6551 = vsel %vm39, %v6542, 0.0
  %6552 = vadd.xlane.f32.xlu0 %v6551
  %v6553 = vpop.xlane.xlu0 %6552
  %v6554 = vsel %vm39, %v6544, 0.0
  %6555 = vadd.xlane.f32.xlu0 %v6554
  %v6556 = vpop.xlane.xlu0 %6555
  %v6557 = vlog2.pop %v6547
  %v6558 = vmul.f32 %v6557, 0.6931472
  %v6559 = vlog2.pop %v6550
  %v6560 = vmul.f32 %v6559, 0.6931472
  %v6561 = vlog2.pop %v6553
  %v6562 = vmul.f32 %v6561, 0.6931472
  %v6563 = vlog2.pop %v6556
  %v6564 = vmul.f32 %v6563, 0.6931472
  %v6565 = vadd.f32 %v6523, %v6558
  %v6566 = vadd.f32 %v6526, %v6560
  %v6567 = vadd.f32 %v6529, %v6562
  %v6568 = vadd.f32 %v6532, %v6564
  %v6569 = vsub.f32 %v6517, %v6565
  %v6570 = vsub.f32 %v6518, %v6566
  %v6571 = vsub.f32 %v6519, %v6567
  %v6572 = vsub.f32 %v6520, %v6568
  %v6573 = vsel %vm39, %v6569, -inf
  %v6574 = vrot.slane %v6573, 4
  %v6575 = vmax.f32 %v6573, %v6574
  %v6576 = vrot.slane %v6575, 2
  %v6577 = vmax.f32 %v6575, %v6576
  %v6578 = vrot.slane %v6577, 1
  %v6579 = vmax.f32 %v6577, %v6578
  %v6580 = vsel %vm39, %v6570, -inf
  %v6581 = vrot.slane %v6580, 4
  %v6582 = vmax.f32 %v6580, %v6581
  %v6583 = vrot.slane %v6582, 2
  %v6584 = vmax.f32 %v6582, %v6583
  %v6585 = vrot.slane %v6584, 1
  %v6586 = vmax.f32 %v6584, %v6585
  %v6587 = vsel %vm39, %v6571, -inf
  %v6588 = vrot.slane %v6587, 4
  %v6589 = vmax.f32 %v6587, %v6588
  %v6590 = vrot.slane %v6589, 2
  %v6591 = vmax.f32 %v6589, %v6590
  %v6592 = vrot.slane %v6591, 1
  %v6593 = vmax.f32 %v6591, %v6592
  %v6594 = vsel %vm39, %v6572, -inf
  %v6595 = vrot.slane %v6594, 4
  %v6596 = vmax.f32 %v6594, %v6595
  %v6597 = vrot.slane %v6596, 2
  %v6598 = vmax.f32 %v6596, %v6597
  %v6599 = vrot.slane %v6598, 1
  %v6600 = vmax.f32 %v6598, %v6599
  %v6601 = vsub.f32 %v6569, %v6579
  %v6602 = vsub.f32 %v6570, %v6586
  %v6603 = vsub.f32 %v6571, %v6593
  %v6604 = vsub.f32 %v6572, %v6600
  %v6605 = vmul.f32 %v6601, 1.442695
  %v6606 = vpow.pop %v6605
  %v6607 = vmul.f32 %v6602, 1.442695
  %v6608 = vpow.pop %v6607
  %v6609 = vmul.f32 %v6603, 1.442695
  %v6610 = vpow.pop %v6609
  %v6611 = vmul.f32 %v6604, 1.442695
  %v6612 = vpow.pop %v6611
  %v6613 = vsel %vm39, %v6606, 0.0
  %v6614 = vrot.slane %v6613, 4
  %v6615 = vadd.f32 %v6613, %v6614
  %v6616 = vrot.slane %v6615, 2
  %v6617 = vadd.f32 %v6615, %v6616
  %v6618 = vrot.slane %v6617, 1
  %v6619 = vadd.f32 %v6617, %v6618
  %v6620 = vsel %vm39, %v6608, 0.0
  %v6621 = vrot.slane %v6620, 4
  %v6622 = vadd.f32 %v6620, %v6621
  %v6623 = vrot.slane %v6622, 2
  %v6624 = vadd.f32 %v6622, %v6623
  %v6625 = vrot.slane %v6624, 1
  %v6626 = vadd.f32 %v6624, %v6625
  %v6627 = vsel %vm39, %v6610, 0.0
  %v6628 = vrot.slane %v6627, 4
  %v6629 = vadd.f32 %v6627, %v6628
  %v6630 = vrot.slane %v6629, 2
  %v6631 = vadd.f32 %v6629, %v6630
  %v6632 = vrot.slane %v6631, 1
  %v6633 = vadd.f32 %v6631, %v6632
  %v6634 = vsel %vm39, %v6612, 0.0
  %v6635 = vrot.slane %v6634, 4
  %v6636 = vadd.f32 %v6634, %v6635
  %v6637 = vrot.slane %v6636, 2
  %v6638 = vadd.f32 %v6636, %v6637
  %v6639 = vrot.slane %v6638, 1
  %v6640 = vadd.f32 %v6638, %v6639
  %v6641 = vlog2.pop %v6619
  %v6642 = vmul.f32 %v6641, 0.6931472
  %v6643 = vlog2.pop %v6626
  %v6644 = vmul.f32 %v6643, 0.6931472
  %v6645 = vlog2.pop %v6633
  %v6646 = vmul.f32 %v6645, 0.6931472
  %v6647 = vlog2.pop %v6640
  %v6648 = vmul.f32 %v6647, 0.6931472
  %v6649 = vadd.f32 %v6579, %v6642
  %v6650 = vadd.f32 %v6586, %v6644
  %v6651 = vadd.f32 %v6593, %v6646
  %v6652 = vadd.f32 %v6600, %v6648
  %v6653 = vsub.f32 %v6569, %v6649
  %v6654 = vsub.f32 %v6570, %v6650
  %v6655 = vsub.f32 %v6571, %v6651
  %v6656 = vsub.f32 %v6572, %v6652
  %v6657 = vsel %vm39, %v6653, -inf
  %6658 = vmax.xlane.f32.xlu0 %v6657
  %v6659 = vpop.xlane.xlu0 %6658
  %v6660 = vsel %vm39, %v6654, -inf
  %6661 = vmax.xlane.f32.xlu0 %v6660
  %v6662 = vpop.xlane.xlu0 %6661
  %v6663 = vsel %vm39, %v6655, -inf
  %6664 = vmax.xlane.f32.xlu0 %v6663
  %v6665 = vpop.xlane.xlu0 %6664
  %v6666 = vsel %vm39, %v6656, -inf
  %6667 = vmax.xlane.f32.xlu0 %v6666
  %v6668 = vpop.xlane.xlu0 %6667
  %v6669 = vsub.f32 %v6653, %v6659
  %v6670 = vsub.f32 %v6654, %v6662
  %v6671 = vsub.f32 %v6655, %v6665
  %v6672 = vsub.f32 %v6656, %v6668
  %v6673 = vmul.f32 %v6669, 1.442695
  %v6674 = vpow.pop %v6673
  %v6675 = vmul.f32 %v6670, 1.442695
  %v6676 = vpow.pop %v6675
  %v6677 = vmul.f32 %v6671, 1.442695
  %v6678 = vpow.pop %v6677
  %v6679 = vmul.f32 %v6672, 1.442695
  %v6680 = vpow.pop %v6679
  %v6681 = vsel %vm39, %v6674, 0.0
  %6682 = vadd.xlane.f32.xlu0 %v6681
  %v6683 = vpop.xlane.xlu0 %6682
  %v6684 = vsel %vm39, %v6676, 0.0
  %6685 = vadd.xlane.f32.xlu0 %v6684
  %v6686 = vpop.xlane.xlu0 %6685
  %v6687 = vsel %vm39, %v6678, 0.0
  %6688 = vadd.xlane.f32.xlu0 %v6687
  %v6689 = vpop.xlane.xlu0 %6688
  %v6690 = vsel %vm39, %v6680, 0.0
  %6691 = vadd.xlane.f32.xlu0 %v6690
  %v6692 = vpop.xlane.xlu0 %6691
  %v6693 = vlog2.pop %v6683
  %v6694 = vmul.f32 %v6693, 0.6931472
  %v6695 = vlog2.pop %v6686
  %v6696 = vmul.f32 %v6695, 0.6931472
  %v6697 = vlog2.pop %v6689
  %v6698 = vmul.f32 %v6697, 0.6931472
  %v6699 = vlog2.pop %v6692
  %v6700 = vmul.f32 %v6699, 0.6931472
  %v6701 = vadd.f32 %v6659, %v6694
  %v6702 = vadd.f32 %v6662, %v6696
  %v6703 = vadd.f32 %v6665, %v6698
  %v6704 = vadd.f32 %v6668, %v6700
  %v6705 = vsub.f32 %v6653, %v6701
  %v6706 = vsub.f32 %v6654, %v6702
  %v6707 = vsub.f32 %v6655, %v6703
  %v6708 = vsub.f32 %v6656, %v6704
  %v6709 = vsel %vm39, %v6705, -inf
  %v6710 = vrot.slane %v6709, 4
  %v6711 = vmax.f32 %v6709, %v6710
  %v6712 = vrot.slane %v6711, 2
  %v6713 = vmax.f32 %v6711, %v6712
  %v6714 = vrot.slane %v6713, 1
  %v6715 = vmax.f32 %v6713, %v6714
  %v6716 = vsel %vm39, %v6706, -inf
  %v6717 = vrot.slane %v6716, 4
  %v6718 = vmax.f32 %v6716, %v6717
  %v6719 = vrot.slane %v6718, 2
  %v6720 = vmax.f32 %v6718, %v6719
  %v6721 = vrot.slane %v6720, 1
  %v6722 = vmax.f32 %v6720, %v6721
  %v6723 = vsel %vm39, %v6707, -inf
  %v6724 = vrot.slane %v6723, 4
  %v6725 = vmax.f32 %v6723, %v6724
  %v6726 = vrot.slane %v6725, 2
  %v6727 = vmax.f32 %v6725, %v6726
  %v6728 = vrot.slane %v6727, 1
  %v6729 = vmax.f32 %v6727, %v6728
  %v6730 = vsel %vm39, %v6708, -inf
  %v6731 = vrot.slane %v6730, 4
  %v6732 = vmax.f32 %v6730, %v6731
  %v6733 = vrot.slane %v6732, 2
  %v6734 = vmax.f32 %v6732, %v6733
  %v6735 = vrot.slane %v6734, 1
  %v6736 = vmax.f32 %v6734, %v6735
  %v6737 = vsub.f32 %v6705, %v6715
  %v6738 = vsub.f32 %v6706, %v6722
  %v6739 = vsub.f32 %v6707, %v6729
  %v6740 = vsub.f32 %v6708, %v6736
  %v6741 = vmul.f32 %v6737, 1.442695
  %v6742 = vpow.pop %v6741
  %v6743 = vmul.f32 %v6738, 1.442695
  %v6744 = vpow.pop %v6743
  %v6745 = vmul.f32 %v6739, 1.442695
  %v6746 = vpow.pop %v6745
  %v6747 = vmul.f32 %v6740, 1.442695
  %v6748 = vpow.pop %v6747
  %v6749 = vsel %vm39, %v6742, 0.0
  %v6750 = vrot.slane %v6749, 4
  %v6751 = vadd.f32 %v6749, %v6750
  %v6752 = vrot.slane %v6751, 2
  %v6753 = vadd.f32 %v6751, %v6752
  %v6754 = vrot.slane %v6753, 1
  %v6755 = vadd.f32 %v6753, %v6754
  %v6756 = vsel %vm39, %v6744, 0.0
  %v6757 = vrot.slane %v6756, 4
  %v6758 = vadd.f32 %v6756, %v6757
  %v6759 = vrot.slane %v6758, 2
  %v6760 = vadd.f32 %v6758, %v6759
  %v6761 = vrot.slane %v6760, 1
  %v6762 = vadd.f32 %v6760, %v6761
  %v6763 = vsel %vm39, %v6746, 0.0
  %v6764 = vrot.slane %v6763, 4
  %v6765 = vadd.f32 %v6763, %v6764
  %v6766 = vrot.slane %v6765, 2
  %v6767 = vadd.f32 %v6765, %v6766
  %v6768 = vrot.slane %v6767, 1
  %v6769 = vadd.f32 %v6767, %v6768
  %v6770 = vsel %vm39, %v6748, 0.0
  %v6771 = vrot.slane %v6770, 4
  %v6772 = vadd.f32 %v6770, %v6771
  %v6773 = vrot.slane %v6772, 2
  %v6774 = vadd.f32 %v6772, %v6773
  %v6775 = vrot.slane %v6774, 1
  %v6776 = vadd.f32 %v6774, %v6775
  %v6777 = vlog2.pop %v6755
  %v6778 = vmul.f32 %v6777, 0.6931472
  %v6779 = vlog2.pop %v6762
  %v6780 = vmul.f32 %v6779, 0.6931472
  %v6781 = vlog2.pop %v6769
  %v6782 = vmul.f32 %v6781, 0.6931472
  %v6783 = vlog2.pop %v6776
  %v6784 = vmul.f32 %v6783, 0.6931472
  %v6785 = vadd.f32 %v6715, %v6778
  %v6786 = vadd.f32 %v6722, %v6780
  %v6787 = vadd.f32 %v6729, %v6782
  %v6788 = vadd.f32 %v6736, %v6784
  %v6789 = vsub.f32 %v6705, %v6785
  %v6790 = vsub.f32 %v6706, %v6786
  %v6791 = vsub.f32 %v6707, %v6787
  %v6792 = vsub.f32 %v6708, %v6788
  %v6793 = vsel %vm39, %v6789, -inf
  %6794 = vmax.xlane.f32.xlu0 %v6793
  %v6795 = vpop.xlane.xlu0 %6794
  %v6796 = vsel %vm39, %v6790, -inf
  %6797 = vmax.xlane.f32.xlu0 %v6796
  %v6798 = vpop.xlane.xlu0 %6797
  %v6799 = vsel %vm39, %v6791, -inf
  %6800 = vmax.xlane.f32.xlu0 %v6799
  %v6801 = vpop.xlane.xlu0 %6800
  %v6802 = vsel %vm39, %v6792, -inf
  %6803 = vmax.xlane.f32.xlu0 %v6802
  %v6804 = vpop.xlane.xlu0 %6803
  %v6805 = vsub.f32 %v6789, %v6795
  %v6806 = vsub.f32 %v6790, %v6798
  %v6807 = vsub.f32 %v6791, %v6801
  %v6808 = vsub.f32 %v6792, %v6804
  %v6809 = vmul.f32 %v6805, 1.442695
  %v6810 = vpow.pop %v6809
  %v6811 = vmul.f32 %v6806, 1.442695
  %v6812 = vpow.pop %v6811
  %v6813 = vmul.f32 %v6807, 1.442695
  %v6814 = vpow.pop %v6813
  %v6815 = vmul.f32 %v6808, 1.442695
  %v6816 = vpow.pop %v6815
  %v6817 = vsel %vm39, %v6810, 0.0
  %6818 = vadd.xlane.f32.xlu0 %v6817
  %v6819 = vpop.xlane.xlu0 %6818
  %v6820 = vsel %vm39, %v6812, 0.0
  %6821 = vadd.xlane.f32.xlu0 %v6820
  %v6822 = vpop.xlane.xlu0 %6821
  %v6823 = vsel %vm39, %v6814, 0.0
  %6824 = vadd.xlane.f32.xlu0 %v6823
  %v6825 = vpop.xlane.xlu0 %6824
  %v6826 = vsel %vm39, %v6816, 0.0
  %6827 = vadd.xlane.f32.xlu0 %v6826
  %v6828 = vpop.xlane.xlu0 %6827
  %v6829 = vlog2.pop %v6819
  %v6830 = vmul.f32 %v6829, 0.6931472
  %v6831 = vlog2.pop %v6822
  %v6832 = vmul.f32 %v6831, 0.6931472
  %v6833 = vlog2.pop %v6825
  %v6834 = vmul.f32 %v6833, 0.6931472
  %v6835 = vlog2.pop %v6828
  %v6836 = vmul.f32 %v6835, 0.6931472
  %v6837 = vadd.f32 %v6795, %v6830
  %v6838 = vadd.f32 %v6798, %v6832
  %v6839 = vadd.f32 %v6801, %v6834
  %v6840 = vadd.f32 %v6804, %v6836
  %v6841 = vsub.f32 %v6789, %v6837
  %v6842 = vsub.f32 %v6790, %v6838
  %v6843 = vsub.f32 %v6791, %v6839
  %v6844 = vsub.f32 %v6792, %v6840
  %v6845 = vsel %vm39, %v6841, -inf
  %v6846 = vrot.slane %v6845, 4
  %v6847 = vmax.f32 %v6845, %v6846
  %v6848 = vrot.slane %v6847, 2
  %v6849 = vmax.f32 %v6847, %v6848
  %v6850 = vrot.slane %v6849, 1
  %v6851 = vmax.f32 %v6849, %v6850
  %v6852 = vsel %vm39, %v6842, -inf
  %v6853 = vrot.slane %v6852, 4
  %v6854 = vmax.f32 %v6852, %v6853
  %v6855 = vrot.slane %v6854, 2
  %v6856 = vmax.f32 %v6854, %v6855
  %v6857 = vrot.slane %v6856, 1
  %v6858 = vmax.f32 %v6856, %v6857
  %v6859 = vsel %vm39, %v6843, -inf
  %v6860 = vrot.slane %v6859, 4
  %v6861 = vmax.f32 %v6859, %v6860
  %v6862 = vrot.slane %v6861, 2
  %v6863 = vmax.f32 %v6861, %v6862
  %v6864 = vrot.slane %v6863, 1
  %v6865 = vmax.f32 %v6863, %v6864
  %v6866 = vsel %vm39, %v6844, -inf
  %v6867 = vrot.slane %v6866, 4
  %v6868 = vmax.f32 %v6866, %v6867
  %v6869 = vrot.slane %v6868, 2
  %v6870 = vmax.f32 %v6868, %v6869
  %v6871 = vrot.slane %v6870, 1
  %v6872 = vmax.f32 %v6870, %v6871
  %v6873 = vsub.f32 %v6841, %v6851
  %v6874 = vsub.f32 %v6842, %v6858
  %v6875 = vsub.f32 %v6843, %v6865
  %v6876 = vsub.f32 %v6844, %v6872
  %v6877 = vmul.f32 %v6873, 1.442695
  %v6878 = vpow.pop %v6877
  %v6879 = vmul.f32 %v6874, 1.442695
  %v6880 = vpow.pop %v6879
  %v6881 = vmul.f32 %v6875, 1.442695
  %v6882 = vpow.pop %v6881
  %v6883 = vmul.f32 %v6876, 1.442695
  %v6884 = vpow.pop %v6883
  %v6885 = vsel %vm39, %v6878, 0.0
  %v6886 = vrot.slane %v6885, 4
  %v6887 = vadd.f32 %v6885, %v6886
  %v6888 = vrot.slane %v6887, 2
  %v6889 = vadd.f32 %v6887, %v6888
  %v6890 = vrot.slane %v6889, 1
  %v6891 = vadd.f32 %v6889, %v6890
  %v6892 = vsel %vm39, %v6880, 0.0
  %v6893 = vrot.slane %v6892, 4
  %v6894 = vadd.f32 %v6892, %v6893
  %v6895 = vrot.slane %v6894, 2
  %v6896 = vadd.f32 %v6894, %v6895
  %v6897 = vrot.slane %v6896, 1
  %v6898 = vadd.f32 %v6896, %v6897
  %v6899 = vsel %vm39, %v6882, 0.0
  %v6900 = vrot.slane %v6899, 4
  %v6901 = vadd.f32 %v6899, %v6900
  %v6902 = vrot.slane %v6901, 2
  %v6903 = vadd.f32 %v6901, %v6902
  %v6904 = vrot.slane %v6903, 1
  %v6905 = vadd.f32 %v6903, %v6904
  %v6906 = vsel %vm39, %v6884, 0.0
  %v6907 = vrot.slane %v6906, 4
  %v6908 = vadd.f32 %v6906, %v6907
  %v6909 = vrot.slane %v6908, 2
  %v6910 = vadd.f32 %v6908, %v6909
  %v6911 = vrot.slane %v6910, 1
  %v6912 = vadd.f32 %v6910, %v6911
  %v6913 = vlog2.pop %v6891
  %v6914 = vmul.f32 %v6913, 0.6931472
  %v6915 = vlog2.pop %v6898
  %v6916 = vmul.f32 %v6915, 0.6931472
  %v6917 = vlog2.pop %v6905
  %v6918 = vmul.f32 %v6917, 0.6931472
  %v6919 = vlog2.pop %v6912
  %v6920 = vmul.f32 %v6919, 0.6931472
  %v6921 = vadd.f32 %v6851, %v6914
  %v6922 = vadd.f32 %v6858, %v6916
  %v6923 = vadd.f32 %v6865, %v6918
  %v6924 = vadd.f32 %v6872, %v6920
  %v6925 = vsub.f32 %v6841, %v6921
  %v6926 = vsub.f32 %v6842, %v6922
  %v6927 = vsub.f32 %v6843, %v6923
  %v6928 = vsub.f32 %v6844, %v6924
  %v6929 = vmul.f32 %v6925, 1.442695
  %v6930 = vpow.pop %v6929
  %v6931 = vmul.f32 %v6926, 1.442695
  %v6932 = vpow.pop %v6931
  %v6933 = vmul.f32 %v6927, 1.442695
  %v6934 = vpow.pop %v6933
  %v6935 = vmul.f32 %v6928, 1.442695
  %v6936 = vpow.pop %v6935
  %6937 = vst.msk [vmem:[%s4] sm:$0xff] %vm39, %v6930
  %6938 = vst.msk [vmem:[%s4 + $0x8] sm:$0xff] %vm39, %v6932
  %6939 = vst.msk [vmem:[%s4 + $0x10] sm:$0xff] %vm39, %v6934
  %6940 = vst.msk [vmem:[%s4 + $0x18] sm:$0xff] %vm39, %v6936
  // Predicated region
  $region18: #{_fair_matching_impl.1} parent=0 // pred_check
    _
  $region19: #{_fair_matching_impl.1} parent=0 // pred_check_branch
    %6942 = sbr.rel (0) target = $region21
  $region20: #{_fair_matching_impl.1} parent=0 // pred_region
    _
  $region21: #{_fair_matching_impl.1} parent=0 // pred_fallthru
    _
  // Predicated region
  $region22: #{_fair_matching_impl.1} parent=0 // pred_check
    _
  $region23: #{_fair_matching_impl.1} parent=0 // pred_check_branch
    %6944 = sbr.rel (0) target = $region25
  $region24: #{_fair_matching_impl.1} parent=0 // pred_region
    _
  $region25: #{_fair_matching_impl.1} parent=0 // pred_fallthru
    _

</llo_original>
